<compile_context>
chip_gen: v5e
topology: v5e:2x2
jax: 0.10.0
libtpu: 0.0.40
codegen_flags: <defaults>
</compile_context>

<pallas_src>
import jax
import jax.numpy as jnp
from jax.experimental import pallas as pl
from jax.experimental.pallas import tpu as pltpu

NUM_CLASSES = 5


# ----------------------------------------------------------------------------
# Pallas kernels
# ----------------------------------------------------------------------------
def _matmul_bias_relu_kernel(a_ref, w_ref, b_ref, o_ref):
    """One (TM, K) x (K, Np) tile: MXU matmul + bias + fused ReLU."""
    acc = jnp.dot(a_ref[...], w_ref[...], preferred_element_type=jnp.float32)
    acc = jnp.maximum(acc + b_ref[...], 0.0)
    o_ref[...] = acc.astype(o_ref.dtype)


def _head_kernel(x_ref, w1_ref, b1_ref, w2_ref, b2_ref, o_ref):
    """Fused classifier head: sigmoid(relu(x @ W1 + b1) @ W2 + b2)."""
    h = jnp.dot(x_ref[...], w1_ref[...], preferred_element_type=jnp.float32)
    h = jnp.maximum(h + b1_ref[...], 0.0)
    z = jnp.dot(h.astype(w2_ref.dtype), w2_ref[...],
                preferred_element_type=jnp.float32)
    o_ref[...] = jax.nn.sigmoid(z + b2_ref[...]).astype(o_ref.dtype)


# ----------------------------------------------------------------------------
# Pallas wrappers
# ----------------------------------------------------------------------------
def matmul_bias_relu(a, w, b2, *, tm=2048, out_dtype=jnp.bfloat16):
    """a: (M, K) bf16, w: (K, Np) bf16, b2: (1, Np) f32 -> (M, Np) out_dtype."""
    M, K = a.shape
    K2, Np = w.shape
    assert K == K2
    tm = M if M <= tm else tm      # full-M block when small (always legal)
    grid = (pl.cdiv(M, tm),)
    return pl.pallas_call(
        _matmul_bias_relu_kernel,
        out_shape=jax.ShapeDtypeStruct((M, Np), out_dtype),
        grid=grid,
        in_specs=[
            pl.BlockSpec((tm, K), lambda i: (i, 0)),
            pl.BlockSpec((K, Np), lambda i: (0, 0)),
            pl.BlockSpec((1, Np), lambda i: (0, 0)),
        ],
        out_specs=pl.BlockSpec((tm, Np), lambda i: (i, 0)),
        compiler_params=pltpu.CompilerParams(
            dimension_semantics=("parallel",)),
    )(a, w, b2)


def classifier_head(x, w1, b1, w2, b2):
    """sigmoid(relu(x @ w1 + b1) @ w2 + b2) as a single fused pallas_call."""
    B = x.shape[0]
    vspec = pl.BlockSpec(memory_space=pltpu.MemorySpace.VMEM)
    return pl.pallas_call(
        _head_kernel,
        out_shape=jax.ShapeDtypeStruct((B, w2.shape[1]), jnp.float32),
        in_specs=[vspec] * 5,
        out_specs=vspec,
    )(x, w1, b1, w2, b2)


def conv3x3_relu(x, w_km, b_km, padding):
    """3x3 conv (stride 1) + ReLU. x: NHWC bf16; w_km: (9*Cin, Np) bf16."""
    B, H, W, Cin = x.shape
    p = padding
    xp = jnp.pad(x, ((0, 0), (p, p), (p, p), (0, 0))) if p else x
    Ho, Wo = H + 2 * p - 2, W + 2 * p - 2
    # im2col (XLA layout glue, fuses into one op): feature order (kh, kw, cin).
    patches = jnp.concatenate(
        [xp[:, i:i + Ho, j:j + Wo, :] for i in range(3) for j in range(3)],
        axis=-1)                                        # (B, Ho, Wo, 9*Cin)
    a = patches.reshape(B * Ho * Wo, 9 * Cin).astype(jnp.bfloat16)
    out = matmul_bias_relu(a, w_km, b_km, tm=2048, out_dtype=jnp.bfloat16)
    return out.reshape(B, Ho, Wo, w_km.shape[1])


def maxpool2(x):
    """2x2 max pool, stride 2, floor mode (reshape+max; XLA fuses it)."""
    B, H, W, C = x.shape
    Ho, Wo = H // 2, W // 2
    x = x[:, :2 * Ho, :2 * Wo, :].reshape(B, Ho, 2, Wo, 2, C)
    return x.max(axis=(2, 4))


def adaptive_avg_pool(x, out_h, out_w):
    """torch adaptive_avg_pool2d semantics (NHWC). Identity when sizes match."""
    B, H, W, C = x.shape
    if (H, W) == (out_h, out_w):
        return x
    rows = []
    for i in range(out_h):
        h0 = (i * H) // out_h
        h1 = -(-((i + 1) * H) // out_h)
        cols = []
        for j in range(out_w):
            w0 = (j * W) // out_w
            w1 = -(-((j + 1) * W) // out_w)
            cols.append(jnp.mean(x[:, h0:h1, w0:w1, :], axis=(1, 2)))
        rows.append(jnp.stack(cols, axis=1))
    return jnp.stack(rows, axis=1)


# ----------------------------------------------------------------------------
# Parameters: PyTorch layout -> kernel-ready layout (done once, not per call)
# ----------------------------------------------------------------------------
def init_params(key, num_classes=NUM_CLASSES):
    """Random parameters in PyTorch layout (Cout,Cin,kh,kw conv; (out,in) fc)."""
    ks = jax.random.split(key, 10)
    s = 0.05
    return {
        "w1": s * jax.random.normal(ks[0], (32, 3, 3, 3), jnp.float32),
        "b1": s * jax.random.normal(ks[1], (32,), jnp.float32),
        "w2": s * jax.random.normal(ks[2], (64, 32, 3, 3), jnp.float32),
        "b2": s * jax.random.normal(ks[3], (64,), jnp.float32),
        "w3": s * jax.random.normal(ks[4], (128, 64, 3, 3), jnp.float32),
        "b3": s * jax.random.normal(ks[5], (128,), jnp.float32),
        "wf1": s * jax.random.normal(ks[6], (256, 128 * 6 * 6), jnp.float32),
        "bf1": s * jax.random.normal(ks[7], (256,), jnp.float32),
        "wf2": s * jax.random.normal(ks[8], (num_classes, 256), jnp.float32),
        "bf2": s * jax.random.normal(ks[9], (num_classes,), jnp.float32),
    }


def _pad_cols(m, np_):
    return jnp.pad(m, ((0, 0), (0, np_ - m.shape[1])))


def prepare_params(p, num_classes=NUM_CLASSES):
    """Hoist all weight-layout work out of forward()."""
    def conv_prep(w, b):
        cout, cin = w.shape[0], w.shape[1]
        npad = ((cout + 127) // 128) * 128          # lane-dense output width
        wk = jnp.transpose(w, (2, 3, 1, 0)).reshape(9 * cin, cout)
        wk = _pad_cols(wk, npad).astype(jnp.bfloat16)
        bk = jnp.pad(b, (0, npad - cout)).reshape(1, npad).astype(jnp.float32)
        return wk, bk

    w1, b1 = conv_prep(p["w1"], p["b1"])
    w2, b2 = conv_prep(p["w2"], p["b2"])
    w3, b3 = conv_prep(p["w3"], p["b3"])

    # fc1: PyTorch flattens NCHW as (c,h,w); the kernel flattens NHWC as
    # (h,w,c) — permute the weight rows once here instead of transposing the
    # activation tensor every forward call.
    wf1 = p["wf1"].reshape(256, 128, 6, 6)                       # (out, c, h, w)
    wf1 = jnp.transpose(wf1, (2, 3, 1, 0)).reshape(6 * 6 * 128, 256)
    wf1 = wf1.astype(jnp.bfloat16)
    bf1 = p["bf1"].reshape(1, 256).astype(jnp.float32)

    npad2 = ((num_classes + 127) // 128) * 128
    wf2 = _pad_cols(p["wf2"].T, npad2).astype(jnp.bfloat16)
    bf2 = jnp.pad(p["bf2"], (0, npad2 - num_classes))
    bf2 = bf2.reshape(1, npad2).astype(jnp.float32)

    return {"w1": w1, "b1": b1, "w2": w2, "b2": b2, "w3": w3, "b3": b3,
            "wf1": wf1, "bf1": bf1, "wf2": wf2, "bf2": bf2}


# ----------------------------------------------------------------------------
# Forward pass
# ----------------------------------------------------------------------------
@jax.jit
def forward(x_nchw, kp):
    # NCHW (PyTorch) -> NHWC so channels sit on the 128-lane axis.
    x = jnp.transpose(x_nchw, (0, 2, 3, 1)).astype(jnp.bfloat16)
    x = conv3x3_relu(x, kp["w1"], kp["b1"], padding=1)[..., :32]    # conv1+relu
    x = maxpool2(x)
    x = conv3x3_relu(x, kp["w2"], kp["b2"], padding=0)[..., :64]    # conv2+relu
    x = maxpool2(x)
    x = conv3x3_relu(x, kp["w3"], kp["b3"], padding=0)[..., :128]   # conv3+relu
    x = maxpool2(x)
    x = adaptive_avg_pool(x, 6, 6)
    # NHWC flatten (fc1 weight rows were pre-permuted to this order).
    xf = x.reshape(x.shape[0], 6 * 6 * 128).astype(jnp.bfloat16)
    out = classifier_head(xf, kp["wf1"], kp["bf1"], kp["wf2"], kp["bf2"])
    return out[:, :NUM_CLASSES]


if __name__ == "__main__":
    key = jax.random.PRNGKey(0)
    kx, kparam = jax.random.split(key)
    # 64x64 input => 6x6 feature map right before the adaptive pool,
    # matching the 128*6*6 fc1 fan-in exactly.
    x = jax.random.normal(kx, (2, 3, 64, 64), jnp.float32)
    params = init_params(kparam)
    kparams = prepare_params(params)

    out = jax.block_until_ready(forward(x, kparams))

    assert out.shape == (2, NUM_CLASSES), out.shape
    assert bool(jnp.all(jnp.isfinite(out)))
    assert bool(jnp.all((out >= 0.0) & (out <= 1.0)))  # sigmoid range
    print("KERNEL_OK")
</pallas_src>

<mosaic_0001>
module attributes {stable_mosaic.version = 11 : i64} {
  func.func @_matmul_bias_relu_kernel(%arg0: i32, %arg1: memref<2048x27xbf16, #tpu.memory_space<vmem>>, %arg2: memref<27x128xbf16, #tpu.memory_space<vmem>>, %arg3: memref<1x128xf32, #tpu.memory_space<vmem>>, %arg4: memref<2048x128xbf16, #tpu.memory_space<vmem>>) attributes {dimension_semantics = [#tpu.dimension_semantics<parallel>], iteration_bounds = array<i64: 4>, scalar_prefetch = 0 : i64, scratch_operands = 0 : i64, tpu.core_type = #tpu.core_type<tc>, window_params = [{transform_indices = @transform_0, window_bounds = array<i64: 2048, 27>}, {pipeline_mode = #tpu.pipeline_mode<synchronous>, transform_indices = @transform_1, window_bounds = array<i64: 27, 128>}, {pipeline_mode = #tpu.pipeline_mode<synchronous>, transform_indices = @transform_2, window_bounds = array<i64: 1, 128>}, {transform_indices = @transform_3, window_bounds = array<i64: 2048, 128>}]} {
    %c0 = arith.constant 0 : index
    %c0_0 = arith.constant 0 : index
    %0 = vector.load %arg1[%c0, %c0_0] : memref<2048x27xbf16, #tpu.memory_space<vmem>>, vector<2048x27xbf16>
    %c0_1 = arith.constant 0 : index
    %c0_2 = arith.constant 0 : index
    %1 = vector.load %arg2[%c0_1, %c0_2] : memref<27x128xbf16, #tpu.memory_space<vmem>>, vector<27x128xbf16>
    %cst = arith.constant dense<0.000000e+00> : vector<2048x128xf32>
    %2 = tpu.matmul %0, %1, %cst {dimension_numbers = #tpu.dot_dimension_numbers<[1], [0], [0], [1], [0, 0, 1, 1], [], []>} : vector<2048x27xbf16>, vector<27x128xbf16>, vector<2048x128xf32> -> vector<2048x128xf32>
    %c0_3 = arith.constant 0 : index
    %c0_4 = arith.constant 0 : index
    %3 = vector.load %arg3[%c0_3, %c0_4] : memref<1x128xf32, #tpu.memory_space<vmem>>, vector<1x128xf32>
    %4 = vector.broadcast %3 : vector<1x128xf32> to vector<2048x128xf32>
    %5 = arith.addf %2, %4 : vector<2048x128xf32>
    %cst_5 = arith.constant 0.000000e+00 : f32
    %6 = vector.broadcast %cst_5 : f32 to vector<2048x128xf32>
    %7 = arith.maximumf %5, %6 : vector<2048x128xf32>
    %8 = arith.truncf %7 : vector<2048x128xf32> to vector<2048x128xbf16>
    %c0_6 = arith.constant 0 : index
    %c0_7 = arith.constant 0 : index
    %9 = vector.load %arg4[%c0_6, %c0_7] : memref<2048x128xbf16, #tpu.memory_space<vmem>>, vector<2048x128xbf16>
    tpu.vector_store %arg4[%c0_6, %c0_7], %8 {strides = array<i32>} : memref<2048x128xbf16, #tpu.memory_space<vmem>>, vector<2048x128xbf16>,
    return
  }
  func.func @transform_0(%arg0: i32) -> (i32, i32) {
    %c0_i32 = arith.constant 0 : i32
    %c0_i32_0 = arith.constant 0 : i32
    return %arg0, %c0_i32 : i32, i32
  }
  func.func @transform_1(%arg0: i32) -> (i32, i32) {
    %c0_i32 = arith.constant 0 : i32
    %c0_i32_0 = arith.constant 0 : i32
    %c0_i32_1 = arith.constant 0 : i32
    return %c0_i32, %c0_i32_0 : i32, i32
  }
  func.func @transform_2(%arg0: i32) -> (i32, i32) {
    %c0_i32 = arith.constant 0 : i32
    %c0_i32_0 = arith.constant 0 : i32
    %c0_i32_1 = arith.constant 0 : i32
    return %c0_i32, %c0_i32_0 : i32, i32
  }
  func.func @transform_3(%arg0: i32) -> (i32, i32) {
    %c0_i32 = arith.constant 0 : i32
    %c0_i32_0 = arith.constant 0 : i32
    return %arg0, %c0_i32 : i32, i32
  }
}

module attributes {stable_mosaic.version = 11 : i64} {
  func.func @_matmul_bias_relu_kernel(%arg0: i32, %arg1: memref<1800x288xbf16, #tpu.memory_space<vmem>>, %arg2: memref<288x128xbf16, #tpu.memory_space<vmem>>, %arg3: memref<1x128xf32, #tpu.memory_space<vmem>>, %arg4: memref<1800x128xbf16, #tpu.memory_space<vmem>>) attributes {dimension_semantics = [#tpu.dimension_semantics<parallel>], iteration_bounds = array<i64: 1>, scalar_prefetch = 0 : i64, scratch_operands = 0 : i64, tpu.core_type = #tpu.core_type<tc>, window_params = [{transform_indices = @transform_0, window_bounds = array<i64: 1800, 288>}, {pipeline_mode = #tpu.pipeline_mode<synchronous>, transform_indices = @transform_1, window_bounds = array<i64: 288, 128>}, {pipeline_mode = #tpu.pipeline_mode<synchronous>, transform_indices = @transform_2, window_bounds = array<i64: 1, 128>}, {transform_indices = @transform_3, window_bounds = array<i64: 1800, 128>}]} {
    %c0 = arith.constant 0 : index
    %c0_0 = arith.constant 0 : index
    %0 = vector.load %arg1[%c0, %c0_0] : memref<1800x288xbf16, #tpu.memory_space<vmem>>, vector<1800x288xbf16>
    %c0_1 = arith.constant 0 : index
    %c0_2 = arith.constant 0 : index
    %1 = vector.load %arg2[%c0_1, %c0_2] : memref<288x128xbf16, #tpu.memory_space<vmem>>, vector<288x128xbf16>
    %cst = arith.constant dense<0.000000e+00> : vector<1800x128xf32>
    %2 = tpu.matmul %0, %1, %cst {dimension_numbers = #tpu.dot_dimension_numbers<[1], [0], [0], [1], [0, 0, 1, 1], [], []>} : vector<1800x288xbf16>, vector<288x128xbf16>, vector<1800x128xf32> -> vector<1800x128xf32>
    %c0_3 = arith.constant 0 : index
    %c0_4 = arith.constant 0 : index
    %3 = vector.load %arg3[%c0_3, %c0_4] : memref<1x128xf32, #tpu.memory_space<vmem>>, vector<1x128xf32>
    %4 = vector.broadcast %3 : vector<1x128xf32> to vector<1800x128xf32>
    %5 = arith.addf %2, %4 : vector<1800x128xf32>
    %cst_5 = arith.constant 0.000000e+00 : f32
    %6 = vector.broadcast %cst_5 : f32 to vector<1800x128xf32>
    %7 = arith.maximumf %5, %6 : vector<1800x128xf32>
    %8 = arith.truncf %7 : vector<1800x128xf32> to vector<1800x128xbf16>
    %c0_6 = arith.constant 0 : index
    %c0_7 = arith.constant 0 : index
    %9 = vector.load %arg4[%c0_6, %c0_7] : memref<1800x128xbf16, #tpu.memory_space<vmem>>, vector<1800x128xbf16>
    tpu.vector_store %arg4[%c0_6, %c0_7], %8 {strides = array<i32>} : memref<1800x128xbf16, #tpu.memory_space<vmem>>, vector<1800x128xbf16>,
    return
  }
  func.func @transform_0(%arg0: i32) -> (i32, i32) {
    %c0_i32 = arith.constant 0 : i32
    %c0_i32_0 = arith.constant 0 : i32
    return %arg0, %c0_i32 : i32, i32
  }
  func.func @transform_1(%arg0: i32) -> (i32, i32) {
    %c0_i32 = arith.constant 0 : i32
    %c0_i32_0 = arith.constant 0 : i32
    %c0_i32_1 = arith.constant 0 : i32
    return %c0_i32, %c0_i32_0 : i32, i32
  }
  func.func @transform_2(%arg0: i32) -> (i32, i32) {
    %c0_i32 = arith.constant 0 : i32
    %c0_i32_0 = arith.constant 0 : i32
    %c0_i32_1 = arith.constant 0 : i32
    return %c0_i32, %c0_i32_0 : i32, i32
  }
  func.func @transform_3(%arg0: i32) -> (i32, i32) {
    %c0_i32 = arith.constant 0 : i32
    %c0_i32_0 = arith.constant 0 : i32
    return %arg0, %c0_i32 : i32, i32
  }
}

module attributes {stable_mosaic.version = 11 : i64} {
  func.func @_matmul_bias_relu_kernel(%arg0: i32, %arg1: memref<338x576xbf16, #tpu.memory_space<vmem>>, %arg2: memref<576x128xbf16, #tpu.memory_space<vmem>>, %arg3: memref<1x128xf32, #tpu.memory_space<vmem>>, %arg4: memref<338x128xbf16, #tpu.memory_space<vmem>>) attributes {dimension_semantics = [#tpu.dimension_semantics<parallel>], iteration_bounds = array<i64: 1>, scalar_prefetch = 0 : i64, scratch_operands = 0 : i64, tpu.core_type = #tpu.core_type<tc>, window_params = [{transform_indices = @transform_0, window_bounds = array<i64: 338, 576>}, {pipeline_mode = #tpu.pipeline_mode<synchronous>, transform_indices = @transform_1, window_bounds = array<i64: 576, 128>}, {pipeline_mode = #tpu.pipeline_mode<synchronous>, transform_indices = @transform_2, window_bounds = array<i64: 1, 128>}, {transform_indices = @transform_3, window_bounds = array<i64: 338, 128>}]} {
    %c0 = arith.constant 0 : index
    %c0_0 = arith.constant 0 : index
    %0 = vector.load %arg1[%c0, %c0_0] : memref<338x576xbf16, #tpu.memory_space<vmem>>, vector<338x576xbf16>
    %c0_1 = arith.constant 0 : index
    %c0_2 = arith.constant 0 : index
    %1 = vector.load %arg2[%c0_1, %c0_2] : memref<576x128xbf16, #tpu.memory_space<vmem>>, vector<576x128xbf16>
    %cst = arith.constant dense<0.000000e+00> : vector<338x128xf32>
    %2 = tpu.matmul %0, %1, %cst {dimension_numbers = #tpu.dot_dimension_numbers<[1], [0], [0], [1], [0, 0, 1, 1], [], []>} : vector<338x576xbf16>, vector<576x128xbf16>, vector<338x128xf32> -> vector<338x128xf32>
    %c0_3 = arith.constant 0 : index
    %c0_4 = arith.constant 0 : index
    %3 = vector.load %arg3[%c0_3, %c0_4] : memref<1x128xf32, #tpu.memory_space<vmem>>, vector<1x128xf32>
    %4 = vector.broadcast %3 : vector<1x128xf32> to vector<338x128xf32>
    %5 = arith.addf %2, %4 : vector<338x128xf32>
    %cst_5 = arith.constant 0.000000e+00 : f32
    %6 = vector.broadcast %cst_5 : f32 to vector<338x128xf32>
    %7 = arith.maximumf %5, %6 : vector<338x128xf32>
    %8 = arith.truncf %7 : vector<338x128xf32> to vector<338x128xbf16>
    %c0_6 = arith.constant 0 : index
    %c0_7 = arith.constant 0 : index
    %9 = vector.load %arg4[%c0_6, %c0_7] : memref<338x128xbf16, #tpu.memory_space<vmem>>, vector<338x128xbf16>
    tpu.vector_store %arg4[%c0_6, %c0_7], %8 {strides = array<i32>} : memref<338x128xbf16, #tpu.memory_space<vmem>>, vector<338x128xbf16>,
    return
  }
  func.func @transform_0(%arg0: i32) -> (i32, i32) {
    %c0_i32 = arith.constant 0 : i32
    %c0_i32_0 = arith.constant 0 : i32
    return %arg0, %c0_i32 : i32, i32
  }
  func.func @transform_1(%arg0: i32) -> (i32, i32) {
    %c0_i32 = arith.constant 0 : i32
    %c0_i32_0 = arith.constant 0 : i32
    %c0_i32_1 = arith.constant 0 : i32
    return %c0_i32, %c0_i32_0 : i32, i32
  }
  func.func @transform_2(%arg0: i32) -> (i32, i32) {
    %c0_i32 = arith.constant 0 : i32
    %c0_i32_0 = arith.constant 0 : i32
    %c0_i32_1 = arith.constant 0 : i32
    return %c0_i32, %c0_i32_0 : i32, i32
  }
  func.func @transform_3(%arg0: i32) -> (i32, i32) {
    %c0_i32 = arith.constant 0 : i32
    %c0_i32_0 = arith.constant 0 : i32
    return %arg0, %c0_i32 : i32, i32
  }
}

module attributes {stable_mosaic.version = 11 : i64} {
  func.func @_head_kernel(%arg0: memref<2x4608xbf16, #tpu.memory_space<vmem>>, %arg1: memref<4608x256xbf16, #tpu.memory_space<vmem>>, %arg2: memref<1x256xf32, #tpu.memory_space<vmem>>, %arg3: memref<256x128xbf16, #tpu.memory_space<vmem>>, %arg4: memref<1x128xf32, #tpu.memory_space<vmem>>, %arg5: memref<2x128xf32, #tpu.memory_space<vmem>>) attributes {dimension_semantics = [], scalar_prefetch = 0 : i64, scratch_operands = 0 : i64, tpu.core_type = #tpu.core_type<tc>} {
    %c0 = arith.constant 0 : index
    %c0_0 = arith.constant 0 : index
    %0 = vector.load %arg0[%c0, %c0_0] : memref<2x4608xbf16, #tpu.memory_space<vmem>>, vector<2x4608xbf16>
    %c0_1 = arith.constant 0 : index
    %c0_2 = arith.constant 0 : index
    %1 = vector.load %arg1[%c0_1, %c0_2] : memref<4608x256xbf16, #tpu.memory_space<vmem>>, vector<4608x256xbf16>
    %cst = arith.constant dense<0.000000e+00> : vector<2x256xf32>
    %2 = tpu.matmul %0, %1, %cst {dimension_numbers = #tpu.dot_dimension_numbers<[1], [0], [0], [1], [0, 0, 1, 1], [], []>} : vector<2x4608xbf16>, vector<4608x256xbf16>, vector<2x256xf32> -> vector<2x256xf32>
    %c0_3 = arith.constant 0 : index
    %c0_4 = arith.constant 0 : index
    %3 = vector.load %arg2[%c0_3, %c0_4] : memref<1x256xf32, #tpu.memory_space<vmem>>, vector<1x256xf32>
    %4 = vector.broadcast %3 : vector<1x256xf32> to vector<2x256xf32>
    %5 = arith.addf %2, %4 : vector<2x256xf32>
    %cst_5 = arith.constant 0.000000e+00 : f32
    %6 = vector.broadcast %cst_5 : f32 to vector<2x256xf32>
    %7 = arith.maximumf %5, %6 : vector<2x256xf32>
    %8 = arith.truncf %7 : vector<2x256xf32> to vector<2x256xbf16>
    %c0_6 = arith.constant 0 : index
    %c0_7 = arith.constant 0 : index
    %9 = vector.load %arg3[%c0_6, %c0_7] : memref<256x128xbf16, #tpu.memory_space<vmem>>, vector<256x128xbf16>
    %cst_8 = arith.constant dense<0.000000e+00> : vector<2x128xf32>
    %10 = tpu.matmul %8, %9, %cst_8 {dimension_numbers = #tpu.dot_dimension_numbers<[1], [0], [0], [1], [0, 0, 1, 1], [], []>} : vector<2x256xbf16>, vector<256x128xbf16>, vector<2x128xf32> -> vector<2x128xf32>
    %c0_9 = arith.constant 0 : index
    %c0_10 = arith.constant 0 : index
    %11 = vector.load %arg4[%c0_9, %c0_10] : memref<1x128xf32, #tpu.memory_space<vmem>>, vector<1x128xf32>
    %12 = vector.broadcast %11 : vector<1x128xf32> to vector<2x128xf32>
    %13 = arith.addf %10, %12 : vector<2x128xf32>
    %14 = arith.negf %13 : vector<2x128xf32>
    %15 = math.exp %14 : vector<2x128xf32>
    %cst_11 = arith.constant 1.000000e+00 : f32
    %16 = vector.broadcast %cst_11 : f32 to vector<2x128xf32>
    %17 = arith.addf %16, %15 : vector<2x128xf32>
    %18 = arith.divf %16, %17 : vector<2x128xf32>
    %c0_12 = arith.constant 0 : index
    %c0_13 = arith.constant 0 : index
    %19 = vector.load %arg5[%c0_12, %c0_13] : memref<2x128xf32, #tpu.memory_space<vmem>>, vector<2x128xf32>
    tpu.vector_store %arg5[%c0_12, %c0_13], %18 {strides = array<i32>} : memref<2x128xf32, #tpu.memory_space<vmem>>, vector<2x128xf32>,
    return
  }
}

</mosaic_0001>

<llo_original>
// kernel: forward.4
$region0: #{forward.4}
  #allocation0 [shape = 'u32[]', space=smem, size = 0x4, offset = 0x4, fixed_abs, tag = 'smem constant byte address 0x4 - core index']
  #allocation1 [shape = 'u32[72,128]{1,0:T(1,128)}', space=vmem, size = 0x9000, scoped, tag = 'internal scratch']
  %s0 = inlined_call_operand.vmem [shape: bf16[8192,27], index: 0, kind: input, shape index: {}]
  %s1 = inlined_call_operand.vmem [shape: bf16[27,128], index: 1, kind: input, shape index: {}]
  %s2 = inlined_call_operand.vmem [shape: f32[1,128], index: 2, kind: input, shape index: {}]
  %s3 = inlined_call_operand.vmem [shape: bf16[8192,128], index: 3, kind: output, shape index: {}]
  %s4 = sld [smem:[#allocation0]]
  $region45: #{forward.4} parent=0
    _
  %s6 = ssub.s32 1, %s4
  %s7 = scalar_select 0, %s6, %s4
  loop: start=0, step=1, limit=6
  $region2: #{forward.4} parent=0 // loop_pre_header
    _
  $region3: #{forward.4} parent=0 // loop_header
    %s9 = sphi 0, %s13
    %p10 = scmp.ge.s32.totalorder %s9, 6
    %s19 = sphi 0, %s21
    %s22 = sphi 0, %s19
    %s23 = sphi 0, %s22
    %s39 = sphi 0, %s23
    %s43 = sphi 0, %s43
    %s45 = sphi 0, %s43
    %s46 = sphi 0, %s45
    %s60 = sphi 0, %s46
    %s64 = sphi 0, %s64
    %s66 = sphi 0, %s64
    %s67 = sphi 0, %s66
    %s81 = sphi 0, %s67
    %s87 = sphi 0, %s89
    %s90 = sphi 0, %s87
    %s91 = sphi 0, %s90
    %s107 = sphi 0, %s91
  $region4: #{forward.4} parent=0 // loop_header_branch
    %12 = sbr.rel (%p10) target = $region8
  $region5: #{forward.4} parent=0 // loop_body
    %s14 = ssub.s32 %s9, 1
    %s15 = ssub.s32 %s9, 2
    %s16 = sadd.s32 %s9, 1
    %s17 = ssub.s32 %s9, %s16
    %p18 = scmp.eq.s32.totalorder %s17, 0
    %s20 = sadd.s32 %s19, 1
    %s21 = scalar_select %p18, %s19, %s20
    %p24 = pneg %p18
    %p25 = scmp.eq.s32.totalorder %s9, 3
    %p26 = por %p24, %p25
    %p27 = scmp.ne.s32.totalorder %s19, %s22
    %p28 = scmp.eq.s32.totalorder %s9, 0
    %p29 = por %p27, %p28
    %p30 = scmp.ne.s32.totalorder %s19, %s22
    %p31 = scmp.eq.s32.totalorder %s14, 3
    %p32 = por %p30, %p31
    %p33 = scmp.ne.s32.totalorder %s22, %s23
    %p34 = scmp.eq.s32.totalorder %s14, 0
    %p35 = por %p33, %p34
    %p36 = scmp.ne.s32.totalorder %s22, %s23
    %p37 = scmp.eq.s32.totalorder %s15, 3
    %p38 = por %p36, %p37
    %p40 = scmp.ne.s32.totalorder %s23, %s39
    %p41 = scmp.eq.s32.totalorder %s15, 0
    %p42 = por %p40, %p41
    %s44 = sadd.s32 %s43, 1
    %p47 = scmp.eq.s32.totalorder %s9, 3
    %p48 = scmp.ne.s32.totalorder %s43, %s45
    %p49 = scmp.eq.s32.totalorder %s9, 0
    %p50 = por %p48, %p49
    %p51 = scmp.ne.s32.totalorder %s43, %s45
    %p52 = scmp.eq.s32.totalorder %s14, 3
    %p53 = por %p51, %p52
    %p54 = scmp.ne.s32.totalorder %s45, %s46
    %p55 = scmp.eq.s32.totalorder %s14, 0
    %p56 = por %p54, %p55
    %p57 = scmp.ne.s32.totalorder %s45, %s46
    %p58 = scmp.eq.s32.totalorder %s15, 3
    %p59 = por %p57, %p58
    %p61 = scmp.ne.s32.totalorder %s46, %s60
    %p62 = scmp.eq.s32.totalorder %s15, 0
    %p63 = por %p61, %p62
    %s65 = sadd.s32 %s64, 1
    %p68 = scmp.eq.s32.totalorder %s9, 3
    %p69 = scmp.ne.s32.totalorder %s64, %s66
    %p70 = scmp.eq.s32.totalorder %s9, 0
    %p71 = por %p69, %p70
    %p72 = scmp.ne.s32.totalorder %s64, %s66
    %p73 = scmp.eq.s32.totalorder %s14, 3
    %p74 = por %p72, %p73
    %p75 = scmp.ne.s32.totalorder %s66, %s67
    %p76 = scmp.eq.s32.totalorder %s14, 0
    %p77 = por %p75, %p76
    %p78 = scmp.ne.s32.totalorder %s66, %s67
    %p79 = scmp.eq.s32.totalorder %s15, 3
    %p80 = por %p78, %p79
    %p82 = scmp.ne.s32.totalorder %s67, %s81
    %p83 = scmp.eq.s32.totalorder %s15, 0
    %p84 = por %p82, %p83
    %s85 = ssub.s32 %s9, %s16
    %p86 = scmp.eq.s32.totalorder %s85, 0
    %s88 = sadd.s32 %s87, 1
    %s89 = scalar_select %p86, %s87, %s88
    %p92 = pneg %p86
    %p93 = scmp.eq.s32.totalorder %s9, 3
    %p94 = por %p92, %p93
    %p95 = scmp.ne.s32.totalorder %s87, %s90
    %p96 = scmp.eq.s32.totalorder %s9, 0
    %p97 = por %p95, %p96
    %p98 = scmp.ne.s32.totalorder %s87, %s90
    %p99 = scmp.eq.s32.totalorder %s14, 3
    %p100 = por %p98, %p99
    %p101 = scmp.ne.s32.totalorder %s90, %s91
    %p102 = scmp.eq.s32.totalorder %s14, 0
    %p103 = por %p101, %p102
    %p104 = scmp.ne.s32.totalorder %s90, %s91
    %p105 = scmp.eq.s32.totalorder %s15, 3
    %p106 = por %p104, %p105
    %p108 = scmp.ne.s32.totalorder %s91, %s107
    %p109 = scmp.eq.s32.totalorder %s15, 0
    %p110 = por %p108, %p109
    %p111 = scmp.le.s32.totalorder 1, %s9
    %p112 = scmp.lt.s32.totalorder %s9, 5
    %p113 = pnand %p111, %p112
    %p114 = pneg %p113
    // Predicated region
    $region9: #{forward.4} parent=5 // pred_check
      _
    $region10: #{forward.4} parent=5 // pred_check_branch
      %116 = sbr.rel (%p113) target = $region12
    $region11: #{forward.4} parent=5 // pred_region
      %s117 = ssub.s32 %s9, 1
      // Predicated region
      $region13: #{forward.4} parent=11 // pred_check
        %p118 = pneg %p56
      $region14: #{forward.4} parent=11 // pred_check_branch
        %120 = sbr.rel (%p118) target = $region16
      $region15: #{forward.4} parent=11 // pred_region
        _
      $region16: #{forward.4} parent=11 // pred_fallthru
        _
      // Predicated region
      $region17: #{forward.4} parent=11 // pred_check
        %p121 = pneg %p77
      $region18: #{forward.4} parent=11 // pred_check_branch
        %123 = sbr.rel (%p121) target = $region20
      $region19: #{forward.4} parent=11 // pred_region
        _
      $region20: #{forward.4} parent=11 // pred_fallthru
        _
    $region12: #{forward.4} parent=5 // pred_fallthru
      _
    %p124 = scmp.lt.s32.totalorder %s9, 4
    // Predicated region
    $region21: #{forward.4} parent=5 // pred_check
      %p125 = pneg %p124
    $region22: #{forward.4} parent=5 // pred_check_branch
      %127 = sbr.rel (%p125) target = $region24
    $region23: #{forward.4} parent=5 // pred_region
      // Predicated region
      $region25: #{forward.4} parent=23 // pred_check
        %p128 = pneg %p29
      $region26: #{forward.4} parent=23 // pred_check_branch
        %130 = sbr.rel (%p128) target = $region28
      $region27: #{forward.4} parent=23 // pred_region
        %s131 = smul.u32 256, %s9
        %p132 = scmp.lt.s32.totalorder %s131, 1023
        %s133 = scalar_select %p132, %s131, 1023
        %s134 = smul.addr %s133, 4
        %s135 = scalar_lea.vmem %s0, %s134
        %s136 = smul.u32 256, %s9
      $region28: #{forward.4} parent=23 // pred_fallthru
        _
    $region24: #{forward.4} parent=5 // pred_fallthru
      _
    %p137 = scmp.le.s32.totalorder 1, %s9
    %p138 = scmp.lt.s32.totalorder %s9, 5
    %p139 = pnand %p137, %p138
    %p140 = pneg %p139
    // Predicated region
    $region29: #{forward.4} parent=5 // pred_check
      _
    $region30: #{forward.4} parent=5 // pred_check_branch
      %142 = sbr.rel (%p139) target = $region32
    $region31: #{forward.4} parent=5 // pred_region
      %s143 = ssub.s32 %s9, 1
      %s144 = smul.u32 256, %s14
      %p145 = scmp.lt.s32.totalorder %s144, 1023
      %s146 = scalar_select %p145, %s144, 1023
      %s147 = smul.addr %s146, 4
      %s148 = scalar_lea.vmem %s0, %s147
      %p149 = pneg %p35
      %p150 = pneg %p32
      %p151 = pneg %p56
      %p152 = pneg %p53
      %p153 = pneg %p77
      %p154 = pneg %p74
      %p155 = pneg %p103
      %p156 = pneg %p100
      %s157 = smul.u32 256, %s14
      %p158 = scmp.lt.s32.totalorder %s157, 1023
      %s159 = scalar_select %p158, %s157, 1023
      %s160 = smul.addr %s159, 4
      %s161 = scalar_lea.vmem %s3, %s160
      %s162 = smul.u32 256, %s14
      %p163 = scmp.lt.s32.totalorder %s162, 1023
      %s164 = scalar_select %p163, %s162, 1023
      %s165 = smul.addr %s164, 4
      %s166 = scalar_lea.vmem %s0, %s165
      %s167 = smul.u32 256, %s14
      %s168 = smul.u32 256, %s14
      %p169 = scmp.lt.s32.totalorder %s168, 1023
      %s170 = scalar_select %p169, %s168, 1023
      %s171 = smul.addr %s170, 4
      %s172 = scalar_lea.vmem %s3, %s171
      %s173 = smul.u32 256, %s14
      %v175 = vld [vmem:[%s166] sm:$0xf]
      %v176 = vld [vmem:[%s166 + $0x4] sm:$0xf]
      %v177 = vld [vmem:[%s166 + $0x8] sm:$0xf]
      %v178 = vld [vmem:[%s166 + $0xc] sm:$0xf]
      %v179 = vld [vmem:[%s166 + $0x10] sm:$0xf]
      %v180 = vld [vmem:[%s166 + $0x14] sm:$0xf]
      %v181 = vld [vmem:[%s166 + $0x18] sm:$0xf]
      %v182 = vld [vmem:[%s166 + $0x1c] sm:$0xf]
      %v183 = vld [vmem:[%s166 + $0x20] sm:$0xf]
      %v184 = vld [vmem:[%s166 + $0x24] sm:$0xf]
      %v185 = vld [vmem:[%s166 + $0x28] sm:$0xf]
      %v186 = vld [vmem:[%s166 + $0x2c] sm:$0xf]
      %v187 = vld [vmem:[%s166 + $0x30] sm:$0xf]
      %v188 = vld [vmem:[%s166 + $0x34] sm:$0xf]
      %v189 = vld [vmem:[%s166 + $0x38] sm:$0xf]
      %v190 = vld [vmem:[%s166 + $0x3c] sm:$0xf]
      %v191 = vld [vmem:[%s166 + $0x40] sm:$0xf]
      %v192 = vld [vmem:[%s166 + $0x44] sm:$0xf]
      %v193 = vld [vmem:[%s166 + $0x48] sm:$0xf]
      %v194 = vld [vmem:[%s166 + $0x4c] sm:$0xf]
      %v195 = vld [vmem:[%s166 + $0x50] sm:$0xf]
      %v196 = vld [vmem:[%s166 + $0x54] sm:$0xf]
      %v197 = vld [vmem:[%s166 + $0x58] sm:$0xf]
      %v198 = vld [vmem:[%s166 + $0x5c] sm:$0xf]
      %v199 = vld [vmem:[%s166 + $0x60] sm:$0xf]
      %v200 = vld [vmem:[%s166 + $0x64] sm:$0xf]
      %v201 = vld [vmem:[%s166 + $0x68] sm:$0xf]
      %v202 = vld [vmem:[%s166 + $0x6c] sm:$0xf]
      %v203 = vld [vmem:[%s166 + $0x70] sm:$0xf]
      %v204 = vld [vmem:[%s166 + $0x74] sm:$0xf]
      %v205 = vld [vmem:[%s166 + $0x78] sm:$0xf]
      %v206 = vld [vmem:[%s166 + $0x7c] sm:$0xf]
      %v207 = vld [vmem:[%s166 + $0x80] sm:$0xf]
      %v208 = vld [vmem:[%s166 + $0x84] sm:$0xf]
      %v209 = vld [vmem:[%s166 + $0x88] sm:$0xf]
      %v210 = vld [vmem:[%s166 + $0x8c] sm:$0xf]
      %v211 = vld [vmem:[%s166 + $0x90] sm:$0xf]
      %v212 = vld [vmem:[%s166 + $0x94] sm:$0xf]
      %v213 = vld [vmem:[%s166 + $0x98] sm:$0xf]
      %v214 = vld [vmem:[%s166 + $0x9c] sm:$0xf]
      %v215 = vld [vmem:[%s166 + $0xa0] sm:$0xf]
      %v216 = vld [vmem:[%s166 + $0xa4] sm:$0xf]
      %v217 = vld [vmem:[%s166 + $0xa8] sm:$0xf]
      %v218 = vld [vmem:[%s166 + $0xac] sm:$0xf]
      %v219 = vld [vmem:[%s166 + $0xb0] sm:$0xf]
      %v220 = vld [vmem:[%s166 + $0xb4] sm:$0xf]
      %v221 = vld [vmem:[%s166 + $0xb8] sm:$0xf]
      %v222 = vld [vmem:[%s166 + $0xbc] sm:$0xf]
      %v223 = vld [vmem:[%s166 + $0xc0] sm:$0xf]
      %v224 = vld [vmem:[%s166 + $0xc4] sm:$0xf]
      %v225 = vld [vmem:[%s166 + $0xc8] sm:$0xf]
      %v226 = vld [vmem:[%s166 + $0xcc] sm:$0xf]
      %v227 = vld [vmem:[%s166 + $0xd0] sm:$0xf]
      %v228 = vld [vmem:[%s166 + $0xd4] sm:$0xf]
      %v229 = vld [vmem:[%s166 + $0xd8] sm:$0xf]
      %v230 = vld [vmem:[%s166 + $0xdc] sm:$0xf]
      %v231 = vld [vmem:[%s166 + $0xe0] sm:$0xf]
      %v232 = vld [vmem:[%s166 + $0xe4] sm:$0xf]
      %v233 = vld [vmem:[%s166 + $0xe8] sm:$0xf]
      %v234 = vld [vmem:[%s166 + $0xec] sm:$0xf]
      %v235 = vld [vmem:[%s166 + $0xf0] sm:$0xf]
      %v236 = vld [vmem:[%s166 + $0xf4] sm:$0xf]
      %v237 = vld [vmem:[%s166 + $0xf8] sm:$0xf]
      %v238 = vld [vmem:[%s166 + $0xfc] sm:$0xf]
      %v239 = vld [vmem:[%s166 + $0x100] sm:$0xf]
      %v240 = vld [vmem:[%s166 + $0x104] sm:$0xf]
      %v241 = vld [vmem:[%s166 + $0x108] sm:$0xf]
      %v242 = vld [vmem:[%s166 + $0x10c] sm:$0xf]
      %v243 = vld [vmem:[%s166 + $0x110] sm:$0xf]
      %v244 = vld [vmem:[%s166 + $0x114] sm:$0xf]
      %v245 = vld [vmem:[%s166 + $0x118] sm:$0xf]
      %v246 = vld [vmem:[%s166 + $0x11c] sm:$0xf]
      %v247 = vld [vmem:[%s166 + $0x120] sm:$0xf]
      %v248 = vld [vmem:[%s166 + $0x124] sm:$0xf]
      %v249 = vld [vmem:[%s166 + $0x128] sm:$0xf]
      %v250 = vld [vmem:[%s166 + $0x12c] sm:$0xf]
      %v251 = vld [vmem:[%s166 + $0x130] sm:$0xf]
      %v252 = vld [vmem:[%s166 + $0x134] sm:$0xf]
      %v253 = vld [vmem:[%s166 + $0x138] sm:$0xf]
      %v254 = vld [vmem:[%s166 + $0x13c] sm:$0xf]
      %v255 = vld [vmem:[%s166 + $0x140] sm:$0xf]
      %v256 = vld [vmem:[%s166 + $0x144] sm:$0xf]
      %v257 = vld [vmem:[%s166 + $0x148] sm:$0xf]
      %v258 = vld [vmem:[%s166 + $0x14c] sm:$0xf]
      %v259 = vld [vmem:[%s166 + $0x150] sm:$0xf]
      %v260 = vld [vmem:[%s166 + $0x154] sm:$0xf]
      %v261 = vld [vmem:[%s166 + $0x158] sm:$0xf]
      %v262 = vld [vmem:[%s166 + $0x15c] sm:$0xf]
      %v263 = vld [vmem:[%s166 + $0x160] sm:$0xf]
      %v264 = vld [vmem:[%s166 + $0x164] sm:$0xf]
      %v265 = vld [vmem:[%s166 + $0x168] sm:$0xf]
      %v266 = vld [vmem:[%s166 + $0x16c] sm:$0xf]
      %v267 = vld [vmem:[%s166 + $0x170] sm:$0xf]
      %v268 = vld [vmem:[%s166 + $0x174] sm:$0xf]
      %v269 = vld [vmem:[%s166 + $0x178] sm:$0xf]
      %v270 = vld [vmem:[%s166 + $0x17c] sm:$0xf]
      %v271 = vld [vmem:[%s166 + $0x180] sm:$0xf]
      %v272 = vld [vmem:[%s166 + $0x184] sm:$0xf]
      %v273 = vld [vmem:[%s166 + $0x188] sm:$0xf]
      %v274 = vld [vmem:[%s166 + $0x18c] sm:$0xf]
      %v275 = vld [vmem:[%s166 + $0x190] sm:$0xf]
      %v276 = vld [vmem:[%s166 + $0x194] sm:$0xf]
      %v277 = vld [vmem:[%s166 + $0x198] sm:$0xf]
      %v278 = vld [vmem:[%s166 + $0x19c] sm:$0xf]
      %v279 = vld [vmem:[%s166 + $0x1a0] sm:$0xf]
      %v280 = vld [vmem:[%s166 + $0x1a4] sm:$0xf]
      %v281 = vld [vmem:[%s166 + $0x1a8] sm:$0xf]
      %v282 = vld [vmem:[%s166 + $0x1ac] sm:$0xf]
      %v283 = vld [vmem:[%s166 + $0x1b0] sm:$0xf]
      %v284 = vld [vmem:[%s166 + $0x1b4] sm:$0xf]
      %v285 = vld [vmem:[%s166 + $0x1b8] sm:$0xf]
      %v286 = vld [vmem:[%s166 + $0x1bc] sm:$0xf]
      %v287 = vld [vmem:[%s166 + $0x1c0] sm:$0xf]
      %v288 = vld [vmem:[%s166 + $0x1c4] sm:$0xf]
      %v289 = vld [vmem:[%s166 + $0x1c8] sm:$0xf]
      %v290 = vld [vmem:[%s166 + $0x1cc] sm:$0xf]
      %v291 = vld [vmem:[%s166 + $0x1d0] sm:$0xf]
      %v292 = vld [vmem:[%s166 + $0x1d4] sm:$0xf]
      %v293 = vld [vmem:[%s166 + $0x1d8] sm:$0xf]
      %v294 = vld [vmem:[%s166 + $0x1dc] sm:$0xf]
      %v295 = vld [vmem:[%s166 + $0x1e0] sm:$0xf]
      %v296 = vld [vmem:[%s166 + $0x1e4] sm:$0xf]
      %v297 = vld [vmem:[%s166 + $0x1e8] sm:$0xf]
      %v298 = vld [vmem:[%s166 + $0x1ec] sm:$0xf]
      %v299 = vld [vmem:[%s166 + $0x1f0] sm:$0xf]
      %v300 = vld [vmem:[%s166 + $0x1f4] sm:$0xf]
      %v301 = vld [vmem:[%s166 + $0x1f8] sm:$0xf]
      %v302 = vld [vmem:[%s166 + $0x1fc] sm:$0xf]
      %v303 = vld [vmem:[%s166 + $0x200] sm:$0xf]
      %v304 = vld [vmem:[%s166 + $0x204] sm:$0xf]
      %v305 = vld [vmem:[%s166 + $0x208] sm:$0xf]
      %v306 = vld [vmem:[%s166 + $0x20c] sm:$0xf]
      %v307 = vld [vmem:[%s166 + $0x210] sm:$0xf]
      %v308 = vld [vmem:[%s166 + $0x214] sm:$0xf]
      %v309 = vld [vmem:[%s166 + $0x218] sm:$0xf]
      %v310 = vld [vmem:[%s166 + $0x21c] sm:$0xf]
      %v311 = vld [vmem:[%s166 + $0x220] sm:$0xf]
      %v312 = vld [vmem:[%s166 + $0x224] sm:$0xf]
      %v313 = vld [vmem:[%s166 + $0x228] sm:$0xf]
      %v314 = vld [vmem:[%s166 + $0x22c] sm:$0xf]
      %v315 = vld [vmem:[%s166 + $0x230] sm:$0xf]
      %v316 = vld [vmem:[%s166 + $0x234] sm:$0xf]
      %v317 = vld [vmem:[%s166 + $0x238] sm:$0xf]
      %v318 = vld [vmem:[%s166 + $0x23c] sm:$0xf]
      %v319 = vld [vmem:[%s166 + $0x240] sm:$0xf]
      %v320 = vld [vmem:[%s166 + $0x244] sm:$0xf]
      %v321 = vld [vmem:[%s166 + $0x248] sm:$0xf]
      %v322 = vld [vmem:[%s166 + $0x24c] sm:$0xf]
      %v323 = vld [vmem:[%s166 + $0x250] sm:$0xf]
      %v324 = vld [vmem:[%s166 + $0x254] sm:$0xf]
      %v325 = vld [vmem:[%s166 + $0x258] sm:$0xf]
      %v326 = vld [vmem:[%s166 + $0x25c] sm:$0xf]
      %v327 = vld [vmem:[%s166 + $0x260] sm:$0xf]
      %v328 = vld [vmem:[%s166 + $0x264] sm:$0xf]
      %v329 = vld [vmem:[%s166 + $0x268] sm:$0xf]
      %v330 = vld [vmem:[%s166 + $0x26c] sm:$0xf]
      %v331 = vld [vmem:[%s166 + $0x270] sm:$0xf]
      %v332 = vld [vmem:[%s166 + $0x274] sm:$0xf]
      %v333 = vld [vmem:[%s166 + $0x278] sm:$0xf]
      %v334 = vld [vmem:[%s166 + $0x27c] sm:$0xf]
      %v335 = vld [vmem:[%s166 + $0x280] sm:$0xf]
      %v336 = vld [vmem:[%s166 + $0x284] sm:$0xf]
      %v337 = vld [vmem:[%s166 + $0x288] sm:$0xf]
      %v338 = vld [vmem:[%s166 + $0x28c] sm:$0xf]
      %v339 = vld [vmem:[%s166 + $0x290] sm:$0xf]
      %v340 = vld [vmem:[%s166 + $0x294] sm:$0xf]
      %v341 = vld [vmem:[%s166 + $0x298] sm:$0xf]
      %v342 = vld [vmem:[%s166 + $0x29c] sm:$0xf]
      %v343 = vld [vmem:[%s166 + $0x2a0] sm:$0xf]
      %v344 = vld [vmem:[%s166 + $0x2a4] sm:$0xf]
      %v345 = vld [vmem:[%s166 + $0x2a8] sm:$0xf]
      %v346 = vld [vmem:[%s166 + $0x2ac] sm:$0xf]
      %v347 = vld [vmem:[%s166 + $0x2b0] sm:$0xf]
      %v348 = vld [vmem:[%s166 + $0x2b4] sm:$0xf]
      %v349 = vld [vmem:[%s166 + $0x2b8] sm:$0xf]
      %v350 = vld [vmem:[%s166 + $0x2bc] sm:$0xf]
      %v351 = vld [vmem:[%s166 + $0x2c0] sm:$0xf]
      %v352 = vld [vmem:[%s166 + $0x2c4] sm:$0xf]
      %v353 = vld [vmem:[%s166 + $0x2c8] sm:$0xf]
      %v354 = vld [vmem:[%s166 + $0x2cc] sm:$0xf]
      %v355 = vld [vmem:[%s166 + $0x2d0] sm:$0xf]
      %v356 = vld [vmem:[%s166 + $0x2d4] sm:$0xf]
      %v357 = vld [vmem:[%s166 + $0x2d8] sm:$0xf]
      %v358 = vld [vmem:[%s166 + $0x2dc] sm:$0xf]
      %v359 = vld [vmem:[%s166 + $0x2e0] sm:$0xf]
      %v360 = vld [vmem:[%s166 + $0x2e4] sm:$0xf]
      %v361 = vld [vmem:[%s166 + $0x2e8] sm:$0xf]
      %v362 = vld [vmem:[%s166 + $0x2ec] sm:$0xf]
      %v363 = vld [vmem:[%s166 + $0x2f0] sm:$0xf]
      %v364 = vld [vmem:[%s166 + $0x2f4] sm:$0xf]
      %v365 = vld [vmem:[%s166 + $0x2f8] sm:$0xf]
      %v366 = vld [vmem:[%s166 + $0x2fc] sm:$0xf]
      %v367 = vld [vmem:[%s166 + $0x300] sm:$0xf]
      %v368 = vld [vmem:[%s166 + $0x304] sm:$0xf]
      %v369 = vld [vmem:[%s166 + $0x308] sm:$0xf]
      %v370 = vld [vmem:[%s166 + $0x30c] sm:$0xf]
      %v371 = vld [vmem:[%s166 + $0x310] sm:$0xf]
      %v372 = vld [vmem:[%s166 + $0x314] sm:$0xf]
      %v373 = vld [vmem:[%s166 + $0x318] sm:$0xf]
      %v374 = vld [vmem:[%s166 + $0x31c] sm:$0xf]
      %v375 = vld [vmem:[%s166 + $0x320] sm:$0xf]
      %v376 = vld [vmem:[%s166 + $0x324] sm:$0xf]
      %v377 = vld [vmem:[%s166 + $0x328] sm:$0xf]
      %v378 = vld [vmem:[%s166 + $0x32c] sm:$0xf]
      %v379 = vld [vmem:[%s166 + $0x330] sm:$0xf]
      %v380 = vld [vmem:[%s166 + $0x334] sm:$0xf]
      %v381 = vld [vmem:[%s166 + $0x338] sm:$0xf]
      %v382 = vld [vmem:[%s166 + $0x33c] sm:$0xf]
      %v383 = vld [vmem:[%s166 + $0x340] sm:$0xf]
      %v384 = vld [vmem:[%s166 + $0x344] sm:$0xf]
      %v385 = vld [vmem:[%s166 + $0x348] sm:$0xf]
      %v386 = vld [vmem:[%s166 + $0x34c] sm:$0xf]
      %v387 = vld [vmem:[%s166 + $0x350] sm:$0xf]
      %v388 = vld [vmem:[%s166 + $0x354] sm:$0xf]
      %v389 = vld [vmem:[%s166 + $0x358] sm:$0xf]
      %v390 = vld [vmem:[%s166 + $0x35c] sm:$0xf]
      %v391 = vld [vmem:[%s166 + $0x360] sm:$0xf]
      %v392 = vld [vmem:[%s166 + $0x364] sm:$0xf]
      %v393 = vld [vmem:[%s166 + $0x368] sm:$0xf]
      %v394 = vld [vmem:[%s166 + $0x36c] sm:$0xf]
      %v395 = vld [vmem:[%s166 + $0x370] sm:$0xf]
      %v396 = vld [vmem:[%s166 + $0x374] sm:$0xf]
      %v397 = vld [vmem:[%s166 + $0x378] sm:$0xf]
      %v398 = vld [vmem:[%s166 + $0x37c] sm:$0xf]
      %v399 = vld [vmem:[%s166 + $0x380] sm:$0xf]
      %v400 = vld [vmem:[%s166 + $0x384] sm:$0xf]
      %v401 = vld [vmem:[%s166 + $0x388] sm:$0xf]
      %v402 = vld [vmem:[%s166 + $0x38c] sm:$0xf]
      %v403 = vld [vmem:[%s166 + $0x390] sm:$0xf]
      %v404 = vld [vmem:[%s166 + $0x394] sm:$0xf]
      %v405 = vld [vmem:[%s166 + $0x398] sm:$0xf]
      %v406 = vld [vmem:[%s166 + $0x39c] sm:$0xf]
      %v407 = vld [vmem:[%s166 + $0x3a0] sm:$0xf]
      %v408 = vld [vmem:[%s166 + $0x3a4] sm:$0xf]
      %v409 = vld [vmem:[%s166 + $0x3a8] sm:$0xf]
      %v410 = vld [vmem:[%s166 + $0x3ac] sm:$0xf]
      %v411 = vld [vmem:[%s166 + $0x3b0] sm:$0xf]
      %v412 = vld [vmem:[%s166 + $0x3b4] sm:$0xf]
      %v413 = vld [vmem:[%s166 + $0x3b8] sm:$0xf]
      %v414 = vld [vmem:[%s166 + $0x3bc] sm:$0xf]
      %v415 = vld [vmem:[%s166 + $0x3c0] sm:$0xf]
      %v416 = vld [vmem:[%s166 + $0x3c4] sm:$0xf]
      %v417 = vld [vmem:[%s166 + $0x3c8] sm:$0xf]
      %v418 = vld [vmem:[%s166 + $0x3cc] sm:$0xf]
      %v419 = vld [vmem:[%s166 + $0x3d0] sm:$0xf]
      %v420 = vld [vmem:[%s166 + $0x3d4] sm:$0xf]
      %v421 = vld [vmem:[%s166 + $0x3d8] sm:$0xf]
      %v422 = vld [vmem:[%s166 + $0x3dc] sm:$0xf]
      %v423 = vld [vmem:[%s166 + $0x3e0] sm:$0xf]
      %v424 = vld [vmem:[%s166 + $0x3e4] sm:$0xf]
      %v425 = vld [vmem:[%s166 + $0x3e8] sm:$0xf]
      %v426 = vld [vmem:[%s166 + $0x3ec] sm:$0xf]
      %v427 = vld [vmem:[%s166 + $0x3f0] sm:$0xf]
      %v428 = vld [vmem:[%s166 + $0x3f4] sm:$0xf]
      %v429 = vld [vmem:[%s166 + $0x3f8] sm:$0xf]
      %v430 = vld [vmem:[%s166 + $0x3fc] sm:$0xf]
      %v431 = vld [vmem:[%s1] sm:$0xf]
      %v432 = vld [vmem:[%s1 + $0x4] sm:$0xf]
      %v433 = vld [vmem:[%s1 + $0x8] sm:$0xf]
      %v434 = vld [vmem:[%s1 + $0xc] sm:$0x3]
      %v435 = vld [vmem:[%s2] sm:$0x1]
      %v437 = vperm.slane %v435, 0
      %v695 = vunpack.c.l.b16 %v175
      %v696 = vunpack.c.l.b16 %v176
      %v697 = vunpack.c.l.b16 %v177
      %v698 = vunpack.c.l.b16 %v178
      %v699 = vunpack.c.l.b16 %v179
      %v700 = vunpack.c.l.b16 %v180
      %v701 = vunpack.c.l.b16 %v181
      %v702 = vunpack.c.l.b16 %v182
      %v703 = vunpack.c.l.b16 %v183
      %v704 = vunpack.c.l.b16 %v184
      %v705 = vunpack.c.l.b16 %v185
      %v706 = vunpack.c.l.b16 %v186
      %v707 = vunpack.c.l.b16 %v187
      %v708 = vunpack.c.l.b16 %v188
      %v709 = vunpack.c.l.b16 %v189
      %v710 = vunpack.c.l.b16 %v190
      %v711 = vunpack.c.l.b16 %v191
      %v712 = vunpack.c.l.b16 %v192
      %v713 = vunpack.c.l.b16 %v193
      %v714 = vunpack.c.l.b16 %v194
      %v715 = vunpack.c.l.b16 %v195
      %v716 = vunpack.c.l.b16 %v196
      %v717 = vunpack.c.l.b16 %v197
      %v718 = vunpack.c.l.b16 %v198
      %v719 = vunpack.c.l.b16 %v199
      %v720 = vunpack.c.l.b16 %v200
      %v721 = vunpack.c.l.b16 %v201
      %v722 = vunpack.c.l.b16 %v202
      %v723 = vunpack.c.l.b16 %v203
      %v724 = vunpack.c.l.b16 %v204
      %v725 = vunpack.c.l.b16 %v205
      %v726 = vunpack.c.l.b16 %v206
      %v727 = vunpack.c.l.b16 %v207
      %v728 = vunpack.c.l.b16 %v208
      %v729 = vunpack.c.l.b16 %v209
      %v730 = vunpack.c.l.b16 %v210
      %v731 = vunpack.c.l.b16 %v211
      %v732 = vunpack.c.l.b16 %v212
      %v733 = vunpack.c.l.b16 %v213
      %v734 = vunpack.c.l.b16 %v214
      %v735 = vunpack.c.l.b16 %v215
      %v736 = vunpack.c.l.b16 %v216
      %v737 = vunpack.c.l.b16 %v217
      %v738 = vunpack.c.l.b16 %v218
      %v739 = vunpack.c.l.b16 %v219
      %v740 = vunpack.c.l.b16 %v220
      %v741 = vunpack.c.l.b16 %v221
      %v742 = vunpack.c.l.b16 %v222
      %v743 = vunpack.c.l.b16 %v223
      %v744 = vunpack.c.l.b16 %v224
      %v745 = vunpack.c.l.b16 %v225
      %v746 = vunpack.c.l.b16 %v226
      %v747 = vunpack.c.l.b16 %v227
      %v748 = vunpack.c.l.b16 %v228
      %v749 = vunpack.c.l.b16 %v229
      %v750 = vunpack.c.l.b16 %v230
      %v751 = vunpack.c.l.b16 %v231
      %v752 = vunpack.c.l.b16 %v232
      %v753 = vunpack.c.l.b16 %v233
      %v754 = vunpack.c.l.b16 %v234
      %v755 = vunpack.c.l.b16 %v235
      %v756 = vunpack.c.l.b16 %v236
      %v757 = vunpack.c.l.b16 %v237
      %v758 = vunpack.c.l.b16 %v238
      %v759 = vunpack.c.l.b16 %v239
      %v760 = vunpack.c.l.b16 %v240
      %v761 = vunpack.c.l.b16 %v241
      %v762 = vunpack.c.l.b16 %v242
      %v763 = vunpack.c.l.b16 %v243
      %v764 = vunpack.c.l.b16 %v244
      %v765 = vunpack.c.l.b16 %v245
      %v766 = vunpack.c.l.b16 %v246
      %v767 = vunpack.c.l.b16 %v247
      %v768 = vunpack.c.l.b16 %v248
      %v769 = vunpack.c.l.b16 %v249
      %v770 = vunpack.c.l.b16 %v250
      %v771 = vunpack.c.l.b16 %v251
      %v772 = vunpack.c.l.b16 %v252
      %v773 = vunpack.c.l.b16 %v253
      %v774 = vunpack.c.l.b16 %v254
      %v775 = vunpack.c.l.b16 %v255
      %v776 = vunpack.c.l.b16 %v256
      %v777 = vunpack.c.l.b16 %v257
      %v778 = vunpack.c.l.b16 %v258
      %v779 = vunpack.c.l.b16 %v259
      %v780 = vunpack.c.l.b16 %v260
      %v781 = vunpack.c.l.b16 %v261
      %v782 = vunpack.c.l.b16 %v262
      %v783 = vunpack.c.l.b16 %v263
      %v784 = vunpack.c.l.b16 %v264
      %v785 = vunpack.c.l.b16 %v265
      %v786 = vunpack.c.l.b16 %v266
      %v787 = vunpack.c.l.b16 %v267
      %v788 = vunpack.c.l.b16 %v268
      %v789 = vunpack.c.l.b16 %v269
      %v790 = vunpack.c.l.b16 %v270
      %v791 = vunpack.c.l.b16 %v271
      %v792 = vunpack.c.l.b16 %v272
      %v793 = vunpack.c.l.b16 %v273
      %v794 = vunpack.c.l.b16 %v274
      %v795 = vunpack.c.l.b16 %v275
      %v796 = vunpack.c.l.b16 %v276
      %v797 = vunpack.c.l.b16 %v277
      %v798 = vunpack.c.l.b16 %v278
      %v799 = vunpack.c.l.b16 %v279
      %v800 = vunpack.c.l.b16 %v280
      %v801 = vunpack.c.l.b16 %v281
      %v802 = vunpack.c.l.b16 %v282
      %v803 = vunpack.c.l.b16 %v283
      %v804 = vunpack.c.l.b16 %v284
      %v805 = vunpack.c.l.b16 %v285
      %v806 = vunpack.c.l.b16 %v286
      %v807 = vunpack.c.l.b16 %v287
      %v808 = vunpack.c.l.b16 %v288
      %v809 = vunpack.c.l.b16 %v289
      %v810 = vunpack.c.l.b16 %v290
      %v811 = vunpack.c.l.b16 %v291
      %v812 = vunpack.c.l.b16 %v292
      %v813 = vunpack.c.l.b16 %v293
      %v814 = vunpack.c.l.b16 %v294
      %v815 = vunpack.c.l.b16 %v295
      %v816 = vunpack.c.l.b16 %v296
      %v817 = vunpack.c.l.b16 %v297
      %v818 = vunpack.c.l.b16 %v298
      %v819 = vunpack.c.l.b16 %v299
      %v820 = vunpack.c.l.b16 %v300
      %v821 = vunpack.c.l.b16 %v301
      %v822 = vunpack.c.l.b16 %v302
      %v823 = vunpack.c.l.b16 %v303
      %v824 = vunpack.c.l.b16 %v304
      %v825 = vunpack.c.l.b16 %v305
      %v826 = vunpack.c.l.b16 %v306
      %v827 = vunpack.c.l.b16 %v307
      %v828 = vunpack.c.l.b16 %v308
      %v829 = vunpack.c.l.b16 %v309
      %v830 = vunpack.c.l.b16 %v310
      %v831 = vunpack.c.l.b16 %v311
      %v832 = vunpack.c.l.b16 %v312
      %v833 = vunpack.c.l.b16 %v313
      %v834 = vunpack.c.l.b16 %v314
      %v835 = vunpack.c.l.b16 %v315
      %v836 = vunpack.c.l.b16 %v316
      %v837 = vunpack.c.l.b16 %v317
      %v838 = vunpack.c.l.b16 %v318
      %v839 = vunpack.c.l.b16 %v319
      %v840 = vunpack.c.l.b16 %v320
      %v841 = vunpack.c.l.b16 %v321
      %v842 = vunpack.c.l.b16 %v322
      %v843 = vunpack.c.l.b16 %v323
      %v844 = vunpack.c.l.b16 %v324
      %v845 = vunpack.c.l.b16 %v325
      %v846 = vunpack.c.l.b16 %v326
      %v847 = vunpack.c.l.b16 %v327
      %v848 = vunpack.c.l.b16 %v328
      %v849 = vunpack.c.l.b16 %v329
      %v850 = vunpack.c.l.b16 %v330
      %v851 = vunpack.c.l.b16 %v331
      %v852 = vunpack.c.l.b16 %v332
      %v853 = vunpack.c.l.b16 %v333
      %v854 = vunpack.c.l.b16 %v334
      %v855 = vunpack.c.l.b16 %v335
      %v856 = vunpack.c.l.b16 %v336
      %v857 = vunpack.c.l.b16 %v337
      %v858 = vunpack.c.l.b16 %v338
      %v859 = vunpack.c.l.b16 %v339
      %v860 = vunpack.c.l.b16 %v340
      %v861 = vunpack.c.l.b16 %v341
      %v862 = vunpack.c.l.b16 %v342
      %v863 = vunpack.c.l.b16 %v343
      %v864 = vunpack.c.l.b16 %v344
      %v865 = vunpack.c.l.b16 %v345
      %v866 = vunpack.c.l.b16 %v346
      %v867 = vunpack.c.l.b16 %v347
      %v868 = vunpack.c.l.b16 %v348
      %v869 = vunpack.c.l.b16 %v349
      %v870 = vunpack.c.l.b16 %v350
      %v871 = vunpack.c.l.b16 %v351
      %v872 = vunpack.c.l.b16 %v352
      %v873 = vunpack.c.l.b16 %v353
      %v874 = vunpack.c.l.b16 %v354
      %v875 = vunpack.c.l.b16 %v355
      %v876 = vunpack.c.l.b16 %v356
      %v877 = vunpack.c.l.b16 %v357
      %v878 = vunpack.c.l.b16 %v358
      %v879 = vunpack.c.l.b16 %v359
      %v880 = vunpack.c.l.b16 %v360
      %v881 = vunpack.c.l.b16 %v361
      %v882 = vunpack.c.l.b16 %v362
      %v883 = vunpack.c.l.b16 %v363
      %v884 = vunpack.c.l.b16 %v364
      %v885 = vunpack.c.l.b16 %v365
      %v886 = vunpack.c.l.b16 %v366
      %v887 = vunpack.c.l.b16 %v367
      %v888 = vunpack.c.l.b16 %v368
      %v889 = vunpack.c.l.b16 %v369
      %v890 = vunpack.c.l.b16 %v370
      %v891 = vunpack.c.l.b16 %v371
      %v892 = vunpack.c.l.b16 %v372
      %v893 = vunpack.c.l.b16 %v373
      %v894 = vunpack.c.l.b16 %v374
      %v895 = vunpack.c.l.b16 %v375
      %v896 = vunpack.c.l.b16 %v376
      %v897 = vunpack.c.l.b16 %v377
      %v898 = vunpack.c.l.b16 %v378
      %v899 = vunpack.c.l.b16 %v379
      %v900 = vunpack.c.l.b16 %v380
      %v901 = vunpack.c.l.b16 %v381
      %v902 = vunpack.c.l.b16 %v382
      %v903 = vunpack.c.l.b16 %v383
      %v904 = vunpack.c.l.b16 %v384
      %v905 = vunpack.c.l.b16 %v385
      %v906 = vunpack.c.l.b16 %v386
      %v907 = vunpack.c.l.b16 %v387
      %v908 = vunpack.c.l.b16 %v388
      %v909 = vunpack.c.l.b16 %v389
      %v910 = vunpack.c.l.b16 %v390
      %v911 = vunpack.c.l.b16 %v391
      %v912 = vunpack.c.l.b16 %v392
      %v913 = vunpack.c.l.b16 %v393
      %v914 = vunpack.c.l.b16 %v394
      %v915 = vunpack.c.l.b16 %v395
      %v916 = vunpack.c.l.b16 %v396
      %v917 = vunpack.c.l.b16 %v397
      %v918 = vunpack.c.l.b16 %v398
      %v919 = vunpack.c.l.b16 %v399
      %v920 = vunpack.c.l.b16 %v400
      %v921 = vunpack.c.l.b16 %v401
      %v922 = vunpack.c.l.b16 %v402
      %v923 = vunpack.c.l.b16 %v403
      %v924 = vunpack.c.l.b16 %v404
      %v925 = vunpack.c.l.b16 %v405
      %v926 = vunpack.c.l.b16 %v406
      %v927 = vunpack.c.l.b16 %v407
      %v928 = vunpack.c.l.b16 %v408
      %v929 = vunpack.c.l.b16 %v409
      %v930 = vunpack.c.l.b16 %v410
      %v931 = vunpack.c.l.b16 %v411
      %v932 = vunpack.c.l.b16 %v412
      %v933 = vunpack.c.l.b16 %v413
      %v934 = vunpack.c.l.b16 %v414
      %v935 = vunpack.c.l.b16 %v415
      %v936 = vunpack.c.l.b16 %v416
      %v937 = vunpack.c.l.b16 %v417
      %v938 = vunpack.c.l.b16 %v418
      %v939 = vunpack.c.l.b16 %v419
      %v940 = vunpack.c.l.b16 %v420
      %v941 = vunpack.c.l.b16 %v421
      %v942 = vunpack.c.l.b16 %v422
      %v943 = vunpack.c.l.b16 %v423
      %v944 = vunpack.c.l.b16 %v424
      %v945 = vunpack.c.l.b16 %v425
      %v946 = vunpack.c.l.b16 %v426
      %v947 = vunpack.c.l.b16 %v427
      %v948 = vunpack.c.l.b16 %v428
      %v949 = vunpack.c.l.b16 %v429
      %v950 = vunpack.c.l.b16 %v430
      %v951 = vpack.c.b16 %v696, %v695
      %v952 = vpack.c.b16 %v698, %v697
      %v953 = vpack.c.b16 %v700, %v699
      %v954 = vpack.c.b16 %v702, %v701
      %v955 = vpack.c.b16 %v704, %v703
      %v956 = vpack.c.b16 %v706, %v705
      %v957 = vpack.c.b16 %v708, %v707
      %v958 = vpack.c.b16 %v710, %v709
      %v959 = vpack.c.b16 %v712, %v711
      %v960 = vpack.c.b16 %v714, %v713
      %v961 = vpack.c.b16 %v716, %v715
      %v962 = vpack.c.b16 %v718, %v717
      %v963 = vpack.c.b16 %v720, %v719
      %v964 = vpack.c.b16 %v722, %v721
      %v965 = vpack.c.b16 %v724, %v723
      %v966 = vpack.c.b16 %v726, %v725
      %v967 = vpack.c.b16 %v728, %v727
      %v968 = vpack.c.b16 %v730, %v729
      %v969 = vpack.c.b16 %v732, %v731
      %v970 = vpack.c.b16 %v734, %v733
      %v971 = vpack.c.b16 %v736, %v735
      %v972 = vpack.c.b16 %v738, %v737
      %v973 = vpack.c.b16 %v740, %v739
      %v974 = vpack.c.b16 %v742, %v741
      %v975 = vpack.c.b16 %v744, %v743
      %v976 = vpack.c.b16 %v746, %v745
      %v977 = vpack.c.b16 %v748, %v747
      %v978 = vpack.c.b16 %v750, %v749
      %v979 = vpack.c.b16 %v752, %v751
      %v980 = vpack.c.b16 %v754, %v753
      %v981 = vpack.c.b16 %v756, %v755
      %v982 = vpack.c.b16 %v758, %v757
      %v983 = vpack.c.b16 %v760, %v759
      %v984 = vpack.c.b16 %v762, %v761
      %v985 = vpack.c.b16 %v764, %v763
      %v986 = vpack.c.b16 %v766, %v765
      %v987 = vpack.c.b16 %v768, %v767
      %v988 = vpack.c.b16 %v770, %v769
      %v989 = vpack.c.b16 %v772, %v771
      %v990 = vpack.c.b16 %v774, %v773
      %v991 = vpack.c.b16 %v776, %v775
      %v992 = vpack.c.b16 %v778, %v777
      %v993 = vpack.c.b16 %v780, %v779
      %v994 = vpack.c.b16 %v782, %v781
      %v995 = vpack.c.b16 %v784, %v783
      %v996 = vpack.c.b16 %v786, %v785
      %v997 = vpack.c.b16 %v788, %v787
      %v998 = vpack.c.b16 %v790, %v789
      %v999 = vpack.c.b16 %v792, %v791
      %v1000 = vpack.c.b16 %v794, %v793
      %v1001 = vpack.c.b16 %v796, %v795
      %v1002 = vpack.c.b16 %v798, %v797
      %v1003 = vpack.c.b16 %v800, %v799
      %v1004 = vpack.c.b16 %v802, %v801
      %v1005 = vpack.c.b16 %v804, %v803
      %v1006 = vpack.c.b16 %v806, %v805
      %v1007 = vpack.c.b16 %v808, %v807
      %v1008 = vpack.c.b16 %v810, %v809
      %v1009 = vpack.c.b16 %v812, %v811
      %v1010 = vpack.c.b16 %v814, %v813
      %v1011 = vpack.c.b16 %v816, %v815
      %v1012 = vpack.c.b16 %v818, %v817
      %v1013 = vpack.c.b16 %v820, %v819
      %v1014 = vpack.c.b16 %v822, %v821
      %v1015 = vpack.c.b16 %v824, %v823
      %v1016 = vpack.c.b16 %v826, %v825
      %v1017 = vpack.c.b16 %v828, %v827
      %v1018 = vpack.c.b16 %v830, %v829
      %v1019 = vpack.c.b16 %v832, %v831
      %v1020 = vpack.c.b16 %v834, %v833
      %v1021 = vpack.c.b16 %v836, %v835
      %v1022 = vpack.c.b16 %v838, %v837
      %v1023 = vpack.c.b16 %v840, %v839
      %v1024 = vpack.c.b16 %v842, %v841
      %v1025 = vpack.c.b16 %v844, %v843
      %v1026 = vpack.c.b16 %v846, %v845
      %v1027 = vpack.c.b16 %v848, %v847
      %v1028 = vpack.c.b16 %v850, %v849
      %v1029 = vpack.c.b16 %v852, %v851
      %v1030 = vpack.c.b16 %v854, %v853
      %v1031 = vpack.c.b16 %v856, %v855
      %v1032 = vpack.c.b16 %v858, %v857
      %v1033 = vpack.c.b16 %v860, %v859
      %v1034 = vpack.c.b16 %v862, %v861
      %v1035 = vpack.c.b16 %v864, %v863
      %v1036 = vpack.c.b16 %v866, %v865
      %v1037 = vpack.c.b16 %v868, %v867
      %v1038 = vpack.c.b16 %v870, %v869
      %v1039 = vpack.c.b16 %v872, %v871
      %v1040 = vpack.c.b16 %v874, %v873
      %v1041 = vpack.c.b16 %v876, %v875
      %v1042 = vpack.c.b16 %v878, %v877
      %v1043 = vpack.c.b16 %v880, %v879
      %v1044 = vpack.c.b16 %v882, %v881
      %v1045 = vpack.c.b16 %v884, %v883
      %v1046 = vpack.c.b16 %v886, %v885
      %v1047 = vpack.c.b16 %v888, %v887
      %v1048 = vpack.c.b16 %v890, %v889
      %v1049 = vpack.c.b16 %v892, %v891
      %v1050 = vpack.c.b16 %v894, %v893
      %v1051 = vpack.c.b16 %v896, %v895
      %v1052 = vpack.c.b16 %v898, %v897
      %v1053 = vpack.c.b16 %v900, %v899
      %v1054 = vpack.c.b16 %v902, %v901
      %v1055 = vpack.c.b16 %v904, %v903
      %v1056 = vpack.c.b16 %v906, %v905
      %v1057 = vpack.c.b16 %v908, %v907
      %v1058 = vpack.c.b16 %v910, %v909
      %v1059 = vpack.c.b16 %v912, %v911
      %v1060 = vpack.c.b16 %v914, %v913
      %v1061 = vpack.c.b16 %v916, %v915
      %v1062 = vpack.c.b16 %v918, %v917
      %v1063 = vpack.c.b16 %v920, %v919
      %v1064 = vpack.c.b16 %v922, %v921
      %v1065 = vpack.c.b16 %v924, %v923
      %v1066 = vpack.c.b16 %v926, %v925
      %v1067 = vpack.c.b16 %v928, %v927
      %v1068 = vpack.c.b16 %v930, %v929
      %v1069 = vpack.c.b16 %v932, %v931
      %v1070 = vpack.c.b16 %v934, %v933
      %v1071 = vpack.c.b16 %v936, %v935
      %v1072 = vpack.c.b16 %v938, %v937
      %v1073 = vpack.c.b16 %v940, %v939
      %v1074 = vpack.c.b16 %v942, %v941
      %v1075 = vpack.c.b16 %v944, %v943
      %v1076 = vpack.c.b16 %v946, %v945
      %v1077 = vpack.c.b16 %v948, %v947
      %v1078 = vpack.c.b16 %v950, %v949
      %v1083 = vunpack.c.l.b16 %v431
      %v1084 = vunpack.c.l.b16 %v432
      %v1085 = vunpack.c.l.b16 %v433
      %v1086 = vunpack.c.l.b16 %v434
      %v1087 = vpack.c.b16 %v1084, %v1083
      %v1088 = vpack.c.b16 %v1086, %v1085
      %vm1090 = vcmask 220160
      %v1092 = vsel %vm1090, %v951, 0
      %v1095 = vsel %vm1090, %v952, 0
      %v1098 = vsel %vm1090, %v953, 0
      %v1101 = vsel %vm1090, %v954, 0
      %v1104 = vsel %vm1090, %v955, 0
      %v1107 = vsel %vm1090, %v956, 0
      %v1110 = vsel %vm1090, %v957, 0
      %v1113 = vsel %vm1090, %v958, 0
      %v1116 = vsel %vm1090, %v959, 0
      %v1119 = vsel %vm1090, %v960, 0
      %v1122 = vsel %vm1090, %v961, 0
      %v1125 = vsel %vm1090, %v962, 0
      %v1128 = vsel %vm1090, %v963, 0
      %v1131 = vsel %vm1090, %v964, 0
      %v1134 = vsel %vm1090, %v965, 0
      %v1137 = vsel %vm1090, %v966, 0
      %v1140 = vsel %vm1090, %v967, 0
      %v1143 = vsel %vm1090, %v968, 0
      %v1146 = vsel %vm1090, %v969, 0
      %v1149 = vsel %vm1090, %v970, 0
      %v1152 = vsel %vm1090, %v971, 0
      %v1155 = vsel %vm1090, %v972, 0
      %v1158 = vsel %vm1090, %v973, 0
      %v1161 = vsel %vm1090, %v974, 0
      %v1164 = vsel %vm1090, %v975, 0
      %v1167 = vsel %vm1090, %v976, 0
      %v1170 = vsel %vm1090, %v977, 0
      %v1173 = vsel %vm1090, %v978, 0
      %v1176 = vsel %vm1090, %v979, 0
      %v1179 = vsel %vm1090, %v980, 0
      %v1182 = vsel %vm1090, %v981, 0
      %v1185 = vsel %vm1090, %v982, 0
      %v1188 = vsel %vm1090, %v983, 0
      %v1191 = vsel %vm1090, %v984, 0
      %v1194 = vsel %vm1090, %v985, 0
      %v1197 = vsel %vm1090, %v986, 0
      %v1200 = vsel %vm1090, %v987, 0
      %v1203 = vsel %vm1090, %v988, 0
      %v1206 = vsel %vm1090, %v989, 0
      %v1209 = vsel %vm1090, %v990, 0
      %v1212 = vsel %vm1090, %v991, 0
      %v1215 = vsel %vm1090, %v992, 0
      %v1218 = vsel %vm1090, %v993, 0
      %v1221 = vsel %vm1090, %v994, 0
      %v1224 = vsel %vm1090, %v995, 0
      %v1227 = vsel %vm1090, %v996, 0
      %v1230 = vsel %vm1090, %v997, 0
      %v1233 = vsel %vm1090, %v998, 0
      %v1236 = vsel %vm1090, %v999, 0
      %v1239 = vsel %vm1090, %v1000, 0
      %v1242 = vsel %vm1090, %v1001, 0
      %v1245 = vsel %vm1090, %v1002, 0
      %v1248 = vsel %vm1090, %v1003, 0
      %v1251 = vsel %vm1090, %v1004, 0
      %v1254 = vsel %vm1090, %v1005, 0
      %v1257 = vsel %vm1090, %v1006, 0
      %v1260 = vsel %vm1090, %v1007, 0
      %v1263 = vsel %vm1090, %v1008, 0
      %v1266 = vsel %vm1090, %v1009, 0
      %v1269 = vsel %vm1090, %v1010, 0
      %v1272 = vsel %vm1090, %v1011, 0
      %v1275 = vsel %vm1090, %v1012, 0
      %v1278 = vsel %vm1090, %v1013, 0
      %v1281 = vsel %vm1090, %v1014, 0
      %v1284 = vsel %vm1090, %v1015, 0
      %v1287 = vsel %vm1090, %v1016, 0
      %v1290 = vsel %vm1090, %v1017, 0
      %v1293 = vsel %vm1090, %v1018, 0
      %v1296 = vsel %vm1090, %v1019, 0
      %v1299 = vsel %vm1090, %v1020, 0
      %v1302 = vsel %vm1090, %v1021, 0
      %v1305 = vsel %vm1090, %v1022, 0
      %v1308 = vsel %vm1090, %v1023, 0
      %v1311 = vsel %vm1090, %v1024, 0
      %v1314 = vsel %vm1090, %v1025, 0
      %v1317 = vsel %vm1090, %v1026, 0
      %v1320 = vsel %vm1090, %v1027, 0
      %v1323 = vsel %vm1090, %v1028, 0
      %v1326 = vsel %vm1090, %v1029, 0
      %v1329 = vsel %vm1090, %v1030, 0
      %v1332 = vsel %vm1090, %v1031, 0
      %v1335 = vsel %vm1090, %v1032, 0
      %v1338 = vsel %vm1090, %v1033, 0
      %v1341 = vsel %vm1090, %v1034, 0
      %v1344 = vsel %vm1090, %v1035, 0
      %v1347 = vsel %vm1090, %v1036, 0
      %v1350 = vsel %vm1090, %v1037, 0
      %v1353 = vsel %vm1090, %v1038, 0
      %v1356 = vsel %vm1090, %v1039, 0
      %v1359 = vsel %vm1090, %v1040, 0
      %v1362 = vsel %vm1090, %v1041, 0
      %v1365 = vsel %vm1090, %v1042, 0
      %v1368 = vsel %vm1090, %v1043, 0
      %v1371 = vsel %vm1090, %v1044, 0
      %v1374 = vsel %vm1090, %v1045, 0
      %v1377 = vsel %vm1090, %v1046, 0
      %v1380 = vsel %vm1090, %v1047, 0
      %v1383 = vsel %vm1090, %v1048, 0
      %v1386 = vsel %vm1090, %v1049, 0
      %v1389 = vsel %vm1090, %v1050, 0
      %v1392 = vsel %vm1090, %v1051, 0
      %v1395 = vsel %vm1090, %v1052, 0
      %v1398 = vsel %vm1090, %v1053, 0
      %v1401 = vsel %vm1090, %v1054, 0
      %v1404 = vsel %vm1090, %v1055, 0
      %v1407 = vsel %vm1090, %v1056, 0
      %v1410 = vsel %vm1090, %v1057, 0
      %v1413 = vsel %vm1090, %v1058, 0
      %v1416 = vsel %vm1090, %v1059, 0
      %v1419 = vsel %vm1090, %v1060, 0
      %v1422 = vsel %vm1090, %v1061, 0
      %v1425 = vsel %vm1090, %v1062, 0
      %v1428 = vsel %vm1090, %v1063, 0
      %v1431 = vsel %vm1090, %v1064, 0
      %v1434 = vsel %vm1090, %v1065, 0
      %v1437 = vsel %vm1090, %v1066, 0
      %v1440 = vsel %vm1090, %v1067, 0
      %v1443 = vsel %vm1090, %v1068, 0
      %v1446 = vsel %vm1090, %v1069, 0
      %v1449 = vsel %vm1090, %v1070, 0
      %v1452 = vsel %vm1090, %v1071, 0
      %v1455 = vsel %vm1090, %v1072, 0
      %v1458 = vsel %vm1090, %v1073, 0
      %v1461 = vsel %vm1090, %v1074, 0
      %v1464 = vsel %vm1090, %v1075, 0
      %v1467 = vsel %vm1090, %v1076, 0
      %v1470 = vsel %vm1090, %v1077, 0
      %v1473 = vsel %vm1090, %v1078, 0
      %vm1475 = vcmask 1044480
      %vm1476 = vcmask 1045504
      %v1477 = vsel %vm1475, 4294967295, 65535
      %v1478 = vsel %vm1476, %v1477, 0
      %v1480 = vand.u32 %v1088, %v1478
      %1482 = vmatpush.bf16.msra.mxu0 0
      %1483 = vmatpush.bf16.msra.mxu0 0
      %1484 = vmatpush.bf16.msra.mxu0 0
      %1485 = vmatpush.bf16.msra.mxu0 0
      %1486 = vmatpush.bf16.msra.mxu0 0
      %1487 = vmatpush.bf16.msra.mxu0 0
      %1488 = vmatpush.bf16.msra.mxu0 %v1480
      %1489 = vmatpush.bf16.msra.mxu0 %v1087
      %1490 = vmatmul.bf16.gmra.mxu0 %v1092
      %v1491 = vpop.f32.mrf.mxu0
      %v1492 = vadd.f32 %v437, %v1491
      %v1493 = vpop.f32.mrf.mxu0
      %v1494 = vadd.f32 %v437, %v1493
      %1495 = vmatmul.bf16.gmra.mxu0 %v1095
      %v1496 = vpop.f32.mrf.mxu0
      %v1497 = vadd.f32 %v437, %v1496
      %v1498 = vpop.f32.mrf.mxu0
      %v1499 = vadd.f32 %v437, %v1498
      %1500 = vmatmul.bf16.gmra.mxu0 %v1098
      %v1501 = vpop.f32.mrf.mxu0
      %v1502 = vadd.f32 %v437, %v1501
      %v1503 = vpop.f32.mrf.mxu0
      %v1504 = vadd.f32 %v437, %v1503
      %1505 = vmatmul.bf16.gmra.mxu0 %v1101
      %v1506 = vpop.f32.mrf.mxu0
      %v1507 = vadd.f32 %v437, %v1506
      %v1508 = vpop.f32.mrf.mxu0
      %v1509 = vadd.f32 %v437, %v1508
      %1510 = vmatmul.bf16.gmra.mxu0 %v1104
      %v1511 = vpop.f32.mrf.mxu0
      %v1512 = vadd.f32 %v437, %v1511
      %v1513 = vpop.f32.mrf.mxu0
      %v1514 = vadd.f32 %v437, %v1513
      %1515 = vmatmul.bf16.gmra.mxu0 %v1107
      %v1516 = vpop.f32.mrf.mxu0
      %v1517 = vadd.f32 %v437, %v1516
      %v1518 = vpop.f32.mrf.mxu0
      %v1519 = vadd.f32 %v437, %v1518
      %1520 = vmatmul.bf16.gmra.mxu0 %v1110
      %v1521 = vpop.f32.mrf.mxu0
      %v1522 = vadd.f32 %v437, %v1521
      %v1523 = vpop.f32.mrf.mxu0
      %v1524 = vadd.f32 %v437, %v1523
      %1525 = vmatmul.bf16.gmra.mxu0 %v1113
      %v1526 = vpop.f32.mrf.mxu0
      %v1527 = vadd.f32 %v437, %v1526
      %v1528 = vpop.f32.mrf.mxu0
      %v1529 = vadd.f32 %v437, %v1528
      %1530 = vmatmul.bf16.gmra.mxu0 %v1116
      %v1531 = vpop.f32.mrf.mxu0
      %v1532 = vadd.f32 %v437, %v1531
      %v1533 = vpop.f32.mrf.mxu0
      %v1534 = vadd.f32 %v437, %v1533
      %1535 = vmatmul.bf16.gmra.mxu0 %v1119
      %v1536 = vpop.f32.mrf.mxu0
      %v1537 = vadd.f32 %v437, %v1536
      %v1538 = vpop.f32.mrf.mxu0
      %v1539 = vadd.f32 %v437, %v1538
      %1540 = vmatmul.bf16.gmra.mxu0 %v1122
      %v1541 = vpop.f32.mrf.mxu0
      %v1542 = vadd.f32 %v437, %v1541
      %v1543 = vpop.f32.mrf.mxu0
      %v1544 = vadd.f32 %v437, %v1543
      %1545 = vmatmul.bf16.gmra.mxu0 %v1125
      %v1546 = vpop.f32.mrf.mxu0
      %v1547 = vadd.f32 %v437, %v1546
      %v1548 = vpop.f32.mrf.mxu0
      %v1549 = vadd.f32 %v437, %v1548
      %1550 = vmatmul.bf16.gmra.mxu0 %v1128
      %v1551 = vpop.f32.mrf.mxu0
      %v1552 = vadd.f32 %v437, %v1551
      %v1553 = vpop.f32.mrf.mxu0
      %v1554 = vadd.f32 %v437, %v1553
      %1555 = vmatmul.bf16.gmra.mxu0 %v1131
      %v1556 = vpop.f32.mrf.mxu0
      %v1557 = vadd.f32 %v437, %v1556
      %v1558 = vpop.f32.mrf.mxu0
      %v1559 = vadd.f32 %v437, %v1558
      %1560 = vmatmul.bf16.gmra.mxu0 %v1134
      %v1561 = vpop.f32.mrf.mxu0
      %v1562 = vadd.f32 %v437, %v1561
      %v1563 = vpop.f32.mrf.mxu0
      %v1564 = vadd.f32 %v437, %v1563
      %1565 = vmatmul.bf16.gmra.mxu0 %v1137
      %v1566 = vpop.f32.mrf.mxu0
      %v1567 = vadd.f32 %v437, %v1566
      %v1568 = vpop.f32.mrf.mxu0
      %v1569 = vadd.f32 %v437, %v1568
      %1570 = vmatmul.bf16.gmra.mxu0 %v1140
      %v1571 = vpop.f32.mrf.mxu0
      %v1572 = vadd.f32 %v437, %v1571
      %v1573 = vpop.f32.mrf.mxu0
      %v1574 = vadd.f32 %v437, %v1573
      %1575 = vmatmul.bf16.gmra.mxu0 %v1143
      %v1576 = vpop.f32.mrf.mxu0
      %v1577 = vadd.f32 %v437, %v1576
      %v1578 = vpop.f32.mrf.mxu0
      %v1579 = vadd.f32 %v437, %v1578
      %1580 = vmatmul.bf16.gmra.mxu0 %v1146
      %v1581 = vpop.f32.mrf.mxu0
      %v1582 = vadd.f32 %v437, %v1581
      %v1583 = vpop.f32.mrf.mxu0
      %v1584 = vadd.f32 %v437, %v1583
      %1585 = vmatmul.bf16.gmra.mxu0 %v1149
      %v1586 = vpop.f32.mrf.mxu0
      %v1587 = vadd.f32 %v437, %v1586
      %v1588 = vpop.f32.mrf.mxu0
      %v1589 = vadd.f32 %v437, %v1588
      %1590 = vmatmul.bf16.gmra.mxu0 %v1152
      %v1591 = vpop.f32.mrf.mxu0
      %v1592 = vadd.f32 %v437, %v1591
      %v1593 = vpop.f32.mrf.mxu0
      %v1594 = vadd.f32 %v437, %v1593
      %1595 = vmatmul.bf16.gmra.mxu0 %v1155
      %v1596 = vpop.f32.mrf.mxu0
      %v1597 = vadd.f32 %v437, %v1596
      %v1598 = vpop.f32.mrf.mxu0
      %v1599 = vadd.f32 %v437, %v1598
      %1600 = vmatmul.bf16.gmra.mxu0 %v1158
      %v1601 = vpop.f32.mrf.mxu0
      %v1602 = vadd.f32 %v437, %v1601
      %v1603 = vpop.f32.mrf.mxu0
      %v1604 = vadd.f32 %v437, %v1603
      %1605 = vmatmul.bf16.gmra.mxu0 %v1161
      %v1606 = vpop.f32.mrf.mxu0
      %v1607 = vadd.f32 %v437, %v1606
      %v1608 = vpop.f32.mrf.mxu0
      %v1609 = vadd.f32 %v437, %v1608
      %1610 = vmatmul.bf16.gmra.mxu0 %v1164
      %v1611 = vpop.f32.mrf.mxu0
      %v1612 = vadd.f32 %v437, %v1611
      %v1613 = vpop.f32.mrf.mxu0
      %v1614 = vadd.f32 %v437, %v1613
      %1615 = vmatmul.bf16.gmra.mxu0 %v1167
      %v1616 = vpop.f32.mrf.mxu0
      %v1617 = vadd.f32 %v437, %v1616
      %v1618 = vpop.f32.mrf.mxu0
      %v1619 = vadd.f32 %v437, %v1618
      %1620 = vmatmul.bf16.gmra.mxu0 %v1170
      %v1621 = vpop.f32.mrf.mxu0
      %v1622 = vadd.f32 %v437, %v1621
      %v1623 = vpop.f32.mrf.mxu0
      %v1624 = vadd.f32 %v437, %v1623
      %1625 = vmatmul.bf16.gmra.mxu0 %v1173
      %v1626 = vpop.f32.mrf.mxu0
      %v1627 = vadd.f32 %v437, %v1626
      %v1628 = vpop.f32.mrf.mxu0
      %v1629 = vadd.f32 %v437, %v1628
      %1630 = vmatmul.bf16.gmra.mxu0 %v1176
      %v1631 = vpop.f32.mrf.mxu0
      %v1632 = vadd.f32 %v437, %v1631
      %v1633 = vpop.f32.mrf.mxu0
      %v1634 = vadd.f32 %v437, %v1633
      %1635 = vmatmul.bf16.gmra.mxu0 %v1179
      %v1636 = vpop.f32.mrf.mxu0
      %v1637 = vadd.f32 %v437, %v1636
      %v1638 = vpop.f32.mrf.mxu0
      %v1639 = vadd.f32 %v437, %v1638
      %1640 = vmatmul.bf16.gmra.mxu0 %v1182
      %v1641 = vpop.f32.mrf.mxu0
      %v1642 = vadd.f32 %v437, %v1641
      %v1643 = vpop.f32.mrf.mxu0
      %v1644 = vadd.f32 %v437, %v1643
      %1645 = vmatmul.bf16.gmra.mxu0 %v1185
      %v1646 = vpop.f32.mrf.mxu0
      %v1647 = vadd.f32 %v437, %v1646
      %v1648 = vpop.f32.mrf.mxu0
      %v1649 = vadd.f32 %v437, %v1648
      %1650 = vmatmul.bf16.gmra.mxu0 %v1188
      %v1651 = vpop.f32.mrf.mxu0
      %v1652 = vadd.f32 %v437, %v1651
      %v1653 = vpop.f32.mrf.mxu0
      %v1654 = vadd.f32 %v437, %v1653
      %1655 = vmatmul.bf16.gmra.mxu0 %v1191
      %v1656 = vpop.f32.mrf.mxu0
      %v1657 = vadd.f32 %v437, %v1656
      %v1658 = vpop.f32.mrf.mxu0
      %v1659 = vadd.f32 %v437, %v1658
      %1660 = vmatmul.bf16.gmra.mxu0 %v1194
      %v1661 = vpop.f32.mrf.mxu0
      %v1662 = vadd.f32 %v437, %v1661
      %v1663 = vpop.f32.mrf.mxu0
      %v1664 = vadd.f32 %v437, %v1663
      %1665 = vmatmul.bf16.gmra.mxu0 %v1197
      %v1666 = vpop.f32.mrf.mxu0
      %v1667 = vadd.f32 %v437, %v1666
      %v1668 = vpop.f32.mrf.mxu0
      %v1669 = vadd.f32 %v437, %v1668
      %1670 = vmatmul.bf16.gmra.mxu0 %v1200
      %v1671 = vpop.f32.mrf.mxu0
      %v1672 = vadd.f32 %v437, %v1671
      %v1673 = vpop.f32.mrf.mxu0
      %v1674 = vadd.f32 %v437, %v1673
      %1675 = vmatmul.bf16.gmra.mxu0 %v1203
      %v1676 = vpop.f32.mrf.mxu0
      %v1677 = vadd.f32 %v437, %v1676
      %v1678 = vpop.f32.mrf.mxu0
      %v1679 = vadd.f32 %v437, %v1678
      %1680 = vmatmul.bf16.gmra.mxu0 %v1206
      %v1681 = vpop.f32.mrf.mxu0
      %v1682 = vadd.f32 %v437, %v1681
      %v1683 = vpop.f32.mrf.mxu0
      %v1684 = vadd.f32 %v437, %v1683
      %1685 = vmatmul.bf16.gmra.mxu0 %v1209
      %v1686 = vpop.f32.mrf.mxu0
      %v1687 = vadd.f32 %v437, %v1686
      %v1688 = vpop.f32.mrf.mxu0
      %v1689 = vadd.f32 %v437, %v1688
      %1690 = vmatmul.bf16.gmra.mxu0 %v1212
      %v1691 = vpop.f32.mrf.mxu0
      %v1692 = vadd.f32 %v437, %v1691
      %v1693 = vpop.f32.mrf.mxu0
      %v1694 = vadd.f32 %v437, %v1693
      %1695 = vmatmul.bf16.gmra.mxu0 %v1215
      %v1696 = vpop.f32.mrf.mxu0
      %v1697 = vadd.f32 %v437, %v1696
      %v1698 = vpop.f32.mrf.mxu0
      %v1699 = vadd.f32 %v437, %v1698
      %1700 = vmatmul.bf16.gmra.mxu0 %v1218
      %v1701 = vpop.f32.mrf.mxu0
      %v1702 = vadd.f32 %v437, %v1701
      %v1703 = vpop.f32.mrf.mxu0
      %v1704 = vadd.f32 %v437, %v1703
      %1705 = vmatmul.bf16.gmra.mxu0 %v1221
      %v1706 = vpop.f32.mrf.mxu0
      %v1707 = vadd.f32 %v437, %v1706
      %v1708 = vpop.f32.mrf.mxu0
      %v1709 = vadd.f32 %v437, %v1708
      %1710 = vmatmul.bf16.gmra.mxu0 %v1224
      %v1711 = vpop.f32.mrf.mxu0
      %v1712 = vadd.f32 %v437, %v1711
      %v1713 = vpop.f32.mrf.mxu0
      %v1714 = vadd.f32 %v437, %v1713
      %1715 = vmatmul.bf16.gmra.mxu0 %v1227
      %v1716 = vpop.f32.mrf.mxu0
      %v1717 = vadd.f32 %v437, %v1716
      %v1718 = vpop.f32.mrf.mxu0
      %v1719 = vadd.f32 %v437, %v1718
      %1720 = vmatmul.bf16.gmra.mxu0 %v1230
      %v1721 = vpop.f32.mrf.mxu0
      %v1722 = vadd.f32 %v437, %v1721
      %v1723 = vpop.f32.mrf.mxu0
      %v1724 = vadd.f32 %v437, %v1723
      %1725 = vmatmul.bf16.gmra.mxu0 %v1233
      %v1726 = vpop.f32.mrf.mxu0
      %v1727 = vadd.f32 %v437, %v1726
      %v1728 = vpop.f32.mrf.mxu0
      %v1729 = vadd.f32 %v437, %v1728
      %1730 = vmatmul.bf16.gmra.mxu0 %v1236
      %v1731 = vpop.f32.mrf.mxu0
      %v1732 = vadd.f32 %v437, %v1731
      %v1733 = vpop.f32.mrf.mxu0
      %v1734 = vadd.f32 %v437, %v1733
      %1735 = vmatmul.bf16.gmra.mxu0 %v1239
      %v1736 = vpop.f32.mrf.mxu0
      %v1737 = vadd.f32 %v437, %v1736
      %v1738 = vpop.f32.mrf.mxu0
      %v1739 = vadd.f32 %v437, %v1738
      %1740 = vmatmul.bf16.gmra.mxu0 %v1242
      %v1741 = vpop.f32.mrf.mxu0
      %v1742 = vadd.f32 %v437, %v1741
      %v1743 = vpop.f32.mrf.mxu0
      %v1744 = vadd.f32 %v437, %v1743
      %1745 = vmatmul.bf16.gmra.mxu0 %v1245
      %v1746 = vpop.f32.mrf.mxu0
      %v1747 = vadd.f32 %v437, %v1746
      %v1748 = vpop.f32.mrf.mxu0
      %v1749 = vadd.f32 %v437, %v1748
      %1750 = vmatmul.bf16.gmra.mxu0 %v1248
      %v1751 = vpop.f32.mrf.mxu0
      %v1752 = vadd.f32 %v437, %v1751
      %v1753 = vpop.f32.mrf.mxu0
      %v1754 = vadd.f32 %v437, %v1753
      %1755 = vmatmul.bf16.gmra.mxu0 %v1251
      %v1756 = vpop.f32.mrf.mxu0
      %v1757 = vadd.f32 %v437, %v1756
      %v1758 = vpop.f32.mrf.mxu0
      %v1759 = vadd.f32 %v437, %v1758
      %1760 = vmatmul.bf16.gmra.mxu0 %v1254
      %v1761 = vpop.f32.mrf.mxu0
      %v1762 = vadd.f32 %v437, %v1761
      %v1763 = vpop.f32.mrf.mxu0
      %v1764 = vadd.f32 %v437, %v1763
      %1765 = vmatmul.bf16.gmra.mxu0 %v1257
      %v1766 = vpop.f32.mrf.mxu0
      %v1767 = vadd.f32 %v437, %v1766
      %v1768 = vpop.f32.mrf.mxu0
      %v1769 = vadd.f32 %v437, %v1768
      %1770 = vmatmul.bf16.gmra.mxu0 %v1260
      %v1771 = vpop.f32.mrf.mxu0
      %v1772 = vadd.f32 %v437, %v1771
      %v1773 = vpop.f32.mrf.mxu0
      %v1774 = vadd.f32 %v437, %v1773
      %1775 = vmatmul.bf16.gmra.mxu0 %v1263
      %v1776 = vpop.f32.mrf.mxu0
      %v1777 = vadd.f32 %v437, %v1776
      %v1778 = vpop.f32.mrf.mxu0
      %v1779 = vadd.f32 %v437, %v1778
      %1780 = vmatmul.bf16.gmra.mxu0 %v1266
      %v1781 = vpop.f32.mrf.mxu0
      %v1782 = vadd.f32 %v437, %v1781
      %v1783 = vpop.f32.mrf.mxu0
      %v1784 = vadd.f32 %v437, %v1783
      %1785 = vmatmul.bf16.gmra.mxu0 %v1269
      %v1786 = vpop.f32.mrf.mxu0
      %v1787 = vadd.f32 %v437, %v1786
      %v1788 = vpop.f32.mrf.mxu0
      %v1789 = vadd.f32 %v437, %v1788
      %1790 = vmatmul.bf16.gmra.mxu0 %v1272
      %v1791 = vpop.f32.mrf.mxu0
      %v1792 = vadd.f32 %v437, %v1791
      %v1793 = vpop.f32.mrf.mxu0
      %v1794 = vadd.f32 %v437, %v1793
      %1795 = vmatmul.bf16.gmra.mxu0 %v1275
      %v1796 = vpop.f32.mrf.mxu0
      %v1797 = vadd.f32 %v437, %v1796
      %v1798 = vpop.f32.mrf.mxu0
      %v1799 = vadd.f32 %v437, %v1798
      %1800 = vmatmul.bf16.gmra.mxu0 %v1278
      %v1801 = vpop.f32.mrf.mxu0
      %v1802 = vadd.f32 %v437, %v1801
      %v1803 = vpop.f32.mrf.mxu0
      %v1804 = vadd.f32 %v437, %v1803
      %1805 = vmatmul.bf16.gmra.mxu0 %v1281
      %v1806 = vpop.f32.mrf.mxu0
      %v1807 = vadd.f32 %v437, %v1806
      %v1808 = vpop.f32.mrf.mxu0
      %v1809 = vadd.f32 %v437, %v1808
      %1810 = vmatmul.bf16.gmra.mxu0 %v1284
      %v1811 = vpop.f32.mrf.mxu0
      %v1812 = vadd.f32 %v437, %v1811
      %v1813 = vpop.f32.mrf.mxu0
      %v1814 = vadd.f32 %v437, %v1813
      %1815 = vmatmul.bf16.gmra.mxu0 %v1287
      %v1816 = vpop.f32.mrf.mxu0
      %v1817 = vadd.f32 %v437, %v1816
      %v1818 = vpop.f32.mrf.mxu0
      %v1819 = vadd.f32 %v437, %v1818
      %1820 = vmatmul.bf16.gmra.mxu0 %v1290
      %v1821 = vpop.f32.mrf.mxu0
      %v1822 = vadd.f32 %v437, %v1821
      %v1823 = vpop.f32.mrf.mxu0
      %v1824 = vadd.f32 %v437, %v1823
      %1825 = vmatmul.bf16.gmra.mxu0 %v1293
      %v1826 = vpop.f32.mrf.mxu0
      %v1827 = vadd.f32 %v437, %v1826
      %v1828 = vpop.f32.mrf.mxu0
      %v1829 = vadd.f32 %v437, %v1828
      %1830 = vmatmul.bf16.gmra.mxu0 %v1296
      %v1831 = vpop.f32.mrf.mxu0
      %v1832 = vadd.f32 %v437, %v1831
      %v1833 = vpop.f32.mrf.mxu0
      %v1834 = vadd.f32 %v437, %v1833
      %1835 = vmatmul.bf16.gmra.mxu0 %v1299
      %v1836 = vpop.f32.mrf.mxu0
      %v1837 = vadd.f32 %v437, %v1836
      %v1838 = vpop.f32.mrf.mxu0
      %v1839 = vadd.f32 %v437, %v1838
      %1840 = vmatmul.bf16.gmra.mxu0 %v1302
      %v1841 = vpop.f32.mrf.mxu0
      %v1842 = vadd.f32 %v437, %v1841
      %v1843 = vpop.f32.mrf.mxu0
      %v1844 = vadd.f32 %v437, %v1843
      %1845 = vmatmul.bf16.gmra.mxu0 %v1305
      %v1846 = vpop.f32.mrf.mxu0
      %v1847 = vadd.f32 %v437, %v1846
      %v1848 = vpop.f32.mrf.mxu0
      %v1849 = vadd.f32 %v437, %v1848
      %1850 = vmatmul.bf16.gmra.mxu0 %v1308
      %v1851 = vpop.f32.mrf.mxu0
      %v1852 = vadd.f32 %v437, %v1851
      %v1853 = vpop.f32.mrf.mxu0
      %v1854 = vadd.f32 %v437, %v1853
      %1855 = vmatmul.bf16.gmra.mxu0 %v1311
      %v1856 = vpop.f32.mrf.mxu0
      %v1857 = vadd.f32 %v437, %v1856
      %v1858 = vpop.f32.mrf.mxu0
      %v1859 = vadd.f32 %v437, %v1858
      %1860 = vmatmul.bf16.gmra.mxu0 %v1314
      %v1861 = vpop.f32.mrf.mxu0
      %v1862 = vadd.f32 %v437, %v1861
      %v1863 = vpop.f32.mrf.mxu0
      %v1864 = vadd.f32 %v437, %v1863
      %1865 = vmatmul.bf16.gmra.mxu0 %v1317
      %v1866 = vpop.f32.mrf.mxu0
      %v1867 = vadd.f32 %v437, %v1866
      %v1868 = vpop.f32.mrf.mxu0
      %v1869 = vadd.f32 %v437, %v1868
      %1870 = vmatmul.bf16.gmra.mxu0 %v1320
      %v1871 = vpop.f32.mrf.mxu0
      %v1872 = vadd.f32 %v437, %v1871
      %v1873 = vpop.f32.mrf.mxu0
      %v1874 = vadd.f32 %v437, %v1873
      %1875 = vmatmul.bf16.gmra.mxu0 %v1323
      %v1876 = vpop.f32.mrf.mxu0
      %v1877 = vadd.f32 %v437, %v1876
      %v1878 = vpop.f32.mrf.mxu0
      %v1879 = vadd.f32 %v437, %v1878
      %1880 = vmatmul.bf16.gmra.mxu0 %v1326
      %v1881 = vpop.f32.mrf.mxu0
      %v1882 = vadd.f32 %v437, %v1881
      %v1883 = vpop.f32.mrf.mxu0
      %v1884 = vadd.f32 %v437, %v1883
      %1885 = vmatmul.bf16.gmra.mxu0 %v1329
      %v1886 = vpop.f32.mrf.mxu0
      %v1887 = vadd.f32 %v437, %v1886
      %v1888 = vpop.f32.mrf.mxu0
      %v1889 = vadd.f32 %v437, %v1888
      %1890 = vmatmul.bf16.gmra.mxu0 %v1332
      %v1891 = vpop.f32.mrf.mxu0
      %v1892 = vadd.f32 %v437, %v1891
      %v1893 = vpop.f32.mrf.mxu0
      %v1894 = vadd.f32 %v437, %v1893
      %1895 = vmatmul.bf16.gmra.mxu0 %v1335
      %v1896 = vpop.f32.mrf.mxu0
      %v1897 = vadd.f32 %v437, %v1896
      %v1898 = vpop.f32.mrf.mxu0
      %v1899 = vadd.f32 %v437, %v1898
      %1900 = vmatmul.bf16.gmra.mxu0 %v1338
      %v1901 = vpop.f32.mrf.mxu0
      %v1902 = vadd.f32 %v437, %v1901
      %v1903 = vpop.f32.mrf.mxu0
      %v1904 = vadd.f32 %v437, %v1903
      %1905 = vmatmul.bf16.gmra.mxu0 %v1341
      %v1906 = vpop.f32.mrf.mxu0
      %v1907 = vadd.f32 %v437, %v1906
      %v1908 = vpop.f32.mrf.mxu0
      %v1909 = vadd.f32 %v437, %v1908
      %1910 = vmatmul.bf16.gmra.mxu0 %v1344
      %v1911 = vpop.f32.mrf.mxu0
      %v1912 = vadd.f32 %v437, %v1911
      %v1913 = vpop.f32.mrf.mxu0
      %v1914 = vadd.f32 %v437, %v1913
      %1915 = vmatmul.bf16.gmra.mxu0 %v1347
      %v1916 = vpop.f32.mrf.mxu0
      %v1917 = vadd.f32 %v437, %v1916
      %v1918 = vpop.f32.mrf.mxu0
      %v1919 = vadd.f32 %v437, %v1918
      %1920 = vmatmul.bf16.gmra.mxu0 %v1350
      %v1921 = vpop.f32.mrf.mxu0
      %v1922 = vadd.f32 %v437, %v1921
      %v1923 = vpop.f32.mrf.mxu0
      %v1924 = vadd.f32 %v437, %v1923
      %1925 = vmatmul.bf16.gmra.mxu0 %v1353
      %v1926 = vpop.f32.mrf.mxu0
      %v1927 = vadd.f32 %v437, %v1926
      %v1928 = vpop.f32.mrf.mxu0
      %v1929 = vadd.f32 %v437, %v1928
      %1930 = vmatmul.bf16.gmra.mxu0 %v1356
      %v1931 = vpop.f32.mrf.mxu0
      %v1932 = vadd.f32 %v437, %v1931
      %v1933 = vpop.f32.mrf.mxu0
      %v1934 = vadd.f32 %v437, %v1933
      %1935 = vmatmul.bf16.gmra.mxu0 %v1359
      %v1936 = vpop.f32.mrf.mxu0
      %v1937 = vadd.f32 %v437, %v1936
      %v1938 = vpop.f32.mrf.mxu0
      %v1939 = vadd.f32 %v437, %v1938
      %1940 = vmatmul.bf16.gmra.mxu0 %v1362
      %v1941 = vpop.f32.mrf.mxu0
      %v1942 = vadd.f32 %v437, %v1941
      %v1943 = vpop.f32.mrf.mxu0
      %v1944 = vadd.f32 %v437, %v1943
      %1945 = vmatmul.bf16.gmra.mxu0 %v1365
      %v1946 = vpop.f32.mrf.mxu0
      %v1947 = vadd.f32 %v437, %v1946
      %v1948 = vpop.f32.mrf.mxu0
      %v1949 = vadd.f32 %v437, %v1948
      %1950 = vmatmul.bf16.gmra.mxu0 %v1368
      %v1951 = vpop.f32.mrf.mxu0
      %v1952 = vadd.f32 %v437, %v1951
      %v1953 = vpop.f32.mrf.mxu0
      %v1954 = vadd.f32 %v437, %v1953
      %1955 = vmatmul.bf16.gmra.mxu0 %v1371
      %v1956 = vpop.f32.mrf.mxu0
      %v1957 = vadd.f32 %v437, %v1956
      %v1958 = vpop.f32.mrf.mxu0
      %v1959 = vadd.f32 %v437, %v1958
      %1960 = vmatmul.bf16.gmra.mxu0 %v1374
      %v1961 = vpop.f32.mrf.mxu0
      %v1962 = vadd.f32 %v437, %v1961
      %v1963 = vpop.f32.mrf.mxu0
      %v1964 = vadd.f32 %v437, %v1963
      %1965 = vmatmul.bf16.gmra.mxu0 %v1377
      %v1966 = vpop.f32.mrf.mxu0
      %v1967 = vadd.f32 %v437, %v1966
      %v1968 = vpop.f32.mrf.mxu0
      %v1969 = vadd.f32 %v437, %v1968
      %1970 = vmatmul.bf16.gmra.mxu0 %v1380
      %v1971 = vpop.f32.mrf.mxu0
      %v1972 = vadd.f32 %v437, %v1971
      %v1973 = vpop.f32.mrf.mxu0
      %v1974 = vadd.f32 %v437, %v1973
      %1975 = vmatmul.bf16.gmra.mxu0 %v1383
      %v1976 = vpop.f32.mrf.mxu0
      %v1977 = vadd.f32 %v437, %v1976
      %v1978 = vpop.f32.mrf.mxu0
      %v1979 = vadd.f32 %v437, %v1978
      %1980 = vmatmul.bf16.gmra.mxu0 %v1386
      %v1981 = vpop.f32.mrf.mxu0
      %v1982 = vadd.f32 %v437, %v1981
      %v1983 = vpop.f32.mrf.mxu0
      %v1984 = vadd.f32 %v437, %v1983
      %1985 = vmatmul.bf16.gmra.mxu0 %v1389
      %v1986 = vpop.f32.mrf.mxu0
      %v1987 = vadd.f32 %v437, %v1986
      %v1988 = vpop.f32.mrf.mxu0
      %v1989 = vadd.f32 %v437, %v1988
      %1990 = vmatmul.bf16.gmra.mxu0 %v1392
      %v1991 = vpop.f32.mrf.mxu0
      %v1992 = vadd.f32 %v437, %v1991
      %v1993 = vpop.f32.mrf.mxu0
      %v1994 = vadd.f32 %v437, %v1993
      %1995 = vmatmul.bf16.gmra.mxu0 %v1395
      %v1996 = vpop.f32.mrf.mxu0
      %v1997 = vadd.f32 %v437, %v1996
      %v1998 = vpop.f32.mrf.mxu0
      %v1999 = vadd.f32 %v437, %v1998
      %2000 = vmatmul.bf16.gmra.mxu0 %v1398
      %v2001 = vpop.f32.mrf.mxu0
      %v2002 = vadd.f32 %v437, %v2001
      %v2003 = vpop.f32.mrf.mxu0
      %v2004 = vadd.f32 %v437, %v2003
      %2005 = vmatmul.bf16.gmra.mxu0 %v1401
      %v2006 = vpop.f32.mrf.mxu0
      %v2007 = vadd.f32 %v437, %v2006
      %v2008 = vpop.f32.mrf.mxu0
      %v2009 = vadd.f32 %v437, %v2008
      %2010 = vmatmul.bf16.gmra.mxu0 %v1404
      %v2011 = vpop.f32.mrf.mxu0
      %v2012 = vadd.f32 %v437, %v2011
      %v2013 = vpop.f32.mrf.mxu0
      %v2014 = vadd.f32 %v437, %v2013
      %2015 = vmatmul.bf16.gmra.mxu0 %v1407
      %v2016 = vpop.f32.mrf.mxu0
      %v2017 = vadd.f32 %v437, %v2016
      %v2018 = vpop.f32.mrf.mxu0
      %v2019 = vadd.f32 %v437, %v2018
      %2020 = vmatmul.bf16.gmra.mxu0 %v1410
      %v2021 = vpop.f32.mrf.mxu0
      %v2022 = vadd.f32 %v437, %v2021
      %v2023 = vpop.f32.mrf.mxu0
      %v2024 = vadd.f32 %v437, %v2023
      %2025 = vmatmul.bf16.gmra.mxu0 %v1413
      %v2026 = vpop.f32.mrf.mxu0
      %v2027 = vadd.f32 %v437, %v2026
      %v2028 = vpop.f32.mrf.mxu0
      %v2029 = vadd.f32 %v437, %v2028
      %2030 = vmatmul.bf16.gmra.mxu0 %v1416
      %v2031 = vpop.f32.mrf.mxu0
      %v2032 = vadd.f32 %v437, %v2031
      %v2033 = vpop.f32.mrf.mxu0
      %v2034 = vadd.f32 %v437, %v2033
      %2035 = vmatmul.bf16.gmra.mxu0 %v1419
      %v2036 = vpop.f32.mrf.mxu0
      %v2037 = vadd.f32 %v437, %v2036
      %v2038 = vpop.f32.mrf.mxu0
      %v2039 = vadd.f32 %v437, %v2038
      %2040 = vmatmul.bf16.gmra.mxu0 %v1422
      %v2041 = vpop.f32.mrf.mxu0
      %v2042 = vadd.f32 %v437, %v2041
      %v2043 = vpop.f32.mrf.mxu0
      %v2044 = vadd.f32 %v437, %v2043
      %2045 = vmatmul.bf16.gmra.mxu0 %v1425
      %v2046 = vpop.f32.mrf.mxu0
      %v2047 = vadd.f32 %v437, %v2046
      %v2048 = vpop.f32.mrf.mxu0
      %v2049 = vadd.f32 %v437, %v2048
      %2050 = vmatmul.bf16.gmra.mxu0 %v1428
      %v2051 = vpop.f32.mrf.mxu0
      %v2052 = vadd.f32 %v437, %v2051
      %v2053 = vpop.f32.mrf.mxu0
      %v2054 = vadd.f32 %v437, %v2053
      %2055 = vmatmul.bf16.gmra.mxu0 %v1431
      %v2056 = vpop.f32.mrf.mxu0
      %v2057 = vadd.f32 %v437, %v2056
      %v2058 = vpop.f32.mrf.mxu0
      %v2059 = vadd.f32 %v437, %v2058
      %2060 = vmatmul.bf16.gmra.mxu0 %v1434
      %v2061 = vpop.f32.mrf.mxu0
      %v2062 = vadd.f32 %v437, %v2061
      %v2063 = vpop.f32.mrf.mxu0
      %v2064 = vadd.f32 %v437, %v2063
      %2065 = vmatmul.bf16.gmra.mxu0 %v1437
      %v2066 = vpop.f32.mrf.mxu0
      %v2067 = vadd.f32 %v437, %v2066
      %v2068 = vpop.f32.mrf.mxu0
      %v2069 = vadd.f32 %v437, %v2068
      %2070 = vmatmul.bf16.gmra.mxu0 %v1440
      %v2071 = vpop.f32.mrf.mxu0
      %v2072 = vadd.f32 %v437, %v2071
      %v2073 = vpop.f32.mrf.mxu0
      %v2074 = vadd.f32 %v437, %v2073
      %2075 = vmatmul.bf16.gmra.mxu0 %v1443
      %v2076 = vpop.f32.mrf.mxu0
      %v2077 = vadd.f32 %v437, %v2076
      %v2078 = vpop.f32.mrf.mxu0
      %v2079 = vadd.f32 %v437, %v2078
      %2080 = vmatmul.bf16.gmra.mxu0 %v1446
      %v2081 = vpop.f32.mrf.mxu0
      %v2082 = vadd.f32 %v437, %v2081
      %v2083 = vpop.f32.mrf.mxu0
      %v2084 = vadd.f32 %v437, %v2083
      %2085 = vmatmul.bf16.gmra.mxu0 %v1449
      %v2086 = vpop.f32.mrf.mxu0
      %v2087 = vadd.f32 %v437, %v2086
      %v2088 = vpop.f32.mrf.mxu0
      %v2089 = vadd.f32 %v437, %v2088
      %2090 = vmatmul.bf16.gmra.mxu0 %v1452
      %v2091 = vpop.f32.mrf.mxu0
      %v2092 = vadd.f32 %v437, %v2091
      %v2093 = vpop.f32.mrf.mxu0
      %v2094 = vadd.f32 %v437, %v2093
      %2095 = vmatmul.bf16.gmra.mxu0 %v1455
      %v2096 = vpop.f32.mrf.mxu0
      %v2097 = vadd.f32 %v437, %v2096
      %v2098 = vpop.f32.mrf.mxu0
      %v2099 = vadd.f32 %v437, %v2098
      %2100 = vmatmul.bf16.gmra.mxu0 %v1458
      %v2101 = vpop.f32.mrf.mxu0
      %v2102 = vadd.f32 %v437, %v2101
      %v2103 = vpop.f32.mrf.mxu0
      %v2104 = vadd.f32 %v437, %v2103
      %2105 = vmatmul.bf16.gmra.mxu0 %v1461
      %v2106 = vpop.f32.mrf.mxu0
      %v2107 = vadd.f32 %v437, %v2106
      %v2108 = vpop.f32.mrf.mxu0
      %v2109 = vadd.f32 %v437, %v2108
      %2110 = vmatmul.bf16.gmra.mxu0 %v1464
      %v2111 = vpop.f32.mrf.mxu0
      %v2112 = vadd.f32 %v437, %v2111
      %v2113 = vpop.f32.mrf.mxu0
      %v2114 = vadd.f32 %v437, %v2113
      %2115 = vmatmul.bf16.gmra.mxu0 %v1467
      %v2116 = vpop.f32.mrf.mxu0
      %v2117 = vadd.f32 %v437, %v2116
      %v2118 = vpop.f32.mrf.mxu0
      %v2119 = vadd.f32 %v437, %v2118
      %2120 = vmatmul.bf16.gmra.mxu0 %v1470
      %v2121 = vpop.f32.mrf.mxu0
      %v2122 = vadd.f32 %v437, %v2121
      %v2123 = vpop.f32.mrf.mxu0
      %v2124 = vadd.f32 %v437, %v2123
      %2125 = vmatmul.bf16.gmra.mxu0 %v1473
      %v2126 = vpop.f32.mrf.mxu0
      %v2127 = vadd.f32 %v437, %v2126
      %v2128 = vpop.f32.mrf.mxu0
      %v2129 = vadd.f32 %v437, %v2128
      %2130 = vdwg.mxu0
      %v2131 = vmax.f32 %v1492, 0.0
      %v2132 = vmax.f32 %v1494, 0.0
      %v2133 = vmax.f32 %v1497, 0.0
      %v2134 = vmax.f32 %v1499, 0.0
      %v2135 = vmax.f32 %v1502, 0.0
      %v2136 = vmax.f32 %v1504, 0.0
      %v2137 = vmax.f32 %v1507, 0.0
      %v2138 = vmax.f32 %v1509, 0.0
      %v2139 = vmax.f32 %v1512, 0.0
      %v2140 = vmax.f32 %v1514, 0.0
      %v2141 = vmax.f32 %v1517, 0.0
      %v2142 = vmax.f32 %v1519, 0.0
      %v2143 = vmax.f32 %v1522, 0.0
      %v2144 = vmax.f32 %v1524, 0.0
      %v2145 = vmax.f32 %v1527, 0.0
      %v2146 = vmax.f32 %v1529, 0.0
      %v2147 = vmax.f32 %v1532, 0.0
      %v2148 = vmax.f32 %v1534, 0.0
      %v2149 = vmax.f32 %v1537, 0.0
      %v2150 = vmax.f32 %v1539, 0.0
      %v2151 = vmax.f32 %v1542, 0.0
      %v2152 = vmax.f32 %v1544, 0.0
      %v2153 = vmax.f32 %v1547, 0.0
      %v2154 = vmax.f32 %v1549, 0.0
      %v2155 = vmax.f32 %v1552, 0.0
      %v2156 = vmax.f32 %v1554, 0.0
      %v2157 = vmax.f32 %v1557, 0.0
      %v2158 = vmax.f32 %v1559, 0.0
      %v2159 = vmax.f32 %v1562, 0.0
      %v2160 = vmax.f32 %v1564, 0.0
      %v2161 = vmax.f32 %v1567, 0.0
      %v2162 = vmax.f32 %v1569, 0.0
      %v2163 = vmax.f32 %v1572, 0.0
      %v2164 = vmax.f32 %v1574, 0.0
      %v2165 = vmax.f32 %v1577, 0.0
      %v2166 = vmax.f32 %v1579, 0.0
      %v2167 = vmax.f32 %v1582, 0.0
      %v2168 = vmax.f32 %v1584, 0.0
      %v2169 = vmax.f32 %v1587, 0.0
      %v2170 = vmax.f32 %v1589, 0.0
      %v2171 = vmax.f32 %v1592, 0.0
      %v2172 = vmax.f32 %v1594, 0.0
      %v2173 = vmax.f32 %v1597, 0.0
      %v2174 = vmax.f32 %v1599, 0.0
      %v2175 = vmax.f32 %v1602, 0.0
      %v2176 = vmax.f32 %v1604, 0.0
      %v2177 = vmax.f32 %v1607, 0.0
      %v2178 = vmax.f32 %v1609, 0.0
      %v2179 = vmax.f32 %v1612, 0.0
      %v2180 = vmax.f32 %v1614, 0.0
      %v2181 = vmax.f32 %v1617, 0.0
      %v2182 = vmax.f32 %v1619, 0.0
      %v2183 = vmax.f32 %v1622, 0.0
      %v2184 = vmax.f32 %v1624, 0.0
      %v2185 = vmax.f32 %v1627, 0.0
      %v2186 = vmax.f32 %v1629, 0.0
      %v2187 = vmax.f32 %v1632, 0.0
      %v2188 = vmax.f32 %v1634, 0.0
      %v2189 = vmax.f32 %v1637, 0.0
      %v2190 = vmax.f32 %v1639, 0.0
      %v2191 = vmax.f32 %v1642, 0.0
      %v2192 = vmax.f32 %v1644, 0.0
      %v2193 = vmax.f32 %v1647, 0.0
      %v2194 = vmax.f32 %v1649, 0.0
      %v2195 = vmax.f32 %v1652, 0.0
      %v2196 = vmax.f32 %v1654, 0.0
      %v2197 = vmax.f32 %v1657, 0.0
      %v2198 = vmax.f32 %v1659, 0.0
      %v2199 = vmax.f32 %v1662, 0.0
      %v2200 = vmax.f32 %v1664, 0.0
      %v2201 = vmax.f32 %v1667, 0.0
      %v2202 = vmax.f32 %v1669, 0.0
      %v2203 = vmax.f32 %v1672, 0.0
      %v2204 = vmax.f32 %v1674, 0.0
      %v2205 = vmax.f32 %v1677, 0.0
      %v2206 = vmax.f32 %v1679, 0.0
      %v2207 = vmax.f32 %v1682, 0.0
      %v2208 = vmax.f32 %v1684, 0.0
      %v2209 = vmax.f32 %v1687, 0.0
      %v2210 = vmax.f32 %v1689, 0.0
      %v2211 = vmax.f32 %v1692, 0.0
      %v2212 = vmax.f32 %v1694, 0.0
      %v2213 = vmax.f32 %v1697, 0.0
      %v2214 = vmax.f32 %v1699, 0.0
      %v2215 = vmax.f32 %v1702, 0.0
      %v2216 = vmax.f32 %v1704, 0.0
      %v2217 = vmax.f32 %v1707, 0.0
      %v2218 = vmax.f32 %v1709, 0.0
      %v2219 = vmax.f32 %v1712, 0.0
      %v2220 = vmax.f32 %v1714, 0.0
      %v2221 = vmax.f32 %v1717, 0.0
      %v2222 = vmax.f32 %v1719, 0.0
      %v2223 = vmax.f32 %v1722, 0.0
      %v2224 = vmax.f32 %v1724, 0.0
      %v2225 = vmax.f32 %v1727, 0.0
      %v2226 = vmax.f32 %v1729, 0.0
      %v2227 = vmax.f32 %v1732, 0.0
      %v2228 = vmax.f32 %v1734, 0.0
      %v2229 = vmax.f32 %v1737, 0.0
      %v2230 = vmax.f32 %v1739, 0.0
      %v2231 = vmax.f32 %v1742, 0.0
      %v2232 = vmax.f32 %v1744, 0.0
      %v2233 = vmax.f32 %v1747, 0.0
      %v2234 = vmax.f32 %v1749, 0.0
      %v2235 = vmax.f32 %v1752, 0.0
      %v2236 = vmax.f32 %v1754, 0.0
      %v2237 = vmax.f32 %v1757, 0.0
      %v2238 = vmax.f32 %v1759, 0.0
      %v2239 = vmax.f32 %v1762, 0.0
      %v2240 = vmax.f32 %v1764, 0.0
      %v2241 = vmax.f32 %v1767, 0.0
      %v2242 = vmax.f32 %v1769, 0.0
      %v2243 = vmax.f32 %v1772, 0.0
      %v2244 = vmax.f32 %v1774, 0.0
      %v2245 = vmax.f32 %v1777, 0.0
      %v2246 = vmax.f32 %v1779, 0.0
      %v2247 = vmax.f32 %v1782, 0.0
      %v2248 = vmax.f32 %v1784, 0.0
      %v2249 = vmax.f32 %v1787, 0.0
      %v2250 = vmax.f32 %v1789, 0.0
      %v2251 = vmax.f32 %v1792, 0.0
      %v2252 = vmax.f32 %v1794, 0.0
      %v2253 = vmax.f32 %v1797, 0.0
      %v2254 = vmax.f32 %v1799, 0.0
      %v2255 = vmax.f32 %v1802, 0.0
      %v2256 = vmax.f32 %v1804, 0.0
      %v2257 = vmax.f32 %v1807, 0.0
      %v2258 = vmax.f32 %v1809, 0.0
      %v2259 = vmax.f32 %v1812, 0.0
      %v2260 = vmax.f32 %v1814, 0.0
      %v2261 = vmax.f32 %v1817, 0.0
      %v2262 = vmax.f32 %v1819, 0.0
      %v2263 = vmax.f32 %v1822, 0.0
      %v2264 = vmax.f32 %v1824, 0.0
      %v2265 = vmax.f32 %v1827, 0.0
      %v2266 = vmax.f32 %v1829, 0.0
      %v2267 = vmax.f32 %v1832, 0.0
      %v2268 = vmax.f32 %v1834, 0.0
      %v2269 = vmax.f32 %v1837, 0.0
      %v2270 = vmax.f32 %v1839, 0.0
      %v2271 = vmax.f32 %v1842, 0.0
      %v2272 = vmax.f32 %v1844, 0.0
      %v2273 = vmax.f32 %v1847, 0.0
      %v2274 = vmax.f32 %v1849, 0.0
      %v2275 = vmax.f32 %v1852, 0.0
      %v2276 = vmax.f32 %v1854, 0.0
      %v2277 = vmax.f32 %v1857, 0.0
      %v2278 = vmax.f32 %v1859, 0.0
      %v2279 = vmax.f32 %v1862, 0.0
      %v2280 = vmax.f32 %v1864, 0.0
      %v2281 = vmax.f32 %v1867, 0.0
      %v2282 = vmax.f32 %v1869, 0.0
      %v2283 = vmax.f32 %v1872, 0.0
      %v2284 = vmax.f32 %v1874, 0.0
      %v2285 = vmax.f32 %v1877, 0.0
      %v2286 = vmax.f32 %v1879, 0.0
      %v2287 = vmax.f32 %v1882, 0.0
      %v2288 = vmax.f32 %v1884, 0.0
      %v2289 = vmax.f32 %v1887, 0.0
      %v2290 = vmax.f32 %v1889, 0.0
      %v2291 = vmax.f32 %v1892, 0.0
      %v2292 = vmax.f32 %v1894, 0.0
      %v2293 = vmax.f32 %v1897, 0.0
      %v2294 = vmax.f32 %v1899, 0.0
      %v2295 = vmax.f32 %v1902, 0.0
      %v2296 = vmax.f32 %v1904, 0.0
      %v2297 = vmax.f32 %v1907, 0.0
      %v2298 = vmax.f32 %v1909, 0.0
      %v2299 = vmax.f32 %v1912, 0.0
      %v2300 = vmax.f32 %v1914, 0.0
      %v2301 = vmax.f32 %v1917, 0.0
      %v2302 = vmax.f32 %v1919, 0.0
      %v2303 = vmax.f32 %v1922, 0.0
      %v2304 = vmax.f32 %v1924, 0.0
      %v2305 = vmax.f32 %v1927, 0.0
      %v2306 = vmax.f32 %v1929, 0.0
      %v2307 = vmax.f32 %v1932, 0.0
      %v2308 = vmax.f32 %v1934, 0.0
      %v2309 = vmax.f32 %v1937, 0.0
      %v2310 = vmax.f32 %v1939, 0.0
      %v2311 = vmax.f32 %v1942, 0.0
      %v2312 = vmax.f32 %v1944, 0.0
      %v2313 = vmax.f32 %v1947, 0.0
      %v2314 = vmax.f32 %v1949, 0.0
      %v2315 = vmax.f32 %v1952, 0.0
      %v2316 = vmax.f32 %v1954, 0.0
      %v2317 = vmax.f32 %v1957, 0.0
      %v2318 = vmax.f32 %v1959, 0.0
      %v2319 = vmax.f32 %v1962, 0.0
      %v2320 = vmax.f32 %v1964, 0.0
      %v2321 = vmax.f32 %v1967, 0.0
      %v2322 = vmax.f32 %v1969, 0.0
      %v2323 = vmax.f32 %v1972, 0.0
      %v2324 = vmax.f32 %v1974, 0.0
      %v2325 = vmax.f32 %v1977, 0.0
      %v2326 = vmax.f32 %v1979, 0.0
      %v2327 = vmax.f32 %v1982, 0.0
      %v2328 = vmax.f32 %v1984, 0.0
      %v2329 = vmax.f32 %v1987, 0.0
      %v2330 = vmax.f32 %v1989, 0.0
      %v2331 = vmax.f32 %v1992, 0.0
      %v2332 = vmax.f32 %v1994, 0.0
      %v2333 = vmax.f32 %v1997, 0.0
      %v2334 = vmax.f32 %v1999, 0.0
      %v2335 = vmax.f32 %v2002, 0.0
      %v2336 = vmax.f32 %v2004, 0.0
      %v2337 = vmax.f32 %v2007, 0.0
      %v2338 = vmax.f32 %v2009, 0.0
      %v2339 = vmax.f32 %v2012, 0.0
      %v2340 = vmax.f32 %v2014, 0.0
      %v2341 = vmax.f32 %v2017, 0.0
      %v2342 = vmax.f32 %v2019, 0.0
      %v2343 = vmax.f32 %v2022, 0.0
      %v2344 = vmax.f32 %v2024, 0.0
      %v2345 = vmax.f32 %v2027, 0.0
      %v2346 = vmax.f32 %v2029, 0.0
      %v2347 = vmax.f32 %v2032, 0.0
      %v2348 = vmax.f32 %v2034, 0.0
      %v2349 = vmax.f32 %v2037, 0.0
      %v2350 = vmax.f32 %v2039, 0.0
      %v2351 = vmax.f32 %v2042, 0.0
      %v2352 = vmax.f32 %v2044, 0.0
      %v2353 = vmax.f32 %v2047, 0.0
      %v2354 = vmax.f32 %v2049, 0.0
      %v2355 = vmax.f32 %v2052, 0.0
      %v2356 = vmax.f32 %v2054, 0.0
      %v2357 = vmax.f32 %v2057, 0.0
      %v2358 = vmax.f32 %v2059, 0.0
      %v2359 = vmax.f32 %v2062, 0.0
      %v2360 = vmax.f32 %v2064, 0.0
      %v2361 = vmax.f32 %v2067, 0.0
      %v2362 = vmax.f32 %v2069, 0.0
      %v2363 = vmax.f32 %v2072, 0.0
      %v2364 = vmax.f32 %v2074, 0.0
      %v2365 = vmax.f32 %v2077, 0.0
      %v2366 = vmax.f32 %v2079, 0.0
      %v2367 = vmax.f32 %v2082, 0.0
      %v2368 = vmax.f32 %v2084, 0.0
      %v2369 = vmax.f32 %v2087, 0.0
      %v2370 = vmax.f32 %v2089, 0.0
      %v2371 = vmax.f32 %v2092, 0.0
      %v2372 = vmax.f32 %v2094, 0.0
      %v2373 = vmax.f32 %v2097, 0.0
      %v2374 = vmax.f32 %v2099, 0.0
      %v2375 = vmax.f32 %v2102, 0.0
      %v2376 = vmax.f32 %v2104, 0.0
      %v2377 = vmax.f32 %v2107, 0.0
      %v2378 = vmax.f32 %v2109, 0.0
      %v2379 = vmax.f32 %v2112, 0.0
      %v2380 = vmax.f32 %v2114, 0.0
      %v2381 = vmax.f32 %v2117, 0.0
      %v2382 = vmax.f32 %v2119, 0.0
      %v2383 = vmax.f32 %v2122, 0.0
      %v2384 = vmax.f32 %v2124, 0.0
      %v2385 = vmax.f32 %v2127, 0.0
      %v2386 = vmax.f32 %v2129, 0.0
      %v2387 = vpack.c.bf16 %v2131, %v2131
      %v2388 = vpack.c.bf16 %v2132, %v2132
      %v2389 = vpack.c.bf16 %v2133, %v2133
      %v2390 = vpack.c.bf16 %v2134, %v2134
      %v2391 = vpack.c.bf16 %v2135, %v2135
      %v2392 = vpack.c.bf16 %v2136, %v2136
      %v2393 = vpack.c.bf16 %v2137, %v2137
      %v2394 = vpack.c.bf16 %v2138, %v2138
      %v2395 = vpack.c.bf16 %v2139, %v2139
      %v2396 = vpack.c.bf16 %v2140, %v2140
      %v2397 = vpack.c.bf16 %v2141, %v2141
      %v2398 = vpack.c.bf16 %v2142, %v2142
      %v2399 = vpack.c.bf16 %v2143, %v2143
      %v2400 = vpack.c.bf16 %v2144, %v2144
      %v2401 = vpack.c.bf16 %v2145, %v2145
      %v2402 = vpack.c.bf16 %v2146, %v2146
      %v2403 = vpack.c.bf16 %v2147, %v2147
      %v2404 = vpack.c.bf16 %v2148, %v2148
      %v2405 = vpack.c.bf16 %v2149, %v2149
      %v2406 = vpack.c.bf16 %v2150, %v2150
      %v2407 = vpack.c.bf16 %v2151, %v2151
      %v2408 = vpack.c.bf16 %v2152, %v2152
      %v2409 = vpack.c.bf16 %v2153, %v2153
      %v2410 = vpack.c.bf16 %v2154, %v2154
      %v2411 = vpack.c.bf16 %v2155, %v2155
      %v2412 = vpack.c.bf16 %v2156, %v2156
      %v2413 = vpack.c.bf16 %v2157, %v2157
      %v2414 = vpack.c.bf16 %v2158, %v2158
      %v2415 = vpack.c.bf16 %v2159, %v2159
      %v2416 = vpack.c.bf16 %v2160, %v2160
      %v2417 = vpack.c.bf16 %v2161, %v2161
      %v2418 = vpack.c.bf16 %v2162, %v2162
      %v2419 = vpack.c.bf16 %v2163, %v2163
      %v2420 = vpack.c.bf16 %v2164, %v2164
      %v2421 = vpack.c.bf16 %v2165, %v2165
      %v2422 = vpack.c.bf16 %v2166, %v2166
      %v2423 = vpack.c.bf16 %v2167, %v2167
      %v2424 = vpack.c.bf16 %v2168, %v2168
      %v2425 = vpack.c.bf16 %v2169, %v2169
      %v2426 = vpack.c.bf16 %v2170, %v2170
      %v2427 = vpack.c.bf16 %v2171, %v2171
      %v2428 = vpack.c.bf16 %v2172, %v2172
      %v2429 = vpack.c.bf16 %v2173, %v2173
      %v2430 = vpack.c.bf16 %v2174, %v2174
      %v2431 = vpack.c.bf16 %v2175, %v2175
      %v2432 = vpack.c.bf16 %v2176, %v2176
      %v2433 = vpack.c.bf16 %v2177, %v2177
      %v2434 = vpack.c.bf16 %v2178, %v2178
      %v2435 = vpack.c.bf16 %v2179, %v2179
      %v2436 = vpack.c.bf16 %v2180, %v2180
      %v2437 = vpack.c.bf16 %v2181, %v2181
      %v2438 = vpack.c.bf16 %v2182, %v2182
      %v2439 = vpack.c.bf16 %v2183, %v2183
      %v2440 = vpack.c.bf16 %v2184, %v2184
      %v2441 = vpack.c.bf16 %v2185, %v2185
      %v2442 = vpack.c.bf16 %v2186, %v2186
      %v2443 = vpack.c.bf16 %v2187, %v2187
      %v2444 = vpack.c.bf16 %v2188, %v2188
      %v2445 = vpack.c.bf16 %v2189, %v2189
      %v2446 = vpack.c.bf16 %v2190, %v2190
      %v2447 = vpack.c.bf16 %v2191, %v2191
      %v2448 = vpack.c.bf16 %v2192, %v2192
      %v2449 = vpack.c.bf16 %v2193, %v2193
      %v2450 = vpack.c.bf16 %v2194, %v2194
      %v2451 = vpack.c.bf16 %v2195, %v2195
      %v2452 = vpack.c.bf16 %v2196, %v2196
      %v2453 = vpack.c.bf16 %v2197, %v2197
      %v2454 = vpack.c.bf16 %v2198, %v2198
      %v2455 = vpack.c.bf16 %v2199, %v2199
      %v2456 = vpack.c.bf16 %v2200, %v2200
      %v2457 = vpack.c.bf16 %v2201, %v2201
      %v2458 = vpack.c.bf16 %v2202, %v2202
      %v2459 = vpack.c.bf16 %v2203, %v2203
      %v2460 = vpack.c.bf16 %v2204, %v2204
      %v2461 = vpack.c.bf16 %v2205, %v2205
      %v2462 = vpack.c.bf16 %v2206, %v2206
      %v2463 = vpack.c.bf16 %v2207, %v2207
      %v2464 = vpack.c.bf16 %v2208, %v2208
      %v2465 = vpack.c.bf16 %v2209, %v2209
      %v2466 = vpack.c.bf16 %v2210, %v2210
      %v2467 = vpack.c.bf16 %v2211, %v2211
      %v2468 = vpack.c.bf16 %v2212, %v2212
      %v2469 = vpack.c.bf16 %v2213, %v2213
      %v2470 = vpack.c.bf16 %v2214, %v2214
      %v2471 = vpack.c.bf16 %v2215, %v2215
      %v2472 = vpack.c.bf16 %v2216, %v2216
      %v2473 = vpack.c.bf16 %v2217, %v2217
      %v2474 = vpack.c.bf16 %v2218, %v2218
      %v2475 = vpack.c.bf16 %v2219, %v2219
      %v2476 = vpack.c.bf16 %v2220, %v2220
      %v2477 = vpack.c.bf16 %v2221, %v2221
      %v2478 = vpack.c.bf16 %v2222, %v2222
      %v2479 = vpack.c.bf16 %v2223, %v2223
      %v2480 = vpack.c.bf16 %v2224, %v2224
      %v2481 = vpack.c.bf16 %v2225, %v2225
      %v2482 = vpack.c.bf16 %v2226, %v2226
      %v2483 = vpack.c.bf16 %v2227, %v2227
      %v2484 = vpack.c.bf16 %v2228, %v2228
      %v2485 = vpack.c.bf16 %v2229, %v2229
      %v2486 = vpack.c.bf16 %v2230, %v2230
      %v2487 = vpack.c.bf16 %v2231, %v2231
      %v2488 = vpack.c.bf16 %v2232, %v2232
      %v2489 = vpack.c.bf16 %v2233, %v2233
      %v2490 = vpack.c.bf16 %v2234, %v2234
      %v2491 = vpack.c.bf16 %v2235, %v2235
      %v2492 = vpack.c.bf16 %v2236, %v2236
      %v2493 = vpack.c.bf16 %v2237, %v2237
      %v2494 = vpack.c.bf16 %v2238, %v2238
      %v2495 = vpack.c.bf16 %v2239, %v2239
      %v2496 = vpack.c.bf16 %v2240, %v2240
      %v2497 = vpack.c.bf16 %v2241, %v2241
      %v2498 = vpack.c.bf16 %v2242, %v2242
      %v2499 = vpack.c.bf16 %v2243, %v2243
      %v2500 = vpack.c.bf16 %v2244, %v2244
      %v2501 = vpack.c.bf16 %v2245, %v2245
      %v2502 = vpack.c.bf16 %v2246, %v2246
      %v2503 = vpack.c.bf16 %v2247, %v2247
      %v2504 = vpack.c.bf16 %v2248, %v2248
      %v2505 = vpack.c.bf16 %v2249, %v2249
      %v2506 = vpack.c.bf16 %v2250, %v2250
      %v2507 = vpack.c.bf16 %v2251, %v2251
      %v2508 = vpack.c.bf16 %v2252, %v2252
      %v2509 = vpack.c.bf16 %v2253, %v2253
      %v2510 = vpack.c.bf16 %v2254, %v2254
      %v2511 = vpack.c.bf16 %v2255, %v2255
      %v2512 = vpack.c.bf16 %v2256, %v2256
      %v2513 = vpack.c.bf16 %v2257, %v2257
      %v2514 = vpack.c.bf16 %v2258, %v2258
      %v2515 = vpack.c.bf16 %v2259, %v2259
      %v2516 = vpack.c.bf16 %v2260, %v2260
      %v2517 = vpack.c.bf16 %v2261, %v2261
      %v2518 = vpack.c.bf16 %v2262, %v2262
      %v2519 = vpack.c.bf16 %v2263, %v2263
      %v2520 = vpack.c.bf16 %v2264, %v2264
      %v2521 = vpack.c.bf16 %v2265, %v2265
      %v2522 = vpack.c.bf16 %v2266, %v2266
      %v2523 = vpack.c.bf16 %v2267, %v2267
      %v2524 = vpack.c.bf16 %v2268, %v2268
      %v2525 = vpack.c.bf16 %v2269, %v2269
      %v2526 = vpack.c.bf16 %v2270, %v2270
      %v2527 = vpack.c.bf16 %v2271, %v2271
      %v2528 = vpack.c.bf16 %v2272, %v2272
      %v2529 = vpack.c.bf16 %v2273, %v2273
      %v2530 = vpack.c.bf16 %v2274, %v2274
      %v2531 = vpack.c.bf16 %v2275, %v2275
      %v2532 = vpack.c.bf16 %v2276, %v2276
      %v2533 = vpack.c.bf16 %v2277, %v2277
      %v2534 = vpack.c.bf16 %v2278, %v2278
      %v2535 = vpack.c.bf16 %v2279, %v2279
      %v2536 = vpack.c.bf16 %v2280, %v2280
      %v2537 = vpack.c.bf16 %v2281, %v2281
      %v2538 = vpack.c.bf16 %v2282, %v2282
      %v2539 = vpack.c.bf16 %v2283, %v2283
      %v2540 = vpack.c.bf16 %v2284, %v2284
      %v2541 = vpack.c.bf16 %v2285, %v2285
      %v2542 = vpack.c.bf16 %v2286, %v2286
      %v2543 = vpack.c.bf16 %v2287, %v2287
      %v2544 = vpack.c.bf16 %v2288, %v2288
      %v2545 = vpack.c.bf16 %v2289, %v2289
      %v2546 = vpack.c.bf16 %v2290, %v2290
      %v2547 = vpack.c.bf16 %v2291, %v2291
      %v2548 = vpack.c.bf16 %v2292, %v2292
      %v2549 = vpack.c.bf16 %v2293, %v2293
      %v2550 = vpack.c.bf16 %v2294, %v2294
      %v2551 = vpack.c.bf16 %v2295, %v2295
      %v2552 = vpack.c.bf16 %v2296, %v2296
      %v2553 = vpack.c.bf16 %v2297, %v2297
      %v2554 = vpack.c.bf16 %v2298, %v2298
      %v2555 = vpack.c.bf16 %v2299, %v2299
      %v2556 = vpack.c.bf16 %v2300, %v2300
      %v2557 = vpack.c.bf16 %v2301, %v2301
      %v2558 = vpack.c.bf16 %v2302, %v2302
      %v2559 = vpack.c.bf16 %v2303, %v2303
      %v2560 = vpack.c.bf16 %v2304, %v2304
      %v2561 = vpack.c.bf16 %v2305, %v2305
      %v2562 = vpack.c.bf16 %v2306, %v2306
      %v2563 = vpack.c.bf16 %v2307, %v2307
      %v2564 = vpack.c.bf16 %v2308, %v2308
      %v2565 = vpack.c.bf16 %v2309, %v2309
      %v2566 = vpack.c.bf16 %v2310, %v2310
      %v2567 = vpack.c.bf16 %v2311, %v2311
      %v2568 = vpack.c.bf16 %v2312, %v2312
      %v2569 = vpack.c.bf16 %v2313, %v2313
      %v2570 = vpack.c.bf16 %v2314, %v2314
      %v2571 = vpack.c.bf16 %v2315, %v2315
      %v2572 = vpack.c.bf16 %v2316, %v2316
      %v2573 = vpack.c.bf16 %v2317, %v2317
      %v2574 = vpack.c.bf16 %v2318, %v2318
      %v2575 = vpack.c.bf16 %v2319, %v2319
      %v2576 = vpack.c.bf16 %v2320, %v2320
      %v2577 = vpack.c.bf16 %v2321, %v2321
      %v2578 = vpack.c.bf16 %v2322, %v2322
      %v2579 = vpack.c.bf16 %v2323, %v2323
      %v2580 = vpack.c.bf16 %v2324, %v2324
      %v2581 = vpack.c.bf16 %v2325, %v2325
      %v2582 = vpack.c.bf16 %v2326, %v2326
      %v2583 = vpack.c.bf16 %v2327, %v2327
      %v2584 = vpack.c.bf16 %v2328, %v2328
      %v2585 = vpack.c.bf16 %v2329, %v2329
      %v2586 = vpack.c.bf16 %v2330, %v2330
      %v2587 = vpack.c.bf16 %v2331, %v2331
      %v2588 = vpack.c.bf16 %v2332, %v2332
      %v2589 = vpack.c.bf16 %v2333, %v2333
      %v2590 = vpack.c.bf16 %v2334, %v2334
      %v2591 = vpack.c.bf16 %v2335, %v2335
      %v2592 = vpack.c.bf16 %v2336, %v2336
      %v2593 = vpack.c.bf16 %v2337, %v2337
      %v2594 = vpack.c.bf16 %v2338, %v2338
      %v2595 = vpack.c.bf16 %v2339, %v2339
      %v2596 = vpack.c.bf16 %v2340, %v2340
      %v2597 = vpack.c.bf16 %v2341, %v2341
      %v2598 = vpack.c.bf16 %v2342, %v2342
      %v2599 = vpack.c.bf16 %v2343, %v2343
      %v2600 = vpack.c.bf16 %v2344, %v2344
      %v2601 = vpack.c.bf16 %v2345, %v2345
      %v2602 = vpack.c.bf16 %v2346, %v2346
      %v2603 = vpack.c.bf16 %v2347, %v2347
      %v2604 = vpack.c.bf16 %v2348, %v2348
      %v2605 = vpack.c.bf16 %v2349, %v2349
      %v2606 = vpack.c.bf16 %v2350, %v2350
      %v2607 = vpack.c.bf16 %v2351, %v2351
      %v2608 = vpack.c.bf16 %v2352, %v2352
      %v2609 = vpack.c.bf16 %v2353, %v2353
      %v2610 = vpack.c.bf16 %v2354, %v2354
      %v2611 = vpack.c.bf16 %v2355, %v2355
      %v2612 = vpack.c.bf16 %v2356, %v2356
      %v2613 = vpack.c.bf16 %v2357, %v2357
      %v2614 = vpack.c.bf16 %v2358, %v2358
      %v2615 = vpack.c.bf16 %v2359, %v2359
      %v2616 = vpack.c.bf16 %v2360, %v2360
      %v2617 = vpack.c.bf16 %v2361, %v2361
      %v2618 = vpack.c.bf16 %v2362, %v2362
      %v2619 = vpack.c.bf16 %v2363, %v2363
      %v2620 = vpack.c.bf16 %v2364, %v2364
      %v2621 = vpack.c.bf16 %v2365, %v2365
      %v2622 = vpack.c.bf16 %v2366, %v2366
      %v2623 = vpack.c.bf16 %v2367, %v2367
      %v2624 = vpack.c.bf16 %v2368, %v2368
      %v2625 = vpack.c.bf16 %v2369, %v2369
      %v2626 = vpack.c.bf16 %v2370, %v2370
      %v2627 = vpack.c.bf16 %v2371, %v2371
      %v2628 = vpack.c.bf16 %v2372, %v2372
      %v2629 = vpack.c.bf16 %v2373, %v2373
      %v2630 = vpack.c.bf16 %v2374, %v2374
      %v2631 = vpack.c.bf16 %v2375, %v2375
      %v2632 = vpack.c.bf16 %v2376, %v2376
      %v2633 = vpack.c.bf16 %v2377, %v2377
      %v2634 = vpack.c.bf16 %v2378, %v2378
      %v2635 = vpack.c.bf16 %v2379, %v2379
      %v2636 = vpack.c.bf16 %v2380, %v2380
      %v2637 = vpack.c.bf16 %v2381, %v2381
      %v2638 = vpack.c.bf16 %v2382, %v2382
      %v2639 = vpack.c.bf16 %v2383, %v2383
      %v2640 = vpack.c.bf16 %v2384, %v2384
      %v2641 = vpack.c.bf16 %v2385, %v2385
      %v2642 = vpack.c.bf16 %v2386, %v2386
      %2643 = vst [vmem:[%s172] sm:$0xf] %v2387
      %2644 = vst [vmem:[%s172 + $0x4] sm:$0xf] %v2388
      %2645 = vst [vmem:[%s172 + $0x8] sm:$0xf] %v2389
      %2646 = vst [vmem:[%s172 + $0xc] sm:$0xf] %v2390
      %2647 = vst [vmem:[%s172 + $0x10] sm:$0xf] %v2391
      %2648 = vst [vmem:[%s172 + $0x14] sm:$0xf] %v2392
      %2649 = vst [vmem:[%s172 + $0x18] sm:$0xf] %v2393
      %2650 = vst [vmem:[%s172 + $0x1c] sm:$0xf] %v2394
      %2651 = vst [vmem:[%s172 + $0x20] sm:$0xf] %v2395
      %2652 = vst [vmem:[%s172 + $0x24] sm:$0xf] %v2396
      %2653 = vst [vmem:[%s172 + $0x28] sm:$0xf] %v2397
      %2654 = vst [vmem:[%s172 + $0x2c] sm:$0xf] %v2398
      %2655 = vst [vmem:[%s172 + $0x30] sm:$0xf] %v2399
      %2656 = vst [vmem:[%s172 + $0x34] sm:$0xf] %v2400
      %2657 = vst [vmem:[%s172 + $0x38] sm:$0xf] %v2401
      %2658 = vst [vmem:[%s172 + $0x3c] sm:$0xf] %v2402
      %2659 = vst [vmem:[%s172 + $0x40] sm:$0xf] %v2403
      %2660 = vst [vmem:[%s172 + $0x44] sm:$0xf] %v2404
      %2661 = vst [vmem:[%s172 + $0x48] sm:$0xf] %v2405
      %2662 = vst [vmem:[%s172 + $0x4c] sm:$0xf] %v2406
      %2663 = vst [vmem:[%s172 + $0x50] sm:$0xf] %v2407
      %2664 = vst [vmem:[%s172 + $0x54] sm:$0xf] %v2408
      %2665 = vst [vmem:[%s172 + $0x58] sm:$0xf] %v2409
      %2666 = vst [vmem:[%s172 + $0x5c] sm:$0xf] %v2410
      %2667 = vst [vmem:[%s172 + $0x60] sm:$0xf] %v2411
      %2668 = vst [vmem:[%s172 + $0x64] sm:$0xf] %v2412
      %2669 = vst [vmem:[%s172 + $0x68] sm:$0xf] %v2413
      %2670 = vst [vmem:[%s172 + $0x6c] sm:$0xf] %v2414
      %2671 = vst [vmem:[%s172 + $0x70] sm:$0xf] %v2415
      %2672 = vst [vmem:[%s172 + $0x74] sm:$0xf] %v2416
      %2673 = vst [vmem:[%s172 + $0x78] sm:$0xf] %v2417
      %2674 = vst [vmem:[%s172 + $0x7c] sm:$0xf] %v2418
      %2675 = vst [vmem:[%s172 + $0x80] sm:$0xf] %v2419
      %2676 = vst [vmem:[%s172 + $0x84] sm:$0xf] %v2420
      %2677 = vst [vmem:[%s172 + $0x88] sm:$0xf] %v2421
      %2678 = vst [vmem:[%s172 + $0x8c] sm:$0xf] %v2422
      %2679 = vst [vmem:[%s172 + $0x90] sm:$0xf] %v2423
      %2680 = vst [vmem:[%s172 + $0x94] sm:$0xf] %v2424
      %2681 = vst [vmem:[%s172 + $0x98] sm:$0xf] %v2425
      %2682 = vst [vmem:[%s172 + $0x9c] sm:$0xf] %v2426
      %2683 = vst [vmem:[%s172 + $0xa0] sm:$0xf] %v2427
      %2684 = vst [vmem:[%s172 + $0xa4] sm:$0xf] %v2428
      %2685 = vst [vmem:[%s172 + $0xa8] sm:$0xf] %v2429
      %2686 = vst [vmem:[%s172 + $0xac] sm:$0xf] %v2430
      %2687 = vst [vmem:[%s172 + $0xb0] sm:$0xf] %v2431
      %2688 = vst [vmem:[%s172 + $0xb4] sm:$0xf] %v2432
      %2689 = vst [vmem:[%s172 + $0xb8] sm:$0xf] %v2433
      %2690 = vst [vmem:[%s172 + $0xbc] sm:$0xf] %v2434
      %2691 = vst [vmem:[%s172 + $0xc0] sm:$0xf] %v2435
      %2692 = vst [vmem:[%s172 + $0xc4] sm:$0xf] %v2436
      %2693 = vst [vmem:[%s172 + $0xc8] sm:$0xf] %v2437
      %2694 = vst [vmem:[%s172 + $0xcc] sm:$0xf] %v2438
      %2695 = vst [vmem:[%s172 + $0xd0] sm:$0xf] %v2439
      %2696 = vst [vmem:[%s172 + $0xd4] sm:$0xf] %v2440
      %2697 = vst [vmem:[%s172 + $0xd8] sm:$0xf] %v2441
      %2698 = vst [vmem:[%s172 + $0xdc] sm:$0xf] %v2442
      %2699 = vst [vmem:[%s172 + $0xe0] sm:$0xf] %v2443
      %2700 = vst [vmem:[%s172 + $0xe4] sm:$0xf] %v2444
      %2701 = vst [vmem:[%s172 + $0xe8] sm:$0xf] %v2445
      %2702 = vst [vmem:[%s172 + $0xec] sm:$0xf] %v2446
      %2703 = vst [vmem:[%s172 + $0xf0] sm:$0xf] %v2447
      %2704 = vst [vmem:[%s172 + $0xf4] sm:$0xf] %v2448
      %2705 = vst [vmem:[%s172 + $0xf8] sm:$0xf] %v2449
      %2706 = vst [vmem:[%s172 + $0xfc] sm:$0xf] %v2450
      %2707 = vst [vmem:[%s172 + $0x100] sm:$0xf] %v2451
      %2708 = vst [vmem:[%s172 + $0x104] sm:$0xf] %v2452
      %2709 = vst [vmem:[%s172 + $0x108] sm:$0xf] %v2453
      %2710 = vst [vmem:[%s172 + $0x10c] sm:$0xf] %v2454
      %2711 = vst [vmem:[%s172 + $0x110] sm:$0xf] %v2455
      %2712 = vst [vmem:[%s172 + $0x114] sm:$0xf] %v2456
      %2713 = vst [vmem:[%s172 + $0x118] sm:$0xf] %v2457
      %2714 = vst [vmem:[%s172 + $0x11c] sm:$0xf] %v2458
      %2715 = vst [vmem:[%s172 + $0x120] sm:$0xf] %v2459
      %2716 = vst [vmem:[%s172 + $0x124] sm:$0xf] %v2460
      %2717 = vst [vmem:[%s172 + $0x128] sm:$0xf] %v2461
      %2718 = vst [vmem:[%s172 + $0x12c] sm:$0xf] %v2462
      %2719 = vst [vmem:[%s172 + $0x130] sm:$0xf] %v2463
      %2720 = vst [vmem:[%s172 + $0x134] sm:$0xf] %v2464
      %2721 = vst [vmem:[%s172 + $0x138] sm:$0xf] %v2465
      %2722 = vst [vmem:[%s172 + $0x13c] sm:$0xf] %v2466
      %2723 = vst [vmem:[%s172 + $0x140] sm:$0xf] %v2467
      %2724 = vst [vmem:[%s172 + $0x144] sm:$0xf] %v2468
      %2725 = vst [vmem:[%s172 + $0x148] sm:$0xf] %v2469
      %2726 = vst [vmem:[%s172 + $0x14c] sm:$0xf] %v2470
      %2727 = vst [vmem:[%s172 + $0x150] sm:$0xf] %v2471
      %2728 = vst [vmem:[%s172 + $0x154] sm:$0xf] %v2472
      %2729 = vst [vmem:[%s172 + $0x158] sm:$0xf] %v2473
      %2730 = vst [vmem:[%s172 + $0x15c] sm:$0xf] %v2474
      %2731 = vst [vmem:[%s172 + $0x160] sm:$0xf] %v2475
      %2732 = vst [vmem:[%s172 + $0x164] sm:$0xf] %v2476
      %2733 = vst [vmem:[%s172 + $0x168] sm:$0xf] %v2477
      %2734 = vst [vmem:[%s172 + $0x16c] sm:$0xf] %v2478
      %2735 = vst [vmem:[%s172 + $0x170] sm:$0xf] %v2479
      %2736 = vst [vmem:[%s172 + $0x174] sm:$0xf] %v2480
      %2737 = vst [vmem:[%s172 + $0x178] sm:$0xf] %v2481
      %2738 = vst [vmem:[%s172 + $0x17c] sm:$0xf] %v2482
      %2739 = vst [vmem:[%s172 + $0x180] sm:$0xf] %v2483
      %2740 = vst [vmem:[%s172 + $0x184] sm:$0xf] %v2484
      %2741 = vst [vmem:[%s172 + $0x188] sm:$0xf] %v2485
      %2742 = vst [vmem:[%s172 + $0x18c] sm:$0xf] %v2486
      %2743 = vst [vmem:[%s172 + $0x190] sm:$0xf] %v2487
      %2744 = vst [vmem:[%s172 + $0x194] sm:$0xf] %v2488
      %2745 = vst [vmem:[%s172 + $0x198] sm:$0xf] %v2489
      %2746 = vst [vmem:[%s172 + $0x19c] sm:$0xf] %v2490
      %2747 = vst [vmem:[%s172 + $0x1a0] sm:$0xf] %v2491
      %2748 = vst [vmem:[%s172 + $0x1a4] sm:$0xf] %v2492
      %2749 = vst [vmem:[%s172 + $0x1a8] sm:$0xf] %v2493
      %2750 = vst [vmem:[%s172 + $0x1ac] sm:$0xf] %v2494
      %2751 = vst [vmem:[%s172 + $0x1b0] sm:$0xf] %v2495
      %2752 = vst [vmem:[%s172 + $0x1b4] sm:$0xf] %v2496
      %2753 = vst [vmem:[%s172 + $0x1b8] sm:$0xf] %v2497
      %2754 = vst [vmem:[%s172 + $0x1bc] sm:$0xf] %v2498
      %2755 = vst [vmem:[%s172 + $0x1c0] sm:$0xf] %v2499
      %2756 = vst [vmem:[%s172 + $0x1c4] sm:$0xf] %v2500
      %2757 = vst [vmem:[%s172 + $0x1c8] sm:$0xf] %v2501
      %2758 = vst [vmem:[%s172 + $0x1cc] sm:$0xf] %v2502
      %2759 = vst [vmem:[%s172 + $0x1d0] sm:$0xf] %v2503
      %2760 = vst [vmem:[%s172 + $0x1d4] sm:$0xf] %v2504
      %2761 = vst [vmem:[%s172 + $0x1d8] sm:$0xf] %v2505
      %2762 = vst [vmem:[%s172 + $0x1dc] sm:$0xf] %v2506
      %2763 = vst [vmem:[%s172 + $0x1e0] sm:$0xf] %v2507
      %2764 = vst [vmem:[%s172 + $0x1e4] sm:$0xf] %v2508
      %2765 = vst [vmem:[%s172 + $0x1e8] sm:$0xf] %v2509
      %2766 = vst [vmem:[%s172 + $0x1ec] sm:$0xf] %v2510
      %2767 = vst [vmem:[%s172 + $0x1f0] sm:$0xf] %v2511
      %2768 = vst [vmem:[%s172 + $0x1f4] sm:$0xf] %v2512
      %2769 = vst [vmem:[%s172 + $0x1f8] sm:$0xf] %v2513
      %2770 = vst [vmem:[%s172 + $0x1fc] sm:$0xf] %v2514
      %2771 = vst [vmem:[%s172 + $0x200] sm:$0xf] %v2515
      %2772 = vst [vmem:[%s172 + $0x204] sm:$0xf] %v2516
      %2773 = vst [vmem:[%s172 + $0x208] sm:$0xf] %v2517
      %2774 = vst [vmem:[%s172 + $0x20c] sm:$0xf] %v2518
      %2775 = vst [vmem:[%s172 + $0x210] sm:$0xf] %v2519
      %2776 = vst [vmem:[%s172 + $0x214] sm:$0xf] %v2520
      %2777 = vst [vmem:[%s172 + $0x218] sm:$0xf] %v2521
      %2778 = vst [vmem:[%s172 + $0x21c] sm:$0xf] %v2522
      %2779 = vst [vmem:[%s172 + $0x220] sm:$0xf] %v2523
      %2780 = vst [vmem:[%s172 + $0x224] sm:$0xf] %v2524
      %2781 = vst [vmem:[%s172 + $0x228] sm:$0xf] %v2525
      %2782 = vst [vmem:[%s172 + $0x22c] sm:$0xf] %v2526
      %2783 = vst [vmem:[%s172 + $0x230] sm:$0xf] %v2527
      %2784 = vst [vmem:[%s172 + $0x234] sm:$0xf] %v2528
      %2785 = vst [vmem:[%s172 + $0x238] sm:$0xf] %v2529
      %2786 = vst [vmem:[%s172 + $0x23c] sm:$0xf] %v2530
      %2787 = vst [vmem:[%s172 + $0x240] sm:$0xf] %v2531
      %2788 = vst [vmem:[%s172 + $0x244] sm:$0xf] %v2532
      %2789 = vst [vmem:[%s172 + $0x248] sm:$0xf] %v2533
      %2790 = vst [vmem:[%s172 + $0x24c] sm:$0xf] %v2534
      %2791 = vst [vmem:[%s172 + $0x250] sm:$0xf] %v2535
      %2792 = vst [vmem:[%s172 + $0x254] sm:$0xf] %v2536
      %2793 = vst [vmem:[%s172 + $0x258] sm:$0xf] %v2537
      %2794 = vst [vmem:[%s172 + $0x25c] sm:$0xf] %v2538
      %2795 = vst [vmem:[%s172 + $0x260] sm:$0xf] %v2539
      %2796 = vst [vmem:[%s172 + $0x264] sm:$0xf] %v2540
      %2797 = vst [vmem:[%s172 + $0x268] sm:$0xf] %v2541
      %2798 = vst [vmem:[%s172 + $0x26c] sm:$0xf] %v2542
      %2799 = vst [vmem:[%s172 + $0x270] sm:$0xf] %v2543
      %2800 = vst [vmem:[%s172 + $0x274] sm:$0xf] %v2544
      %2801 = vst [vmem:[%s172 + $0x278] sm:$0xf] %v2545
      %2802 = vst [vmem:[%s172 + $0x27c] sm:$0xf] %v2546
      %2803 = vst [vmem:[%s172 + $0x280] sm:$0xf] %v2547
      %2804 = vst [vmem:[%s172 + $0x284] sm:$0xf] %v2548
      %2805 = vst [vmem:[%s172 + $0x288] sm:$0xf] %v2549
      %2806 = vst [vmem:[%s172 + $0x28c] sm:$0xf] %v2550
      %2807 = vst [vmem:[%s172 + $0x290] sm:$0xf] %v2551
      %2808 = vst [vmem:[%s172 + $0x294] sm:$0xf] %v2552
      %2809 = vst [vmem:[%s172 + $0x298] sm:$0xf] %v2553
      %2810 = vst [vmem:[%s172 + $0x29c] sm:$0xf] %v2554
      %2811 = vst [vmem:[%s172 + $0x2a0] sm:$0xf] %v2555
      %2812 = vst [vmem:[%s172 + $0x2a4] sm:$0xf] %v2556
      %2813 = vst [vmem:[%s172 + $0x2a8] sm:$0xf] %v2557
      %2814 = vst [vmem:[%s172 + $0x2ac] sm:$0xf] %v2558
      %2815 = vst [vmem:[%s172 + $0x2b0] sm:$0xf] %v2559
      %2816 = vst [vmem:[%s172 + $0x2b4] sm:$0xf] %v2560
      %2817 = vst [vmem:[%s172 + $0x2b8] sm:$0xf] %v2561
      %2818 = vst [vmem:[%s172 + $0x2bc] sm:$0xf] %v2562
      %2819 = vst [vmem:[%s172 + $0x2c0] sm:$0xf] %v2563
      %2820 = vst [vmem:[%s172 + $0x2c4] sm:$0xf] %v2564
      %2821 = vst [vmem:[%s172 + $0x2c8] sm:$0xf] %v2565
      %2822 = vst [vmem:[%s172 + $0x2cc] sm:$0xf] %v2566
      %2823 = vst [vmem:[%s172 + $0x2d0] sm:$0xf] %v2567
      %2824 = vst [vmem:[%s172 + $0x2d4] sm:$0xf] %v2568
      %2825 = vst [vmem:[%s172 + $0x2d8] sm:$0xf] %v2569
      %2826 = vst [vmem:[%s172 + $0x2dc] sm:$0xf] %v2570
      %2827 = vst [vmem:[%s172 + $0x2e0] sm:$0xf] %v2571
      %2828 = vst [vmem:[%s172 + $0x2e4] sm:$0xf] %v2572
      %2829 = vst [vmem:[%s172 + $0x2e8] sm:$0xf] %v2573
      %2830 = vst [vmem:[%s172 + $0x2ec] sm:$0xf] %v2574
      %2831 = vst [vmem:[%s172 + $0x2f0] sm:$0xf] %v2575
      %2832 = vst [vmem:[%s172 + $0x2f4] sm:$0xf] %v2576
      %2833 = vst [vmem:[%s172 + $0x2f8] sm:$0xf] %v2577
      %2834 = vst [vmem:[%s172 + $0x2fc] sm:$0xf] %v2578
      %2835 = vst [vmem:[%s172 + $0x300] sm:$0xf] %v2579
      %2836 = vst [vmem:[%s172 + $0x304] sm:$0xf] %v2580
      %2837 = vst [vmem:[%s172 + $0x308] sm:$0xf] %v2581
      %2838 = vst [vmem:[%s172 + $0x30c] sm:$0xf] %v2582
      %2839 = vst [vmem:[%s172 + $0x310] sm:$0xf] %v2583
      %2840 = vst [vmem:[%s172 + $0x314] sm:$0xf] %v2584
      %2841 = vst [vmem:[%s172 + $0x318] sm:$0xf] %v2585
      %2842 = vst [vmem:[%s172 + $0x31c] sm:$0xf] %v2586
      %2843 = vst [vmem:[%s172 + $0x320] sm:$0xf] %v2587
      %2844 = vst [vmem:[%s172 + $0x324] sm:$0xf] %v2588
      %2845 = vst [vmem:[%s172 + $0x328] sm:$0xf] %v2589
      %2846 = vst [vmem:[%s172 + $0x32c] sm:$0xf] %v2590
      %2847 = vst [vmem:[%s172 + $0x330] sm:$0xf] %v2591
      %2848 = vst [vmem:[%s172 + $0x334] sm:$0xf] %v2592
      %2849 = vst [vmem:[%s172 + $0x338] sm:$0xf] %v2593
      %2850 = vst [vmem:[%s172 + $0x33c] sm:$0xf] %v2594
      %2851 = vst [vmem:[%s172 + $0x340] sm:$0xf] %v2595
      %2852 = vst [vmem:[%s172 + $0x344] sm:$0xf] %v2596
      %2853 = vst [vmem:[%s172 + $0x348] sm:$0xf] %v2597
      %2854 = vst [vmem:[%s172 + $0x34c] sm:$0xf] %v2598
      %2855 = vst [vmem:[%s172 + $0x350] sm:$0xf] %v2599
      %2856 = vst [vmem:[%s172 + $0x354] sm:$0xf] %v2600
      %2857 = vst [vmem:[%s172 + $0x358] sm:$0xf] %v2601
      %2858 = vst [vmem:[%s172 + $0x35c] sm:$0xf] %v2602
      %2859 = vst [vmem:[%s172 + $0x360] sm:$0xf] %v2603
      %2860 = vst [vmem:[%s172 + $0x364] sm:$0xf] %v2604
      %2861 = vst [vmem:[%s172 + $0x368] sm:$0xf] %v2605
      %2862 = vst [vmem:[%s172 + $0x36c] sm:$0xf] %v2606
      %2863 = vst [vmem:[%s172 + $0x370] sm:$0xf] %v2607
      %2864 = vst [vmem:[%s172 + $0x374] sm:$0xf] %v2608
      %2865 = vst [vmem:[%s172 + $0x378] sm:$0xf] %v2609
      %2866 = vst [vmem:[%s172 + $0x37c] sm:$0xf] %v2610
      %2867 = vst [vmem:[%s172 + $0x380] sm:$0xf] %v2611
      %2868 = vst [vmem:[%s172 + $0x384] sm:$0xf] %v2612
      %2869 = vst [vmem:[%s172 + $0x388] sm:$0xf] %v2613
      %2870 = vst [vmem:[%s172 + $0x38c] sm:$0xf] %v2614
      %2871 = vst [vmem:[%s172 + $0x390] sm:$0xf] %v2615
      %2872 = vst [vmem:[%s172 + $0x394] sm:$0xf] %v2616
      %2873 = vst [vmem:[%s172 + $0x398] sm:$0xf] %v2617
      %2874 = vst [vmem:[%s172 + $0x39c] sm:$0xf] %v2618
      %2875 = vst [vmem:[%s172 + $0x3a0] sm:$0xf] %v2619
      %2876 = vst [vmem:[%s172 + $0x3a4] sm:$0xf] %v2620
      %2877 = vst [vmem:[%s172 + $0x3a8] sm:$0xf] %v2621
      %2878 = vst [vmem:[%s172 + $0x3ac] sm:$0xf] %v2622
      %2879 = vst [vmem:[%s172 + $0x3b0] sm:$0xf] %v2623
      %2880 = vst [vmem:[%s172 + $0x3b4] sm:$0xf] %v2624
      %2881 = vst [vmem:[%s172 + $0x3b8] sm:$0xf] %v2625
      %2882 = vst [vmem:[%s172 + $0x3bc] sm:$0xf] %v2626
      %2883 = vst [vmem:[%s172 + $0x3c0] sm:$0xf] %v2627
      %2884 = vst [vmem:[%s172 + $0x3c4] sm:$0xf] %v2628
      %2885 = vst [vmem:[%s172 + $0x3c8] sm:$0xf] %v2629
      %2886 = vst [vmem:[%s172 + $0x3cc] sm:$0xf] %v2630
      %2887 = vst [vmem:[%s172 + $0x3d0] sm:$0xf] %v2631
      %2888 = vst [vmem:[%s172 + $0x3d4] sm:$0xf] %v2632
      %2889 = vst [vmem:[%s172 + $0x3d8] sm:$0xf] %v2633
      %2890 = vst [vmem:[%s172 + $0x3dc] sm:$0xf] %v2634
      %2891 = vst [vmem:[%s172 + $0x3e0] sm:$0xf] %v2635
      %2892 = vst [vmem:[%s172 + $0x3e4] sm:$0xf] %v2636
      %2893 = vst [vmem:[%s172 + $0x3e8] sm:$0xf] %v2637
      %2894 = vst [vmem:[%s172 + $0x3ec] sm:$0xf] %v2638
      %2895 = vst [vmem:[%s172 + $0x3f0] sm:$0xf] %v2639
      %2896 = vst [vmem:[%s172 + $0x3f4] sm:$0xf] %v2640
      %2897 = vst [vmem:[%s172 + $0x3f8] sm:$0xf] %v2641
      %2898 = vst [vmem:[%s172 + $0x3fc] sm:$0xf] %v2642
      %s2899 = smul.u32 256, %s14
      %p2900 = scmp.lt.s32.totalorder %s2899, 1023
      %s2901 = scalar_select %p2900, %s2899, 1023
      %s2902 = smul.addr %s2901, 4
      %s2903 = scalar_lea.vmem %s3, %s2902
      // Predicated region
      $region33: #{forward.4} parent=31 // pred_check
        %p2904 = pneg %p100
      $region34: #{forward.4} parent=31 // pred_check_branch
        %2906 = sbr.rel (%p2904) target = $region36
      $region35: #{forward.4} parent=31 // pred_region
        %s2907 = smul.u32 256, %s14
      $region36: #{forward.4} parent=31 // pred_fallthru
        _
    $region32: #{forward.4} parent=5 // pred_fallthru
      _
    %p2908 = scmp.le.s32.totalorder 2, %s9
    // Predicated region
    $region37: #{forward.4} parent=5 // pred_check
      %p2909 = pneg %p2908
    $region38: #{forward.4} parent=5 // pred_check_branch
      %2911 = sbr.rel (%p2909) target = $region40
    $region39: #{forward.4} parent=5 // pred_region
      %s2912 = ssub.s32 %s9, 2
      // Predicated region
      $region41: #{forward.4} parent=39 // pred_check
        %p2913 = pneg %p106
      $region42: #{forward.4} parent=39 // pred_check_branch
        %2915 = sbr.rel (%p2913) target = $region44
      $region43: #{forward.4} parent=39 // pred_region
        %s2916 = smul.u32 256, %s15
        %p2917 = scmp.lt.s32.totalorder %s2916, 1023
        %s2918 = scalar_select %p2917, %s2916, 1023
        %s2919 = smul.addr %s2918, 4
        %s2920 = scalar_lea.vmem %s3, %s2919
      $region44: #{forward.4} parent=39 // pred_fallthru
        _
    $region40: #{forward.4} parent=5 // pred_fallthru
      _
  $region6: #{forward.4} parent=0 // loop_footer
    %s13 = sadd.s32 1, %s9
  $region7: #{forward.4} parent=0 // loop_footer_branch
    %8 = sbr.rel target = $region3
  $region8: #{forward.4} parent=0 // loop_exit
    _

// kernel: forward.5
$region0: #{forward.5}
  #allocation0 [shape = 'u32[]', space=smem, size = 0x4, offset = 0x4, fixed_abs, tag = 'smem constant byte address 0x4 - core index']
  #allocation1 [shape = 'u32[72,128]{1,0:T(1,128)}', space=vmem, size = 0x9000, scoped, tag = 'internal scratch']
  %s0 = inlined_call_operand.vmem [shape: bf16[1800,288], index: 0, kind: input, shape index: {}]
  %s1 = inlined_call_operand.vmem [shape: bf16[288,128], index: 1, kind: input, shape index: {}]
  %s2 = inlined_call_operand.vmem [shape: f32[1,128], index: 2, kind: input, shape index: {}]
  %s3 = inlined_call_operand.vmem [shape: bf16[1800,128], index: 3, kind: output, shape index: {}]
  %s4 = sld [smem:[#allocation0]]
  $region22: #{forward.5} parent=0
    _
  %s6 = ssub.s32 1, %s4
  %s7 = scalar_select 0, %s6, %s4
  // Predicated region
  $region2: #{forward.5} parent=0 // pred_check
    _
  $region3: #{forward.5} parent=0 // pred_check_branch
    %9 = sbr.rel (0) target = $region5
  $region4: #{forward.5} parent=0 // pred_region
    _
  $region5: #{forward.5} parent=0 // pred_fallthru
    _
  // Predicated region
  $region6: #{forward.5} parent=0 // pred_check
    _
  $region7: #{forward.5} parent=0 // pred_check_branch
    %11 = sbr.rel (0) target = $region9
  $region8: #{forward.5} parent=0 // pred_region
    _
  $region9: #{forward.5} parent=0 // pred_fallthru
    _
  // Predicated region
  $region10: #{forward.5} parent=0 // pred_check
    _
  $region11: #{forward.5} parent=0 // pred_check_branch
    %13 = sbr.rel (0) target = $region13
  $region12: #{forward.5} parent=0 // pred_region
    _
  $region13: #{forward.5} parent=0 // pred_fallthru
    _
  %v15 = vld [vmem:[%s0] sm:$0xff]
  %v16 = vld [vmem:[%s0 + $0x8] sm:$0xf]
  %v17 = vld [vmem:[%s0 + $0xc] sm:$0xff]
  %v18 = vld [vmem:[%s0 + $0x14] sm:$0xf]
  %v19 = vld [vmem:[%s0 + $0x18] sm:$0xff]
  %v20 = vld [vmem:[%s0 + $0x20] sm:$0xf]
  %v21 = vld [vmem:[%s0 + $0x24] sm:$0xff]
  %v22 = vld [vmem:[%s0 + $0x2c] sm:$0xf]
  %v23 = vld [vmem:[%s0 + $0x30] sm:$0xff]
  %v24 = vld [vmem:[%s0 + $0x38] sm:$0xf]
  %v25 = vld [vmem:[%s0 + $0x3c] sm:$0xff]
  %v26 = vld [vmem:[%s0 + $0x44] sm:$0xf]
  %v27 = vld [vmem:[%s0 + $0x48] sm:$0xff]
  %v28 = vld [vmem:[%s0 + $0x50] sm:$0xf]
  %v29 = vld [vmem:[%s0 + $0x54] sm:$0xff]
  %v30 = vld [vmem:[%s0 + $0x5c] sm:$0xf]
  %v31 = vld [vmem:[%s0 + $0x60] sm:$0xff]
  %v32 = vld [vmem:[%s0 + $0x68] sm:$0xf]
  %v33 = vld [vmem:[%s0 + $0x6c] sm:$0xff]
  %v34 = vld [vmem:[%s0 + $0x74] sm:$0xf]
  %v35 = vld [vmem:[%s0 + $0x78] sm:$0xff]
  %v36 = vld [vmem:[%s0 + $0x80] sm:$0xf]
  %v37 = vld [vmem:[%s0 + $0x84] sm:$0xff]
  %v38 = vld [vmem:[%s0 + $0x8c] sm:$0xf]
  %v39 = vld [vmem:[%s0 + $0x90] sm:$0xff]
  %v40 = vld [vmem:[%s0 + $0x98] sm:$0xf]
  %v41 = vld [vmem:[%s0 + $0x9c] sm:$0xff]
  %v42 = vld [vmem:[%s0 + $0xa4] sm:$0xf]
  %v43 = vld [vmem:[%s0 + $0xa8] sm:$0xff]
  %v44 = vld [vmem:[%s0 + $0xb0] sm:$0xf]
  %v45 = vld [vmem:[%s0 + $0xb4] sm:$0xff]
  %v46 = vld [vmem:[%s0 + $0xbc] sm:$0xf]
  %v47 = vld [vmem:[%s0 + $0xc0] sm:$0xff]
  %v48 = vld [vmem:[%s0 + $0xc8] sm:$0xf]
  %v49 = vld [vmem:[%s0 + $0xcc] sm:$0xff]
  %v50 = vld [vmem:[%s0 + $0xd4] sm:$0xf]
  %v51 = vld [vmem:[%s0 + $0xd8] sm:$0xff]
  %v52 = vld [vmem:[%s0 + $0xe0] sm:$0xf]
  %v53 = vld [vmem:[%s0 + $0xe4] sm:$0xff]
  %v54 = vld [vmem:[%s0 + $0xec] sm:$0xf]
  %v55 = vld [vmem:[%s0 + $0xf0] sm:$0xff]
  %v56 = vld [vmem:[%s0 + $0xf8] sm:$0xf]
  %v57 = vld [vmem:[%s0 + $0xfc] sm:$0xff]
  %v58 = vld [vmem:[%s0 + $0x104] sm:$0xf]
  %v59 = vld [vmem:[%s0 + $0x108] sm:$0xff]
  %v60 = vld [vmem:[%s0 + $0x110] sm:$0xf]
  %v61 = vld [vmem:[%s0 + $0x114] sm:$0xff]
  %v62 = vld [vmem:[%s0 + $0x11c] sm:$0xf]
  %v63 = vld [vmem:[%s0 + $0x120] sm:$0xff]
  %v64 = vld [vmem:[%s0 + $0x128] sm:$0xf]
  %v65 = vld [vmem:[%s0 + $0x12c] sm:$0xff]
  %v66 = vld [vmem:[%s0 + $0x134] sm:$0xf]
  %v67 = vld [vmem:[%s0 + $0x138] sm:$0xff]
  %v68 = vld [vmem:[%s0 + $0x140] sm:$0xf]
  %v69 = vld [vmem:[%s0 + $0x144] sm:$0xff]
  %v70 = vld [vmem:[%s0 + $0x14c] sm:$0xf]
  %v71 = vld [vmem:[%s0 + $0x150] sm:$0xff]
  %v72 = vld [vmem:[%s0 + $0x158] sm:$0xf]
  %v73 = vld [vmem:[%s0 + $0x15c] sm:$0xff]
  %v74 = vld [vmem:[%s0 + $0x164] sm:$0xf]
  %v75 = vld [vmem:[%s0 + $0x168] sm:$0xff]
  %v76 = vld [vmem:[%s0 + $0x170] sm:$0xf]
  %v77 = vld [vmem:[%s0 + $0x174] sm:$0xff]
  %v78 = vld [vmem:[%s0 + $0x17c] sm:$0xf]
  %v79 = vld [vmem:[%s0 + $0x180] sm:$0xff]
  %v80 = vld [vmem:[%s0 + $0x188] sm:$0xf]
  %v81 = vld [vmem:[%s0 + $0x18c] sm:$0xff]
  %v82 = vld [vmem:[%s0 + $0x194] sm:$0xf]
  %v83 = vld [vmem:[%s0 + $0x198] sm:$0xff]
  %v84 = vld [vmem:[%s0 + $0x1a0] sm:$0xf]
  %v85 = vld [vmem:[%s0 + $0x1a4] sm:$0xff]
  %v86 = vld [vmem:[%s0 + $0x1ac] sm:$0xf]
  %v87 = vld [vmem:[%s0 + $0x1b0] sm:$0xff]
  %v88 = vld [vmem:[%s0 + $0x1b8] sm:$0xf]
  %v89 = vld [vmem:[%s0 + $0x1bc] sm:$0xff]
  %v90 = vld [vmem:[%s0 + $0x1c4] sm:$0xf]
  %v91 = vld [vmem:[%s0 + $0x1c8] sm:$0xff]
  %v92 = vld [vmem:[%s0 + $0x1d0] sm:$0xf]
  %v93 = vld [vmem:[%s0 + $0x1d4] sm:$0xff]
  %v94 = vld [vmem:[%s0 + $0x1dc] sm:$0xf]
  %v95 = vld [vmem:[%s0 + $0x1e0] sm:$0xff]
  %v96 = vld [vmem:[%s0 + $0x1e8] sm:$0xf]
  %v97 = vld [vmem:[%s0 + $0x1ec] sm:$0xff]
  %v98 = vld [vmem:[%s0 + $0x1f4] sm:$0xf]
  %v99 = vld [vmem:[%s0 + $0x1f8] sm:$0xff]
  %v100 = vld [vmem:[%s0 + $0x200] sm:$0xf]
  %v101 = vld [vmem:[%s0 + $0x204] sm:$0xff]
  %v102 = vld [vmem:[%s0 + $0x20c] sm:$0xf]
  %v103 = vld [vmem:[%s0 + $0x210] sm:$0xff]
  %v104 = vld [vmem:[%s0 + $0x218] sm:$0xf]
  %v105 = vld [vmem:[%s0 + $0x21c] sm:$0xff]
  %v106 = vld [vmem:[%s0 + $0x224] sm:$0xf]
  %v107 = vld [vmem:[%s0 + $0x228] sm:$0xff]
  %v108 = vld [vmem:[%s0 + $0x230] sm:$0xf]
  %v109 = vld [vmem:[%s0 + $0x234] sm:$0xff]
  %v110 = vld [vmem:[%s0 + $0x23c] sm:$0xf]
  %v111 = vld [vmem:[%s0 + $0x240] sm:$0xff]
  %v112 = vld [vmem:[%s0 + $0x248] sm:$0xf]
  %v113 = vld [vmem:[%s0 + $0x24c] sm:$0xff]
  %v114 = vld [vmem:[%s0 + $0x254] sm:$0xf]
  %v115 = vld [vmem:[%s0 + $0x258] sm:$0xff]
  %v116 = vld [vmem:[%s0 + $0x260] sm:$0xf]
  %v117 = vld [vmem:[%s0 + $0x264] sm:$0xff]
  %v118 = vld [vmem:[%s0 + $0x26c] sm:$0xf]
  %v119 = vld [vmem:[%s0 + $0x270] sm:$0xff]
  %v120 = vld [vmem:[%s0 + $0x278] sm:$0xf]
  %v121 = vld [vmem:[%s0 + $0x27c] sm:$0xff]
  %v122 = vld [vmem:[%s0 + $0x284] sm:$0xf]
  %v123 = vld [vmem:[%s0 + $0x288] sm:$0xff]
  %v124 = vld [vmem:[%s0 + $0x290] sm:$0xf]
  %v125 = vld [vmem:[%s0 + $0x294] sm:$0xff]
  %v126 = vld [vmem:[%s0 + $0x29c] sm:$0xf]
  %v127 = vld [vmem:[%s0 + $0x2a0] sm:$0xff]
  %v128 = vld [vmem:[%s0 + $0x2a8] sm:$0xf]
  %v129 = vld [vmem:[%s0 + $0x2ac] sm:$0xff]
  %v130 = vld [vmem:[%s0 + $0x2b4] sm:$0xf]
  %v131 = vld [vmem:[%s0 + $0x2b8] sm:$0xff]
  %v132 = vld [vmem:[%s0 + $0x2c0] sm:$0xf]
  %v133 = vld [vmem:[%s0 + $0x2c4] sm:$0xff]
  %v134 = vld [vmem:[%s0 + $0x2cc] sm:$0xf]
  %v135 = vld [vmem:[%s0 + $0x2d0] sm:$0xff]
  %v136 = vld [vmem:[%s0 + $0x2d8] sm:$0xf]
  %v137 = vld [vmem:[%s0 + $0x2dc] sm:$0xff]
  %v138 = vld [vmem:[%s0 + $0x2e4] sm:$0xf]
  %v139 = vld [vmem:[%s0 + $0x2e8] sm:$0xff]
  %v140 = vld [vmem:[%s0 + $0x2f0] sm:$0xf]
  %v141 = vld [vmem:[%s0 + $0x2f4] sm:$0xff]
  %v142 = vld [vmem:[%s0 + $0x2fc] sm:$0xf]
  %v143 = vld [vmem:[%s0 + $0x300] sm:$0xff]
  %v144 = vld [vmem:[%s0 + $0x308] sm:$0xf]
  %v145 = vld [vmem:[%s0 + $0x30c] sm:$0xff]
  %v146 = vld [vmem:[%s0 + $0x314] sm:$0xf]
  %v147 = vld [vmem:[%s0 + $0x318] sm:$0xff]
  %v148 = vld [vmem:[%s0 + $0x320] sm:$0xf]
  %v149 = vld [vmem:[%s0 + $0x324] sm:$0xff]
  %v150 = vld [vmem:[%s0 + $0x32c] sm:$0xf]
  %v151 = vld [vmem:[%s0 + $0x330] sm:$0xff]
  %v152 = vld [vmem:[%s0 + $0x338] sm:$0xf]
  %v153 = vld [vmem:[%s0 + $0x33c] sm:$0xff]
  %v154 = vld [vmem:[%s0 + $0x344] sm:$0xf]
  %v155 = vld [vmem:[%s0 + $0x348] sm:$0xff]
  %v156 = vld [vmem:[%s0 + $0x350] sm:$0xf]
  %v157 = vld [vmem:[%s0 + $0x354] sm:$0xff]
  %v158 = vld [vmem:[%s0 + $0x35c] sm:$0xf]
  %v159 = vld [vmem:[%s0 + $0x360] sm:$0xff]
  %v160 = vld [vmem:[%s0 + $0x368] sm:$0xf]
  %v161 = vld [vmem:[%s0 + $0x36c] sm:$0xff]
  %v162 = vld [vmem:[%s0 + $0x374] sm:$0xf]
  %v163 = vld [vmem:[%s0 + $0x378] sm:$0xff]
  %v164 = vld [vmem:[%s0 + $0x380] sm:$0xf]
  %v165 = vld [vmem:[%s0 + $0x384] sm:$0xff]
  %v166 = vld [vmem:[%s0 + $0x38c] sm:$0xf]
  %v167 = vld [vmem:[%s0 + $0x390] sm:$0xff]
  %v168 = vld [vmem:[%s0 + $0x398] sm:$0xf]
  %v169 = vld [vmem:[%s0 + $0x39c] sm:$0xff]
  %v170 = vld [vmem:[%s0 + $0x3a4] sm:$0xf]
  %v171 = vld [vmem:[%s0 + $0x3a8] sm:$0xff]
  %v172 = vld [vmem:[%s0 + $0x3b0] sm:$0xf]
  %v173 = vld [vmem:[%s0 + $0x3b4] sm:$0xff]
  %v174 = vld [vmem:[%s0 + $0x3bc] sm:$0xf]
  %v175 = vld [vmem:[%s0 + $0x3c0] sm:$0xff]
  %v176 = vld [vmem:[%s0 + $0x3c8] sm:$0xf]
  %v177 = vld [vmem:[%s0 + $0x3cc] sm:$0xff]
  %v178 = vld [vmem:[%s0 + $0x3d4] sm:$0xf]
  %v179 = vld [vmem:[%s0 + $0x3d8] sm:$0xff]
  %v180 = vld [vmem:[%s0 + $0x3e0] sm:$0xf]
  %v181 = vld [vmem:[%s0 + $0x3e4] sm:$0xff]
  %v182 = vld [vmem:[%s0 + $0x3ec] sm:$0xf]
  %v183 = vld [vmem:[%s0 + $0x3f0] sm:$0xff]
  %v184 = vld [vmem:[%s0 + $0x3f8] sm:$0xf]
  %v185 = vld [vmem:[%s0 + $0x3fc] sm:$0xff]
  %v186 = vld [vmem:[%s0 + $0x404] sm:$0xf]
  %v187 = vld [vmem:[%s0 + $0x408] sm:$0xff]
  %v188 = vld [vmem:[%s0 + $0x410] sm:$0xf]
  %v189 = vld [vmem:[%s0 + $0x414] sm:$0xff]
  %v190 = vld [vmem:[%s0 + $0x41c] sm:$0xf]
  %v191 = vld [vmem:[%s0 + $0x420] sm:$0xff]
  %v192 = vld [vmem:[%s0 + $0x428] sm:$0xf]
  %v193 = vld [vmem:[%s0 + $0x42c] sm:$0xff]
  %v194 = vld [vmem:[%s0 + $0x434] sm:$0xf]
  %v195 = vld [vmem:[%s0 + $0x438] sm:$0xff]
  %v196 = vld [vmem:[%s0 + $0x440] sm:$0xf]
  %v197 = vld [vmem:[%s0 + $0x444] sm:$0xff]
  %v198 = vld [vmem:[%s0 + $0x44c] sm:$0xf]
  %v199 = vld [vmem:[%s0 + $0x450] sm:$0xff]
  %v200 = vld [vmem:[%s0 + $0x458] sm:$0xf]
  %v201 = vld [vmem:[%s0 + $0x45c] sm:$0xff]
  %v202 = vld [vmem:[%s0 + $0x464] sm:$0xf]
  %v203 = vld [vmem:[%s0 + $0x468] sm:$0xff]
  %v204 = vld [vmem:[%s0 + $0x470] sm:$0xf]
  %v205 = vld [vmem:[%s0 + $0x474] sm:$0xff]
  %v206 = vld [vmem:[%s0 + $0x47c] sm:$0xf]
  %v207 = vld [vmem:[%s0 + $0x480] sm:$0xff]
  %v208 = vld [vmem:[%s0 + $0x488] sm:$0xf]
  %v209 = vld [vmem:[%s0 + $0x48c] sm:$0xff]
  %v210 = vld [vmem:[%s0 + $0x494] sm:$0xf]
  %v211 = vld [vmem:[%s0 + $0x498] sm:$0xff]
  %v212 = vld [vmem:[%s0 + $0x4a0] sm:$0xf]
  %v213 = vld [vmem:[%s0 + $0x4a4] sm:$0xff]
  %v214 = vld [vmem:[%s0 + $0x4ac] sm:$0xf]
  %v215 = vld [vmem:[%s0 + $0x4b0] sm:$0xff]
  %v216 = vld [vmem:[%s0 + $0x4b8] sm:$0xf]
  %v217 = vld [vmem:[%s0 + $0x4bc] sm:$0xff]
  %v218 = vld [vmem:[%s0 + $0x4c4] sm:$0xf]
  %v219 = vld [vmem:[%s0 + $0x4c8] sm:$0xff]
  %v220 = vld [vmem:[%s0 + $0x4d0] sm:$0xf]
  %v221 = vld [vmem:[%s0 + $0x4d4] sm:$0xff]
  %v222 = vld [vmem:[%s0 + $0x4dc] sm:$0xf]
  %v223 = vld [vmem:[%s0 + $0x4e0] sm:$0xff]
  %v224 = vld [vmem:[%s0 + $0x4e8] sm:$0xf]
  %v225 = vld [vmem:[%s0 + $0x4ec] sm:$0xff]
  %v226 = vld [vmem:[%s0 + $0x4f4] sm:$0xf]
  %v227 = vld [vmem:[%s0 + $0x4f8] sm:$0xff]
  %v228 = vld [vmem:[%s0 + $0x500] sm:$0xf]
  %v229 = vld [vmem:[%s0 + $0x504] sm:$0xff]
  %v230 = vld [vmem:[%s0 + $0x50c] sm:$0xf]
  %v231 = vld [vmem:[%s0 + $0x510] sm:$0xff]
  %v232 = vld [vmem:[%s0 + $0x518] sm:$0xf]
  %v233 = vld [vmem:[%s0 + $0x51c] sm:$0xff]
  %v234 = vld [vmem:[%s0 + $0x524] sm:$0xf]
  %v235 = vld [vmem:[%s0 + $0x528] sm:$0xff]
  %v236 = vld [vmem:[%s0 + $0x530] sm:$0xf]
  %v237 = vld [vmem:[%s0 + $0x534] sm:$0xff]
  %v238 = vld [vmem:[%s0 + $0x53c] sm:$0xf]
  %v239 = vld [vmem:[%s0 + $0x540] sm:$0xff]
  %v240 = vld [vmem:[%s0 + $0x548] sm:$0xf]
  %v241 = vld [vmem:[%s0 + $0x54c] sm:$0xff]
  %v242 = vld [vmem:[%s0 + $0x554] sm:$0xf]
  %v243 = vld [vmem:[%s0 + $0x558] sm:$0xff]
  %v244 = vld [vmem:[%s0 + $0x560] sm:$0xf]
  %v245 = vld [vmem:[%s0 + $0x564] sm:$0xff]
  %v246 = vld [vmem:[%s0 + $0x56c] sm:$0xf]
  %v247 = vld [vmem:[%s0 + $0x570] sm:$0xff]
  %v248 = vld [vmem:[%s0 + $0x578] sm:$0xf]
  %v249 = vld [vmem:[%s0 + $0x57c] sm:$0xff]
  %v250 = vld [vmem:[%s0 + $0x584] sm:$0xf]
  %v251 = vld [vmem:[%s0 + $0x588] sm:$0xff]
  %v252 = vld [vmem:[%s0 + $0x590] sm:$0xf]
  %v253 = vld [vmem:[%s0 + $0x594] sm:$0xff]
  %v254 = vld [vmem:[%s0 + $0x59c] sm:$0xf]
  %v255 = vld [vmem:[%s0 + $0x5a0] sm:$0xff]
  %v256 = vld [vmem:[%s0 + $0x5a8] sm:$0xf]
  %v257 = vld [vmem:[%s0 + $0x5ac] sm:$0xff]
  %v258 = vld [vmem:[%s0 + $0x5b4] sm:$0xf]
  %v259 = vld [vmem:[%s0 + $0x5b8] sm:$0xff]
  %v260 = vld [vmem:[%s0 + $0x5c0] sm:$0xf]
  %v261 = vld [vmem:[%s0 + $0x5c4] sm:$0xff]
  %v262 = vld [vmem:[%s0 + $0x5cc] sm:$0xf]
  %v263 = vld [vmem:[%s0 + $0x5d0] sm:$0xff]
  %v264 = vld [vmem:[%s0 + $0x5d8] sm:$0xf]
  %v265 = vld [vmem:[%s0 + $0x5dc] sm:$0xff]
  %v266 = vld [vmem:[%s0 + $0x5e4] sm:$0xf]
  %v267 = vld [vmem:[%s0 + $0x5e8] sm:$0xff]
  %v268 = vld [vmem:[%s0 + $0x5f0] sm:$0xf]
  %v269 = vld [vmem:[%s0 + $0x5f4] sm:$0xff]
  %v270 = vld [vmem:[%s0 + $0x5fc] sm:$0xf]
  %v271 = vld [vmem:[%s0 + $0x600] sm:$0xff]
  %v272 = vld [vmem:[%s0 + $0x608] sm:$0xf]
  %v273 = vld [vmem:[%s0 + $0x60c] sm:$0xff]
  %v274 = vld [vmem:[%s0 + $0x614] sm:$0xf]
  %v275 = vld [vmem:[%s0 + $0x618] sm:$0xff]
  %v276 = vld [vmem:[%s0 + $0x620] sm:$0xf]
  %v277 = vld [vmem:[%s0 + $0x624] sm:$0xff]
  %v278 = vld [vmem:[%s0 + $0x62c] sm:$0xf]
  %v279 = vld [vmem:[%s0 + $0x630] sm:$0xff]
  %v280 = vld [vmem:[%s0 + $0x638] sm:$0xf]
  %v281 = vld [vmem:[%s0 + $0x63c] sm:$0xff]
  %v282 = vld [vmem:[%s0 + $0x644] sm:$0xf]
  %v283 = vld [vmem:[%s0 + $0x648] sm:$0xff]
  %v284 = vld [vmem:[%s0 + $0x650] sm:$0xf]
  %v285 = vld [vmem:[%s0 + $0x654] sm:$0xff]
  %v286 = vld [vmem:[%s0 + $0x65c] sm:$0xf]
  %v287 = vld [vmem:[%s0 + $0x660] sm:$0xff]
  %v288 = vld [vmem:[%s0 + $0x668] sm:$0xf]
  %v289 = vld [vmem:[%s0 + $0x66c] sm:$0xff]
  %v290 = vld [vmem:[%s0 + $0x674] sm:$0xf]
  %v291 = vld [vmem:[%s0 + $0x678] sm:$0xff]
  %v292 = vld [vmem:[%s0 + $0x680] sm:$0xf]
  %v293 = vld [vmem:[%s0 + $0x684] sm:$0xff]
  %v294 = vld [vmem:[%s0 + $0x68c] sm:$0xf]
  %v295 = vld [vmem:[%s0 + $0x690] sm:$0xff]
  %v296 = vld [vmem:[%s0 + $0x698] sm:$0xf]
  %v297 = vld [vmem:[%s0 + $0x69c] sm:$0xff]
  %v298 = vld [vmem:[%s0 + $0x6a4] sm:$0xf]
  %v299 = vld [vmem:[%s0 + $0x6a8] sm:$0xff]
  %v300 = vld [vmem:[%s0 + $0x6b0] sm:$0xf]
  %v301 = vld [vmem:[%s0 + $0x6b4] sm:$0xff]
  %v302 = vld [vmem:[%s0 + $0x6bc] sm:$0xf]
  %v303 = vld [vmem:[%s0 + $0x6c0] sm:$0xff]
  %v304 = vld [vmem:[%s0 + $0x6c8] sm:$0xf]
  %v305 = vld [vmem:[%s0 + $0x6cc] sm:$0xff]
  %v306 = vld [vmem:[%s0 + $0x6d4] sm:$0xf]
  %v307 = vld [vmem:[%s0 + $0x6d8] sm:$0xff]
  %v308 = vld [vmem:[%s0 + $0x6e0] sm:$0xf]
  %v309 = vld [vmem:[%s0 + $0x6e4] sm:$0xff]
  %v310 = vld [vmem:[%s0 + $0x6ec] sm:$0xf]
  %v311 = vld [vmem:[%s0 + $0x6f0] sm:$0xff]
  %v312 = vld [vmem:[%s0 + $0x6f8] sm:$0xf]
  %v313 = vld [vmem:[%s0 + $0x6fc] sm:$0xff]
  %v314 = vld [vmem:[%s0 + $0x704] sm:$0xf]
  %v315 = vld [vmem:[%s0 + $0x708] sm:$0xff]
  %v316 = vld [vmem:[%s0 + $0x710] sm:$0xf]
  %v317 = vld [vmem:[%s0 + $0x714] sm:$0xff]
  %v318 = vld [vmem:[%s0 + $0x71c] sm:$0xf]
  %v319 = vld [vmem:[%s0 + $0x720] sm:$0xff]
  %v320 = vld [vmem:[%s0 + $0x728] sm:$0xf]
  %v321 = vld [vmem:[%s0 + $0x72c] sm:$0xff]
  %v322 = vld [vmem:[%s0 + $0x734] sm:$0xf]
  %v323 = vld [vmem:[%s0 + $0x738] sm:$0xff]
  %v324 = vld [vmem:[%s0 + $0x740] sm:$0xf]
  %v325 = vld [vmem:[%s0 + $0x744] sm:$0xff]
  %v326 = vld [vmem:[%s0 + $0x74c] sm:$0xf]
  %v327 = vld [vmem:[%s0 + $0x750] sm:$0xff]
  %v328 = vld [vmem:[%s0 + $0x758] sm:$0xf]
  %v329 = vld [vmem:[%s0 + $0x75c] sm:$0xff]
  %v330 = vld [vmem:[%s0 + $0x764] sm:$0xf]
  %v331 = vld [vmem:[%s0 + $0x768] sm:$0xff]
  %v332 = vld [vmem:[%s0 + $0x770] sm:$0xf]
  %v333 = vld [vmem:[%s0 + $0x774] sm:$0xff]
  %v334 = vld [vmem:[%s0 + $0x77c] sm:$0xf]
  %v335 = vld [vmem:[%s0 + $0x780] sm:$0xff]
  %v336 = vld [vmem:[%s0 + $0x788] sm:$0xf]
  %v337 = vld [vmem:[%s0 + $0x78c] sm:$0xff]
  %v338 = vld [vmem:[%s0 + $0x794] sm:$0xf]
  %v339 = vld [vmem:[%s0 + $0x798] sm:$0xff]
  %v340 = vld [vmem:[%s0 + $0x7a0] sm:$0xf]
  %v341 = vld [vmem:[%s0 + $0x7a4] sm:$0xff]
  %v342 = vld [vmem:[%s0 + $0x7ac] sm:$0xf]
  %v343 = vld [vmem:[%s0 + $0x7b0] sm:$0xff]
  %v344 = vld [vmem:[%s0 + $0x7b8] sm:$0xf]
  %v345 = vld [vmem:[%s0 + $0x7bc] sm:$0xff]
  %v346 = vld [vmem:[%s0 + $0x7c4] sm:$0xf]
  %v347 = vld [vmem:[%s0 + $0x7c8] sm:$0xff]
  %v348 = vld [vmem:[%s0 + $0x7d0] sm:$0xf]
  %v349 = vld [vmem:[%s0 + $0x7d4] sm:$0xff]
  %v350 = vld [vmem:[%s0 + $0x7dc] sm:$0xf]
  %v351 = vld [vmem:[%s0 + $0x7e0] sm:$0xff]
  %v352 = vld [vmem:[%s0 + $0x7e8] sm:$0xf]
  %v353 = vld [vmem:[%s0 + $0x7ec] sm:$0xff]
  %v354 = vld [vmem:[%s0 + $0x7f4] sm:$0xf]
  %v355 = vld [vmem:[%s0 + $0x7f8] sm:$0xff]
  %v356 = vld [vmem:[%s0 + $0x800] sm:$0xf]
  %v357 = vld [vmem:[%s0 + $0x804] sm:$0xff]
  %v358 = vld [vmem:[%s0 + $0x80c] sm:$0xf]
  %v359 = vld [vmem:[%s0 + $0x810] sm:$0xff]
  %v360 = vld [vmem:[%s0 + $0x818] sm:$0xf]
  %v361 = vld [vmem:[%s0 + $0x81c] sm:$0xff]
  %v362 = vld [vmem:[%s0 + $0x824] sm:$0xf]
  %v363 = vld [vmem:[%s0 + $0x828] sm:$0xff]
  %v364 = vld [vmem:[%s0 + $0x830] sm:$0xf]
  %v365 = vld [vmem:[%s0 + $0x834] sm:$0xff]
  %v366 = vld [vmem:[%s0 + $0x83c] sm:$0xf]
  %v367 = vld [vmem:[%s0 + $0x840] sm:$0xff]
  %v368 = vld [vmem:[%s0 + $0x848] sm:$0xf]
  %v369 = vld [vmem:[%s0 + $0x84c] sm:$0xff]
  %v370 = vld [vmem:[%s0 + $0x854] sm:$0xf]
  %v371 = vld [vmem:[%s0 + $0x858] sm:$0xff]
  %v372 = vld [vmem:[%s0 + $0x860] sm:$0xf]
  %v373 = vld [vmem:[%s0 + $0x864] sm:$0xff]
  %v374 = vld [vmem:[%s0 + $0x86c] sm:$0xf]
  %v375 = vld [vmem:[%s0 + $0x870] sm:$0xff]
  %v376 = vld [vmem:[%s0 + $0x878] sm:$0xf]
  %v377 = vld [vmem:[%s0 + $0x87c] sm:$0xff]
  %v378 = vld [vmem:[%s0 + $0x884] sm:$0xf]
  %v379 = vld [vmem:[%s0 + $0x888] sm:$0xff]
  %v380 = vld [vmem:[%s0 + $0x890] sm:$0xf]
  %v381 = vld [vmem:[%s0 + $0x894] sm:$0xff]
  %v382 = vld [vmem:[%s0 + $0x89c] sm:$0xf]
  %v383 = vld [vmem:[%s0 + $0x8a0] sm:$0xff]
  %v384 = vld [vmem:[%s0 + $0x8a8] sm:$0xf]
  %v385 = vld [vmem:[%s0 + $0x8ac] sm:$0xff]
  %v386 = vld [vmem:[%s0 + $0x8b4] sm:$0xf]
  %v387 = vld [vmem:[%s0 + $0x8b8] sm:$0xff]
  %v388 = vld [vmem:[%s0 + $0x8c0] sm:$0xf]
  %v389 = vld [vmem:[%s0 + $0x8c4] sm:$0xff]
  %v390 = vld [vmem:[%s0 + $0x8cc] sm:$0xf]
  %v391 = vld [vmem:[%s0 + $0x8d0] sm:$0xff]
  %v392 = vld [vmem:[%s0 + $0x8d8] sm:$0xf]
  %v393 = vld [vmem:[%s0 + $0x8dc] sm:$0xff]
  %v394 = vld [vmem:[%s0 + $0x8e4] sm:$0xf]
  %v395 = vld [vmem:[%s0 + $0x8e8] sm:$0xff]
  %v396 = vld [vmem:[%s0 + $0x8f0] sm:$0xf]
  %v397 = vld [vmem:[%s0 + $0x8f4] sm:$0xff]
  %v398 = vld [vmem:[%s0 + $0x8fc] sm:$0xf]
  %v399 = vld [vmem:[%s0 + $0x900] sm:$0xff]
  %v400 = vld [vmem:[%s0 + $0x908] sm:$0xf]
  %v401 = vld [vmem:[%s0 + $0x90c] sm:$0xff]
  %v402 = vld [vmem:[%s0 + $0x914] sm:$0xf]
  %v403 = vld [vmem:[%s0 + $0x918] sm:$0xff]
  %v404 = vld [vmem:[%s0 + $0x920] sm:$0xf]
  %v405 = vld [vmem:[%s0 + $0x924] sm:$0xff]
  %v406 = vld [vmem:[%s0 + $0x92c] sm:$0xf]
  %v407 = vld [vmem:[%s0 + $0x930] sm:$0xff]
  %v408 = vld [vmem:[%s0 + $0x938] sm:$0xf]
  %v409 = vld [vmem:[%s0 + $0x93c] sm:$0xff]
  %v410 = vld [vmem:[%s0 + $0x944] sm:$0xf]
  %v411 = vld [vmem:[%s0 + $0x948] sm:$0xff]
  %v412 = vld [vmem:[%s0 + $0x950] sm:$0xf]
  %v413 = vld [vmem:[%s0 + $0x954] sm:$0xff]
  %v414 = vld [vmem:[%s0 + $0x95c] sm:$0xf]
  %v415 = vld [vmem:[%s0 + $0x960] sm:$0xff]
  %v416 = vld [vmem:[%s0 + $0x968] sm:$0xf]
  %v417 = vld [vmem:[%s0 + $0x96c] sm:$0xff]
  %v418 = vld [vmem:[%s0 + $0x974] sm:$0xf]
  %v419 = vld [vmem:[%s0 + $0x978] sm:$0xff]
  %v420 = vld [vmem:[%s0 + $0x980] sm:$0xf]
  %v421 = vld [vmem:[%s0 + $0x984] sm:$0xff]
  %v422 = vld [vmem:[%s0 + $0x98c] sm:$0xf]
  %v423 = vld [vmem:[%s0 + $0x990] sm:$0xff]
  %v424 = vld [vmem:[%s0 + $0x998] sm:$0xf]
  %v425 = vld [vmem:[%s0 + $0x99c] sm:$0xff]
  %v426 = vld [vmem:[%s0 + $0x9a4] sm:$0xf]
  %v427 = vld [vmem:[%s0 + $0x9a8] sm:$0xff]
  %v428 = vld [vmem:[%s0 + $0x9b0] sm:$0xf]
  %v429 = vld [vmem:[%s0 + $0x9b4] sm:$0xff]
  %v430 = vld [vmem:[%s0 + $0x9bc] sm:$0xf]
  %v431 = vld [vmem:[%s0 + $0x9c0] sm:$0xff]
  %v432 = vld [vmem:[%s0 + $0x9c8] sm:$0xf]
  %v433 = vld [vmem:[%s0 + $0x9cc] sm:$0xff]
  %v434 = vld [vmem:[%s0 + $0x9d4] sm:$0xf]
  %v435 = vld [vmem:[%s0 + $0x9d8] sm:$0xff]
  %v436 = vld [vmem:[%s0 + $0x9e0] sm:$0xf]
  %v437 = vld [vmem:[%s0 + $0x9e4] sm:$0xff]
  %v438 = vld [vmem:[%s0 + $0x9ec] sm:$0xf]
  %v439 = vld [vmem:[%s0 + $0x9f0] sm:$0xff]
  %v440 = vld [vmem:[%s0 + $0x9f8] sm:$0xf]
  %v441 = vld [vmem:[%s0 + $0x9fc] sm:$0xff]
  %v442 = vld [vmem:[%s0 + $0xa04] sm:$0xf]
  %v443 = vld [vmem:[%s0 + $0xa08] sm:$0xff]
  %v444 = vld [vmem:[%s0 + $0xa10] sm:$0xf]
  %v445 = vld [vmem:[%s0 + $0xa14] sm:$0xff]
  %v446 = vld [vmem:[%s0 + $0xa1c] sm:$0xf]
  %v447 = vld [vmem:[%s0 + $0xa20] sm:$0xff]
  %v448 = vld [vmem:[%s0 + $0xa28] sm:$0xf]
  %v449 = vld [vmem:[%s0 + $0xa2c] sm:$0xff]
  %v450 = vld [vmem:[%s0 + $0xa34] sm:$0xf]
  %v451 = vld [vmem:[%s0 + $0xa38] sm:$0xff]
  %v452 = vld [vmem:[%s0 + $0xa40] sm:$0xf]
  %v453 = vld [vmem:[%s0 + $0xa44] sm:$0xff]
  %v454 = vld [vmem:[%s0 + $0xa4c] sm:$0xf]
  %v455 = vld [vmem:[%s0 + $0xa50] sm:$0xff]
  %v456 = vld [vmem:[%s0 + $0xa58] sm:$0xf]
  %v457 = vld [vmem:[%s0 + $0xa5c] sm:$0xff]
  %v458 = vld [vmem:[%s0 + $0xa64] sm:$0xf]
  %v459 = vld [vmem:[%s0 + $0xa68] sm:$0xff]
  %v460 = vld [vmem:[%s0 + $0xa70] sm:$0xf]
  %v461 = vld [vmem:[%s0 + $0xa74] sm:$0xff]
  %v462 = vld [vmem:[%s0 + $0xa7c] sm:$0xf]
  %v463 = vld [vmem:[%s0 + $0xa80] sm:$0xff]
  %v464 = vld [vmem:[%s0 + $0xa88] sm:$0xf]
  %v465 = vld [vmem:[%s1] sm:$0xf]
  %v466 = vld [vmem:[%s1 + $0x4] sm:$0xf]
  %v467 = vld [vmem:[%s1 + $0x8] sm:$0xf]
  %v468 = vld [vmem:[%s1 + $0xc] sm:$0xf]
  %v469 = vld [vmem:[%s1 + $0x10] sm:$0xf]
  %v470 = vld [vmem:[%s1 + $0x14] sm:$0xf]
  %v471 = vld [vmem:[%s1 + $0x18] sm:$0xf]
  %v472 = vld [vmem:[%s1 + $0x1c] sm:$0xf]
  %v473 = vld [vmem:[%s1 + $0x20] sm:$0xf]
  %v474 = vld [vmem:[%s1 + $0x24] sm:$0xf]
  %v475 = vld [vmem:[%s1 + $0x28] sm:$0xf]
  %v476 = vld [vmem:[%s1 + $0x2c] sm:$0xf]
  %v477 = vld [vmem:[%s1 + $0x30] sm:$0xf]
  %v478 = vld [vmem:[%s1 + $0x34] sm:$0xf]
  %v479 = vld [vmem:[%s1 + $0x38] sm:$0xf]
  %v480 = vld [vmem:[%s1 + $0x3c] sm:$0xf]
  %v481 = vld [vmem:[%s1 + $0x40] sm:$0xf]
  %v482 = vld [vmem:[%s1 + $0x44] sm:$0xf]
  %v483 = vld [vmem:[%s1 + $0x48] sm:$0xf]
  %v484 = vld [vmem:[%s1 + $0x4c] sm:$0xf]
  %v485 = vld [vmem:[%s1 + $0x50] sm:$0xf]
  %v486 = vld [vmem:[%s1 + $0x54] sm:$0xf]
  %v487 = vld [vmem:[%s1 + $0x58] sm:$0xf]
  %v488 = vld [vmem:[%s1 + $0x5c] sm:$0xf]
  %v489 = vld [vmem:[%s1 + $0x60] sm:$0xf]
  %v490 = vld [vmem:[%s1 + $0x64] sm:$0xf]
  %v491 = vld [vmem:[%s1 + $0x68] sm:$0xf]
  %v492 = vld [vmem:[%s1 + $0x6c] sm:$0xf]
  %v493 = vld [vmem:[%s1 + $0x70] sm:$0xf]
  %v494 = vld [vmem:[%s1 + $0x74] sm:$0xf]
  %v495 = vld [vmem:[%s1 + $0x78] sm:$0xf]
  %v496 = vld [vmem:[%s1 + $0x7c] sm:$0xf]
  %v497 = vld [vmem:[%s1 + $0x80] sm:$0xf]
  %v498 = vld [vmem:[%s1 + $0x84] sm:$0xf]
  %v499 = vld [vmem:[%s1 + $0x88] sm:$0xf]
  %v500 = vld [vmem:[%s1 + $0x8c] sm:$0xf]
  %v501 = vld [vmem:[%s2] sm:$0x1]
  %v503 = vperm.slane %v501, 0
  %v955 = vunpack.c.l.b16 %v15
  %v956 = vunpack.c.h.b16 %v15
  %v957 = vunpack.c.l.b16 %v16
  %v958 = vunpack.c.l.b16 %v17
  %v959 = vunpack.c.h.b16 %v17
  %v960 = vunpack.c.l.b16 %v18
  %v961 = vunpack.c.l.b16 %v19
  %v962 = vunpack.c.h.b16 %v19
  %v963 = vunpack.c.l.b16 %v20
  %v964 = vunpack.c.l.b16 %v21
  %v965 = vunpack.c.h.b16 %v21
  %v966 = vunpack.c.l.b16 %v22
  %v967 = vunpack.c.l.b16 %v23
  %v968 = vunpack.c.h.b16 %v23
  %v969 = vunpack.c.l.b16 %v24
  %v970 = vunpack.c.l.b16 %v25
  %v971 = vunpack.c.h.b16 %v25
  %v972 = vunpack.c.l.b16 %v26
  %v973 = vunpack.c.l.b16 %v27
  %v974 = vunpack.c.h.b16 %v27
  %v975 = vunpack.c.l.b16 %v28
  %v976 = vunpack.c.l.b16 %v29
  %v977 = vunpack.c.h.b16 %v29
  %v978 = vunpack.c.l.b16 %v30
  %v979 = vunpack.c.l.b16 %v31
  %v980 = vunpack.c.h.b16 %v31
  %v981 = vunpack.c.l.b16 %v32
  %v982 = vunpack.c.l.b16 %v33
  %v983 = vunpack.c.h.b16 %v33
  %v984 = vunpack.c.l.b16 %v34
  %v985 = vunpack.c.l.b16 %v35
  %v986 = vunpack.c.h.b16 %v35
  %v987 = vunpack.c.l.b16 %v36
  %v988 = vunpack.c.l.b16 %v37
  %v989 = vunpack.c.h.b16 %v37
  %v990 = vunpack.c.l.b16 %v38
  %v991 = vunpack.c.l.b16 %v39
  %v992 = vunpack.c.h.b16 %v39
  %v993 = vunpack.c.l.b16 %v40
  %v994 = vunpack.c.l.b16 %v41
  %v995 = vunpack.c.h.b16 %v41
  %v996 = vunpack.c.l.b16 %v42
  %v997 = vunpack.c.l.b16 %v43
  %v998 = vunpack.c.h.b16 %v43
  %v999 = vunpack.c.l.b16 %v44
  %v1000 = vunpack.c.l.b16 %v45
  %v1001 = vunpack.c.h.b16 %v45
  %v1002 = vunpack.c.l.b16 %v46
  %v1003 = vunpack.c.l.b16 %v47
  %v1004 = vunpack.c.h.b16 %v47
  %v1005 = vunpack.c.l.b16 %v48
  %v1006 = vunpack.c.l.b16 %v49
  %v1007 = vunpack.c.h.b16 %v49
  %v1008 = vunpack.c.l.b16 %v50
  %v1009 = vunpack.c.l.b16 %v51
  %v1010 = vunpack.c.h.b16 %v51
  %v1011 = vunpack.c.l.b16 %v52
  %v1012 = vunpack.c.l.b16 %v53
  %v1013 = vunpack.c.h.b16 %v53
  %v1014 = vunpack.c.l.b16 %v54
  %v1015 = vunpack.c.l.b16 %v55
  %v1016 = vunpack.c.h.b16 %v55
  %v1017 = vunpack.c.l.b16 %v56
  %v1018 = vunpack.c.l.b16 %v57
  %v1019 = vunpack.c.h.b16 %v57
  %v1020 = vunpack.c.l.b16 %v58
  %v1021 = vunpack.c.l.b16 %v59
  %v1022 = vunpack.c.h.b16 %v59
  %v1023 = vunpack.c.l.b16 %v60
  %v1024 = vunpack.c.l.b16 %v61
  %v1025 = vunpack.c.h.b16 %v61
  %v1026 = vunpack.c.l.b16 %v62
  %v1027 = vunpack.c.l.b16 %v63
  %v1028 = vunpack.c.h.b16 %v63
  %v1029 = vunpack.c.l.b16 %v64
  %v1030 = vunpack.c.l.b16 %v65
  %v1031 = vunpack.c.h.b16 %v65
  %v1032 = vunpack.c.l.b16 %v66
  %v1033 = vunpack.c.l.b16 %v67
  %v1034 = vunpack.c.h.b16 %v67
  %v1035 = vunpack.c.l.b16 %v68
  %v1036 = vunpack.c.l.b16 %v69
  %v1037 = vunpack.c.h.b16 %v69
  %v1038 = vunpack.c.l.b16 %v70
  %v1039 = vunpack.c.l.b16 %v71
  %v1040 = vunpack.c.h.b16 %v71
  %v1041 = vunpack.c.l.b16 %v72
  %v1042 = vunpack.c.l.b16 %v73
  %v1043 = vunpack.c.h.b16 %v73
  %v1044 = vunpack.c.l.b16 %v74
  %v1045 = vunpack.c.l.b16 %v75
  %v1046 = vunpack.c.h.b16 %v75
  %v1047 = vunpack.c.l.b16 %v76
  %v1048 = vunpack.c.l.b16 %v77
  %v1049 = vunpack.c.h.b16 %v77
  %v1050 = vunpack.c.l.b16 %v78
  %v1051 = vunpack.c.l.b16 %v79
  %v1052 = vunpack.c.h.b16 %v79
  %v1053 = vunpack.c.l.b16 %v80
  %v1054 = vunpack.c.l.b16 %v81
  %v1055 = vunpack.c.h.b16 %v81
  %v1056 = vunpack.c.l.b16 %v82
  %v1057 = vunpack.c.l.b16 %v83
  %v1058 = vunpack.c.h.b16 %v83
  %v1059 = vunpack.c.l.b16 %v84
  %v1060 = vunpack.c.l.b16 %v85
  %v1061 = vunpack.c.h.b16 %v85
  %v1062 = vunpack.c.l.b16 %v86
  %v1063 = vunpack.c.l.b16 %v87
  %v1064 = vunpack.c.h.b16 %v87
  %v1065 = vunpack.c.l.b16 %v88
  %v1066 = vunpack.c.l.b16 %v89
  %v1067 = vunpack.c.h.b16 %v89
  %v1068 = vunpack.c.l.b16 %v90
  %v1069 = vunpack.c.l.b16 %v91
  %v1070 = vunpack.c.h.b16 %v91
  %v1071 = vunpack.c.l.b16 %v92
  %v1072 = vunpack.c.l.b16 %v93
  %v1073 = vunpack.c.h.b16 %v93
  %v1074 = vunpack.c.l.b16 %v94
  %v1075 = vunpack.c.l.b16 %v95
  %v1076 = vunpack.c.h.b16 %v95
  %v1077 = vunpack.c.l.b16 %v96
  %v1078 = vunpack.c.l.b16 %v97
  %v1079 = vunpack.c.h.b16 %v97
  %v1080 = vunpack.c.l.b16 %v98
  %v1081 = vunpack.c.l.b16 %v99
  %v1082 = vunpack.c.h.b16 %v99
  %v1083 = vunpack.c.l.b16 %v100
  %v1084 = vunpack.c.l.b16 %v101
  %v1085 = vunpack.c.h.b16 %v101
  %v1086 = vunpack.c.l.b16 %v102
  %v1087 = vunpack.c.l.b16 %v103
  %v1088 = vunpack.c.h.b16 %v103
  %v1089 = vunpack.c.l.b16 %v104
  %v1090 = vunpack.c.l.b16 %v105
  %v1091 = vunpack.c.h.b16 %v105
  %v1092 = vunpack.c.l.b16 %v106
  %v1093 = vunpack.c.l.b16 %v107
  %v1094 = vunpack.c.h.b16 %v107
  %v1095 = vunpack.c.l.b16 %v108
  %v1096 = vunpack.c.l.b16 %v109
  %v1097 = vunpack.c.h.b16 %v109
  %v1098 = vunpack.c.l.b16 %v110
  %v1099 = vunpack.c.l.b16 %v111
  %v1100 = vunpack.c.h.b16 %v111
  %v1101 = vunpack.c.l.b16 %v112
  %v1102 = vunpack.c.l.b16 %v113
  %v1103 = vunpack.c.h.b16 %v113
  %v1104 = vunpack.c.l.b16 %v114
  %v1105 = vunpack.c.l.b16 %v115
  %v1106 = vunpack.c.h.b16 %v115
  %v1107 = vunpack.c.l.b16 %v116
  %v1108 = vunpack.c.l.b16 %v117
  %v1109 = vunpack.c.h.b16 %v117
  %v1110 = vunpack.c.l.b16 %v118
  %v1111 = vunpack.c.l.b16 %v119
  %v1112 = vunpack.c.h.b16 %v119
  %v1113 = vunpack.c.l.b16 %v120
  %v1114 = vunpack.c.l.b16 %v121
  %v1115 = vunpack.c.h.b16 %v121
  %v1116 = vunpack.c.l.b16 %v122
  %v1117 = vunpack.c.l.b16 %v123
  %v1118 = vunpack.c.h.b16 %v123
  %v1119 = vunpack.c.l.b16 %v124
  %v1120 = vunpack.c.l.b16 %v125
  %v1121 = vunpack.c.h.b16 %v125
  %v1122 = vunpack.c.l.b16 %v126
  %v1123 = vunpack.c.l.b16 %v127
  %v1124 = vunpack.c.h.b16 %v127
  %v1125 = vunpack.c.l.b16 %v128
  %v1126 = vunpack.c.l.b16 %v129
  %v1127 = vunpack.c.h.b16 %v129
  %v1128 = vunpack.c.l.b16 %v130
  %v1129 = vunpack.c.l.b16 %v131
  %v1130 = vunpack.c.h.b16 %v131
  %v1131 = vunpack.c.l.b16 %v132
  %v1132 = vunpack.c.l.b16 %v133
  %v1133 = vunpack.c.h.b16 %v133
  %v1134 = vunpack.c.l.b16 %v134
  %v1135 = vunpack.c.l.b16 %v135
  %v1136 = vunpack.c.h.b16 %v135
  %v1137 = vunpack.c.l.b16 %v136
  %v1138 = vunpack.c.l.b16 %v137
  %v1139 = vunpack.c.h.b16 %v137
  %v1140 = vunpack.c.l.b16 %v138
  %v1141 = vunpack.c.l.b16 %v139
  %v1142 = vunpack.c.h.b16 %v139
  %v1143 = vunpack.c.l.b16 %v140
  %v1144 = vunpack.c.l.b16 %v141
  %v1145 = vunpack.c.h.b16 %v141
  %v1146 = vunpack.c.l.b16 %v142
  %v1147 = vunpack.c.l.b16 %v143
  %v1148 = vunpack.c.h.b16 %v143
  %v1149 = vunpack.c.l.b16 %v144
  %v1150 = vunpack.c.l.b16 %v145
  %v1151 = vunpack.c.h.b16 %v145
  %v1152 = vunpack.c.l.b16 %v146
  %v1153 = vunpack.c.l.b16 %v147
  %v1154 = vunpack.c.h.b16 %v147
  %v1155 = vunpack.c.l.b16 %v148
  %v1156 = vunpack.c.l.b16 %v149
  %v1157 = vunpack.c.h.b16 %v149
  %v1158 = vunpack.c.l.b16 %v150
  %v1159 = vunpack.c.l.b16 %v151
  %v1160 = vunpack.c.h.b16 %v151
  %v1161 = vunpack.c.l.b16 %v152
  %v1162 = vunpack.c.l.b16 %v153
  %v1163 = vunpack.c.h.b16 %v153
  %v1164 = vunpack.c.l.b16 %v154
  %v1165 = vunpack.c.l.b16 %v155
  %v1166 = vunpack.c.h.b16 %v155
  %v1167 = vunpack.c.l.b16 %v156
  %v1168 = vunpack.c.l.b16 %v157
  %v1169 = vunpack.c.h.b16 %v157
  %v1170 = vunpack.c.l.b16 %v158
  %v1171 = vunpack.c.l.b16 %v159
  %v1172 = vunpack.c.h.b16 %v159
  %v1173 = vunpack.c.l.b16 %v160
  %v1174 = vunpack.c.l.b16 %v161
  %v1175 = vunpack.c.h.b16 %v161
  %v1176 = vunpack.c.l.b16 %v162
  %v1177 = vunpack.c.l.b16 %v163
  %v1178 = vunpack.c.h.b16 %v163
  %v1179 = vunpack.c.l.b16 %v164
  %v1180 = vunpack.c.l.b16 %v165
  %v1181 = vunpack.c.h.b16 %v165
  %v1182 = vunpack.c.l.b16 %v166
  %v1183 = vunpack.c.l.b16 %v167
  %v1184 = vunpack.c.h.b16 %v167
  %v1185 = vunpack.c.l.b16 %v168
  %v1186 = vunpack.c.l.b16 %v169
  %v1187 = vunpack.c.h.b16 %v169
  %v1188 = vunpack.c.l.b16 %v170
  %v1189 = vunpack.c.l.b16 %v171
  %v1190 = vunpack.c.h.b16 %v171
  %v1191 = vunpack.c.l.b16 %v172
  %v1192 = vunpack.c.l.b16 %v173
  %v1193 = vunpack.c.h.b16 %v173
  %v1194 = vunpack.c.l.b16 %v174
  %v1195 = vunpack.c.l.b16 %v175
  %v1196 = vunpack.c.h.b16 %v175
  %v1197 = vunpack.c.l.b16 %v176
  %v1198 = vunpack.c.l.b16 %v177
  %v1199 = vunpack.c.h.b16 %v177
  %v1200 = vunpack.c.l.b16 %v178
  %v1201 = vunpack.c.l.b16 %v179
  %v1202 = vunpack.c.h.b16 %v179
  %v1203 = vunpack.c.l.b16 %v180
  %v1204 = vunpack.c.l.b16 %v181
  %v1205 = vunpack.c.h.b16 %v181
  %v1206 = vunpack.c.l.b16 %v182
  %v1207 = vunpack.c.l.b16 %v183
  %v1208 = vunpack.c.h.b16 %v183
  %v1209 = vunpack.c.l.b16 %v184
  %v1210 = vunpack.c.l.b16 %v185
  %v1211 = vunpack.c.h.b16 %v185
  %v1212 = vunpack.c.l.b16 %v186
  %v1213 = vunpack.c.l.b16 %v187
  %v1214 = vunpack.c.h.b16 %v187
  %v1215 = vunpack.c.l.b16 %v188
  %v1216 = vunpack.c.l.b16 %v189
  %v1217 = vunpack.c.h.b16 %v189
  %v1218 = vunpack.c.l.b16 %v190
  %v1219 = vunpack.c.l.b16 %v191
  %v1220 = vunpack.c.h.b16 %v191
  %v1221 = vunpack.c.l.b16 %v192
  %v1222 = vunpack.c.l.b16 %v193
  %v1223 = vunpack.c.h.b16 %v193
  %v1224 = vunpack.c.l.b16 %v194
  %v1225 = vunpack.c.l.b16 %v195
  %v1226 = vunpack.c.h.b16 %v195
  %v1227 = vunpack.c.l.b16 %v196
  %v1228 = vunpack.c.l.b16 %v197
  %v1229 = vunpack.c.h.b16 %v197
  %v1230 = vunpack.c.l.b16 %v198
  %v1231 = vunpack.c.l.b16 %v199
  %v1232 = vunpack.c.h.b16 %v199
  %v1233 = vunpack.c.l.b16 %v200
  %v1234 = vunpack.c.l.b16 %v201
  %v1235 = vunpack.c.h.b16 %v201
  %v1236 = vunpack.c.l.b16 %v202
  %v1237 = vunpack.c.l.b16 %v203
  %v1238 = vunpack.c.h.b16 %v203
  %v1239 = vunpack.c.l.b16 %v204
  %v1240 = vunpack.c.l.b16 %v205
  %v1241 = vunpack.c.h.b16 %v205
  %v1242 = vunpack.c.l.b16 %v206
  %v1243 = vunpack.c.l.b16 %v207
  %v1244 = vunpack.c.h.b16 %v207
  %v1245 = vunpack.c.l.b16 %v208
  %v1246 = vunpack.c.l.b16 %v209
  %v1247 = vunpack.c.h.b16 %v209
  %v1248 = vunpack.c.l.b16 %v210
  %v1249 = vunpack.c.l.b16 %v211
  %v1250 = vunpack.c.h.b16 %v211
  %v1251 = vunpack.c.l.b16 %v212
  %v1252 = vunpack.c.l.b16 %v213
  %v1253 = vunpack.c.h.b16 %v213
  %v1254 = vunpack.c.l.b16 %v214
  %v1255 = vunpack.c.l.b16 %v215
  %v1256 = vunpack.c.h.b16 %v215
  %v1257 = vunpack.c.l.b16 %v216
  %v1258 = vunpack.c.l.b16 %v217
  %v1259 = vunpack.c.h.b16 %v217
  %v1260 = vunpack.c.l.b16 %v218
  %v1261 = vunpack.c.l.b16 %v219
  %v1262 = vunpack.c.h.b16 %v219
  %v1263 = vunpack.c.l.b16 %v220
  %v1264 = vunpack.c.l.b16 %v221
  %v1265 = vunpack.c.h.b16 %v221
  %v1266 = vunpack.c.l.b16 %v222
  %v1267 = vunpack.c.l.b16 %v223
  %v1268 = vunpack.c.h.b16 %v223
  %v1269 = vunpack.c.l.b16 %v224
  %v1270 = vunpack.c.l.b16 %v225
  %v1271 = vunpack.c.h.b16 %v225
  %v1272 = vunpack.c.l.b16 %v226
  %v1273 = vunpack.c.l.b16 %v227
  %v1274 = vunpack.c.h.b16 %v227
  %v1275 = vunpack.c.l.b16 %v228
  %v1276 = vunpack.c.l.b16 %v229
  %v1277 = vunpack.c.h.b16 %v229
  %v1278 = vunpack.c.l.b16 %v230
  %v1279 = vunpack.c.l.b16 %v231
  %v1280 = vunpack.c.h.b16 %v231
  %v1281 = vunpack.c.l.b16 %v232
  %v1282 = vunpack.c.l.b16 %v233
  %v1283 = vunpack.c.h.b16 %v233
  %v1284 = vunpack.c.l.b16 %v234
  %v1285 = vunpack.c.l.b16 %v235
  %v1286 = vunpack.c.h.b16 %v235
  %v1287 = vunpack.c.l.b16 %v236
  %v1288 = vunpack.c.l.b16 %v237
  %v1289 = vunpack.c.h.b16 %v237
  %v1290 = vunpack.c.l.b16 %v238
  %v1291 = vunpack.c.l.b16 %v239
  %v1292 = vunpack.c.h.b16 %v239
  %v1293 = vunpack.c.l.b16 %v240
  %v1294 = vunpack.c.l.b16 %v241
  %v1295 = vunpack.c.h.b16 %v241
  %v1296 = vunpack.c.l.b16 %v242
  %v1297 = vunpack.c.l.b16 %v243
  %v1298 = vunpack.c.h.b16 %v243
  %v1299 = vunpack.c.l.b16 %v244
  %v1300 = vunpack.c.l.b16 %v245
  %v1301 = vunpack.c.h.b16 %v245
  %v1302 = vunpack.c.l.b16 %v246
  %v1303 = vunpack.c.l.b16 %v247
  %v1304 = vunpack.c.h.b16 %v247
  %v1305 = vunpack.c.l.b16 %v248
  %v1306 = vunpack.c.l.b16 %v249
  %v1307 = vunpack.c.h.b16 %v249
  %v1308 = vunpack.c.l.b16 %v250
  %v1309 = vunpack.c.l.b16 %v251
  %v1310 = vunpack.c.h.b16 %v251
  %v1311 = vunpack.c.l.b16 %v252
  %v1312 = vunpack.c.l.b16 %v253
  %v1313 = vunpack.c.h.b16 %v253
  %v1314 = vunpack.c.l.b16 %v254
  %v1315 = vunpack.c.l.b16 %v255
  %v1316 = vunpack.c.h.b16 %v255
  %v1317 = vunpack.c.l.b16 %v256
  %v1318 = vunpack.c.l.b16 %v257
  %v1319 = vunpack.c.h.b16 %v257
  %v1320 = vunpack.c.l.b16 %v258
  %v1321 = vunpack.c.l.b16 %v259
  %v1322 = vunpack.c.h.b16 %v259
  %v1323 = vunpack.c.l.b16 %v260
  %v1324 = vunpack.c.l.b16 %v261
  %v1325 = vunpack.c.h.b16 %v261
  %v1326 = vunpack.c.l.b16 %v262
  %v1327 = vunpack.c.l.b16 %v263
  %v1328 = vunpack.c.h.b16 %v263
  %v1329 = vunpack.c.l.b16 %v264
  %v1330 = vunpack.c.l.b16 %v265
  %v1331 = vunpack.c.h.b16 %v265
  %v1332 = vunpack.c.l.b16 %v266
  %v1333 = vunpack.c.l.b16 %v267
  %v1334 = vunpack.c.h.b16 %v267
  %v1335 = vunpack.c.l.b16 %v268
  %v1336 = vunpack.c.l.b16 %v269
  %v1337 = vunpack.c.h.b16 %v269
  %v1338 = vunpack.c.l.b16 %v270
  %v1339 = vunpack.c.l.b16 %v271
  %v1340 = vunpack.c.h.b16 %v271
  %v1341 = vunpack.c.l.b16 %v272
  %v1342 = vunpack.c.l.b16 %v273
  %v1343 = vunpack.c.h.b16 %v273
  %v1344 = vunpack.c.l.b16 %v274
  %v1345 = vunpack.c.l.b16 %v275
  %v1346 = vunpack.c.h.b16 %v275
  %v1347 = vunpack.c.l.b16 %v276
  %v1348 = vunpack.c.l.b16 %v277
  %v1349 = vunpack.c.h.b16 %v277
  %v1350 = vunpack.c.l.b16 %v278
  %v1351 = vunpack.c.l.b16 %v279
  %v1352 = vunpack.c.h.b16 %v279
  %v1353 = vunpack.c.l.b16 %v280
  %v1354 = vunpack.c.l.b16 %v281
  %v1355 = vunpack.c.h.b16 %v281
  %v1356 = vunpack.c.l.b16 %v282
  %v1357 = vunpack.c.l.b16 %v283
  %v1358 = vunpack.c.h.b16 %v283
  %v1359 = vunpack.c.l.b16 %v284
  %v1360 = vunpack.c.l.b16 %v285
  %v1361 = vunpack.c.h.b16 %v285
  %v1362 = vunpack.c.l.b16 %v286
  %v1363 = vunpack.c.l.b16 %v287
  %v1364 = vunpack.c.h.b16 %v287
  %v1365 = vunpack.c.l.b16 %v288
  %v1366 = vunpack.c.l.b16 %v289
  %v1367 = vunpack.c.h.b16 %v289
  %v1368 = vunpack.c.l.b16 %v290
  %v1369 = vunpack.c.l.b16 %v291
  %v1370 = vunpack.c.h.b16 %v291
  %v1371 = vunpack.c.l.b16 %v292
  %v1372 = vunpack.c.l.b16 %v293
  %v1373 = vunpack.c.h.b16 %v293
  %v1374 = vunpack.c.l.b16 %v294
  %v1375 = vunpack.c.l.b16 %v295
  %v1376 = vunpack.c.h.b16 %v295
  %v1377 = vunpack.c.l.b16 %v296
  %v1378 = vunpack.c.l.b16 %v297
  %v1379 = vunpack.c.h.b16 %v297
  %v1380 = vunpack.c.l.b16 %v298
  %v1381 = vunpack.c.l.b16 %v299
  %v1382 = vunpack.c.h.b16 %v299
  %v1383 = vunpack.c.l.b16 %v300
  %v1384 = vunpack.c.l.b16 %v301
  %v1385 = vunpack.c.h.b16 %v301
  %v1386 = vunpack.c.l.b16 %v302
  %v1387 = vunpack.c.l.b16 %v303
  %v1388 = vunpack.c.h.b16 %v303
  %v1389 = vunpack.c.l.b16 %v304
  %v1390 = vunpack.c.l.b16 %v305
  %v1391 = vunpack.c.h.b16 %v305
  %v1392 = vunpack.c.l.b16 %v306
  %v1393 = vunpack.c.l.b16 %v307
  %v1394 = vunpack.c.h.b16 %v307
  %v1395 = vunpack.c.l.b16 %v308
  %v1396 = vunpack.c.l.b16 %v309
  %v1397 = vunpack.c.h.b16 %v309
  %v1398 = vunpack.c.l.b16 %v310
  %v1399 = vunpack.c.l.b16 %v311
  %v1400 = vunpack.c.h.b16 %v311
  %v1401 = vunpack.c.l.b16 %v312
  %v1402 = vunpack.c.l.b16 %v313
  %v1403 = vunpack.c.h.b16 %v313
  %v1404 = vunpack.c.l.b16 %v314
  %v1405 = vunpack.c.l.b16 %v315
  %v1406 = vunpack.c.h.b16 %v315
  %v1407 = vunpack.c.l.b16 %v316
  %v1408 = vunpack.c.l.b16 %v317
  %v1409 = vunpack.c.h.b16 %v317
  %v1410 = vunpack.c.l.b16 %v318
  %v1411 = vunpack.c.l.b16 %v319
  %v1412 = vunpack.c.h.b16 %v319
  %v1413 = vunpack.c.l.b16 %v320
  %v1414 = vunpack.c.l.b16 %v321
  %v1415 = vunpack.c.h.b16 %v321
  %v1416 = vunpack.c.l.b16 %v322
  %v1417 = vunpack.c.l.b16 %v323
  %v1418 = vunpack.c.h.b16 %v323
  %v1419 = vunpack.c.l.b16 %v324
  %v1420 = vunpack.c.l.b16 %v325
  %v1421 = vunpack.c.h.b16 %v325
  %v1422 = vunpack.c.l.b16 %v326
  %v1423 = vunpack.c.l.b16 %v327
  %v1424 = vunpack.c.h.b16 %v327
  %v1425 = vunpack.c.l.b16 %v328
  %v1426 = vunpack.c.l.b16 %v329
  %v1427 = vunpack.c.h.b16 %v329
  %v1428 = vunpack.c.l.b16 %v330
  %v1429 = vunpack.c.l.b16 %v331
  %v1430 = vunpack.c.h.b16 %v331
  %v1431 = vunpack.c.l.b16 %v332
  %v1432 = vunpack.c.l.b16 %v333
  %v1433 = vunpack.c.h.b16 %v333
  %v1434 = vunpack.c.l.b16 %v334
  %v1435 = vunpack.c.l.b16 %v335
  %v1436 = vunpack.c.h.b16 %v335
  %v1437 = vunpack.c.l.b16 %v336
  %v1438 = vunpack.c.l.b16 %v337
  %v1439 = vunpack.c.h.b16 %v337
  %v1440 = vunpack.c.l.b16 %v338
  %v1441 = vunpack.c.l.b16 %v339
  %v1442 = vunpack.c.h.b16 %v339
  %v1443 = vunpack.c.l.b16 %v340
  %v1444 = vunpack.c.l.b16 %v341
  %v1445 = vunpack.c.h.b16 %v341
  %v1446 = vunpack.c.l.b16 %v342
  %v1447 = vunpack.c.l.b16 %v343
  %v1448 = vunpack.c.h.b16 %v343
  %v1449 = vunpack.c.l.b16 %v344
  %v1450 = vunpack.c.l.b16 %v345
  %v1451 = vunpack.c.h.b16 %v345
  %v1452 = vunpack.c.l.b16 %v346
  %v1453 = vunpack.c.l.b16 %v347
  %v1454 = vunpack.c.h.b16 %v347
  %v1455 = vunpack.c.l.b16 %v348
  %v1456 = vunpack.c.l.b16 %v349
  %v1457 = vunpack.c.h.b16 %v349
  %v1458 = vunpack.c.l.b16 %v350
  %v1459 = vunpack.c.l.b16 %v351
  %v1460 = vunpack.c.h.b16 %v351
  %v1461 = vunpack.c.l.b16 %v352
  %v1462 = vunpack.c.l.b16 %v353
  %v1463 = vunpack.c.h.b16 %v353
  %v1464 = vunpack.c.l.b16 %v354
  %v1465 = vunpack.c.l.b16 %v355
  %v1466 = vunpack.c.h.b16 %v355
  %v1467 = vunpack.c.l.b16 %v356
  %v1468 = vunpack.c.l.b16 %v357
  %v1469 = vunpack.c.h.b16 %v357
  %v1470 = vunpack.c.l.b16 %v358
  %v1471 = vunpack.c.l.b16 %v359
  %v1472 = vunpack.c.h.b16 %v359
  %v1473 = vunpack.c.l.b16 %v360
  %v1474 = vunpack.c.l.b16 %v361
  %v1475 = vunpack.c.h.b16 %v361
  %v1476 = vunpack.c.l.b16 %v362
  %v1477 = vunpack.c.l.b16 %v363
  %v1478 = vunpack.c.h.b16 %v363
  %v1479 = vunpack.c.l.b16 %v364
  %v1480 = vunpack.c.l.b16 %v365
  %v1481 = vunpack.c.h.b16 %v365
  %v1482 = vunpack.c.l.b16 %v366
  %v1483 = vunpack.c.l.b16 %v367
  %v1484 = vunpack.c.h.b16 %v367
  %v1485 = vunpack.c.l.b16 %v368
  %v1486 = vunpack.c.l.b16 %v369
  %v1487 = vunpack.c.h.b16 %v369
  %v1488 = vunpack.c.l.b16 %v370
  %v1489 = vunpack.c.l.b16 %v371
  %v1490 = vunpack.c.h.b16 %v371
  %v1491 = vunpack.c.l.b16 %v372
  %v1492 = vunpack.c.l.b16 %v373
  %v1493 = vunpack.c.h.b16 %v373
  %v1494 = vunpack.c.l.b16 %v374
  %v1495 = vunpack.c.l.b16 %v375
  %v1496 = vunpack.c.h.b16 %v375
  %v1497 = vunpack.c.l.b16 %v376
  %v1498 = vunpack.c.l.b16 %v377
  %v1499 = vunpack.c.h.b16 %v377
  %v1500 = vunpack.c.l.b16 %v378
  %v1501 = vunpack.c.l.b16 %v379
  %v1502 = vunpack.c.h.b16 %v379
  %v1503 = vunpack.c.l.b16 %v380
  %v1504 = vunpack.c.l.b16 %v381
  %v1505 = vunpack.c.h.b16 %v381
  %v1506 = vunpack.c.l.b16 %v382
  %v1507 = vunpack.c.l.b16 %v383
  %v1508 = vunpack.c.h.b16 %v383
  %v1509 = vunpack.c.l.b16 %v384
  %v1510 = vunpack.c.l.b16 %v385
  %v1511 = vunpack.c.h.b16 %v385
  %v1512 = vunpack.c.l.b16 %v386
  %v1513 = vunpack.c.l.b16 %v387
  %v1514 = vunpack.c.h.b16 %v387
  %v1515 = vunpack.c.l.b16 %v388
  %v1516 = vunpack.c.l.b16 %v389
  %v1517 = vunpack.c.h.b16 %v389
  %v1518 = vunpack.c.l.b16 %v390
  %v1519 = vunpack.c.l.b16 %v391
  %v1520 = vunpack.c.h.b16 %v391
  %v1521 = vunpack.c.l.b16 %v392
  %v1522 = vunpack.c.l.b16 %v393
  %v1523 = vunpack.c.h.b16 %v393
  %v1524 = vunpack.c.l.b16 %v394
  %v1525 = vunpack.c.l.b16 %v395
  %v1526 = vunpack.c.h.b16 %v395
  %v1527 = vunpack.c.l.b16 %v396
  %v1528 = vunpack.c.l.b16 %v397
  %v1529 = vunpack.c.h.b16 %v397
  %v1530 = vunpack.c.l.b16 %v398
  %v1531 = vunpack.c.l.b16 %v399
  %v1532 = vunpack.c.h.b16 %v399
  %v1533 = vunpack.c.l.b16 %v400
  %v1534 = vunpack.c.l.b16 %v401
  %v1535 = vunpack.c.h.b16 %v401
  %v1536 = vunpack.c.l.b16 %v402
  %v1537 = vunpack.c.l.b16 %v403
  %v1538 = vunpack.c.h.b16 %v403
  %v1539 = vunpack.c.l.b16 %v404
  %v1540 = vunpack.c.l.b16 %v405
  %v1541 = vunpack.c.h.b16 %v405
  %v1542 = vunpack.c.l.b16 %v406
  %v1543 = vunpack.c.l.b16 %v407
  %v1544 = vunpack.c.h.b16 %v407
  %v1545 = vunpack.c.l.b16 %v408
  %v1546 = vunpack.c.l.b16 %v409
  %v1547 = vunpack.c.h.b16 %v409
  %v1548 = vunpack.c.l.b16 %v410
  %v1549 = vunpack.c.l.b16 %v411
  %v1550 = vunpack.c.h.b16 %v411
  %v1551 = vunpack.c.l.b16 %v412
  %v1552 = vunpack.c.l.b16 %v413
  %v1553 = vunpack.c.h.b16 %v413
  %v1554 = vunpack.c.l.b16 %v414
  %v1555 = vunpack.c.l.b16 %v415
  %v1556 = vunpack.c.h.b16 %v415
  %v1557 = vunpack.c.l.b16 %v416
  %v1558 = vunpack.c.l.b16 %v417
  %v1559 = vunpack.c.h.b16 %v417
  %v1560 = vunpack.c.l.b16 %v418
  %v1561 = vunpack.c.l.b16 %v419
  %v1562 = vunpack.c.h.b16 %v419
  %v1563 = vunpack.c.l.b16 %v420
  %v1564 = vunpack.c.l.b16 %v421
  %v1565 = vunpack.c.h.b16 %v421
  %v1566 = vunpack.c.l.b16 %v422
  %v1567 = vunpack.c.l.b16 %v423
  %v1568 = vunpack.c.h.b16 %v423
  %v1569 = vunpack.c.l.b16 %v424
  %v1570 = vunpack.c.l.b16 %v425
  %v1571 = vunpack.c.h.b16 %v425
  %v1572 = vunpack.c.l.b16 %v426
  %v1573 = vunpack.c.l.b16 %v427
  %v1574 = vunpack.c.h.b16 %v427
  %v1575 = vunpack.c.l.b16 %v428
  %v1576 = vunpack.c.l.b16 %v429
  %v1577 = vunpack.c.h.b16 %v429
  %v1578 = vunpack.c.l.b16 %v430
  %v1579 = vunpack.c.l.b16 %v431
  %v1580 = vunpack.c.h.b16 %v431
  %v1581 = vunpack.c.l.b16 %v432
  %v1582 = vunpack.c.l.b16 %v433
  %v1583 = vunpack.c.h.b16 %v433
  %v1584 = vunpack.c.l.b16 %v434
  %v1585 = vunpack.c.l.b16 %v435
  %v1586 = vunpack.c.h.b16 %v435
  %v1587 = vunpack.c.l.b16 %v436
  %v1588 = vunpack.c.l.b16 %v437
  %v1589 = vunpack.c.h.b16 %v437
  %v1590 = vunpack.c.l.b16 %v438
  %v1591 = vunpack.c.l.b16 %v439
  %v1592 = vunpack.c.h.b16 %v439
  %v1593 = vunpack.c.l.b16 %v440
  %v1594 = vunpack.c.l.b16 %v441
  %v1595 = vunpack.c.h.b16 %v441
  %v1596 = vunpack.c.l.b16 %v442
  %v1597 = vunpack.c.l.b16 %v443
  %v1598 = vunpack.c.h.b16 %v443
  %v1599 = vunpack.c.l.b16 %v444
  %v1600 = vunpack.c.l.b16 %v445
  %v1601 = vunpack.c.h.b16 %v445
  %v1602 = vunpack.c.l.b16 %v446
  %v1603 = vunpack.c.l.b16 %v447
  %v1604 = vunpack.c.h.b16 %v447
  %v1605 = vunpack.c.l.b16 %v448
  %v1606 = vunpack.c.l.b16 %v449
  %v1607 = vunpack.c.h.b16 %v449
  %v1608 = vunpack.c.l.b16 %v450
  %v1609 = vunpack.c.l.b16 %v451
  %v1610 = vunpack.c.h.b16 %v451
  %v1611 = vunpack.c.l.b16 %v452
  %v1612 = vunpack.c.l.b16 %v453
  %v1613 = vunpack.c.h.b16 %v453
  %v1614 = vunpack.c.l.b16 %v454
  %v1615 = vunpack.c.l.b16 %v455
  %v1616 = vunpack.c.h.b16 %v455
  %v1617 = vunpack.c.l.b16 %v456
  %v1618 = vunpack.c.l.b16 %v457
  %v1619 = vunpack.c.h.b16 %v457
  %v1620 = vunpack.c.l.b16 %v458
  %v1621 = vunpack.c.l.b16 %v459
  %v1622 = vunpack.c.h.b16 %v459
  %v1623 = vunpack.c.l.b16 %v460
  %v1624 = vunpack.c.l.b16 %v461
  %v1625 = vunpack.c.h.b16 %v461
  %v1626 = vunpack.c.l.b16 %v462
  %v1627 = vunpack.c.l.b16 %v463
  %v1628 = vunpack.c.h.b16 %v463
  %v1629 = vunpack.c.l.b16 %v464
  %v1630 = vpack.c.b16 %v958, %v955
  %v1631 = vpack.c.b16 %v959, %v956
  %v1632 = vpack.c.b16 %v960, %v957
  %v1633 = vpack.c.b16 %v964, %v961
  %v1634 = vpack.c.b16 %v965, %v962
  %v1635 = vpack.c.b16 %v966, %v963
  %v1636 = vpack.c.b16 %v970, %v967
  %v1637 = vpack.c.b16 %v971, %v968
  %v1638 = vpack.c.b16 %v972, %v969
  %v1639 = vpack.c.b16 %v976, %v973
  %v1640 = vpack.c.b16 %v977, %v974
  %v1641 = vpack.c.b16 %v978, %v975
  %v1642 = vpack.c.b16 %v982, %v979
  %v1643 = vpack.c.b16 %v983, %v980
  %v1644 = vpack.c.b16 %v984, %v981
  %v1645 = vpack.c.b16 %v988, %v985
  %v1646 = vpack.c.b16 %v989, %v986
  %v1647 = vpack.c.b16 %v990, %v987
  %v1648 = vpack.c.b16 %v994, %v991
  %v1649 = vpack.c.b16 %v995, %v992
  %v1650 = vpack.c.b16 %v996, %v993
  %v1651 = vpack.c.b16 %v1000, %v997
  %v1652 = vpack.c.b16 %v1001, %v998
  %v1653 = vpack.c.b16 %v1002, %v999
  %v1654 = vpack.c.b16 %v1006, %v1003
  %v1655 = vpack.c.b16 %v1007, %v1004
  %v1656 = vpack.c.b16 %v1008, %v1005
  %v1657 = vpack.c.b16 %v1012, %v1009
  %v1658 = vpack.c.b16 %v1013, %v1010
  %v1659 = vpack.c.b16 %v1014, %v1011
  %v1660 = vpack.c.b16 %v1018, %v1015
  %v1661 = vpack.c.b16 %v1019, %v1016
  %v1662 = vpack.c.b16 %v1020, %v1017
  %v1663 = vpack.c.b16 %v1024, %v1021
  %v1664 = vpack.c.b16 %v1025, %v1022
  %v1665 = vpack.c.b16 %v1026, %v1023
  %v1666 = vpack.c.b16 %v1030, %v1027
  %v1667 = vpack.c.b16 %v1031, %v1028
  %v1668 = vpack.c.b16 %v1032, %v1029
  %v1669 = vpack.c.b16 %v1036, %v1033
  %v1670 = vpack.c.b16 %v1037, %v1034
  %v1671 = vpack.c.b16 %v1038, %v1035
  %v1672 = vpack.c.b16 %v1042, %v1039
  %v1673 = vpack.c.b16 %v1043, %v1040
  %v1674 = vpack.c.b16 %v1044, %v1041
  %v1675 = vpack.c.b16 %v1048, %v1045
  %v1676 = vpack.c.b16 %v1049, %v1046
  %v1677 = vpack.c.b16 %v1050, %v1047
  %v1678 = vpack.c.b16 %v1054, %v1051
  %v1679 = vpack.c.b16 %v1055, %v1052
  %v1680 = vpack.c.b16 %v1056, %v1053
  %v1681 = vpack.c.b16 %v1060, %v1057
  %v1682 = vpack.c.b16 %v1061, %v1058
  %v1683 = vpack.c.b16 %v1062, %v1059
  %v1684 = vpack.c.b16 %v1066, %v1063
  %v1685 = vpack.c.b16 %v1067, %v1064
  %v1686 = vpack.c.b16 %v1068, %v1065
  %v1687 = vpack.c.b16 %v1072, %v1069
  %v1688 = vpack.c.b16 %v1073, %v1070
  %v1689 = vpack.c.b16 %v1074, %v1071
  %v1690 = vpack.c.b16 %v1078, %v1075
  %v1691 = vpack.c.b16 %v1079, %v1076
  %v1692 = vpack.c.b16 %v1080, %v1077
  %v1693 = vpack.c.b16 %v1084, %v1081
  %v1694 = vpack.c.b16 %v1085, %v1082
  %v1695 = vpack.c.b16 %v1086, %v1083
  %v1696 = vpack.c.b16 %v1090, %v1087
  %v1697 = vpack.c.b16 %v1091, %v1088
  %v1698 = vpack.c.b16 %v1092, %v1089
  %v1699 = vpack.c.b16 %v1096, %v1093
  %v1700 = vpack.c.b16 %v1097, %v1094
  %v1701 = vpack.c.b16 %v1098, %v1095
  %v1702 = vpack.c.b16 %v1102, %v1099
  %v1703 = vpack.c.b16 %v1103, %v1100
  %v1704 = vpack.c.b16 %v1104, %v1101
  %v1705 = vpack.c.b16 %v1108, %v1105
  %v1706 = vpack.c.b16 %v1109, %v1106
  %v1707 = vpack.c.b16 %v1110, %v1107
  %v1708 = vpack.c.b16 %v1114, %v1111
  %v1709 = vpack.c.b16 %v1115, %v1112
  %v1710 = vpack.c.b16 %v1116, %v1113
  %v1711 = vpack.c.b16 %v1120, %v1117
  %v1712 = vpack.c.b16 %v1121, %v1118
  %v1713 = vpack.c.b16 %v1122, %v1119
  %v1714 = vpack.c.b16 %v1126, %v1123
  %v1715 = vpack.c.b16 %v1127, %v1124
  %v1716 = vpack.c.b16 %v1128, %v1125
  %v1717 = vpack.c.b16 %v1132, %v1129
  %v1718 = vpack.c.b16 %v1133, %v1130
  %v1719 = vpack.c.b16 %v1134, %v1131
  %v1720 = vpack.c.b16 %v1138, %v1135
  %v1721 = vpack.c.b16 %v1139, %v1136
  %v1722 = vpack.c.b16 %v1140, %v1137
  %v1723 = vpack.c.b16 %v1144, %v1141
  %v1724 = vpack.c.b16 %v1145, %v1142
  %v1725 = vpack.c.b16 %v1146, %v1143
  %v1726 = vpack.c.b16 %v1150, %v1147
  %v1727 = vpack.c.b16 %v1151, %v1148
  %v1728 = vpack.c.b16 %v1152, %v1149
  %v1729 = vpack.c.b16 %v1156, %v1153
  %v1730 = vpack.c.b16 %v1157, %v1154
  %v1731 = vpack.c.b16 %v1158, %v1155
  %v1732 = vpack.c.b16 %v1162, %v1159
  %v1733 = vpack.c.b16 %v1163, %v1160
  %v1734 = vpack.c.b16 %v1164, %v1161
  %v1735 = vpack.c.b16 %v1168, %v1165
  %v1736 = vpack.c.b16 %v1169, %v1166
  %v1737 = vpack.c.b16 %v1170, %v1167
  %v1738 = vpack.c.b16 %v1174, %v1171
  %v1739 = vpack.c.b16 %v1175, %v1172
  %v1740 = vpack.c.b16 %v1176, %v1173
  %v1741 = vpack.c.b16 %v1180, %v1177
  %v1742 = vpack.c.b16 %v1181, %v1178
  %v1743 = vpack.c.b16 %v1182, %v1179
  %v1744 = vpack.c.b16 %v1186, %v1183
  %v1745 = vpack.c.b16 %v1187, %v1184
  %v1746 = vpack.c.b16 %v1188, %v1185
  %v1747 = vpack.c.b16 %v1192, %v1189
  %v1748 = vpack.c.b16 %v1193, %v1190
  %v1749 = vpack.c.b16 %v1194, %v1191
  %v1750 = vpack.c.b16 %v1198, %v1195
  %v1751 = vpack.c.b16 %v1199, %v1196
  %v1752 = vpack.c.b16 %v1200, %v1197
  %v1753 = vpack.c.b16 %v1204, %v1201
  %v1754 = vpack.c.b16 %v1205, %v1202
  %v1755 = vpack.c.b16 %v1206, %v1203
  %v1756 = vpack.c.b16 %v1210, %v1207
  %v1757 = vpack.c.b16 %v1211, %v1208
  %v1758 = vpack.c.b16 %v1212, %v1209
  %v1759 = vpack.c.b16 %v1216, %v1213
  %v1760 = vpack.c.b16 %v1217, %v1214
  %v1761 = vpack.c.b16 %v1218, %v1215
  %v1762 = vpack.c.b16 %v1222, %v1219
  %v1763 = vpack.c.b16 %v1223, %v1220
  %v1764 = vpack.c.b16 %v1224, %v1221
  %v1765 = vpack.c.b16 %v1228, %v1225
  %v1766 = vpack.c.b16 %v1229, %v1226
  %v1767 = vpack.c.b16 %v1230, %v1227
  %v1768 = vpack.c.b16 %v1234, %v1231
  %v1769 = vpack.c.b16 %v1235, %v1232
  %v1770 = vpack.c.b16 %v1236, %v1233
  %v1771 = vpack.c.b16 %v1240, %v1237
  %v1772 = vpack.c.b16 %v1241, %v1238
  %v1773 = vpack.c.b16 %v1242, %v1239
  %v1774 = vpack.c.b16 %v1246, %v1243
  %v1775 = vpack.c.b16 %v1247, %v1244
  %v1776 = vpack.c.b16 %v1248, %v1245
  %v1777 = vpack.c.b16 %v1252, %v1249
  %v1778 = vpack.c.b16 %v1253, %v1250
  %v1779 = vpack.c.b16 %v1254, %v1251
  %v1780 = vpack.c.b16 %v1258, %v1255
  %v1781 = vpack.c.b16 %v1259, %v1256
  %v1782 = vpack.c.b16 %v1260, %v1257
  %v1783 = vpack.c.b16 %v1264, %v1261
  %v1784 = vpack.c.b16 %v1265, %v1262
  %v1785 = vpack.c.b16 %v1266, %v1263
  %v1786 = vpack.c.b16 %v1270, %v1267
  %v1787 = vpack.c.b16 %v1271, %v1268
  %v1788 = vpack.c.b16 %v1272, %v1269
  %v1789 = vpack.c.b16 %v1276, %v1273
  %v1790 = vpack.c.b16 %v1277, %v1274
  %v1791 = vpack.c.b16 %v1278, %v1275
  %v1792 = vpack.c.b16 %v1282, %v1279
  %v1793 = vpack.c.b16 %v1283, %v1280
  %v1794 = vpack.c.b16 %v1284, %v1281
  %v1795 = vpack.c.b16 %v1288, %v1285
  %v1796 = vpack.c.b16 %v1289, %v1286
  %v1797 = vpack.c.b16 %v1290, %v1287
  %v1798 = vpack.c.b16 %v1294, %v1291
  %v1799 = vpack.c.b16 %v1295, %v1292
  %v1800 = vpack.c.b16 %v1296, %v1293
  %v1801 = vpack.c.b16 %v1300, %v1297
  %v1802 = vpack.c.b16 %v1301, %v1298
  %v1803 = vpack.c.b16 %v1302, %v1299
  %v1804 = vpack.c.b16 %v1306, %v1303
  %v1805 = vpack.c.b16 %v1307, %v1304
  %v1806 = vpack.c.b16 %v1308, %v1305
  %v1807 = vpack.c.b16 %v1312, %v1309
  %v1808 = vpack.c.b16 %v1313, %v1310
  %v1809 = vpack.c.b16 %v1314, %v1311
  %v1810 = vpack.c.b16 %v1318, %v1315
  %v1811 = vpack.c.b16 %v1319, %v1316
  %v1812 = vpack.c.b16 %v1320, %v1317
  %v1813 = vpack.c.b16 %v1324, %v1321
  %v1814 = vpack.c.b16 %v1325, %v1322
  %v1815 = vpack.c.b16 %v1326, %v1323
  %v1816 = vpack.c.b16 %v1330, %v1327
  %v1817 = vpack.c.b16 %v1331, %v1328
  %v1818 = vpack.c.b16 %v1332, %v1329
  %v1819 = vpack.c.b16 %v1336, %v1333
  %v1820 = vpack.c.b16 %v1337, %v1334
  %v1821 = vpack.c.b16 %v1338, %v1335
  %v1822 = vpack.c.b16 %v1342, %v1339
  %v1823 = vpack.c.b16 %v1343, %v1340
  %v1824 = vpack.c.b16 %v1344, %v1341
  %v1825 = vpack.c.b16 %v1348, %v1345
  %v1826 = vpack.c.b16 %v1349, %v1346
  %v1827 = vpack.c.b16 %v1350, %v1347
  %v1828 = vpack.c.b16 %v1354, %v1351
  %v1829 = vpack.c.b16 %v1355, %v1352
  %v1830 = vpack.c.b16 %v1356, %v1353
  %v1831 = vpack.c.b16 %v1360, %v1357
  %v1832 = vpack.c.b16 %v1361, %v1358
  %v1833 = vpack.c.b16 %v1362, %v1359
  %v1834 = vpack.c.b16 %v1366, %v1363
  %v1835 = vpack.c.b16 %v1367, %v1364
  %v1836 = vpack.c.b16 %v1368, %v1365
  %v1837 = vpack.c.b16 %v1372, %v1369
  %v1838 = vpack.c.b16 %v1373, %v1370
  %v1839 = vpack.c.b16 %v1374, %v1371
  %v1840 = vpack.c.b16 %v1378, %v1375
  %v1841 = vpack.c.b16 %v1379, %v1376
  %v1842 = vpack.c.b16 %v1380, %v1377
  %v1843 = vpack.c.b16 %v1384, %v1381
  %v1844 = vpack.c.b16 %v1385, %v1382
  %v1845 = vpack.c.b16 %v1386, %v1383
  %v1846 = vpack.c.b16 %v1390, %v1387
  %v1847 = vpack.c.b16 %v1391, %v1388
  %v1848 = vpack.c.b16 %v1392, %v1389
  %v1849 = vpack.c.b16 %v1396, %v1393
  %v1850 = vpack.c.b16 %v1397, %v1394
  %v1851 = vpack.c.b16 %v1398, %v1395
  %v1852 = vpack.c.b16 %v1402, %v1399
  %v1853 = vpack.c.b16 %v1403, %v1400
  %v1854 = vpack.c.b16 %v1404, %v1401
  %v1855 = vpack.c.b16 %v1408, %v1405
  %v1856 = vpack.c.b16 %v1409, %v1406
  %v1857 = vpack.c.b16 %v1410, %v1407
  %v1858 = vpack.c.b16 %v1414, %v1411
  %v1859 = vpack.c.b16 %v1415, %v1412
  %v1860 = vpack.c.b16 %v1416, %v1413
  %v1861 = vpack.c.b16 %v1420, %v1417
  %v1862 = vpack.c.b16 %v1421, %v1418
  %v1863 = vpack.c.b16 %v1422, %v1419
  %v1864 = vpack.c.b16 %v1426, %v1423
  %v1865 = vpack.c.b16 %v1427, %v1424
  %v1866 = vpack.c.b16 %v1428, %v1425
  %v1867 = vpack.c.b16 %v1432, %v1429
  %v1868 = vpack.c.b16 %v1433, %v1430
  %v1869 = vpack.c.b16 %v1434, %v1431
  %v1870 = vpack.c.b16 %v1438, %v1435
  %v1871 = vpack.c.b16 %v1439, %v1436
  %v1872 = vpack.c.b16 %v1440, %v1437
  %v1873 = vpack.c.b16 %v1444, %v1441
  %v1874 = vpack.c.b16 %v1445, %v1442
  %v1875 = vpack.c.b16 %v1446, %v1443
  %v1876 = vpack.c.b16 %v1450, %v1447
  %v1877 = vpack.c.b16 %v1451, %v1448
  %v1878 = vpack.c.b16 %v1452, %v1449
  %v1879 = vpack.c.b16 %v1456, %v1453
  %v1880 = vpack.c.b16 %v1457, %v1454
  %v1881 = vpack.c.b16 %v1458, %v1455
  %v1882 = vpack.c.b16 %v1462, %v1459
  %v1883 = vpack.c.b16 %v1463, %v1460
  %v1884 = vpack.c.b16 %v1464, %v1461
  %v1885 = vpack.c.b16 %v1468, %v1465
  %v1886 = vpack.c.b16 %v1469, %v1466
  %v1887 = vpack.c.b16 %v1470, %v1467
  %v1888 = vpack.c.b16 %v1474, %v1471
  %v1889 = vpack.c.b16 %v1475, %v1472
  %v1890 = vpack.c.b16 %v1476, %v1473
  %v1891 = vpack.c.b16 %v1480, %v1477
  %v1892 = vpack.c.b16 %v1481, %v1478
  %v1893 = vpack.c.b16 %v1482, %v1479
  %v1894 = vpack.c.b16 %v1486, %v1483
  %v1895 = vpack.c.b16 %v1487, %v1484
  %v1896 = vpack.c.b16 %v1488, %v1485
  %v1897 = vpack.c.b16 %v1492, %v1489
  %v1898 = vpack.c.b16 %v1493, %v1490
  %v1899 = vpack.c.b16 %v1494, %v1491
  %v1900 = vpack.c.b16 %v1498, %v1495
  %v1901 = vpack.c.b16 %v1499, %v1496
  %v1902 = vpack.c.b16 %v1500, %v1497
  %v1903 = vpack.c.b16 %v1504, %v1501
  %v1904 = vpack.c.b16 %v1505, %v1502
  %v1905 = vpack.c.b16 %v1506, %v1503
  %v1906 = vpack.c.b16 %v1510, %v1507
  %v1907 = vpack.c.b16 %v1511, %v1508
  %v1908 = vpack.c.b16 %v1512, %v1509
  %v1909 = vpack.c.b16 %v1516, %v1513
  %v1910 = vpack.c.b16 %v1517, %v1514
  %v1911 = vpack.c.b16 %v1518, %v1515
  %v1912 = vpack.c.b16 %v1522, %v1519
  %v1913 = vpack.c.b16 %v1523, %v1520
  %v1914 = vpack.c.b16 %v1524, %v1521
  %v1915 = vpack.c.b16 %v1528, %v1525
  %v1916 = vpack.c.b16 %v1529, %v1526
  %v1917 = vpack.c.b16 %v1530, %v1527
  %v1918 = vpack.c.b16 %v1534, %v1531
  %v1919 = vpack.c.b16 %v1535, %v1532
  %v1920 = vpack.c.b16 %v1536, %v1533
  %v1921 = vpack.c.b16 %v1540, %v1537
  %v1922 = vpack.c.b16 %v1541, %v1538
  %v1923 = vpack.c.b16 %v1542, %v1539
  %v1924 = vpack.c.b16 %v1546, %v1543
  %v1925 = vpack.c.b16 %v1547, %v1544
  %v1926 = vpack.c.b16 %v1548, %v1545
  %v1927 = vpack.c.b16 %v1552, %v1549
  %v1928 = vpack.c.b16 %v1553, %v1550
  %v1929 = vpack.c.b16 %v1554, %v1551
  %v1930 = vpack.c.b16 %v1558, %v1555
  %v1931 = vpack.c.b16 %v1559, %v1556
  %v1932 = vpack.c.b16 %v1560, %v1557
  %v1933 = vpack.c.b16 %v1564, %v1561
  %v1934 = vpack.c.b16 %v1565, %v1562
  %v1935 = vpack.c.b16 %v1566, %v1563
  %v1936 = vpack.c.b16 %v1570, %v1567
  %v1937 = vpack.c.b16 %v1571, %v1568
  %v1938 = vpack.c.b16 %v1572, %v1569
  %v1939 = vpack.c.b16 %v1576, %v1573
  %v1940 = vpack.c.b16 %v1577, %v1574
  %v1941 = vpack.c.b16 %v1578, %v1575
  %v1942 = vpack.c.b16 %v1582, %v1579
  %v1943 = vpack.c.b16 %v1583, %v1580
  %v1944 = vpack.c.b16 %v1584, %v1581
  %v1945 = vpack.c.b16 %v1588, %v1585
  %v1946 = vpack.c.b16 %v1589, %v1586
  %v1947 = vpack.c.b16 %v1590, %v1587
  %v1948 = vpack.c.b16 %v1594, %v1591
  %v1949 = vpack.c.b16 %v1595, %v1592
  %v1950 = vpack.c.b16 %v1596, %v1593
  %v1951 = vpack.c.b16 %v1600, %v1597
  %v1952 = vpack.c.b16 %v1601, %v1598
  %v1953 = vpack.c.b16 %v1602, %v1599
  %v1954 = vpack.c.b16 %v1606, %v1603
  %v1955 = vpack.c.b16 %v1607, %v1604
  %v1956 = vpack.c.b16 %v1608, %v1605
  %v1957 = vpack.c.b16 %v1612, %v1609
  %v1958 = vpack.c.b16 %v1613, %v1610
  %v1959 = vpack.c.b16 %v1614, %v1611
  %v1960 = vpack.c.b16 %v1618, %v1615
  %v1961 = vpack.c.b16 %v1619, %v1616
  %v1962 = vpack.c.b16 %v1620, %v1617
  %v1963 = vpack.c.b16 %v1624, %v1621
  %v1964 = vpack.c.b16 %v1625, %v1622
  %v1965 = vpack.c.b16 %v1626, %v1623
  %v1966 = vpack.c.b16 %v1627, %v1627
  %v1967 = vpack.c.b16 %v1628, %v1628
  %v1968 = vpack.c.b16 %v1629, %v1629
  %v2231 = vunpack.c.l.b16 %v465
  %v2232 = vunpack.c.l.b16 %v466
  %v2233 = vunpack.c.l.b16 %v467
  %v2234 = vunpack.c.l.b16 %v468
  %v2235 = vunpack.c.l.b16 %v469
  %v2236 = vunpack.c.l.b16 %v470
  %v2237 = vunpack.c.l.b16 %v471
  %v2238 = vunpack.c.l.b16 %v472
  %v2239 = vunpack.c.l.b16 %v473
  %v2240 = vunpack.c.l.b16 %v474
  %v2241 = vunpack.c.l.b16 %v475
  %v2242 = vunpack.c.l.b16 %v476
  %v2243 = vunpack.c.l.b16 %v477
  %v2244 = vunpack.c.l.b16 %v478
  %v2245 = vunpack.c.l.b16 %v479
  %v2246 = vunpack.c.l.b16 %v480
  %v2247 = vunpack.c.l.b16 %v481
  %v2248 = vunpack.c.l.b16 %v482
  %v2249 = vunpack.c.l.b16 %v483
  %v2250 = vunpack.c.l.b16 %v484
  %v2251 = vunpack.c.l.b16 %v485
  %v2252 = vunpack.c.l.b16 %v486
  %v2253 = vunpack.c.l.b16 %v487
  %v2254 = vunpack.c.l.b16 %v488
  %v2255 = vunpack.c.l.b16 %v489
  %v2256 = vunpack.c.l.b16 %v490
  %v2257 = vunpack.c.l.b16 %v491
  %v2258 = vunpack.c.l.b16 %v492
  %v2259 = vunpack.c.l.b16 %v493
  %v2260 = vunpack.c.l.b16 %v494
  %v2261 = vunpack.c.l.b16 %v495
  %v2262 = vunpack.c.l.b16 %v496
  %v2263 = vunpack.c.l.b16 %v497
  %v2264 = vunpack.c.l.b16 %v498
  %v2265 = vunpack.c.l.b16 %v499
  %v2266 = vunpack.c.l.b16 %v500
  %v2267 = vpack.c.b16 %v2232, %v2231
  %v2268 = vpack.c.b16 %v2234, %v2233
  %v2269 = vpack.c.b16 %v2236, %v2235
  %v2270 = vpack.c.b16 %v2238, %v2237
  %v2271 = vpack.c.b16 %v2240, %v2239
  %v2272 = vpack.c.b16 %v2242, %v2241
  %v2273 = vpack.c.b16 %v2244, %v2243
  %v2274 = vpack.c.b16 %v2246, %v2245
  %v2275 = vpack.c.b16 %v2248, %v2247
  %v2276 = vpack.c.b16 %v2250, %v2249
  %v2277 = vpack.c.b16 %v2252, %v2251
  %v2278 = vpack.c.b16 %v2254, %v2253
  %v2279 = vpack.c.b16 %v2256, %v2255
  %v2280 = vpack.c.b16 %v2258, %v2257
  %v2281 = vpack.c.b16 %v2260, %v2259
  %v2282 = vpack.c.b16 %v2262, %v2261
  %v2283 = vpack.c.b16 %v2264, %v2263
  %v2284 = vpack.c.b16 %v2266, %v2265
  %vm2303 = vcmask 261120
  %v2305 = vsel %vm2303, %v1632, 0
  %v2308 = vsel %vm2303, %v1635, 0
  %v2311 = vsel %vm2303, %v1638, 0
  %v2314 = vsel %vm2303, %v1641, 0
  %v2317 = vsel %vm2303, %v1644, 0
  %v2320 = vsel %vm2303, %v1647, 0
  %v2323 = vsel %vm2303, %v1650, 0
  %v2326 = vsel %vm2303, %v1653, 0
  %v2329 = vsel %vm2303, %v1656, 0
  %v2332 = vsel %vm2303, %v1659, 0
  %v2335 = vsel %vm2303, %v1662, 0
  %v2338 = vsel %vm2303, %v1665, 0
  %v2341 = vsel %vm2303, %v1668, 0
  %v2344 = vsel %vm2303, %v1671, 0
  %v2347 = vsel %vm2303, %v1674, 0
  %v2350 = vsel %vm2303, %v1677, 0
  %v2353 = vsel %vm2303, %v1680, 0
  %v2356 = vsel %vm2303, %v1683, 0
  %v2359 = vsel %vm2303, %v1686, 0
  %v2362 = vsel %vm2303, %v1689, 0
  %v2365 = vsel %vm2303, %v1692, 0
  %v2368 = vsel %vm2303, %v1695, 0
  %v2371 = vsel %vm2303, %v1698, 0
  %v2374 = vsel %vm2303, %v1701, 0
  %v2377 = vsel %vm2303, %v1704, 0
  %v2380 = vsel %vm2303, %v1707, 0
  %v2383 = vsel %vm2303, %v1710, 0
  %v2386 = vsel %vm2303, %v1713, 0
  %v2389 = vsel %vm2303, %v1716, 0
  %v2392 = vsel %vm2303, %v1719, 0
  %v2395 = vsel %vm2303, %v1722, 0
  %v2398 = vsel %vm2303, %v1725, 0
  %v2401 = vsel %vm2303, %v1728, 0
  %v2404 = vsel %vm2303, %v1731, 0
  %v2407 = vsel %vm2303, %v1734, 0
  %v2410 = vsel %vm2303, %v1737, 0
  %v2413 = vsel %vm2303, %v1740, 0
  %v2416 = vsel %vm2303, %v1743, 0
  %v2419 = vsel %vm2303, %v1746, 0
  %v2422 = vsel %vm2303, %v1749, 0
  %v2425 = vsel %vm2303, %v1752, 0
  %v2428 = vsel %vm2303, %v1755, 0
  %v2431 = vsel %vm2303, %v1758, 0
  %v2434 = vsel %vm2303, %v1761, 0
  %v2437 = vsel %vm2303, %v1764, 0
  %v2440 = vsel %vm2303, %v1767, 0
  %v2443 = vsel %vm2303, %v1770, 0
  %v2446 = vsel %vm2303, %v1773, 0
  %v2449 = vsel %vm2303, %v1776, 0
  %v2452 = vsel %vm2303, %v1779, 0
  %v2455 = vsel %vm2303, %v1782, 0
  %v2458 = vsel %vm2303, %v1785, 0
  %v2461 = vsel %vm2303, %v1788, 0
  %v2464 = vsel %vm2303, %v1791, 0
  %v2467 = vsel %vm2303, %v1794, 0
  %v2470 = vsel %vm2303, %v1797, 0
  %v2473 = vsel %vm2303, %v1800, 0
  %v2476 = vsel %vm2303, %v1803, 0
  %v2479 = vsel %vm2303, %v1806, 0
  %v2482 = vsel %vm2303, %v1809, 0
  %v2485 = vsel %vm2303, %v1812, 0
  %v2488 = vsel %vm2303, %v1815, 0
  %v2491 = vsel %vm2303, %v1818, 0
  %v2494 = vsel %vm2303, %v1821, 0
  %v2497 = vsel %vm2303, %v1824, 0
  %v2500 = vsel %vm2303, %v1827, 0
  %v2503 = vsel %vm2303, %v1830, 0
  %v2506 = vsel %vm2303, %v1833, 0
  %v2509 = vsel %vm2303, %v1836, 0
  %v2512 = vsel %vm2303, %v1839, 0
  %v2515 = vsel %vm2303, %v1842, 0
  %v2518 = vsel %vm2303, %v1845, 0
  %v2521 = vsel %vm2303, %v1848, 0
  %v2524 = vsel %vm2303, %v1851, 0
  %v2527 = vsel %vm2303, %v1854, 0
  %v2530 = vsel %vm2303, %v1857, 0
  %v2533 = vsel %vm2303, %v1860, 0
  %v2536 = vsel %vm2303, %v1863, 0
  %v2539 = vsel %vm2303, %v1866, 0
  %v2542 = vsel %vm2303, %v1869, 0
  %v2545 = vsel %vm2303, %v1872, 0
  %v2548 = vsel %vm2303, %v1875, 0
  %v2551 = vsel %vm2303, %v1878, 0
  %v2554 = vsel %vm2303, %v1881, 0
  %v2557 = vsel %vm2303, %v1884, 0
  %v2560 = vsel %vm2303, %v1887, 0
  %v2563 = vsel %vm2303, %v1890, 0
  %v2566 = vsel %vm2303, %v1893, 0
  %v2569 = vsel %vm2303, %v1896, 0
  %v2572 = vsel %vm2303, %v1899, 0
  %v2575 = vsel %vm2303, %v1902, 0
  %v2578 = vsel %vm2303, %v1905, 0
  %v2581 = vsel %vm2303, %v1908, 0
  %v2584 = vsel %vm2303, %v1911, 0
  %v2587 = vsel %vm2303, %v1914, 0
  %v2590 = vsel %vm2303, %v1917, 0
  %v2593 = vsel %vm2303, %v1920, 0
  %v2596 = vsel %vm2303, %v1923, 0
  %v2599 = vsel %vm2303, %v1926, 0
  %v2602 = vsel %vm2303, %v1929, 0
  %v2605 = vsel %vm2303, %v1932, 0
  %v2608 = vsel %vm2303, %v1935, 0
  %v2611 = vsel %vm2303, %v1938, 0
  %v2614 = vsel %vm2303, %v1941, 0
  %v2617 = vsel %vm2303, %v1944, 0
  %v2620 = vsel %vm2303, %v1947, 0
  %v2623 = vsel %vm2303, %v1950, 0
  %v2626 = vsel %vm2303, %v1953, 0
  %v2629 = vsel %vm2303, %v1956, 0
  %v2632 = vsel %vm2303, %v1959, 0
  %v2635 = vsel %vm2303, %v1962, 0
  %v2638 = vsel %vm2303, %v1965, 0
  %v2641 = vsel %vm2303, %v1968, 0
  %2643 = vmatpush.bf16.msra.mxu0 %v2274
  %2644 = vmatpush.bf16.msra.mxu0 %v2273
  %2645 = vmatpush.bf16.msra.mxu0 %v2272
  %2646 = vmatpush.bf16.msra.mxu0 %v2271
  %2647 = vmatpush.bf16.msra.mxu0 %v2270
  %2648 = vmatpush.bf16.msra.mxu0 %v2269
  %2649 = vmatpush.bf16.msra.mxu0 %v2268
  %2650 = vmatpush.bf16.msra.mxu0 %v2267
  %2651 = vmatmul.bf16.gmra.mxu0 %v1630
  %v2652 = vpop.f32.mrf.mxu0
  %v2653 = vadd.f32 %v503, %v2652
  %v2654 = vpop.f32.mrf.mxu0
  %v2655 = vadd.f32 %v503, %v2654
  %2656 = vmatmul.bf16.gmra.mxu0 %v1633
  %v2657 = vpop.f32.mrf.mxu0
  %v2658 = vadd.f32 %v503, %v2657
  %v2659 = vpop.f32.mrf.mxu0
  %v2660 = vadd.f32 %v503, %v2659
  %2661 = vmatmul.bf16.gmra.mxu0 %v1636
  %v2662 = vpop.f32.mrf.mxu0
  %v2663 = vadd.f32 %v503, %v2662
  %v2664 = vpop.f32.mrf.mxu0
  %v2665 = vadd.f32 %v503, %v2664
  %2666 = vmatmul.bf16.gmra.mxu0 %v1639
  %v2667 = vpop.f32.mrf.mxu0
  %v2668 = vadd.f32 %v503, %v2667
  %v2669 = vpop.f32.mrf.mxu0
  %v2670 = vadd.f32 %v503, %v2669
  %2671 = vmatmul.bf16.gmra.mxu0 %v1642
  %v2672 = vpop.f32.mrf.mxu0
  %v2673 = vadd.f32 %v503, %v2672
  %v2674 = vpop.f32.mrf.mxu0
  %v2675 = vadd.f32 %v503, %v2674
  %2676 = vmatmul.bf16.gmra.mxu0 %v1645
  %v2677 = vpop.f32.mrf.mxu0
  %v2678 = vadd.f32 %v503, %v2677
  %v2679 = vpop.f32.mrf.mxu0
  %v2680 = vadd.f32 %v503, %v2679
  %2681 = vmatmul.bf16.gmra.mxu0 %v1648
  %v2682 = vpop.f32.mrf.mxu0
  %v2683 = vadd.f32 %v503, %v2682
  %v2684 = vpop.f32.mrf.mxu0
  %v2685 = vadd.f32 %v503, %v2684
  %2686 = vmatmul.bf16.gmra.mxu0 %v1651
  %v2687 = vpop.f32.mrf.mxu0
  %v2688 = vadd.f32 %v503, %v2687
  %v2689 = vpop.f32.mrf.mxu0
  %v2690 = vadd.f32 %v503, %v2689
  %2691 = vmatmul.bf16.gmra.mxu0 %v1654
  %v2692 = vpop.f32.mrf.mxu0
  %v2693 = vadd.f32 %v503, %v2692
  %v2694 = vpop.f32.mrf.mxu0
  %v2695 = vadd.f32 %v503, %v2694
  %2696 = vmatmul.bf16.gmra.mxu0 %v1657
  %v2697 = vpop.f32.mrf.mxu0
  %v2698 = vadd.f32 %v503, %v2697
  %v2699 = vpop.f32.mrf.mxu0
  %v2700 = vadd.f32 %v503, %v2699
  %2701 = vmatmul.bf16.gmra.mxu0 %v1660
  %v2702 = vpop.f32.mrf.mxu0
  %v2703 = vadd.f32 %v503, %v2702
  %v2704 = vpop.f32.mrf.mxu0
  %v2705 = vadd.f32 %v503, %v2704
  %2706 = vmatmul.bf16.gmra.mxu0 %v1663
  %v2707 = vpop.f32.mrf.mxu0
  %v2708 = vadd.f32 %v503, %v2707
  %v2709 = vpop.f32.mrf.mxu0
  %v2710 = vadd.f32 %v503, %v2709
  %2711 = vmatmul.bf16.gmra.mxu0 %v1666
  %v2712 = vpop.f32.mrf.mxu0
  %v2713 = vadd.f32 %v503, %v2712
  %v2714 = vpop.f32.mrf.mxu0
  %v2715 = vadd.f32 %v503, %v2714
  %2716 = vmatmul.bf16.gmra.mxu0 %v1669
  %v2717 = vpop.f32.mrf.mxu0
  %v2718 = vadd.f32 %v503, %v2717
  %v2719 = vpop.f32.mrf.mxu0
  %v2720 = vadd.f32 %v503, %v2719
  %2721 = vmatmul.bf16.gmra.mxu0 %v1672
  %v2722 = vpop.f32.mrf.mxu0
  %v2723 = vadd.f32 %v503, %v2722
  %v2724 = vpop.f32.mrf.mxu0
  %v2725 = vadd.f32 %v503, %v2724
  %2726 = vmatmul.bf16.gmra.mxu0 %v1675
  %v2727 = vpop.f32.mrf.mxu0
  %v2728 = vadd.f32 %v503, %v2727
  %v2729 = vpop.f32.mrf.mxu0
  %v2730 = vadd.f32 %v503, %v2729
  %2731 = vmatmul.bf16.gmra.mxu0 %v1678
  %v2732 = vpop.f32.mrf.mxu0
  %v2733 = vadd.f32 %v503, %v2732
  %v2734 = vpop.f32.mrf.mxu0
  %v2735 = vadd.f32 %v503, %v2734
  %2736 = vmatmul.bf16.gmra.mxu0 %v1681
  %v2737 = vpop.f32.mrf.mxu0
  %v2738 = vadd.f32 %v503, %v2737
  %v2739 = vpop.f32.mrf.mxu0
  %v2740 = vadd.f32 %v503, %v2739
  %2741 = vmatmul.bf16.gmra.mxu0 %v1684
  %v2742 = vpop.f32.mrf.mxu0
  %v2743 = vadd.f32 %v503, %v2742
  %v2744 = vpop.f32.mrf.mxu0
  %v2745 = vadd.f32 %v503, %v2744
  %2746 = vmatmul.bf16.gmra.mxu0 %v1687
  %v2747 = vpop.f32.mrf.mxu0
  %v2748 = vadd.f32 %v503, %v2747
  %v2749 = vpop.f32.mrf.mxu0
  %v2750 = vadd.f32 %v503, %v2749
  %2751 = vmatmul.bf16.gmra.mxu0 %v1690
  %v2752 = vpop.f32.mrf.mxu0
  %v2753 = vadd.f32 %v503, %v2752
  %v2754 = vpop.f32.mrf.mxu0
  %v2755 = vadd.f32 %v503, %v2754
  %2756 = vmatmul.bf16.gmra.mxu0 %v1693
  %v2757 = vpop.f32.mrf.mxu0
  %v2758 = vadd.f32 %v503, %v2757
  %v2759 = vpop.f32.mrf.mxu0
  %v2760 = vadd.f32 %v503, %v2759
  %2761 = vmatmul.bf16.gmra.mxu0 %v1696
  %v2762 = vpop.f32.mrf.mxu0
  %v2763 = vadd.f32 %v503, %v2762
  %v2764 = vpop.f32.mrf.mxu0
  %v2765 = vadd.f32 %v503, %v2764
  %2766 = vmatmul.bf16.gmra.mxu0 %v1699
  %v2767 = vpop.f32.mrf.mxu0
  %v2768 = vadd.f32 %v503, %v2767
  %v2769 = vpop.f32.mrf.mxu0
  %v2770 = vadd.f32 %v503, %v2769
  %2771 = vmatmul.bf16.gmra.mxu0 %v1702
  %v2772 = vpop.f32.mrf.mxu0
  %v2773 = vadd.f32 %v503, %v2772
  %v2774 = vpop.f32.mrf.mxu0
  %v2775 = vadd.f32 %v503, %v2774
  %2776 = vmatmul.bf16.gmra.mxu0 %v1705
  %v2777 = vpop.f32.mrf.mxu0
  %v2778 = vadd.f32 %v503, %v2777
  %v2779 = vpop.f32.mrf.mxu0
  %v2780 = vadd.f32 %v503, %v2779
  %2781 = vmatmul.bf16.gmra.mxu0 %v1708
  %v2782 = vpop.f32.mrf.mxu0
  %v2783 = vadd.f32 %v503, %v2782
  %v2784 = vpop.f32.mrf.mxu0
  %v2785 = vadd.f32 %v503, %v2784
  %2786 = vmatmul.bf16.gmra.mxu0 %v1711
  %v2787 = vpop.f32.mrf.mxu0
  %v2788 = vadd.f32 %v503, %v2787
  %v2789 = vpop.f32.mrf.mxu0
  %v2790 = vadd.f32 %v503, %v2789
  %2791 = vmatmul.bf16.gmra.mxu0 %v1714
  %v2792 = vpop.f32.mrf.mxu0
  %v2793 = vadd.f32 %v503, %v2792
  %v2794 = vpop.f32.mrf.mxu0
  %v2795 = vadd.f32 %v503, %v2794
  %2796 = vmatmul.bf16.gmra.mxu0 %v1717
  %v2797 = vpop.f32.mrf.mxu0
  %v2798 = vadd.f32 %v503, %v2797
  %v2799 = vpop.f32.mrf.mxu0
  %v2800 = vadd.f32 %v503, %v2799
  %2801 = vmatmul.bf16.gmra.mxu0 %v1720
  %v2802 = vpop.f32.mrf.mxu0
  %v2803 = vadd.f32 %v503, %v2802
  %v2804 = vpop.f32.mrf.mxu0
  %v2805 = vadd.f32 %v503, %v2804
  %2806 = vmatmul.bf16.gmra.mxu0 %v1723
  %v2807 = vpop.f32.mrf.mxu0
  %v2808 = vadd.f32 %v503, %v2807
  %v2809 = vpop.f32.mrf.mxu0
  %v2810 = vadd.f32 %v503, %v2809
  %2811 = vmatmul.bf16.gmra.mxu0 %v1726
  %v2812 = vpop.f32.mrf.mxu0
  %v2813 = vadd.f32 %v503, %v2812
  %v2814 = vpop.f32.mrf.mxu0
  %v2815 = vadd.f32 %v503, %v2814
  %2816 = vmatmul.bf16.gmra.mxu0 %v1729
  %v2817 = vpop.f32.mrf.mxu0
  %v2818 = vadd.f32 %v503, %v2817
  %v2819 = vpop.f32.mrf.mxu0
  %v2820 = vadd.f32 %v503, %v2819
  %2821 = vmatmul.bf16.gmra.mxu0 %v1732
  %v2822 = vpop.f32.mrf.mxu0
  %v2823 = vadd.f32 %v503, %v2822
  %v2824 = vpop.f32.mrf.mxu0
  %v2825 = vadd.f32 %v503, %v2824
  %2826 = vmatmul.bf16.gmra.mxu0 %v1735
  %v2827 = vpop.f32.mrf.mxu0
  %v2828 = vadd.f32 %v503, %v2827
  %v2829 = vpop.f32.mrf.mxu0
  %v2830 = vadd.f32 %v503, %v2829
  %2831 = vmatmul.bf16.gmra.mxu0 %v1738
  %v2832 = vpop.f32.mrf.mxu0
  %v2833 = vadd.f32 %v503, %v2832
  %v2834 = vpop.f32.mrf.mxu0
  %v2835 = vadd.f32 %v503, %v2834
  %2836 = vmatmul.bf16.gmra.mxu0 %v1741
  %v2837 = vpop.f32.mrf.mxu0
  %v2838 = vadd.f32 %v503, %v2837
  %v2839 = vpop.f32.mrf.mxu0
  %v2840 = vadd.f32 %v503, %v2839
  %2841 = vmatmul.bf16.gmra.mxu0 %v1744
  %v2842 = vpop.f32.mrf.mxu0
  %v2843 = vadd.f32 %v503, %v2842
  %v2844 = vpop.f32.mrf.mxu0
  %v2845 = vadd.f32 %v503, %v2844
  %2846 = vmatmul.bf16.gmra.mxu0 %v1747
  %v2847 = vpop.f32.mrf.mxu0
  %v2848 = vadd.f32 %v503, %v2847
  %v2849 = vpop.f32.mrf.mxu0
  %v2850 = vadd.f32 %v503, %v2849
  %2851 = vmatmul.bf16.gmra.mxu0 %v1750
  %v2852 = vpop.f32.mrf.mxu0
  %v2853 = vadd.f32 %v503, %v2852
  %v2854 = vpop.f32.mrf.mxu0
  %v2855 = vadd.f32 %v503, %v2854
  %2856 = vmatmul.bf16.gmra.mxu0 %v1753
  %v2857 = vpop.f32.mrf.mxu0
  %v2858 = vadd.f32 %v503, %v2857
  %v2859 = vpop.f32.mrf.mxu0
  %v2860 = vadd.f32 %v503, %v2859
  %2861 = vmatmul.bf16.gmra.mxu0 %v1756
  %v2862 = vpop.f32.mrf.mxu0
  %v2863 = vadd.f32 %v503, %v2862
  %v2864 = vpop.f32.mrf.mxu0
  %v2865 = vadd.f32 %v503, %v2864
  %2866 = vmatmul.bf16.gmra.mxu0 %v1759
  %v2867 = vpop.f32.mrf.mxu0
  %v2868 = vadd.f32 %v503, %v2867
  %v2869 = vpop.f32.mrf.mxu0
  %v2870 = vadd.f32 %v503, %v2869
  %2871 = vmatmul.bf16.gmra.mxu0 %v1762
  %v2872 = vpop.f32.mrf.mxu0
  %v2873 = vadd.f32 %v503, %v2872
  %v2874 = vpop.f32.mrf.mxu0
  %v2875 = vadd.f32 %v503, %v2874
  %2876 = vmatmul.bf16.gmra.mxu0 %v1765
  %v2877 = vpop.f32.mrf.mxu0
  %v2878 = vadd.f32 %v503, %v2877
  %v2879 = vpop.f32.mrf.mxu0
  %v2880 = vadd.f32 %v503, %v2879
  %2881 = vmatmul.bf16.gmra.mxu0 %v1768
  %v2882 = vpop.f32.mrf.mxu0
  %v2883 = vadd.f32 %v503, %v2882
  %v2884 = vpop.f32.mrf.mxu0
  %v2885 = vadd.f32 %v503, %v2884
  %2886 = vmatmul.bf16.gmra.mxu0 %v1771
  %v2887 = vpop.f32.mrf.mxu0
  %v2888 = vadd.f32 %v503, %v2887
  %v2889 = vpop.f32.mrf.mxu0
  %v2890 = vadd.f32 %v503, %v2889
  %2891 = vmatmul.bf16.gmra.mxu0 %v1774
  %v2892 = vpop.f32.mrf.mxu0
  %v2893 = vadd.f32 %v503, %v2892
  %v2894 = vpop.f32.mrf.mxu0
  %v2895 = vadd.f32 %v503, %v2894
  %2896 = vmatmul.bf16.gmra.mxu0 %v1777
  %v2897 = vpop.f32.mrf.mxu0
  %v2898 = vadd.f32 %v503, %v2897
  %v2899 = vpop.f32.mrf.mxu0
  %v2900 = vadd.f32 %v503, %v2899
  %2901 = vmatmul.bf16.gmra.mxu0 %v1780
  %v2902 = vpop.f32.mrf.mxu0
  %v2903 = vadd.f32 %v503, %v2902
  %v2904 = vpop.f32.mrf.mxu0
  %v2905 = vadd.f32 %v503, %v2904
  %2906 = vmatmul.bf16.gmra.mxu0 %v1783
  %v2907 = vpop.f32.mrf.mxu0
  %v2908 = vadd.f32 %v503, %v2907
  %v2909 = vpop.f32.mrf.mxu0
  %v2910 = vadd.f32 %v503, %v2909
  %2911 = vmatmul.bf16.gmra.mxu0 %v1786
  %v2912 = vpop.f32.mrf.mxu0
  %v2913 = vadd.f32 %v503, %v2912
  %v2914 = vpop.f32.mrf.mxu0
  %v2915 = vadd.f32 %v503, %v2914
  %2916 = vmatmul.bf16.gmra.mxu0 %v1789
  %v2917 = vpop.f32.mrf.mxu0
  %v2918 = vadd.f32 %v503, %v2917
  %v2919 = vpop.f32.mrf.mxu0
  %v2920 = vadd.f32 %v503, %v2919
  %2921 = vmatmul.bf16.gmra.mxu0 %v1792
  %v2922 = vpop.f32.mrf.mxu0
  %v2923 = vadd.f32 %v503, %v2922
  %v2924 = vpop.f32.mrf.mxu0
  %v2925 = vadd.f32 %v503, %v2924
  %2926 = vmatmul.bf16.gmra.mxu0 %v1795
  %v2927 = vpop.f32.mrf.mxu0
  %v2928 = vadd.f32 %v503, %v2927
  %v2929 = vpop.f32.mrf.mxu0
  %v2930 = vadd.f32 %v503, %v2929
  %2931 = vmatmul.bf16.gmra.mxu0 %v1798
  %v2932 = vpop.f32.mrf.mxu0
  %v2933 = vadd.f32 %v503, %v2932
  %v2934 = vpop.f32.mrf.mxu0
  %v2935 = vadd.f32 %v503, %v2934
  %2936 = vmatmul.bf16.gmra.mxu0 %v1801
  %v2937 = vpop.f32.mrf.mxu0
  %v2938 = vadd.f32 %v503, %v2937
  %v2939 = vpop.f32.mrf.mxu0
  %v2940 = vadd.f32 %v503, %v2939
  %2941 = vmatmul.bf16.gmra.mxu0 %v1804
  %v2942 = vpop.f32.mrf.mxu0
  %v2943 = vadd.f32 %v503, %v2942
  %v2944 = vpop.f32.mrf.mxu0
  %v2945 = vadd.f32 %v503, %v2944
  %2946 = vmatmul.bf16.gmra.mxu0 %v1807
  %v2947 = vpop.f32.mrf.mxu0
  %v2948 = vadd.f32 %v503, %v2947
  %v2949 = vpop.f32.mrf.mxu0
  %v2950 = vadd.f32 %v503, %v2949
  %2951 = vmatmul.bf16.gmra.mxu0 %v1810
  %v2952 = vpop.f32.mrf.mxu0
  %v2953 = vadd.f32 %v503, %v2952
  %v2954 = vpop.f32.mrf.mxu0
  %v2955 = vadd.f32 %v503, %v2954
  %2956 = vmatmul.bf16.gmra.mxu0 %v1813
  %v2957 = vpop.f32.mrf.mxu0
  %v2958 = vadd.f32 %v503, %v2957
  %v2959 = vpop.f32.mrf.mxu0
  %v2960 = vadd.f32 %v503, %v2959
  %2961 = vmatmul.bf16.gmra.mxu0 %v1816
  %v2962 = vpop.f32.mrf.mxu0
  %v2963 = vadd.f32 %v503, %v2962
  %v2964 = vpop.f32.mrf.mxu0
  %v2965 = vadd.f32 %v503, %v2964
  %2966 = vmatmul.bf16.gmra.mxu0 %v1819
  %v2967 = vpop.f32.mrf.mxu0
  %v2968 = vadd.f32 %v503, %v2967
  %v2969 = vpop.f32.mrf.mxu0
  %v2970 = vadd.f32 %v503, %v2969
  %2971 = vmatmul.bf16.gmra.mxu0 %v1822
  %v2972 = vpop.f32.mrf.mxu0
  %v2973 = vadd.f32 %v503, %v2972
  %v2974 = vpop.f32.mrf.mxu0
  %v2975 = vadd.f32 %v503, %v2974
  %2976 = vmatmul.bf16.gmra.mxu0 %v1825
  %v2977 = vpop.f32.mrf.mxu0
  %v2978 = vadd.f32 %v503, %v2977
  %v2979 = vpop.f32.mrf.mxu0
  %v2980 = vadd.f32 %v503, %v2979
  %2981 = vmatmul.bf16.gmra.mxu0 %v1828
  %v2982 = vpop.f32.mrf.mxu0
  %v2983 = vadd.f32 %v503, %v2982
  %v2984 = vpop.f32.mrf.mxu0
  %v2985 = vadd.f32 %v503, %v2984
  %2986 = vmatmul.bf16.gmra.mxu0 %v1831
  %v2987 = vpop.f32.mrf.mxu0
  %v2988 = vadd.f32 %v503, %v2987
  %v2989 = vpop.f32.mrf.mxu0
  %v2990 = vadd.f32 %v503, %v2989
  %2991 = vmatmul.bf16.gmra.mxu0 %v1834
  %v2992 = vpop.f32.mrf.mxu0
  %v2993 = vadd.f32 %v503, %v2992
  %v2994 = vpop.f32.mrf.mxu0
  %v2995 = vadd.f32 %v503, %v2994
  %2996 = vmatmul.bf16.gmra.mxu0 %v1837
  %v2997 = vpop.f32.mrf.mxu0
  %v2998 = vadd.f32 %v503, %v2997
  %v2999 = vpop.f32.mrf.mxu0
  %v3000 = vadd.f32 %v503, %v2999
  %3001 = vmatmul.bf16.gmra.mxu0 %v1840
  %v3002 = vpop.f32.mrf.mxu0
  %v3003 = vadd.f32 %v503, %v3002
  %v3004 = vpop.f32.mrf.mxu0
  %v3005 = vadd.f32 %v503, %v3004
  %3006 = vmatmul.bf16.gmra.mxu0 %v1843
  %v3007 = vpop.f32.mrf.mxu0
  %v3008 = vadd.f32 %v503, %v3007
  %v3009 = vpop.f32.mrf.mxu0
  %v3010 = vadd.f32 %v503, %v3009
  %3011 = vmatmul.bf16.gmra.mxu0 %v1846
  %v3012 = vpop.f32.mrf.mxu0
  %v3013 = vadd.f32 %v503, %v3012
  %v3014 = vpop.f32.mrf.mxu0
  %v3015 = vadd.f32 %v503, %v3014
  %3016 = vmatmul.bf16.gmra.mxu0 %v1849
  %v3017 = vpop.f32.mrf.mxu0
  %v3018 = vadd.f32 %v503, %v3017
  %v3019 = vpop.f32.mrf.mxu0
  %v3020 = vadd.f32 %v503, %v3019
  %3021 = vmatmul.bf16.gmra.mxu0 %v1852
  %v3022 = vpop.f32.mrf.mxu0
  %v3023 = vadd.f32 %v503, %v3022
  %v3024 = vpop.f32.mrf.mxu0
  %v3025 = vadd.f32 %v503, %v3024
  %3026 = vmatmul.bf16.gmra.mxu0 %v1855
  %v3027 = vpop.f32.mrf.mxu0
  %v3028 = vadd.f32 %v503, %v3027
  %v3029 = vpop.f32.mrf.mxu0
  %v3030 = vadd.f32 %v503, %v3029
  %3031 = vmatmul.bf16.gmra.mxu0 %v1858
  %v3032 = vpop.f32.mrf.mxu0
  %v3033 = vadd.f32 %v503, %v3032
  %v3034 = vpop.f32.mrf.mxu0
  %v3035 = vadd.f32 %v503, %v3034
  %3036 = vmatmul.bf16.gmra.mxu0 %v1861
  %v3037 = vpop.f32.mrf.mxu0
  %v3038 = vadd.f32 %v503, %v3037
  %v3039 = vpop.f32.mrf.mxu0
  %v3040 = vadd.f32 %v503, %v3039
  %3041 = vmatmul.bf16.gmra.mxu0 %v1864
  %v3042 = vpop.f32.mrf.mxu0
  %v3043 = vadd.f32 %v503, %v3042
  %v3044 = vpop.f32.mrf.mxu0
  %v3045 = vadd.f32 %v503, %v3044
  %3046 = vmatmul.bf16.gmra.mxu0 %v1867
  %v3047 = vpop.f32.mrf.mxu0
  %v3048 = vadd.f32 %v503, %v3047
  %v3049 = vpop.f32.mrf.mxu0
  %v3050 = vadd.f32 %v503, %v3049
  %3051 = vmatmul.bf16.gmra.mxu0 %v1870
  %v3052 = vpop.f32.mrf.mxu0
  %v3053 = vadd.f32 %v503, %v3052
  %v3054 = vpop.f32.mrf.mxu0
  %v3055 = vadd.f32 %v503, %v3054
  %3056 = vmatmul.bf16.gmra.mxu0 %v1873
  %v3057 = vpop.f32.mrf.mxu0
  %v3058 = vadd.f32 %v503, %v3057
  %v3059 = vpop.f32.mrf.mxu0
  %v3060 = vadd.f32 %v503, %v3059
  %3061 = vmatmul.bf16.gmra.mxu0 %v1876
  %v3062 = vpop.f32.mrf.mxu0
  %v3063 = vadd.f32 %v503, %v3062
  %v3064 = vpop.f32.mrf.mxu0
  %v3065 = vadd.f32 %v503, %v3064
  %3066 = vmatmul.bf16.gmra.mxu0 %v1879
  %v3067 = vpop.f32.mrf.mxu0
  %v3068 = vadd.f32 %v503, %v3067
  %v3069 = vpop.f32.mrf.mxu0
  %v3070 = vadd.f32 %v503, %v3069
  %3071 = vmatmul.bf16.gmra.mxu0 %v1882
  %v3072 = vpop.f32.mrf.mxu0
  %v3073 = vadd.f32 %v503, %v3072
  %v3074 = vpop.f32.mrf.mxu0
  %v3075 = vadd.f32 %v503, %v3074
  %3076 = vmatmul.bf16.gmra.mxu0 %v1885
  %v3077 = vpop.f32.mrf.mxu0
  %v3078 = vadd.f32 %v503, %v3077
  %v3079 = vpop.f32.mrf.mxu0
  %v3080 = vadd.f32 %v503, %v3079
  %3081 = vmatmul.bf16.gmra.mxu0 %v1888
  %v3082 = vpop.f32.mrf.mxu0
  %v3083 = vadd.f32 %v503, %v3082
  %v3084 = vpop.f32.mrf.mxu0
  %v3085 = vadd.f32 %v503, %v3084
  %3086 = vmatmul.bf16.gmra.mxu0 %v1891
  %v3087 = vpop.f32.mrf.mxu0
  %v3088 = vadd.f32 %v503, %v3087
  %v3089 = vpop.f32.mrf.mxu0
  %v3090 = vadd.f32 %v503, %v3089
  %3091 = vmatmul.bf16.gmra.mxu0 %v1894
  %v3092 = vpop.f32.mrf.mxu0
  %v3093 = vadd.f32 %v503, %v3092
  %v3094 = vpop.f32.mrf.mxu0
  %v3095 = vadd.f32 %v503, %v3094
  %3096 = vmatmul.bf16.gmra.mxu0 %v1897
  %v3097 = vpop.f32.mrf.mxu0
  %v3098 = vadd.f32 %v503, %v3097
  %v3099 = vpop.f32.mrf.mxu0
  %v3100 = vadd.f32 %v503, %v3099
  %3101 = vmatmul.bf16.gmra.mxu0 %v1900
  %v3102 = vpop.f32.mrf.mxu0
  %v3103 = vadd.f32 %v503, %v3102
  %v3104 = vpop.f32.mrf.mxu0
  %v3105 = vadd.f32 %v503, %v3104
  %3106 = vmatmul.bf16.gmra.mxu0 %v1903
  %v3107 = vpop.f32.mrf.mxu0
  %v3108 = vadd.f32 %v503, %v3107
  %v3109 = vpop.f32.mrf.mxu0
  %v3110 = vadd.f32 %v503, %v3109
  %3111 = vmatmul.bf16.gmra.mxu0 %v1906
  %v3112 = vpop.f32.mrf.mxu0
  %v3113 = vadd.f32 %v503, %v3112
  %v3114 = vpop.f32.mrf.mxu0
  %v3115 = vadd.f32 %v503, %v3114
  %3116 = vmatmul.bf16.gmra.mxu0 %v1909
  %v3117 = vpop.f32.mrf.mxu0
  %v3118 = vadd.f32 %v503, %v3117
  %v3119 = vpop.f32.mrf.mxu0
  %v3120 = vadd.f32 %v503, %v3119
  %3121 = vmatmul.bf16.gmra.mxu0 %v1912
  %v3122 = vpop.f32.mrf.mxu0
  %v3123 = vadd.f32 %v503, %v3122
  %v3124 = vpop.f32.mrf.mxu0
  %v3125 = vadd.f32 %v503, %v3124
  %3126 = vmatmul.bf16.gmra.mxu0 %v1915
  %v3127 = vpop.f32.mrf.mxu0
  %v3128 = vadd.f32 %v503, %v3127
  %v3129 = vpop.f32.mrf.mxu0
  %v3130 = vadd.f32 %v503, %v3129
  %3131 = vmatmul.bf16.gmra.mxu0 %v1918
  %v3132 = vpop.f32.mrf.mxu0
  %v3133 = vadd.f32 %v503, %v3132
  %v3134 = vpop.f32.mrf.mxu0
  %v3135 = vadd.f32 %v503, %v3134
  %3136 = vmatmul.bf16.gmra.mxu0 %v1921
  %v3137 = vpop.f32.mrf.mxu0
  %v3138 = vadd.f32 %v503, %v3137
  %v3139 = vpop.f32.mrf.mxu0
  %v3140 = vadd.f32 %v503, %v3139
  %3141 = vmatmul.bf16.gmra.mxu0 %v1924
  %v3142 = vpop.f32.mrf.mxu0
  %v3143 = vadd.f32 %v503, %v3142
  %v3144 = vpop.f32.mrf.mxu0
  %v3145 = vadd.f32 %v503, %v3144
  %3146 = vmatmul.bf16.gmra.mxu0 %v1927
  %v3147 = vpop.f32.mrf.mxu0
  %v3148 = vadd.f32 %v503, %v3147
  %v3149 = vpop.f32.mrf.mxu0
  %v3150 = vadd.f32 %v503, %v3149
  %3151 = vmatmul.bf16.gmra.mxu0 %v1930
  %v3152 = vpop.f32.mrf.mxu0
  %v3153 = vadd.f32 %v503, %v3152
  %v3154 = vpop.f32.mrf.mxu0
  %v3155 = vadd.f32 %v503, %v3154
  %3156 = vmatmul.bf16.gmra.mxu0 %v1933
  %v3157 = vpop.f32.mrf.mxu0
  %v3158 = vadd.f32 %v503, %v3157
  %v3159 = vpop.f32.mrf.mxu0
  %v3160 = vadd.f32 %v503, %v3159
  %3161 = vmatmul.bf16.gmra.mxu0 %v1936
  %v3162 = vpop.f32.mrf.mxu0
  %v3163 = vadd.f32 %v503, %v3162
  %v3164 = vpop.f32.mrf.mxu0
  %v3165 = vadd.f32 %v503, %v3164
  %3166 = vmatmul.bf16.gmra.mxu0 %v1939
  %v3167 = vpop.f32.mrf.mxu0
  %v3168 = vadd.f32 %v503, %v3167
  %v3169 = vpop.f32.mrf.mxu0
  %v3170 = vadd.f32 %v503, %v3169
  %3171 = vmatmul.bf16.gmra.mxu0 %v1942
  %v3172 = vpop.f32.mrf.mxu0
  %v3173 = vadd.f32 %v503, %v3172
  %v3174 = vpop.f32.mrf.mxu0
  %v3175 = vadd.f32 %v503, %v3174
  %3176 = vmatmul.bf16.gmra.mxu0 %v1945
  %v3177 = vpop.f32.mrf.mxu0
  %v3178 = vadd.f32 %v503, %v3177
  %v3179 = vpop.f32.mrf.mxu0
  %v3180 = vadd.f32 %v503, %v3179
  %3181 = vmatmul.bf16.gmra.mxu0 %v1948
  %v3182 = vpop.f32.mrf.mxu0
  %v3183 = vadd.f32 %v503, %v3182
  %v3184 = vpop.f32.mrf.mxu0
  %v3185 = vadd.f32 %v503, %v3184
  %3186 = vmatmul.bf16.gmra.mxu0 %v1951
  %v3187 = vpop.f32.mrf.mxu0
  %v3188 = vadd.f32 %v503, %v3187
  %v3189 = vpop.f32.mrf.mxu0
  %v3190 = vadd.f32 %v503, %v3189
  %3191 = vmatmul.bf16.gmra.mxu0 %v1954
  %v3192 = vpop.f32.mrf.mxu0
  %v3193 = vadd.f32 %v503, %v3192
  %v3194 = vpop.f32.mrf.mxu0
  %v3195 = vadd.f32 %v503, %v3194
  %3196 = vmatmul.bf16.gmra.mxu0 %v1957
  %v3197 = vpop.f32.mrf.mxu0
  %v3198 = vadd.f32 %v503, %v3197
  %v3199 = vpop.f32.mrf.mxu0
  %v3200 = vadd.f32 %v503, %v3199
  %3201 = vmatmul.bf16.gmra.mxu0 %v1960
  %v3202 = vpop.f32.mrf.mxu0
  %v3203 = vadd.f32 %v503, %v3202
  %v3204 = vpop.f32.mrf.mxu0
  %v3205 = vadd.f32 %v503, %v3204
  %3206 = vmatmul.bf16.gmra.mxu0 %v1963
  %v3207 = vpop.f32.mrf.mxu0
  %v3208 = vadd.f32 %v503, %v3207
  %v3209 = vpop.f32.mrf.mxu0
  %v3210 = vadd.f32 %v503, %v3209
  %3211 = vmatmul.bf16.gmra.mxu0 %v1966
  %v3212 = vpop.f32.mrf.mxu0
  %v3213 = vadd.f32 %v503, %v3212
  %v3214 = vpop.f32.mrf.mxu0
  %3215 = vdwg.mxu0
  %3216 = vmatpush.bf16.msra.mxu0 %v2282
  %3217 = vmatpush.bf16.msra.mxu0 %v2281
  %3218 = vmatpush.bf16.msra.mxu0 %v2280
  %3219 = vmatpush.bf16.msra.mxu0 %v2279
  %3220 = vmatpush.bf16.msra.mxu0 %v2278
  %3221 = vmatpush.bf16.msra.mxu0 %v2277
  %3222 = vmatpush.bf16.msra.mxu0 %v2276
  %3223 = vmatpush.bf16.msra.mxu0 %v2275
  %3224 = vmatmul.bf16.gmra.mxu0 %v1631
  %v3225 = vpop.f32.mrf.mxu0
  %v3226 = vadd.f32 %v2653, %v3225
  %v3227 = vpop.f32.mrf.mxu0
  %v3228 = vadd.f32 %v2655, %v3227
  %3229 = vmatmul.bf16.gmra.mxu0 %v1634
  %v3230 = vpop.f32.mrf.mxu0
  %v3231 = vadd.f32 %v2658, %v3230
  %v3232 = vpop.f32.mrf.mxu0
  %v3233 = vadd.f32 %v2660, %v3232
  %3234 = vmatmul.bf16.gmra.mxu0 %v1637
  %v3235 = vpop.f32.mrf.mxu0
  %v3236 = vadd.f32 %v2663, %v3235
  %v3237 = vpop.f32.mrf.mxu0
  %v3238 = vadd.f32 %v2665, %v3237
  %3239 = vmatmul.bf16.gmra.mxu0 %v1640
  %v3240 = vpop.f32.mrf.mxu0
  %v3241 = vadd.f32 %v2668, %v3240
  %v3242 = vpop.f32.mrf.mxu0
  %v3243 = vadd.f32 %v2670, %v3242
  %3244 = vmatmul.bf16.gmra.mxu0 %v1643
  %v3245 = vpop.f32.mrf.mxu0
  %v3246 = vadd.f32 %v2673, %v3245
  %v3247 = vpop.f32.mrf.mxu0
  %v3248 = vadd.f32 %v2675, %v3247
  %3249 = vmatmul.bf16.gmra.mxu0 %v1646
  %v3250 = vpop.f32.mrf.mxu0
  %v3251 = vadd.f32 %v2678, %v3250
  %v3252 = vpop.f32.mrf.mxu0
  %v3253 = vadd.f32 %v2680, %v3252
  %3254 = vmatmul.bf16.gmra.mxu0 %v1649
  %v3255 = vpop.f32.mrf.mxu0
  %v3256 = vadd.f32 %v2683, %v3255
  %v3257 = vpop.f32.mrf.mxu0
  %v3258 = vadd.f32 %v2685, %v3257
  %3259 = vmatmul.bf16.gmra.mxu0 %v1652
  %v3260 = vpop.f32.mrf.mxu0
  %v3261 = vadd.f32 %v2688, %v3260
  %v3262 = vpop.f32.mrf.mxu0
  %v3263 = vadd.f32 %v2690, %v3262
  %3264 = vmatmul.bf16.gmra.mxu0 %v1655
  %v3265 = vpop.f32.mrf.mxu0
  %v3266 = vadd.f32 %v2693, %v3265
  %v3267 = vpop.f32.mrf.mxu0
  %v3268 = vadd.f32 %v2695, %v3267
  %3269 = vmatmul.bf16.gmra.mxu0 %v1658
  %v3270 = vpop.f32.mrf.mxu0
  %v3271 = vadd.f32 %v2698, %v3270
  %v3272 = vpop.f32.mrf.mxu0
  %v3273 = vadd.f32 %v2700, %v3272
  %3274 = vmatmul.bf16.gmra.mxu0 %v1661
  %v3275 = vpop.f32.mrf.mxu0
  %v3276 = vadd.f32 %v2703, %v3275
  %v3277 = vpop.f32.mrf.mxu0
  %v3278 = vadd.f32 %v2705, %v3277
  %3279 = vmatmul.bf16.gmra.mxu0 %v1664
  %v3280 = vpop.f32.mrf.mxu0
  %v3281 = vadd.f32 %v2708, %v3280
  %v3282 = vpop.f32.mrf.mxu0
  %v3283 = vadd.f32 %v2710, %v3282
  %3284 = vmatmul.bf16.gmra.mxu0 %v1667
  %v3285 = vpop.f32.mrf.mxu0
  %v3286 = vadd.f32 %v2713, %v3285
  %v3287 = vpop.f32.mrf.mxu0
  %v3288 = vadd.f32 %v2715, %v3287
  %3289 = vmatmul.bf16.gmra.mxu0 %v1670
  %v3290 = vpop.f32.mrf.mxu0
  %v3291 = vadd.f32 %v2718, %v3290
  %v3292 = vpop.f32.mrf.mxu0
  %v3293 = vadd.f32 %v2720, %v3292
  %3294 = vmatmul.bf16.gmra.mxu0 %v1673
  %v3295 = vpop.f32.mrf.mxu0
  %v3296 = vadd.f32 %v2723, %v3295
  %v3297 = vpop.f32.mrf.mxu0
  %v3298 = vadd.f32 %v2725, %v3297
  %3299 = vmatmul.bf16.gmra.mxu0 %v1676
  %v3300 = vpop.f32.mrf.mxu0
  %v3301 = vadd.f32 %v2728, %v3300
  %v3302 = vpop.f32.mrf.mxu0
  %v3303 = vadd.f32 %v2730, %v3302
  %3304 = vmatmul.bf16.gmra.mxu0 %v1679
  %v3305 = vpop.f32.mrf.mxu0
  %v3306 = vadd.f32 %v2733, %v3305
  %v3307 = vpop.f32.mrf.mxu0
  %v3308 = vadd.f32 %v2735, %v3307
  %3309 = vmatmul.bf16.gmra.mxu0 %v1682
  %v3310 = vpop.f32.mrf.mxu0
  %v3311 = vadd.f32 %v2738, %v3310
  %v3312 = vpop.f32.mrf.mxu0
  %v3313 = vadd.f32 %v2740, %v3312
  %3314 = vmatmul.bf16.gmra.mxu0 %v1685
  %v3315 = vpop.f32.mrf.mxu0
  %v3316 = vadd.f32 %v2743, %v3315
  %v3317 = vpop.f32.mrf.mxu0
  %v3318 = vadd.f32 %v2745, %v3317
  %3319 = vmatmul.bf16.gmra.mxu0 %v1688
  %v3320 = vpop.f32.mrf.mxu0
  %v3321 = vadd.f32 %v2748, %v3320
  %v3322 = vpop.f32.mrf.mxu0
  %v3323 = vadd.f32 %v2750, %v3322
  %3324 = vmatmul.bf16.gmra.mxu0 %v1691
  %v3325 = vpop.f32.mrf.mxu0
  %v3326 = vadd.f32 %v2753, %v3325
  %v3327 = vpop.f32.mrf.mxu0
  %v3328 = vadd.f32 %v2755, %v3327
  %3329 = vmatmul.bf16.gmra.mxu0 %v1694
  %v3330 = vpop.f32.mrf.mxu0
  %v3331 = vadd.f32 %v2758, %v3330
  %v3332 = vpop.f32.mrf.mxu0
  %v3333 = vadd.f32 %v2760, %v3332
  %3334 = vmatmul.bf16.gmra.mxu0 %v1697
  %v3335 = vpop.f32.mrf.mxu0
  %v3336 = vadd.f32 %v2763, %v3335
  %v3337 = vpop.f32.mrf.mxu0
  %v3338 = vadd.f32 %v2765, %v3337
  %3339 = vmatmul.bf16.gmra.mxu0 %v1700
  %v3340 = vpop.f32.mrf.mxu0
  %v3341 = vadd.f32 %v2768, %v3340
  %v3342 = vpop.f32.mrf.mxu0
  %v3343 = vadd.f32 %v2770, %v3342
  %3344 = vmatmul.bf16.gmra.mxu0 %v1703
  %v3345 = vpop.f32.mrf.mxu0
  %v3346 = vadd.f32 %v2773, %v3345
  %v3347 = vpop.f32.mrf.mxu0
  %v3348 = vadd.f32 %v2775, %v3347
  %3349 = vmatmul.bf16.gmra.mxu0 %v1706
  %v3350 = vpop.f32.mrf.mxu0
  %v3351 = vadd.f32 %v2778, %v3350
  %v3352 = vpop.f32.mrf.mxu0
  %v3353 = vadd.f32 %v2780, %v3352
  %3354 = vmatmul.bf16.gmra.mxu0 %v1709
  %v3355 = vpop.f32.mrf.mxu0
  %v3356 = vadd.f32 %v2783, %v3355
  %v3357 = vpop.f32.mrf.mxu0
  %v3358 = vadd.f32 %v2785, %v3357
  %3359 = vmatmul.bf16.gmra.mxu0 %v1712
  %v3360 = vpop.f32.mrf.mxu0
  %v3361 = vadd.f32 %v2788, %v3360
  %v3362 = vpop.f32.mrf.mxu0
  %v3363 = vadd.f32 %v2790, %v3362
  %3364 = vmatmul.bf16.gmra.mxu0 %v1715
  %v3365 = vpop.f32.mrf.mxu0
  %v3366 = vadd.f32 %v2793, %v3365
  %v3367 = vpop.f32.mrf.mxu0
  %v3368 = vadd.f32 %v2795, %v3367
  %3369 = vmatmul.bf16.gmra.mxu0 %v1718
  %v3370 = vpop.f32.mrf.mxu0
  %v3371 = vadd.f32 %v2798, %v3370
  %v3372 = vpop.f32.mrf.mxu0
  %v3373 = vadd.f32 %v2800, %v3372
  %3374 = vmatmul.bf16.gmra.mxu0 %v1721
  %v3375 = vpop.f32.mrf.mxu0
  %v3376 = vadd.f32 %v2803, %v3375
  %v3377 = vpop.f32.mrf.mxu0
  %v3378 = vadd.f32 %v2805, %v3377
  %3379 = vmatmul.bf16.gmra.mxu0 %v1724
  %v3380 = vpop.f32.mrf.mxu0
  %v3381 = vadd.f32 %v2808, %v3380
  %v3382 = vpop.f32.mrf.mxu0
  %v3383 = vadd.f32 %v2810, %v3382
  %3384 = vmatmul.bf16.gmra.mxu0 %v1727
  %v3385 = vpop.f32.mrf.mxu0
  %v3386 = vadd.f32 %v2813, %v3385
  %v3387 = vpop.f32.mrf.mxu0
  %v3388 = vadd.f32 %v2815, %v3387
  %3389 = vmatmul.bf16.gmra.mxu0 %v1730
  %v3390 = vpop.f32.mrf.mxu0
  %v3391 = vadd.f32 %v2818, %v3390
  %v3392 = vpop.f32.mrf.mxu0
  %v3393 = vadd.f32 %v2820, %v3392
  %3394 = vmatmul.bf16.gmra.mxu0 %v1733
  %v3395 = vpop.f32.mrf.mxu0
  %v3396 = vadd.f32 %v2823, %v3395
  %v3397 = vpop.f32.mrf.mxu0
  %v3398 = vadd.f32 %v2825, %v3397
  %3399 = vmatmul.bf16.gmra.mxu0 %v1736
  %v3400 = vpop.f32.mrf.mxu0
  %v3401 = vadd.f32 %v2828, %v3400
  %v3402 = vpop.f32.mrf.mxu0
  %v3403 = vadd.f32 %v2830, %v3402
  %3404 = vmatmul.bf16.gmra.mxu0 %v1739
  %v3405 = vpop.f32.mrf.mxu0
  %v3406 = vadd.f32 %v2833, %v3405
  %v3407 = vpop.f32.mrf.mxu0
  %v3408 = vadd.f32 %v2835, %v3407
  %3409 = vmatmul.bf16.gmra.mxu0 %v1742
  %v3410 = vpop.f32.mrf.mxu0
  %v3411 = vadd.f32 %v2838, %v3410
  %v3412 = vpop.f32.mrf.mxu0
  %v3413 = vadd.f32 %v2840, %v3412
  %3414 = vmatmul.bf16.gmra.mxu0 %v1745
  %v3415 = vpop.f32.mrf.mxu0
  %v3416 = vadd.f32 %v2843, %v3415
  %v3417 = vpop.f32.mrf.mxu0
  %v3418 = vadd.f32 %v2845, %v3417
  %3419 = vmatmul.bf16.gmra.mxu0 %v1748
  %v3420 = vpop.f32.mrf.mxu0
  %v3421 = vadd.f32 %v2848, %v3420
  %v3422 = vpop.f32.mrf.mxu0
  %v3423 = vadd.f32 %v2850, %v3422
  %3424 = vmatmul.bf16.gmra.mxu0 %v1751
  %v3425 = vpop.f32.mrf.mxu0
  %v3426 = vadd.f32 %v2853, %v3425
  %v3427 = vpop.f32.mrf.mxu0
  %v3428 = vadd.f32 %v2855, %v3427
  %3429 = vmatmul.bf16.gmra.mxu0 %v1754
  %v3430 = vpop.f32.mrf.mxu0
  %v3431 = vadd.f32 %v2858, %v3430
  %v3432 = vpop.f32.mrf.mxu0
  %v3433 = vadd.f32 %v2860, %v3432
  %3434 = vmatmul.bf16.gmra.mxu0 %v1757
  %v3435 = vpop.f32.mrf.mxu0
  %v3436 = vadd.f32 %v2863, %v3435
  %v3437 = vpop.f32.mrf.mxu0
  %v3438 = vadd.f32 %v2865, %v3437
  %3439 = vmatmul.bf16.gmra.mxu0 %v1760
  %v3440 = vpop.f32.mrf.mxu0
  %v3441 = vadd.f32 %v2868, %v3440
  %v3442 = vpop.f32.mrf.mxu0
  %v3443 = vadd.f32 %v2870, %v3442
  %3444 = vmatmul.bf16.gmra.mxu0 %v1763
  %v3445 = vpop.f32.mrf.mxu0
  %v3446 = vadd.f32 %v2873, %v3445
  %v3447 = vpop.f32.mrf.mxu0
  %v3448 = vadd.f32 %v2875, %v3447
  %3449 = vmatmul.bf16.gmra.mxu0 %v1766
  %v3450 = vpop.f32.mrf.mxu0
  %v3451 = vadd.f32 %v2878, %v3450
  %v3452 = vpop.f32.mrf.mxu0
  %v3453 = vadd.f32 %v2880, %v3452
  %3454 = vmatmul.bf16.gmra.mxu0 %v1769
  %v3455 = vpop.f32.mrf.mxu0
  %v3456 = vadd.f32 %v2883, %v3455
  %v3457 = vpop.f32.mrf.mxu0
  %v3458 = vadd.f32 %v2885, %v3457
  %3459 = vmatmul.bf16.gmra.mxu0 %v1772
  %v3460 = vpop.f32.mrf.mxu0
  %v3461 = vadd.f32 %v2888, %v3460
  %v3462 = vpop.f32.mrf.mxu0
  %v3463 = vadd.f32 %v2890, %v3462
  %3464 = vmatmul.bf16.gmra.mxu0 %v1775
  %v3465 = vpop.f32.mrf.mxu0
  %v3466 = vadd.f32 %v2893, %v3465
  %v3467 = vpop.f32.mrf.mxu0
  %v3468 = vadd.f32 %v2895, %v3467
  %3469 = vmatmul.bf16.gmra.mxu0 %v1778
  %v3470 = vpop.f32.mrf.mxu0
  %v3471 = vadd.f32 %v2898, %v3470
  %v3472 = vpop.f32.mrf.mxu0
  %v3473 = vadd.f32 %v2900, %v3472
  %3474 = vmatmul.bf16.gmra.mxu0 %v1781
  %v3475 = vpop.f32.mrf.mxu0
  %v3476 = vadd.f32 %v2903, %v3475
  %v3477 = vpop.f32.mrf.mxu0
  %v3478 = vadd.f32 %v2905, %v3477
  %3479 = vmatmul.bf16.gmra.mxu0 %v1784
  %v3480 = vpop.f32.mrf.mxu0
  %v3481 = vadd.f32 %v2908, %v3480
  %v3482 = vpop.f32.mrf.mxu0
  %v3483 = vadd.f32 %v2910, %v3482
  %3484 = vmatmul.bf16.gmra.mxu0 %v1787
  %v3485 = vpop.f32.mrf.mxu0
  %v3486 = vadd.f32 %v2913, %v3485
  %v3487 = vpop.f32.mrf.mxu0
  %v3488 = vadd.f32 %v2915, %v3487
  %3489 = vmatmul.bf16.gmra.mxu0 %v1790
  %v3490 = vpop.f32.mrf.mxu0
  %v3491 = vadd.f32 %v2918, %v3490
  %v3492 = vpop.f32.mrf.mxu0
  %v3493 = vadd.f32 %v2920, %v3492
  %3494 = vmatmul.bf16.gmra.mxu0 %v1793
  %v3495 = vpop.f32.mrf.mxu0
  %v3496 = vadd.f32 %v2923, %v3495
  %v3497 = vpop.f32.mrf.mxu0
  %v3498 = vadd.f32 %v2925, %v3497
  %3499 = vmatmul.bf16.gmra.mxu0 %v1796
  %v3500 = vpop.f32.mrf.mxu0
  %v3501 = vadd.f32 %v2928, %v3500
  %v3502 = vpop.f32.mrf.mxu0
  %v3503 = vadd.f32 %v2930, %v3502
  %3504 = vmatmul.bf16.gmra.mxu0 %v1799
  %v3505 = vpop.f32.mrf.mxu0
  %v3506 = vadd.f32 %v2933, %v3505
  %v3507 = vpop.f32.mrf.mxu0
  %v3508 = vadd.f32 %v2935, %v3507
  %3509 = vmatmul.bf16.gmra.mxu0 %v1802
  %v3510 = vpop.f32.mrf.mxu0
  %v3511 = vadd.f32 %v2938, %v3510
  %v3512 = vpop.f32.mrf.mxu0
  %v3513 = vadd.f32 %v2940, %v3512
  %3514 = vmatmul.bf16.gmra.mxu0 %v1805
  %v3515 = vpop.f32.mrf.mxu0
  %v3516 = vadd.f32 %v2943, %v3515
  %v3517 = vpop.f32.mrf.mxu0
  %v3518 = vadd.f32 %v2945, %v3517
  %3519 = vmatmul.bf16.gmra.mxu0 %v1808
  %v3520 = vpop.f32.mrf.mxu0
  %v3521 = vadd.f32 %v2948, %v3520
  %v3522 = vpop.f32.mrf.mxu0
  %v3523 = vadd.f32 %v2950, %v3522
  %3524 = vmatmul.bf16.gmra.mxu0 %v1811
  %v3525 = vpop.f32.mrf.mxu0
  %v3526 = vadd.f32 %v2953, %v3525
  %v3527 = vpop.f32.mrf.mxu0
  %v3528 = vadd.f32 %v2955, %v3527
  %3529 = vmatmul.bf16.gmra.mxu0 %v1814
  %v3530 = vpop.f32.mrf.mxu0
  %v3531 = vadd.f32 %v2958, %v3530
  %v3532 = vpop.f32.mrf.mxu0
  %v3533 = vadd.f32 %v2960, %v3532
  %3534 = vmatmul.bf16.gmra.mxu0 %v1817
  %v3535 = vpop.f32.mrf.mxu0
  %v3536 = vadd.f32 %v2963, %v3535
  %v3537 = vpop.f32.mrf.mxu0
  %v3538 = vadd.f32 %v2965, %v3537
  %3539 = vmatmul.bf16.gmra.mxu0 %v1820
  %v3540 = vpop.f32.mrf.mxu0
  %v3541 = vadd.f32 %v2968, %v3540
  %v3542 = vpop.f32.mrf.mxu0
  %v3543 = vadd.f32 %v2970, %v3542
  %3544 = vmatmul.bf16.gmra.mxu0 %v1823
  %v3545 = vpop.f32.mrf.mxu0
  %v3546 = vadd.f32 %v2973, %v3545
  %v3547 = vpop.f32.mrf.mxu0
  %v3548 = vadd.f32 %v2975, %v3547
  %3549 = vmatmul.bf16.gmra.mxu0 %v1826
  %v3550 = vpop.f32.mrf.mxu0
  %v3551 = vadd.f32 %v2978, %v3550
  %v3552 = vpop.f32.mrf.mxu0
  %v3553 = vadd.f32 %v2980, %v3552
  %3554 = vmatmul.bf16.gmra.mxu0 %v1829
  %v3555 = vpop.f32.mrf.mxu0
  %v3556 = vadd.f32 %v2983, %v3555
  %v3557 = vpop.f32.mrf.mxu0
  %v3558 = vadd.f32 %v2985, %v3557
  %3559 = vmatmul.bf16.gmra.mxu0 %v1832
  %v3560 = vpop.f32.mrf.mxu0
  %v3561 = vadd.f32 %v2988, %v3560
  %v3562 = vpop.f32.mrf.mxu0
  %v3563 = vadd.f32 %v2990, %v3562
  %3564 = vmatmul.bf16.gmra.mxu0 %v1835
  %v3565 = vpop.f32.mrf.mxu0
  %v3566 = vadd.f32 %v2993, %v3565
  %v3567 = vpop.f32.mrf.mxu0
  %v3568 = vadd.f32 %v2995, %v3567
  %3569 = vmatmul.bf16.gmra.mxu0 %v1838
  %v3570 = vpop.f32.mrf.mxu0
  %v3571 = vadd.f32 %v2998, %v3570
  %v3572 = vpop.f32.mrf.mxu0
  %v3573 = vadd.f32 %v3000, %v3572
  %3574 = vmatmul.bf16.gmra.mxu0 %v1841
  %v3575 = vpop.f32.mrf.mxu0
  %v3576 = vadd.f32 %v3003, %v3575
  %v3577 = vpop.f32.mrf.mxu0
  %v3578 = vadd.f32 %v3005, %v3577
  %3579 = vmatmul.bf16.gmra.mxu0 %v1844
  %v3580 = vpop.f32.mrf.mxu0
  %v3581 = vadd.f32 %v3008, %v3580
  %v3582 = vpop.f32.mrf.mxu0
  %v3583 = vadd.f32 %v3010, %v3582
  %3584 = vmatmul.bf16.gmra.mxu0 %v1847
  %v3585 = vpop.f32.mrf.mxu0
  %v3586 = vadd.f32 %v3013, %v3585
  %v3587 = vpop.f32.mrf.mxu0
  %v3588 = vadd.f32 %v3015, %v3587
  %3589 = vmatmul.bf16.gmra.mxu0 %v1850
  %v3590 = vpop.f32.mrf.mxu0
  %v3591 = vadd.f32 %v3018, %v3590
  %v3592 = vpop.f32.mrf.mxu0
  %v3593 = vadd.f32 %v3020, %v3592
  %3594 = vmatmul.bf16.gmra.mxu0 %v1853
  %v3595 = vpop.f32.mrf.mxu0
  %v3596 = vadd.f32 %v3023, %v3595
  %v3597 = vpop.f32.mrf.mxu0
  %v3598 = vadd.f32 %v3025, %v3597
  %3599 = vmatmul.bf16.gmra.mxu0 %v1856
  %v3600 = vpop.f32.mrf.mxu0
  %v3601 = vadd.f32 %v3028, %v3600
  %v3602 = vpop.f32.mrf.mxu0
  %v3603 = vadd.f32 %v3030, %v3602
  %3604 = vmatmul.bf16.gmra.mxu0 %v1859
  %v3605 = vpop.f32.mrf.mxu0
  %v3606 = vadd.f32 %v3033, %v3605
  %v3607 = vpop.f32.mrf.mxu0
  %v3608 = vadd.f32 %v3035, %v3607
  %3609 = vmatmul.bf16.gmra.mxu0 %v1862
  %v3610 = vpop.f32.mrf.mxu0
  %v3611 = vadd.f32 %v3038, %v3610
  %v3612 = vpop.f32.mrf.mxu0
  %v3613 = vadd.f32 %v3040, %v3612
  %3614 = vmatmul.bf16.gmra.mxu0 %v1865
  %v3615 = vpop.f32.mrf.mxu0
  %v3616 = vadd.f32 %v3043, %v3615
  %v3617 = vpop.f32.mrf.mxu0
  %v3618 = vadd.f32 %v3045, %v3617
  %3619 = vmatmul.bf16.gmra.mxu0 %v1868
  %v3620 = vpop.f32.mrf.mxu0
  %v3621 = vadd.f32 %v3048, %v3620
  %v3622 = vpop.f32.mrf.mxu0
  %v3623 = vadd.f32 %v3050, %v3622
  %3624 = vmatmul.bf16.gmra.mxu0 %v1871
  %v3625 = vpop.f32.mrf.mxu0
  %v3626 = vadd.f32 %v3053, %v3625
  %v3627 = vpop.f32.mrf.mxu0
  %v3628 = vadd.f32 %v3055, %v3627
  %3629 = vmatmul.bf16.gmra.mxu0 %v1874
  %v3630 = vpop.f32.mrf.mxu0
  %v3631 = vadd.f32 %v3058, %v3630
  %v3632 = vpop.f32.mrf.mxu0
  %v3633 = vadd.f32 %v3060, %v3632
  %3634 = vmatmul.bf16.gmra.mxu0 %v1877
  %v3635 = vpop.f32.mrf.mxu0
  %v3636 = vadd.f32 %v3063, %v3635
  %v3637 = vpop.f32.mrf.mxu0
  %v3638 = vadd.f32 %v3065, %v3637
  %3639 = vmatmul.bf16.gmra.mxu0 %v1880
  %v3640 = vpop.f32.mrf.mxu0
  %v3641 = vadd.f32 %v3068, %v3640
  %v3642 = vpop.f32.mrf.mxu0
  %v3643 = vadd.f32 %v3070, %v3642
  %3644 = vmatmul.bf16.gmra.mxu0 %v1883
  %v3645 = vpop.f32.mrf.mxu0
  %v3646 = vadd.f32 %v3073, %v3645
  %v3647 = vpop.f32.mrf.mxu0
  %v3648 = vadd.f32 %v3075, %v3647
  %3649 = vmatmul.bf16.gmra.mxu0 %v1886
  %v3650 = vpop.f32.mrf.mxu0
  %v3651 = vadd.f32 %v3078, %v3650
  %v3652 = vpop.f32.mrf.mxu0
  %v3653 = vadd.f32 %v3080, %v3652
  %3654 = vmatmul.bf16.gmra.mxu0 %v1889
  %v3655 = vpop.f32.mrf.mxu0
  %v3656 = vadd.f32 %v3083, %v3655
  %v3657 = vpop.f32.mrf.mxu0
  %v3658 = vadd.f32 %v3085, %v3657
  %3659 = vmatmul.bf16.gmra.mxu0 %v1892
  %v3660 = vpop.f32.mrf.mxu0
  %v3661 = vadd.f32 %v3088, %v3660
  %v3662 = vpop.f32.mrf.mxu0
  %v3663 = vadd.f32 %v3090, %v3662
  %3664 = vmatmul.bf16.gmra.mxu0 %v1895
  %v3665 = vpop.f32.mrf.mxu0
  %v3666 = vadd.f32 %v3093, %v3665
  %v3667 = vpop.f32.mrf.mxu0
  %v3668 = vadd.f32 %v3095, %v3667
  %3669 = vmatmul.bf16.gmra.mxu0 %v1898
  %v3670 = vpop.f32.mrf.mxu0
  %v3671 = vadd.f32 %v3098, %v3670
  %v3672 = vpop.f32.mrf.mxu0
  %v3673 = vadd.f32 %v3100, %v3672
  %3674 = vmatmul.bf16.gmra.mxu0 %v1901
  %v3675 = vpop.f32.mrf.mxu0
  %v3676 = vadd.f32 %v3103, %v3675
  %v3677 = vpop.f32.mrf.mxu0
  %v3678 = vadd.f32 %v3105, %v3677
  %3679 = vmatmul.bf16.gmra.mxu0 %v1904
  %v3680 = vpop.f32.mrf.mxu0
  %v3681 = vadd.f32 %v3108, %v3680
  %v3682 = vpop.f32.mrf.mxu0
  %v3683 = vadd.f32 %v3110, %v3682
  %3684 = vmatmul.bf16.gmra.mxu0 %v1907
  %v3685 = vpop.f32.mrf.mxu0
  %v3686 = vadd.f32 %v3113, %v3685
  %v3687 = vpop.f32.mrf.mxu0
  %v3688 = vadd.f32 %v3115, %v3687
  %3689 = vmatmul.bf16.gmra.mxu0 %v1910
  %v3690 = vpop.f32.mrf.mxu0
  %v3691 = vadd.f32 %v3118, %v3690
  %v3692 = vpop.f32.mrf.mxu0
  %v3693 = vadd.f32 %v3120, %v3692
  %3694 = vmatmul.bf16.gmra.mxu0 %v1913
  %v3695 = vpop.f32.mrf.mxu0
  %v3696 = vadd.f32 %v3123, %v3695
  %v3697 = vpop.f32.mrf.mxu0
  %v3698 = vadd.f32 %v3125, %v3697
  %3699 = vmatmul.bf16.gmra.mxu0 %v1916
  %v3700 = vpop.f32.mrf.mxu0
  %v3701 = vadd.f32 %v3128, %v3700
  %v3702 = vpop.f32.mrf.mxu0
  %v3703 = vadd.f32 %v3130, %v3702
  %3704 = vmatmul.bf16.gmra.mxu0 %v1919
  %v3705 = vpop.f32.mrf.mxu0
  %v3706 = vadd.f32 %v3133, %v3705
  %v3707 = vpop.f32.mrf.mxu0
  %v3708 = vadd.f32 %v3135, %v3707
  %3709 = vmatmul.bf16.gmra.mxu0 %v1922
  %v3710 = vpop.f32.mrf.mxu0
  %v3711 = vadd.f32 %v3138, %v3710
  %v3712 = vpop.f32.mrf.mxu0
  %v3713 = vadd.f32 %v3140, %v3712
  %3714 = vmatmul.bf16.gmra.mxu0 %v1925
  %v3715 = vpop.f32.mrf.mxu0
  %v3716 = vadd.f32 %v3143, %v3715
  %v3717 = vpop.f32.mrf.mxu0
  %v3718 = vadd.f32 %v3145, %v3717
  %3719 = vmatmul.bf16.gmra.mxu0 %v1928
  %v3720 = vpop.f32.mrf.mxu0
  %v3721 = vadd.f32 %v3148, %v3720
  %v3722 = vpop.f32.mrf.mxu0
  %v3723 = vadd.f32 %v3150, %v3722
  %3724 = vmatmul.bf16.gmra.mxu0 %v1931
  %v3725 = vpop.f32.mrf.mxu0
  %v3726 = vadd.f32 %v3153, %v3725
  %v3727 = vpop.f32.mrf.mxu0
  %v3728 = vadd.f32 %v3155, %v3727
  %3729 = vmatmul.bf16.gmra.mxu0 %v1934
  %v3730 = vpop.f32.mrf.mxu0
  %v3731 = vadd.f32 %v3158, %v3730
  %v3732 = vpop.f32.mrf.mxu0
  %v3733 = vadd.f32 %v3160, %v3732
  %3734 = vmatmul.bf16.gmra.mxu0 %v1937
  %v3735 = vpop.f32.mrf.mxu0
  %v3736 = vadd.f32 %v3163, %v3735
  %v3737 = vpop.f32.mrf.mxu0
  %v3738 = vadd.f32 %v3165, %v3737
  %3739 = vmatmul.bf16.gmra.mxu0 %v1940
  %v3740 = vpop.f32.mrf.mxu0
  %v3741 = vadd.f32 %v3168, %v3740
  %v3742 = vpop.f32.mrf.mxu0
  %v3743 = vadd.f32 %v3170, %v3742
  %3744 = vmatmul.bf16.gmra.mxu0 %v1943
  %v3745 = vpop.f32.mrf.mxu0
  %v3746 = vadd.f32 %v3173, %v3745
  %v3747 = vpop.f32.mrf.mxu0
  %v3748 = vadd.f32 %v3175, %v3747
  %3749 = vmatmul.bf16.gmra.mxu0 %v1946
  %v3750 = vpop.f32.mrf.mxu0
  %v3751 = vadd.f32 %v3178, %v3750
  %v3752 = vpop.f32.mrf.mxu0
  %v3753 = vadd.f32 %v3180, %v3752
  %3754 = vmatmul.bf16.gmra.mxu0 %v1949
  %v3755 = vpop.f32.mrf.mxu0
  %v3756 = vadd.f32 %v3183, %v3755
  %v3757 = vpop.f32.mrf.mxu0
  %v3758 = vadd.f32 %v3185, %v3757
  %3759 = vmatmul.bf16.gmra.mxu0 %v1952
  %v3760 = vpop.f32.mrf.mxu0
  %v3761 = vadd.f32 %v3188, %v3760
  %v3762 = vpop.f32.mrf.mxu0
  %v3763 = vadd.f32 %v3190, %v3762
  %3764 = vmatmul.bf16.gmra.mxu0 %v1955
  %v3765 = vpop.f32.mrf.mxu0
  %v3766 = vadd.f32 %v3193, %v3765
  %v3767 = vpop.f32.mrf.mxu0
  %v3768 = vadd.f32 %v3195, %v3767
  %3769 = vmatmul.bf16.gmra.mxu0 %v1958
  %v3770 = vpop.f32.mrf.mxu0
  %v3771 = vadd.f32 %v3198, %v3770
  %v3772 = vpop.f32.mrf.mxu0
  %v3773 = vadd.f32 %v3200, %v3772
  %3774 = vmatmul.bf16.gmra.mxu0 %v1961
  %v3775 = vpop.f32.mrf.mxu0
  %v3776 = vadd.f32 %v3203, %v3775
  %v3777 = vpop.f32.mrf.mxu0
  %v3778 = vadd.f32 %v3205, %v3777
  %3779 = vmatmul.bf16.gmra.mxu0 %v1964
  %v3780 = vpop.f32.mrf.mxu0
  %v3781 = vadd.f32 %v3208, %v3780
  %v3782 = vpop.f32.mrf.mxu0
  %v3783 = vadd.f32 %v3210, %v3782
  %3784 = vmatmul.bf16.gmra.mxu0 %v1967
  %v3785 = vpop.f32.mrf.mxu0
  %v3786 = vadd.f32 %v3213, %v3785
  %v3787 = vpop.f32.mrf.mxu0
  %3788 = vdwg.mxu0
  %3789 = vmatpush.bf16.msra.mxu0 0
  %3790 = vmatpush.bf16.msra.mxu0 0
  %3791 = vmatpush.bf16.msra.mxu0 0
  %3792 = vmatpush.bf16.msra.mxu0 0
  %3793 = vmatpush.bf16.msra.mxu0 0
  %3794 = vmatpush.bf16.msra.mxu0 0
  %3795 = vmatpush.bf16.msra.mxu0 %v2284
  %3796 = vmatpush.bf16.msra.mxu0 %v2283
  %3797 = vmatmul.bf16.gmra.mxu0 %v2305
  %v3798 = vpop.f32.mrf.mxu0
  %v3799 = vadd.f32 %v3226, %v3798
  %v3800 = vpop.f32.mrf.mxu0
  %v3801 = vadd.f32 %v3228, %v3800
  %3802 = vmatmul.bf16.gmra.mxu0 %v2308
  %v3803 = vpop.f32.mrf.mxu0
  %v3804 = vadd.f32 %v3231, %v3803
  %v3805 = vpop.f32.mrf.mxu0
  %v3806 = vadd.f32 %v3233, %v3805
  %3807 = vmatmul.bf16.gmra.mxu0 %v2311
  %v3808 = vpop.f32.mrf.mxu0
  %v3809 = vadd.f32 %v3236, %v3808
  %v3810 = vpop.f32.mrf.mxu0
  %v3811 = vadd.f32 %v3238, %v3810
  %3812 = vmatmul.bf16.gmra.mxu0 %v2314
  %v3813 = vpop.f32.mrf.mxu0
  %v3814 = vadd.f32 %v3241, %v3813
  %v3815 = vpop.f32.mrf.mxu0
  %v3816 = vadd.f32 %v3243, %v3815
  %3817 = vmatmul.bf16.gmra.mxu0 %v2317
  %v3818 = vpop.f32.mrf.mxu0
  %v3819 = vadd.f32 %v3246, %v3818
  %v3820 = vpop.f32.mrf.mxu0
  %v3821 = vadd.f32 %v3248, %v3820
  %3822 = vmatmul.bf16.gmra.mxu0 %v2320
  %v3823 = vpop.f32.mrf.mxu0
  %v3824 = vadd.f32 %v3251, %v3823
  %v3825 = vpop.f32.mrf.mxu0
  %v3826 = vadd.f32 %v3253, %v3825
  %3827 = vmatmul.bf16.gmra.mxu0 %v2323
  %v3828 = vpop.f32.mrf.mxu0
  %v3829 = vadd.f32 %v3256, %v3828
  %v3830 = vpop.f32.mrf.mxu0
  %v3831 = vadd.f32 %v3258, %v3830
  %3832 = vmatmul.bf16.gmra.mxu0 %v2326
  %v3833 = vpop.f32.mrf.mxu0
  %v3834 = vadd.f32 %v3261, %v3833
  %v3835 = vpop.f32.mrf.mxu0
  %v3836 = vadd.f32 %v3263, %v3835
  %3837 = vmatmul.bf16.gmra.mxu0 %v2329
  %v3838 = vpop.f32.mrf.mxu0
  %v3839 = vadd.f32 %v3266, %v3838
  %v3840 = vpop.f32.mrf.mxu0
  %v3841 = vadd.f32 %v3268, %v3840
  %3842 = vmatmul.bf16.gmra.mxu0 %v2332
  %v3843 = vpop.f32.mrf.mxu0
  %v3844 = vadd.f32 %v3271, %v3843
  %v3845 = vpop.f32.mrf.mxu0
  %v3846 = vadd.f32 %v3273, %v3845
  %3847 = vmatmul.bf16.gmra.mxu0 %v2335
  %v3848 = vpop.f32.mrf.mxu0
  %v3849 = vadd.f32 %v3276, %v3848
  %v3850 = vpop.f32.mrf.mxu0
  %v3851 = vadd.f32 %v3278, %v3850
  %3852 = vmatmul.bf16.gmra.mxu0 %v2338
  %v3853 = vpop.f32.mrf.mxu0
  %v3854 = vadd.f32 %v3281, %v3853
  %v3855 = vpop.f32.mrf.mxu0
  %v3856 = vadd.f32 %v3283, %v3855
  %3857 = vmatmul.bf16.gmra.mxu0 %v2341
  %v3858 = vpop.f32.mrf.mxu0
  %v3859 = vadd.f32 %v3286, %v3858
  %v3860 = vpop.f32.mrf.mxu0
  %v3861 = vadd.f32 %v3288, %v3860
  %3862 = vmatmul.bf16.gmra.mxu0 %v2344
  %v3863 = vpop.f32.mrf.mxu0
  %v3864 = vadd.f32 %v3291, %v3863
  %v3865 = vpop.f32.mrf.mxu0
  %v3866 = vadd.f32 %v3293, %v3865
  %3867 = vmatmul.bf16.gmra.mxu0 %v2347
  %v3868 = vpop.f32.mrf.mxu0
  %v3869 = vadd.f32 %v3296, %v3868
  %v3870 = vpop.f32.mrf.mxu0
  %v3871 = vadd.f32 %v3298, %v3870
  %3872 = vmatmul.bf16.gmra.mxu0 %v2350
  %v3873 = vpop.f32.mrf.mxu0
  %v3874 = vadd.f32 %v3301, %v3873
  %v3875 = vpop.f32.mrf.mxu0
  %v3876 = vadd.f32 %v3303, %v3875
  %3877 = vmatmul.bf16.gmra.mxu0 %v2353
  %v3878 = vpop.f32.mrf.mxu0
  %v3879 = vadd.f32 %v3306, %v3878
  %v3880 = vpop.f32.mrf.mxu0
  %v3881 = vadd.f32 %v3308, %v3880
  %3882 = vmatmul.bf16.gmra.mxu0 %v2356
  %v3883 = vpop.f32.mrf.mxu0
  %v3884 = vadd.f32 %v3311, %v3883
  %v3885 = vpop.f32.mrf.mxu0
  %v3886 = vadd.f32 %v3313, %v3885
  %3887 = vmatmul.bf16.gmra.mxu0 %v2359
  %v3888 = vpop.f32.mrf.mxu0
  %v3889 = vadd.f32 %v3316, %v3888
  %v3890 = vpop.f32.mrf.mxu0
  %v3891 = vadd.f32 %v3318, %v3890
  %3892 = vmatmul.bf16.gmra.mxu0 %v2362
  %v3893 = vpop.f32.mrf.mxu0
  %v3894 = vadd.f32 %v3321, %v3893
  %v3895 = vpop.f32.mrf.mxu0
  %v3896 = vadd.f32 %v3323, %v3895
  %3897 = vmatmul.bf16.gmra.mxu0 %v2365
  %v3898 = vpop.f32.mrf.mxu0
  %v3899 = vadd.f32 %v3326, %v3898
  %v3900 = vpop.f32.mrf.mxu0
  %v3901 = vadd.f32 %v3328, %v3900
  %3902 = vmatmul.bf16.gmra.mxu0 %v2368
  %v3903 = vpop.f32.mrf.mxu0
  %v3904 = vadd.f32 %v3331, %v3903
  %v3905 = vpop.f32.mrf.mxu0
  %v3906 = vadd.f32 %v3333, %v3905
  %3907 = vmatmul.bf16.gmra.mxu0 %v2371
  %v3908 = vpop.f32.mrf.mxu0
  %v3909 = vadd.f32 %v3336, %v3908
  %v3910 = vpop.f32.mrf.mxu0
  %v3911 = vadd.f32 %v3338, %v3910
  %3912 = vmatmul.bf16.gmra.mxu0 %v2374
  %v3913 = vpop.f32.mrf.mxu0
  %v3914 = vadd.f32 %v3341, %v3913
  %v3915 = vpop.f32.mrf.mxu0
  %v3916 = vadd.f32 %v3343, %v3915
  %3917 = vmatmul.bf16.gmra.mxu0 %v2377
  %v3918 = vpop.f32.mrf.mxu0
  %v3919 = vadd.f32 %v3346, %v3918
  %v3920 = vpop.f32.mrf.mxu0
  %v3921 = vadd.f32 %v3348, %v3920
  %3922 = vmatmul.bf16.gmra.mxu0 %v2380
  %v3923 = vpop.f32.mrf.mxu0
  %v3924 = vadd.f32 %v3351, %v3923
  %v3925 = vpop.f32.mrf.mxu0
  %v3926 = vadd.f32 %v3353, %v3925
  %3927 = vmatmul.bf16.gmra.mxu0 %v2383
  %v3928 = vpop.f32.mrf.mxu0
  %v3929 = vadd.f32 %v3356, %v3928
  %v3930 = vpop.f32.mrf.mxu0
  %v3931 = vadd.f32 %v3358, %v3930
  %3932 = vmatmul.bf16.gmra.mxu0 %v2386
  %v3933 = vpop.f32.mrf.mxu0
  %v3934 = vadd.f32 %v3361, %v3933
  %v3935 = vpop.f32.mrf.mxu0
  %v3936 = vadd.f32 %v3363, %v3935
  %3937 = vmatmul.bf16.gmra.mxu0 %v2389
  %v3938 = vpop.f32.mrf.mxu0
  %v3939 = vadd.f32 %v3366, %v3938
  %v3940 = vpop.f32.mrf.mxu0
  %v3941 = vadd.f32 %v3368, %v3940
  %3942 = vmatmul.bf16.gmra.mxu0 %v2392
  %v3943 = vpop.f32.mrf.mxu0
  %v3944 = vadd.f32 %v3371, %v3943
  %v3945 = vpop.f32.mrf.mxu0
  %v3946 = vadd.f32 %v3373, %v3945
  %3947 = vmatmul.bf16.gmra.mxu0 %v2395
  %v3948 = vpop.f32.mrf.mxu0
  %v3949 = vadd.f32 %v3376, %v3948
  %v3950 = vpop.f32.mrf.mxu0
  %v3951 = vadd.f32 %v3378, %v3950
  %3952 = vmatmul.bf16.gmra.mxu0 %v2398
  %v3953 = vpop.f32.mrf.mxu0
  %v3954 = vadd.f32 %v3381, %v3953
  %v3955 = vpop.f32.mrf.mxu0
  %v3956 = vadd.f32 %v3383, %v3955
  %3957 = vmatmul.bf16.gmra.mxu0 %v2401
  %v3958 = vpop.f32.mrf.mxu0
  %v3959 = vadd.f32 %v3386, %v3958
  %v3960 = vpop.f32.mrf.mxu0
  %v3961 = vadd.f32 %v3388, %v3960
  %3962 = vmatmul.bf16.gmra.mxu0 %v2404
  %v3963 = vpop.f32.mrf.mxu0
  %v3964 = vadd.f32 %v3391, %v3963
  %v3965 = vpop.f32.mrf.mxu0
  %v3966 = vadd.f32 %v3393, %v3965
  %3967 = vmatmul.bf16.gmra.mxu0 %v2407
  %v3968 = vpop.f32.mrf.mxu0
  %v3969 = vadd.f32 %v3396, %v3968
  %v3970 = vpop.f32.mrf.mxu0
  %v3971 = vadd.f32 %v3398, %v3970
  %3972 = vmatmul.bf16.gmra.mxu0 %v2410
  %v3973 = vpop.f32.mrf.mxu0
  %v3974 = vadd.f32 %v3401, %v3973
  %v3975 = vpop.f32.mrf.mxu0
  %v3976 = vadd.f32 %v3403, %v3975
  %3977 = vmatmul.bf16.gmra.mxu0 %v2413
  %v3978 = vpop.f32.mrf.mxu0
  %v3979 = vadd.f32 %v3406, %v3978
  %v3980 = vpop.f32.mrf.mxu0
  %v3981 = vadd.f32 %v3408, %v3980
  %3982 = vmatmul.bf16.gmra.mxu0 %v2416
  %v3983 = vpop.f32.mrf.mxu0
  %v3984 = vadd.f32 %v3411, %v3983
  %v3985 = vpop.f32.mrf.mxu0
  %v3986 = vadd.f32 %v3413, %v3985
  %3987 = vmatmul.bf16.gmra.mxu0 %v2419
  %v3988 = vpop.f32.mrf.mxu0
  %v3989 = vadd.f32 %v3416, %v3988
  %v3990 = vpop.f32.mrf.mxu0
  %v3991 = vadd.f32 %v3418, %v3990
  %3992 = vmatmul.bf16.gmra.mxu0 %v2422
  %v3993 = vpop.f32.mrf.mxu0
  %v3994 = vadd.f32 %v3421, %v3993
  %v3995 = vpop.f32.mrf.mxu0
  %v3996 = vadd.f32 %v3423, %v3995
  %3997 = vmatmul.bf16.gmra.mxu0 %v2425
  %v3998 = vpop.f32.mrf.mxu0
  %v3999 = vadd.f32 %v3426, %v3998
  %v4000 = vpop.f32.mrf.mxu0
  %v4001 = vadd.f32 %v3428, %v4000
  %4002 = vmatmul.bf16.gmra.mxu0 %v2428
  %v4003 = vpop.f32.mrf.mxu0
  %v4004 = vadd.f32 %v3431, %v4003
  %v4005 = vpop.f32.mrf.mxu0
  %v4006 = vadd.f32 %v3433, %v4005
  %4007 = vmatmul.bf16.gmra.mxu0 %v2431
  %v4008 = vpop.f32.mrf.mxu0
  %v4009 = vadd.f32 %v3436, %v4008
  %v4010 = vpop.f32.mrf.mxu0
  %v4011 = vadd.f32 %v3438, %v4010
  %4012 = vmatmul.bf16.gmra.mxu0 %v2434
  %v4013 = vpop.f32.mrf.mxu0
  %v4014 = vadd.f32 %v3441, %v4013
  %v4015 = vpop.f32.mrf.mxu0
  %v4016 = vadd.f32 %v3443, %v4015
  %4017 = vmatmul.bf16.gmra.mxu0 %v2437
  %v4018 = vpop.f32.mrf.mxu0
  %v4019 = vadd.f32 %v3446, %v4018
  %v4020 = vpop.f32.mrf.mxu0
  %v4021 = vadd.f32 %v3448, %v4020
  %4022 = vmatmul.bf16.gmra.mxu0 %v2440
  %v4023 = vpop.f32.mrf.mxu0
  %v4024 = vadd.f32 %v3451, %v4023
  %v4025 = vpop.f32.mrf.mxu0
  %v4026 = vadd.f32 %v3453, %v4025
  %4027 = vmatmul.bf16.gmra.mxu0 %v2443
  %v4028 = vpop.f32.mrf.mxu0
  %v4029 = vadd.f32 %v3456, %v4028
  %v4030 = vpop.f32.mrf.mxu0
  %v4031 = vadd.f32 %v3458, %v4030
  %4032 = vmatmul.bf16.gmra.mxu0 %v2446
  %v4033 = vpop.f32.mrf.mxu0
  %v4034 = vadd.f32 %v3461, %v4033
  %v4035 = vpop.f32.mrf.mxu0
  %v4036 = vadd.f32 %v3463, %v4035
  %4037 = vmatmul.bf16.gmra.mxu0 %v2449
  %v4038 = vpop.f32.mrf.mxu0
  %v4039 = vadd.f32 %v3466, %v4038
  %v4040 = vpop.f32.mrf.mxu0
  %v4041 = vadd.f32 %v3468, %v4040
  %4042 = vmatmul.bf16.gmra.mxu0 %v2452
  %v4043 = vpop.f32.mrf.mxu0
  %v4044 = vadd.f32 %v3471, %v4043
  %v4045 = vpop.f32.mrf.mxu0
  %v4046 = vadd.f32 %v3473, %v4045
  %4047 = vmatmul.bf16.gmra.mxu0 %v2455
  %v4048 = vpop.f32.mrf.mxu0
  %v4049 = vadd.f32 %v3476, %v4048
  %v4050 = vpop.f32.mrf.mxu0
  %v4051 = vadd.f32 %v3478, %v4050
  %4052 = vmatmul.bf16.gmra.mxu0 %v2458
  %v4053 = vpop.f32.mrf.mxu0
  %v4054 = vadd.f32 %v3481, %v4053
  %v4055 = vpop.f32.mrf.mxu0
  %v4056 = vadd.f32 %v3483, %v4055
  %4057 = vmatmul.bf16.gmra.mxu0 %v2461
  %v4058 = vpop.f32.mrf.mxu0
  %v4059 = vadd.f32 %v3486, %v4058
  %v4060 = vpop.f32.mrf.mxu0
  %v4061 = vadd.f32 %v3488, %v4060
  %4062 = vmatmul.bf16.gmra.mxu0 %v2464
  %v4063 = vpop.f32.mrf.mxu0
  %v4064 = vadd.f32 %v3491, %v4063
  %v4065 = vpop.f32.mrf.mxu0
  %v4066 = vadd.f32 %v3493, %v4065
  %4067 = vmatmul.bf16.gmra.mxu0 %v2467
  %v4068 = vpop.f32.mrf.mxu0
  %v4069 = vadd.f32 %v3496, %v4068
  %v4070 = vpop.f32.mrf.mxu0
  %v4071 = vadd.f32 %v3498, %v4070
  %4072 = vmatmul.bf16.gmra.mxu0 %v2470
  %v4073 = vpop.f32.mrf.mxu0
  %v4074 = vadd.f32 %v3501, %v4073
  %v4075 = vpop.f32.mrf.mxu0
  %v4076 = vadd.f32 %v3503, %v4075
  %4077 = vmatmul.bf16.gmra.mxu0 %v2473
  %v4078 = vpop.f32.mrf.mxu0
  %v4079 = vadd.f32 %v3506, %v4078
  %v4080 = vpop.f32.mrf.mxu0
  %v4081 = vadd.f32 %v3508, %v4080
  %4082 = vmatmul.bf16.gmra.mxu0 %v2476
  %v4083 = vpop.f32.mrf.mxu0
  %v4084 = vadd.f32 %v3511, %v4083
  %v4085 = vpop.f32.mrf.mxu0
  %v4086 = vadd.f32 %v3513, %v4085
  %4087 = vmatmul.bf16.gmra.mxu0 %v2479
  %v4088 = vpop.f32.mrf.mxu0
  %v4089 = vadd.f32 %v3516, %v4088
  %v4090 = vpop.f32.mrf.mxu0
  %v4091 = vadd.f32 %v3518, %v4090
  %4092 = vmatmul.bf16.gmra.mxu0 %v2482
  %v4093 = vpop.f32.mrf.mxu0
  %v4094 = vadd.f32 %v3521, %v4093
  %v4095 = vpop.f32.mrf.mxu0
  %v4096 = vadd.f32 %v3523, %v4095
  %4097 = vmatmul.bf16.gmra.mxu0 %v2485
  %v4098 = vpop.f32.mrf.mxu0
  %v4099 = vadd.f32 %v3526, %v4098
  %v4100 = vpop.f32.mrf.mxu0
  %v4101 = vadd.f32 %v3528, %v4100
  %4102 = vmatmul.bf16.gmra.mxu0 %v2488
  %v4103 = vpop.f32.mrf.mxu0
  %v4104 = vadd.f32 %v3531, %v4103
  %v4105 = vpop.f32.mrf.mxu0
  %v4106 = vadd.f32 %v3533, %v4105
  %4107 = vmatmul.bf16.gmra.mxu0 %v2491
  %v4108 = vpop.f32.mrf.mxu0
  %v4109 = vadd.f32 %v3536, %v4108
  %v4110 = vpop.f32.mrf.mxu0
  %v4111 = vadd.f32 %v3538, %v4110
  %4112 = vmatmul.bf16.gmra.mxu0 %v2494
  %v4113 = vpop.f32.mrf.mxu0
  %v4114 = vadd.f32 %v3541, %v4113
  %v4115 = vpop.f32.mrf.mxu0
  %v4116 = vadd.f32 %v3543, %v4115
  %4117 = vmatmul.bf16.gmra.mxu0 %v2497
  %v4118 = vpop.f32.mrf.mxu0
  %v4119 = vadd.f32 %v3546, %v4118
  %v4120 = vpop.f32.mrf.mxu0
  %v4121 = vadd.f32 %v3548, %v4120
  %4122 = vmatmul.bf16.gmra.mxu0 %v2500
  %v4123 = vpop.f32.mrf.mxu0
  %v4124 = vadd.f32 %v3551, %v4123
  %v4125 = vpop.f32.mrf.mxu0
  %v4126 = vadd.f32 %v3553, %v4125
  %4127 = vmatmul.bf16.gmra.mxu0 %v2503
  %v4128 = vpop.f32.mrf.mxu0
  %v4129 = vadd.f32 %v3556, %v4128
  %v4130 = vpop.f32.mrf.mxu0
  %v4131 = vadd.f32 %v3558, %v4130
  %4132 = vmatmul.bf16.gmra.mxu0 %v2506
  %v4133 = vpop.f32.mrf.mxu0
  %v4134 = vadd.f32 %v3561, %v4133
  %v4135 = vpop.f32.mrf.mxu0
  %v4136 = vadd.f32 %v3563, %v4135
  %4137 = vmatmul.bf16.gmra.mxu0 %v2509
  %v4138 = vpop.f32.mrf.mxu0
  %v4139 = vadd.f32 %v3566, %v4138
  %v4140 = vpop.f32.mrf.mxu0
  %v4141 = vadd.f32 %v3568, %v4140
  %4142 = vmatmul.bf16.gmra.mxu0 %v2512
  %v4143 = vpop.f32.mrf.mxu0
  %v4144 = vadd.f32 %v3571, %v4143
  %v4145 = vpop.f32.mrf.mxu0
  %v4146 = vadd.f32 %v3573, %v4145
  %4147 = vmatmul.bf16.gmra.mxu0 %v2515
  %v4148 = vpop.f32.mrf.mxu0
  %v4149 = vadd.f32 %v3576, %v4148
  %v4150 = vpop.f32.mrf.mxu0
  %v4151 = vadd.f32 %v3578, %v4150
  %4152 = vmatmul.bf16.gmra.mxu0 %v2518
  %v4153 = vpop.f32.mrf.mxu0
  %v4154 = vadd.f32 %v3581, %v4153
  %v4155 = vpop.f32.mrf.mxu0
  %v4156 = vadd.f32 %v3583, %v4155
  %4157 = vmatmul.bf16.gmra.mxu0 %v2521
  %v4158 = vpop.f32.mrf.mxu0
  %v4159 = vadd.f32 %v3586, %v4158
  %v4160 = vpop.f32.mrf.mxu0
  %v4161 = vadd.f32 %v3588, %v4160
  %4162 = vmatmul.bf16.gmra.mxu0 %v2524
  %v4163 = vpop.f32.mrf.mxu0
  %v4164 = vadd.f32 %v3591, %v4163
  %v4165 = vpop.f32.mrf.mxu0
  %v4166 = vadd.f32 %v3593, %v4165
  %4167 = vmatmul.bf16.gmra.mxu0 %v2527
  %v4168 = vpop.f32.mrf.mxu0
  %v4169 = vadd.f32 %v3596, %v4168
  %v4170 = vpop.f32.mrf.mxu0
  %v4171 = vadd.f32 %v3598, %v4170
  %4172 = vmatmul.bf16.gmra.mxu0 %v2530
  %v4173 = vpop.f32.mrf.mxu0
  %v4174 = vadd.f32 %v3601, %v4173
  %v4175 = vpop.f32.mrf.mxu0
  %v4176 = vadd.f32 %v3603, %v4175
  %4177 = vmatmul.bf16.gmra.mxu0 %v2533
  %v4178 = vpop.f32.mrf.mxu0
  %v4179 = vadd.f32 %v3606, %v4178
  %v4180 = vpop.f32.mrf.mxu0
  %v4181 = vadd.f32 %v3608, %v4180
  %4182 = vmatmul.bf16.gmra.mxu0 %v2536
  %v4183 = vpop.f32.mrf.mxu0
  %v4184 = vadd.f32 %v3611, %v4183
  %v4185 = vpop.f32.mrf.mxu0
  %v4186 = vadd.f32 %v3613, %v4185
  %4187 = vmatmul.bf16.gmra.mxu0 %v2539
  %v4188 = vpop.f32.mrf.mxu0
  %v4189 = vadd.f32 %v3616, %v4188
  %v4190 = vpop.f32.mrf.mxu0
  %v4191 = vadd.f32 %v3618, %v4190
  %4192 = vmatmul.bf16.gmra.mxu0 %v2542
  %v4193 = vpop.f32.mrf.mxu0
  %v4194 = vadd.f32 %v3621, %v4193
  %v4195 = vpop.f32.mrf.mxu0
  %v4196 = vadd.f32 %v3623, %v4195
  %4197 = vmatmul.bf16.gmra.mxu0 %v2545
  %v4198 = vpop.f32.mrf.mxu0
  %v4199 = vadd.f32 %v3626, %v4198
  %v4200 = vpop.f32.mrf.mxu0
  %v4201 = vadd.f32 %v3628, %v4200
  %4202 = vmatmul.bf16.gmra.mxu0 %v2548
  %v4203 = vpop.f32.mrf.mxu0
  %v4204 = vadd.f32 %v3631, %v4203
  %v4205 = vpop.f32.mrf.mxu0
  %v4206 = vadd.f32 %v3633, %v4205
  %4207 = vmatmul.bf16.gmra.mxu0 %v2551
  %v4208 = vpop.f32.mrf.mxu0
  %v4209 = vadd.f32 %v3636, %v4208
  %v4210 = vpop.f32.mrf.mxu0
  %v4211 = vadd.f32 %v3638, %v4210
  %4212 = vmatmul.bf16.gmra.mxu0 %v2554
  %v4213 = vpop.f32.mrf.mxu0
  %v4214 = vadd.f32 %v3641, %v4213
  %v4215 = vpop.f32.mrf.mxu0
  %v4216 = vadd.f32 %v3643, %v4215
  %4217 = vmatmul.bf16.gmra.mxu0 %v2557
  %v4218 = vpop.f32.mrf.mxu0
  %v4219 = vadd.f32 %v3646, %v4218
  %v4220 = vpop.f32.mrf.mxu0
  %v4221 = vadd.f32 %v3648, %v4220
  %4222 = vmatmul.bf16.gmra.mxu0 %v2560
  %v4223 = vpop.f32.mrf.mxu0
  %v4224 = vadd.f32 %v3651, %v4223
  %v4225 = vpop.f32.mrf.mxu0
  %v4226 = vadd.f32 %v3653, %v4225
  %4227 = vmatmul.bf16.gmra.mxu0 %v2563
  %v4228 = vpop.f32.mrf.mxu0
  %v4229 = vadd.f32 %v3656, %v4228
  %v4230 = vpop.f32.mrf.mxu0
  %v4231 = vadd.f32 %v3658, %v4230
  %4232 = vmatmul.bf16.gmra.mxu0 %v2566
  %v4233 = vpop.f32.mrf.mxu0
  %v4234 = vadd.f32 %v3661, %v4233
  %v4235 = vpop.f32.mrf.mxu0
  %v4236 = vadd.f32 %v3663, %v4235
  %4237 = vmatmul.bf16.gmra.mxu0 %v2569
  %v4238 = vpop.f32.mrf.mxu0
  %v4239 = vadd.f32 %v3666, %v4238
  %v4240 = vpop.f32.mrf.mxu0
  %v4241 = vadd.f32 %v3668, %v4240
  %4242 = vmatmul.bf16.gmra.mxu0 %v2572
  %v4243 = vpop.f32.mrf.mxu0
  %v4244 = vadd.f32 %v3671, %v4243
  %v4245 = vpop.f32.mrf.mxu0
  %v4246 = vadd.f32 %v3673, %v4245
  %4247 = vmatmul.bf16.gmra.mxu0 %v2575
  %v4248 = vpop.f32.mrf.mxu0
  %v4249 = vadd.f32 %v3676, %v4248
  %v4250 = vpop.f32.mrf.mxu0
  %v4251 = vadd.f32 %v3678, %v4250
  %4252 = vmatmul.bf16.gmra.mxu0 %v2578
  %v4253 = vpop.f32.mrf.mxu0
  %v4254 = vadd.f32 %v3681, %v4253
  %v4255 = vpop.f32.mrf.mxu0
  %v4256 = vadd.f32 %v3683, %v4255
  %4257 = vmatmul.bf16.gmra.mxu0 %v2581
  %v4258 = vpop.f32.mrf.mxu0
  %v4259 = vadd.f32 %v3686, %v4258
  %v4260 = vpop.f32.mrf.mxu0
  %v4261 = vadd.f32 %v3688, %v4260
  %4262 = vmatmul.bf16.gmra.mxu0 %v2584
  %v4263 = vpop.f32.mrf.mxu0
  %v4264 = vadd.f32 %v3691, %v4263
  %v4265 = vpop.f32.mrf.mxu0
  %v4266 = vadd.f32 %v3693, %v4265
  %4267 = vmatmul.bf16.gmra.mxu0 %v2587
  %v4268 = vpop.f32.mrf.mxu0
  %v4269 = vadd.f32 %v3696, %v4268
  %v4270 = vpop.f32.mrf.mxu0
  %v4271 = vadd.f32 %v3698, %v4270
  %4272 = vmatmul.bf16.gmra.mxu0 %v2590
  %v4273 = vpop.f32.mrf.mxu0
  %v4274 = vadd.f32 %v3701, %v4273
  %v4275 = vpop.f32.mrf.mxu0
  %v4276 = vadd.f32 %v3703, %v4275
  %4277 = vmatmul.bf16.gmra.mxu0 %v2593
  %v4278 = vpop.f32.mrf.mxu0
  %v4279 = vadd.f32 %v3706, %v4278
  %v4280 = vpop.f32.mrf.mxu0
  %v4281 = vadd.f32 %v3708, %v4280
  %4282 = vmatmul.bf16.gmra.mxu0 %v2596
  %v4283 = vpop.f32.mrf.mxu0
  %v4284 = vadd.f32 %v3711, %v4283
  %v4285 = vpop.f32.mrf.mxu0
  %v4286 = vadd.f32 %v3713, %v4285
  %4287 = vmatmul.bf16.gmra.mxu0 %v2599
  %v4288 = vpop.f32.mrf.mxu0
  %v4289 = vadd.f32 %v3716, %v4288
  %v4290 = vpop.f32.mrf.mxu0
  %v4291 = vadd.f32 %v3718, %v4290
  %4292 = vmatmul.bf16.gmra.mxu0 %v2602
  %v4293 = vpop.f32.mrf.mxu0
  %v4294 = vadd.f32 %v3721, %v4293
  %v4295 = vpop.f32.mrf.mxu0
  %v4296 = vadd.f32 %v3723, %v4295
  %4297 = vmatmul.bf16.gmra.mxu0 %v2605
  %v4298 = vpop.f32.mrf.mxu0
  %v4299 = vadd.f32 %v3726, %v4298
  %v4300 = vpop.f32.mrf.mxu0
  %v4301 = vadd.f32 %v3728, %v4300
  %4302 = vmatmul.bf16.gmra.mxu0 %v2608
  %v4303 = vpop.f32.mrf.mxu0
  %v4304 = vadd.f32 %v3731, %v4303
  %v4305 = vpop.f32.mrf.mxu0
  %v4306 = vadd.f32 %v3733, %v4305
  %4307 = vmatmul.bf16.gmra.mxu0 %v2611
  %v4308 = vpop.f32.mrf.mxu0
  %v4309 = vadd.f32 %v3736, %v4308
  %v4310 = vpop.f32.mrf.mxu0
  %v4311 = vadd.f32 %v3738, %v4310
  %4312 = vmatmul.bf16.gmra.mxu0 %v2614
  %v4313 = vpop.f32.mrf.mxu0
  %v4314 = vadd.f32 %v3741, %v4313
  %v4315 = vpop.f32.mrf.mxu0
  %v4316 = vadd.f32 %v3743, %v4315
  %4317 = vmatmul.bf16.gmra.mxu0 %v2617
  %v4318 = vpop.f32.mrf.mxu0
  %v4319 = vadd.f32 %v3746, %v4318
  %v4320 = vpop.f32.mrf.mxu0
  %v4321 = vadd.f32 %v3748, %v4320
  %4322 = vmatmul.bf16.gmra.mxu0 %v2620
  %v4323 = vpop.f32.mrf.mxu0
  %v4324 = vadd.f32 %v3751, %v4323
  %v4325 = vpop.f32.mrf.mxu0
  %v4326 = vadd.f32 %v3753, %v4325
  %4327 = vmatmul.bf16.gmra.mxu0 %v2623
  %v4328 = vpop.f32.mrf.mxu0
  %v4329 = vadd.f32 %v3756, %v4328
  %v4330 = vpop.f32.mrf.mxu0
  %v4331 = vadd.f32 %v3758, %v4330
  %4332 = vmatmul.bf16.gmra.mxu0 %v2626
  %v4333 = vpop.f32.mrf.mxu0
  %v4334 = vadd.f32 %v3761, %v4333
  %v4335 = vpop.f32.mrf.mxu0
  %v4336 = vadd.f32 %v3763, %v4335
  %4337 = vmatmul.bf16.gmra.mxu0 %v2629
  %v4338 = vpop.f32.mrf.mxu0
  %v4339 = vadd.f32 %v3766, %v4338
  %v4340 = vpop.f32.mrf.mxu0
  %v4341 = vadd.f32 %v3768, %v4340
  %4342 = vmatmul.bf16.gmra.mxu0 %v2632
  %v4343 = vpop.f32.mrf.mxu0
  %v4344 = vadd.f32 %v3771, %v4343
  %v4345 = vpop.f32.mrf.mxu0
  %v4346 = vadd.f32 %v3773, %v4345
  %4347 = vmatmul.bf16.gmra.mxu0 %v2635
  %v4348 = vpop.f32.mrf.mxu0
  %v4349 = vadd.f32 %v3776, %v4348
  %v4350 = vpop.f32.mrf.mxu0
  %v4351 = vadd.f32 %v3778, %v4350
  %4352 = vmatmul.bf16.gmra.mxu0 %v2638
  %v4353 = vpop.f32.mrf.mxu0
  %v4354 = vadd.f32 %v3781, %v4353
  %v4355 = vpop.f32.mrf.mxu0
  %v4356 = vadd.f32 %v3783, %v4355
  %4357 = vmatmul.bf16.gmra.mxu0 %v2641
  %v4358 = vpop.f32.mrf.mxu0
  %v4359 = vadd.f32 %v3786, %v4358
  %v4360 = vpop.f32.mrf.mxu0
  %4361 = vdwg.mxu0
  %v4362 = vmax.f32 %v3799, 0.0
  %v4363 = vmax.f32 %v3801, 0.0
  %v4364 = vmax.f32 %v3804, 0.0
  %v4365 = vmax.f32 %v3806, 0.0
  %v4366 = vmax.f32 %v3809, 0.0
  %v4367 = vmax.f32 %v3811, 0.0
  %v4368 = vmax.f32 %v3814, 0.0
  %v4369 = vmax.f32 %v3816, 0.0
  %v4370 = vmax.f32 %v3819, 0.0
  %v4371 = vmax.f32 %v3821, 0.0
  %v4372 = vmax.f32 %v3824, 0.0
  %v4373 = vmax.f32 %v3826, 0.0
  %v4374 = vmax.f32 %v3829, 0.0
  %v4375 = vmax.f32 %v3831, 0.0
  %v4376 = vmax.f32 %v3834, 0.0
  %v4377 = vmax.f32 %v3836, 0.0
  %v4378 = vmax.f32 %v3839, 0.0
  %v4379 = vmax.f32 %v3841, 0.0
  %v4380 = vmax.f32 %v3844, 0.0
  %v4381 = vmax.f32 %v3846, 0.0
  %v4382 = vmax.f32 %v3849, 0.0
  %v4383 = vmax.f32 %v3851, 0.0
  %v4384 = vmax.f32 %v3854, 0.0
  %v4385 = vmax.f32 %v3856, 0.0
  %v4386 = vmax.f32 %v3859, 0.0
  %v4387 = vmax.f32 %v3861, 0.0
  %v4388 = vmax.f32 %v3864, 0.0
  %v4389 = vmax.f32 %v3866, 0.0
  %v4390 = vmax.f32 %v3869, 0.0
  %v4391 = vmax.f32 %v3871, 0.0
  %v4392 = vmax.f32 %v3874, 0.0
  %v4393 = vmax.f32 %v3876, 0.0
  %v4394 = vmax.f32 %v3879, 0.0
  %v4395 = vmax.f32 %v3881, 0.0
  %v4396 = vmax.f32 %v3884, 0.0
  %v4397 = vmax.f32 %v3886, 0.0
  %v4398 = vmax.f32 %v3889, 0.0
  %v4399 = vmax.f32 %v3891, 0.0
  %v4400 = vmax.f32 %v3894, 0.0
  %v4401 = vmax.f32 %v3896, 0.0
  %v4402 = vmax.f32 %v3899, 0.0
  %v4403 = vmax.f32 %v3901, 0.0
  %v4404 = vmax.f32 %v3904, 0.0
  %v4405 = vmax.f32 %v3906, 0.0
  %v4406 = vmax.f32 %v3909, 0.0
  %v4407 = vmax.f32 %v3911, 0.0
  %v4408 = vmax.f32 %v3914, 0.0
  %v4409 = vmax.f32 %v3916, 0.0
  %v4410 = vmax.f32 %v3919, 0.0
  %v4411 = vmax.f32 %v3921, 0.0
  %v4412 = vmax.f32 %v3924, 0.0
  %v4413 = vmax.f32 %v3926, 0.0
  %v4414 = vmax.f32 %v3929, 0.0
  %v4415 = vmax.f32 %v3931, 0.0
  %v4416 = vmax.f32 %v3934, 0.0
  %v4417 = vmax.f32 %v3936, 0.0
  %v4418 = vmax.f32 %v3939, 0.0
  %v4419 = vmax.f32 %v3941, 0.0
  %v4420 = vmax.f32 %v3944, 0.0
  %v4421 = vmax.f32 %v3946, 0.0
  %v4422 = vmax.f32 %v3949, 0.0
  %v4423 = vmax.f32 %v3951, 0.0
  %v4424 = vmax.f32 %v3954, 0.0
  %v4425 = vmax.f32 %v3956, 0.0
  %v4426 = vmax.f32 %v3959, 0.0
  %v4427 = vmax.f32 %v3961, 0.0
  %v4428 = vmax.f32 %v3964, 0.0
  %v4429 = vmax.f32 %v3966, 0.0
  %v4430 = vmax.f32 %v3969, 0.0
  %v4431 = vmax.f32 %v3971, 0.0
  %v4432 = vmax.f32 %v3974, 0.0
  %v4433 = vmax.f32 %v3976, 0.0
  %v4434 = vmax.f32 %v3979, 0.0
  %v4435 = vmax.f32 %v3981, 0.0
  %v4436 = vmax.f32 %v3984, 0.0
  %v4437 = vmax.f32 %v3986, 0.0
  %v4438 = vmax.f32 %v3989, 0.0
  %v4439 = vmax.f32 %v3991, 0.0
  %v4440 = vmax.f32 %v3994, 0.0
  %v4441 = vmax.f32 %v3996, 0.0
  %v4442 = vmax.f32 %v3999, 0.0
  %v4443 = vmax.f32 %v4001, 0.0
  %v4444 = vmax.f32 %v4004, 0.0
  %v4445 = vmax.f32 %v4006, 0.0
  %v4446 = vmax.f32 %v4009, 0.0
  %v4447 = vmax.f32 %v4011, 0.0
  %v4448 = vmax.f32 %v4014, 0.0
  %v4449 = vmax.f32 %v4016, 0.0
  %v4450 = vmax.f32 %v4019, 0.0
  %v4451 = vmax.f32 %v4021, 0.0
  %v4452 = vmax.f32 %v4024, 0.0
  %v4453 = vmax.f32 %v4026, 0.0
  %v4454 = vmax.f32 %v4029, 0.0
  %v4455 = vmax.f32 %v4031, 0.0
  %v4456 = vmax.f32 %v4034, 0.0
  %v4457 = vmax.f32 %v4036, 0.0
  %v4458 = vmax.f32 %v4039, 0.0
  %v4459 = vmax.f32 %v4041, 0.0
  %v4460 = vmax.f32 %v4044, 0.0
  %v4461 = vmax.f32 %v4046, 0.0
  %v4462 = vmax.f32 %v4049, 0.0
  %v4463 = vmax.f32 %v4051, 0.0
  %v4464 = vmax.f32 %v4054, 0.0
  %v4465 = vmax.f32 %v4056, 0.0
  %v4466 = vmax.f32 %v4059, 0.0
  %v4467 = vmax.f32 %v4061, 0.0
  %v4468 = vmax.f32 %v4064, 0.0
  %v4469 = vmax.f32 %v4066, 0.0
  %v4470 = vmax.f32 %v4069, 0.0
  %v4471 = vmax.f32 %v4071, 0.0
  %v4472 = vmax.f32 %v4074, 0.0
  %v4473 = vmax.f32 %v4076, 0.0
  %v4474 = vmax.f32 %v4079, 0.0
  %v4475 = vmax.f32 %v4081, 0.0
  %v4476 = vmax.f32 %v4084, 0.0
  %v4477 = vmax.f32 %v4086, 0.0
  %v4478 = vmax.f32 %v4089, 0.0
  %v4479 = vmax.f32 %v4091, 0.0
  %v4480 = vmax.f32 %v4094, 0.0
  %v4481 = vmax.f32 %v4096, 0.0
  %v4482 = vmax.f32 %v4099, 0.0
  %v4483 = vmax.f32 %v4101, 0.0
  %v4484 = vmax.f32 %v4104, 0.0
  %v4485 = vmax.f32 %v4106, 0.0
  %v4486 = vmax.f32 %v4109, 0.0
  %v4487 = vmax.f32 %v4111, 0.0
  %v4488 = vmax.f32 %v4114, 0.0
  %v4489 = vmax.f32 %v4116, 0.0
  %v4490 = vmax.f32 %v4119, 0.0
  %v4491 = vmax.f32 %v4121, 0.0
  %v4492 = vmax.f32 %v4124, 0.0
  %v4493 = vmax.f32 %v4126, 0.0
  %v4494 = vmax.f32 %v4129, 0.0
  %v4495 = vmax.f32 %v4131, 0.0
  %v4496 = vmax.f32 %v4134, 0.0
  %v4497 = vmax.f32 %v4136, 0.0
  %v4498 = vmax.f32 %v4139, 0.0
  %v4499 = vmax.f32 %v4141, 0.0
  %v4500 = vmax.f32 %v4144, 0.0
  %v4501 = vmax.f32 %v4146, 0.0
  %v4502 = vmax.f32 %v4149, 0.0
  %v4503 = vmax.f32 %v4151, 0.0
  %v4504 = vmax.f32 %v4154, 0.0
  %v4505 = vmax.f32 %v4156, 0.0
  %v4506 = vmax.f32 %v4159, 0.0
  %v4507 = vmax.f32 %v4161, 0.0
  %v4508 = vmax.f32 %v4164, 0.0
  %v4509 = vmax.f32 %v4166, 0.0
  %v4510 = vmax.f32 %v4169, 0.0
  %v4511 = vmax.f32 %v4171, 0.0
  %v4512 = vmax.f32 %v4174, 0.0
  %v4513 = vmax.f32 %v4176, 0.0
  %v4514 = vmax.f32 %v4179, 0.0
  %v4515 = vmax.f32 %v4181, 0.0
  %v4516 = vmax.f32 %v4184, 0.0
  %v4517 = vmax.f32 %v4186, 0.0
  %v4518 = vmax.f32 %v4189, 0.0
  %v4519 = vmax.f32 %v4191, 0.0
  %v4520 = vmax.f32 %v4194, 0.0
  %v4521 = vmax.f32 %v4196, 0.0
  %v4522 = vmax.f32 %v4199, 0.0
  %v4523 = vmax.f32 %v4201, 0.0
  %v4524 = vmax.f32 %v4204, 0.0
  %v4525 = vmax.f32 %v4206, 0.0
  %v4526 = vmax.f32 %v4209, 0.0
  %v4527 = vmax.f32 %v4211, 0.0
  %v4528 = vmax.f32 %v4214, 0.0
  %v4529 = vmax.f32 %v4216, 0.0
  %v4530 = vmax.f32 %v4219, 0.0
  %v4531 = vmax.f32 %v4221, 0.0
  %v4532 = vmax.f32 %v4224, 0.0
  %v4533 = vmax.f32 %v4226, 0.0
  %v4534 = vmax.f32 %v4229, 0.0
  %v4535 = vmax.f32 %v4231, 0.0
  %v4536 = vmax.f32 %v4234, 0.0
  %v4537 = vmax.f32 %v4236, 0.0
  %v4538 = vmax.f32 %v4239, 0.0
  %v4539 = vmax.f32 %v4241, 0.0
  %v4540 = vmax.f32 %v4244, 0.0
  %v4541 = vmax.f32 %v4246, 0.0
  %v4542 = vmax.f32 %v4249, 0.0
  %v4543 = vmax.f32 %v4251, 0.0
  %v4544 = vmax.f32 %v4254, 0.0
  %v4545 = vmax.f32 %v4256, 0.0
  %v4546 = vmax.f32 %v4259, 0.0
  %v4547 = vmax.f32 %v4261, 0.0
  %v4548 = vmax.f32 %v4264, 0.0
  %v4549 = vmax.f32 %v4266, 0.0
  %v4550 = vmax.f32 %v4269, 0.0
  %v4551 = vmax.f32 %v4271, 0.0
  %v4552 = vmax.f32 %v4274, 0.0
  %v4553 = vmax.f32 %v4276, 0.0
  %v4554 = vmax.f32 %v4279, 0.0
  %v4555 = vmax.f32 %v4281, 0.0
  %v4556 = vmax.f32 %v4284, 0.0
  %v4557 = vmax.f32 %v4286, 0.0
  %v4558 = vmax.f32 %v4289, 0.0
  %v4559 = vmax.f32 %v4291, 0.0
  %v4560 = vmax.f32 %v4294, 0.0
  %v4561 = vmax.f32 %v4296, 0.0
  %v4562 = vmax.f32 %v4299, 0.0
  %v4563 = vmax.f32 %v4301, 0.0
  %v4564 = vmax.f32 %v4304, 0.0
  %v4565 = vmax.f32 %v4306, 0.0
  %v4566 = vmax.f32 %v4309, 0.0
  %v4567 = vmax.f32 %v4311, 0.0
  %v4568 = vmax.f32 %v4314, 0.0
  %v4569 = vmax.f32 %v4316, 0.0
  %v4570 = vmax.f32 %v4319, 0.0
  %v4571 = vmax.f32 %v4321, 0.0
  %v4572 = vmax.f32 %v4324, 0.0
  %v4573 = vmax.f32 %v4326, 0.0
  %v4574 = vmax.f32 %v4329, 0.0
  %v4575 = vmax.f32 %v4331, 0.0
  %v4576 = vmax.f32 %v4334, 0.0
  %v4577 = vmax.f32 %v4336, 0.0
  %v4578 = vmax.f32 %v4339, 0.0
  %v4579 = vmax.f32 %v4341, 0.0
  %v4580 = vmax.f32 %v4344, 0.0
  %v4581 = vmax.f32 %v4346, 0.0
  %v4582 = vmax.f32 %v4349, 0.0
  %v4583 = vmax.f32 %v4351, 0.0
  %v4584 = vmax.f32 %v4354, 0.0
  %v4585 = vmax.f32 %v4356, 0.0
  %v4586 = vmax.f32 %v4359, 0.0
  %v4587 = vpack.c.bf16 %v4362, %v4362
  %v4588 = vpack.c.bf16 %v4363, %v4363
  %v4589 = vpack.c.bf16 %v4364, %v4364
  %v4590 = vpack.c.bf16 %v4365, %v4365
  %v4591 = vpack.c.bf16 %v4366, %v4366
  %v4592 = vpack.c.bf16 %v4367, %v4367
  %v4593 = vpack.c.bf16 %v4368, %v4368
  %v4594 = vpack.c.bf16 %v4369, %v4369
  %v4595 = vpack.c.bf16 %v4370, %v4370
  %v4596 = vpack.c.bf16 %v4371, %v4371
  %v4597 = vpack.c.bf16 %v4372, %v4372
  %v4598 = vpack.c.bf16 %v4373, %v4373
  %v4599 = vpack.c.bf16 %v4374, %v4374
  %v4600 = vpack.c.bf16 %v4375, %v4375
  %v4601 = vpack.c.bf16 %v4376, %v4376
  %v4602 = vpack.c.bf16 %v4377, %v4377
  %v4603 = vpack.c.bf16 %v4378, %v4378
  %v4604 = vpack.c.bf16 %v4379, %v4379
  %v4605 = vpack.c.bf16 %v4380, %v4380
  %v4606 = vpack.c.bf16 %v4381, %v4381
  %v4607 = vpack.c.bf16 %v4382, %v4382
  %v4608 = vpack.c.bf16 %v4383, %v4383
  %v4609 = vpack.c.bf16 %v4384, %v4384
  %v4610 = vpack.c.bf16 %v4385, %v4385
  %v4611 = vpack.c.bf16 %v4386, %v4386
  %v4612 = vpack.c.bf16 %v4387, %v4387
  %v4613 = vpack.c.bf16 %v4388, %v4388
  %v4614 = vpack.c.bf16 %v4389, %v4389
  %v4615 = vpack.c.bf16 %v4390, %v4390
  %v4616 = vpack.c.bf16 %v4391, %v4391
  %v4617 = vpack.c.bf16 %v4392, %v4392
  %v4618 = vpack.c.bf16 %v4393, %v4393
  %v4619 = vpack.c.bf16 %v4394, %v4394
  %v4620 = vpack.c.bf16 %v4395, %v4395
  %v4621 = vpack.c.bf16 %v4396, %v4396
  %v4622 = vpack.c.bf16 %v4397, %v4397
  %v4623 = vpack.c.bf16 %v4398, %v4398
  %v4624 = vpack.c.bf16 %v4399, %v4399
  %v4625 = vpack.c.bf16 %v4400, %v4400
  %v4626 = vpack.c.bf16 %v4401, %v4401
  %v4627 = vpack.c.bf16 %v4402, %v4402
  %v4628 = vpack.c.bf16 %v4403, %v4403
  %v4629 = vpack.c.bf16 %v4404, %v4404
  %v4630 = vpack.c.bf16 %v4405, %v4405
  %v4631 = vpack.c.bf16 %v4406, %v4406
  %v4632 = vpack.c.bf16 %v4407, %v4407
  %v4633 = vpack.c.bf16 %v4408, %v4408
  %v4634 = vpack.c.bf16 %v4409, %v4409
  %v4635 = vpack.c.bf16 %v4410, %v4410
  %v4636 = vpack.c.bf16 %v4411, %v4411
  %v4637 = vpack.c.bf16 %v4412, %v4412
  %v4638 = vpack.c.bf16 %v4413, %v4413
  %v4639 = vpack.c.bf16 %v4414, %v4414
  %v4640 = vpack.c.bf16 %v4415, %v4415
  %v4641 = vpack.c.bf16 %v4416, %v4416
  %v4642 = vpack.c.bf16 %v4417, %v4417
  %v4643 = vpack.c.bf16 %v4418, %v4418
  %v4644 = vpack.c.bf16 %v4419, %v4419
  %v4645 = vpack.c.bf16 %v4420, %v4420
  %v4646 = vpack.c.bf16 %v4421, %v4421
  %v4647 = vpack.c.bf16 %v4422, %v4422
  %v4648 = vpack.c.bf16 %v4423, %v4423
  %v4649 = vpack.c.bf16 %v4424, %v4424
  %v4650 = vpack.c.bf16 %v4425, %v4425
  %v4651 = vpack.c.bf16 %v4426, %v4426
  %v4652 = vpack.c.bf16 %v4427, %v4427
  %v4653 = vpack.c.bf16 %v4428, %v4428
  %v4654 = vpack.c.bf16 %v4429, %v4429
  %v4655 = vpack.c.bf16 %v4430, %v4430
  %v4656 = vpack.c.bf16 %v4431, %v4431
  %v4657 = vpack.c.bf16 %v4432, %v4432
  %v4658 = vpack.c.bf16 %v4433, %v4433
  %v4659 = vpack.c.bf16 %v4434, %v4434
  %v4660 = vpack.c.bf16 %v4435, %v4435
  %v4661 = vpack.c.bf16 %v4436, %v4436
  %v4662 = vpack.c.bf16 %v4437, %v4437
  %v4663 = vpack.c.bf16 %v4438, %v4438
  %v4664 = vpack.c.bf16 %v4439, %v4439
  %v4665 = vpack.c.bf16 %v4440, %v4440
  %v4666 = vpack.c.bf16 %v4441, %v4441
  %v4667 = vpack.c.bf16 %v4442, %v4442
  %v4668 = vpack.c.bf16 %v4443, %v4443
  %v4669 = vpack.c.bf16 %v4444, %v4444
  %v4670 = vpack.c.bf16 %v4445, %v4445
  %v4671 = vpack.c.bf16 %v4446, %v4446
  %v4672 = vpack.c.bf16 %v4447, %v4447
  %v4673 = vpack.c.bf16 %v4448, %v4448
  %v4674 = vpack.c.bf16 %v4449, %v4449
  %v4675 = vpack.c.bf16 %v4450, %v4450
  %v4676 = vpack.c.bf16 %v4451, %v4451
  %v4677 = vpack.c.bf16 %v4452, %v4452
  %v4678 = vpack.c.bf16 %v4453, %v4453
  %v4679 = vpack.c.bf16 %v4454, %v4454
  %v4680 = vpack.c.bf16 %v4455, %v4455
  %v4681 = vpack.c.bf16 %v4456, %v4456
  %v4682 = vpack.c.bf16 %v4457, %v4457
  %v4683 = vpack.c.bf16 %v4458, %v4458
  %v4684 = vpack.c.bf16 %v4459, %v4459
  %v4685 = vpack.c.bf16 %v4460, %v4460
  %v4686 = vpack.c.bf16 %v4461, %v4461
  %v4687 = vpack.c.bf16 %v4462, %v4462
  %v4688 = vpack.c.bf16 %v4463, %v4463
  %v4689 = vpack.c.bf16 %v4464, %v4464
  %v4690 = vpack.c.bf16 %v4465, %v4465
  %v4691 = vpack.c.bf16 %v4466, %v4466
  %v4692 = vpack.c.bf16 %v4467, %v4467
  %v4693 = vpack.c.bf16 %v4468, %v4468
  %v4694 = vpack.c.bf16 %v4469, %v4469
  %v4695 = vpack.c.bf16 %v4470, %v4470
  %v4696 = vpack.c.bf16 %v4471, %v4471
  %v4697 = vpack.c.bf16 %v4472, %v4472
  %v4698 = vpack.c.bf16 %v4473, %v4473
  %v4699 = vpack.c.bf16 %v4474, %v4474
  %v4700 = vpack.c.bf16 %v4475, %v4475
  %v4701 = vpack.c.bf16 %v4476, %v4476
  %v4702 = vpack.c.bf16 %v4477, %v4477
  %v4703 = vpack.c.bf16 %v4478, %v4478
  %v4704 = vpack.c.bf16 %v4479, %v4479
  %v4705 = vpack.c.bf16 %v4480, %v4480
  %v4706 = vpack.c.bf16 %v4481, %v4481
  %v4707 = vpack.c.bf16 %v4482, %v4482
  %v4708 = vpack.c.bf16 %v4483, %v4483
  %v4709 = vpack.c.bf16 %v4484, %v4484
  %v4710 = vpack.c.bf16 %v4485, %v4485
  %v4711 = vpack.c.bf16 %v4486, %v4486
  %v4712 = vpack.c.bf16 %v4487, %v4487
  %v4713 = vpack.c.bf16 %v4488, %v4488
  %v4714 = vpack.c.bf16 %v4489, %v4489
  %v4715 = vpack.c.bf16 %v4490, %v4490
  %v4716 = vpack.c.bf16 %v4491, %v4491
  %v4717 = vpack.c.bf16 %v4492, %v4492
  %v4718 = vpack.c.bf16 %v4493, %v4493
  %v4719 = vpack.c.bf16 %v4494, %v4494
  %v4720 = vpack.c.bf16 %v4495, %v4495
  %v4721 = vpack.c.bf16 %v4496, %v4496
  %v4722 = vpack.c.bf16 %v4497, %v4497
  %v4723 = vpack.c.bf16 %v4498, %v4498
  %v4724 = vpack.c.bf16 %v4499, %v4499
  %v4725 = vpack.c.bf16 %v4500, %v4500
  %v4726 = vpack.c.bf16 %v4501, %v4501
  %v4727 = vpack.c.bf16 %v4502, %v4502
  %v4728 = vpack.c.bf16 %v4503, %v4503
  %v4729 = vpack.c.bf16 %v4504, %v4504
  %v4730 = vpack.c.bf16 %v4505, %v4505
  %v4731 = vpack.c.bf16 %v4506, %v4506
  %v4732 = vpack.c.bf16 %v4507, %v4507
  %v4733 = vpack.c.bf16 %v4508, %v4508
  %v4734 = vpack.c.bf16 %v4509, %v4509
  %v4735 = vpack.c.bf16 %v4510, %v4510
  %v4736 = vpack.c.bf16 %v4511, %v4511
  %v4737 = vpack.c.bf16 %v4512, %v4512
  %v4738 = vpack.c.bf16 %v4513, %v4513
  %v4739 = vpack.c.bf16 %v4514, %v4514
  %v4740 = vpack.c.bf16 %v4515, %v4515
  %v4741 = vpack.c.bf16 %v4516, %v4516
  %v4742 = vpack.c.bf16 %v4517, %v4517
  %v4743 = vpack.c.bf16 %v4518, %v4518
  %v4744 = vpack.c.bf16 %v4519, %v4519
  %v4745 = vpack.c.bf16 %v4520, %v4520
  %v4746 = vpack.c.bf16 %v4521, %v4521
  %v4747 = vpack.c.bf16 %v4522, %v4522
  %v4748 = vpack.c.bf16 %v4523, %v4523
  %v4749 = vpack.c.bf16 %v4524, %v4524
  %v4750 = vpack.c.bf16 %v4525, %v4525
  %v4751 = vpack.c.bf16 %v4526, %v4526
  %v4752 = vpack.c.bf16 %v4527, %v4527
  %v4753 = vpack.c.bf16 %v4528, %v4528
  %v4754 = vpack.c.bf16 %v4529, %v4529
  %v4755 = vpack.c.bf16 %v4530, %v4530
  %v4756 = vpack.c.bf16 %v4531, %v4531
  %v4757 = vpack.c.bf16 %v4532, %v4532
  %v4758 = vpack.c.bf16 %v4533, %v4533
  %v4759 = vpack.c.bf16 %v4534, %v4534
  %v4760 = vpack.c.bf16 %v4535, %v4535
  %v4761 = vpack.c.bf16 %v4536, %v4536
  %v4762 = vpack.c.bf16 %v4537, %v4537
  %v4763 = vpack.c.bf16 %v4538, %v4538
  %v4764 = vpack.c.bf16 %v4539, %v4539
  %v4765 = vpack.c.bf16 %v4540, %v4540
  %v4766 = vpack.c.bf16 %v4541, %v4541
  %v4767 = vpack.c.bf16 %v4542, %v4542
  %v4768 = vpack.c.bf16 %v4543, %v4543
  %v4769 = vpack.c.bf16 %v4544, %v4544
  %v4770 = vpack.c.bf16 %v4545, %v4545
  %v4771 = vpack.c.bf16 %v4546, %v4546
  %v4772 = vpack.c.bf16 %v4547, %v4547
  %v4773 = vpack.c.bf16 %v4548, %v4548
  %v4774 = vpack.c.bf16 %v4549, %v4549
  %v4775 = vpack.c.bf16 %v4550, %v4550
  %v4776 = vpack.c.bf16 %v4551, %v4551
  %v4777 = vpack.c.bf16 %v4552, %v4552
  %v4778 = vpack.c.bf16 %v4553, %v4553
  %v4779 = vpack.c.bf16 %v4554, %v4554
  %v4780 = vpack.c.bf16 %v4555, %v4555
  %v4781 = vpack.c.bf16 %v4556, %v4556
  %v4782 = vpack.c.bf16 %v4557, %v4557
  %v4783 = vpack.c.bf16 %v4558, %v4558
  %v4784 = vpack.c.bf16 %v4559, %v4559
  %v4785 = vpack.c.bf16 %v4560, %v4560
  %v4786 = vpack.c.bf16 %v4561, %v4561
  %v4787 = vpack.c.bf16 %v4562, %v4562
  %v4788 = vpack.c.bf16 %v4563, %v4563
  %v4789 = vpack.c.bf16 %v4564, %v4564
  %v4790 = vpack.c.bf16 %v4565, %v4565
  %v4791 = vpack.c.bf16 %v4566, %v4566
  %v4792 = vpack.c.bf16 %v4567, %v4567
  %v4793 = vpack.c.bf16 %v4568, %v4568
  %v4794 = vpack.c.bf16 %v4569, %v4569
  %v4795 = vpack.c.bf16 %v4570, %v4570
  %v4796 = vpack.c.bf16 %v4571, %v4571
  %v4797 = vpack.c.bf16 %v4572, %v4572
  %v4798 = vpack.c.bf16 %v4573, %v4573
  %v4799 = vpack.c.bf16 %v4574, %v4574
  %v4800 = vpack.c.bf16 %v4575, %v4575
  %v4801 = vpack.c.bf16 %v4576, %v4576
  %v4802 = vpack.c.bf16 %v4577, %v4577
  %v4803 = vpack.c.bf16 %v4578, %v4578
  %v4804 = vpack.c.bf16 %v4579, %v4579
  %v4805 = vpack.c.bf16 %v4580, %v4580
  %v4806 = vpack.c.bf16 %v4581, %v4581
  %v4807 = vpack.c.bf16 %v4582, %v4582
  %v4808 = vpack.c.bf16 %v4583, %v4583
  %v4809 = vpack.c.bf16 %v4584, %v4584
  %v4810 = vpack.c.bf16 %v4585, %v4585
  %v4811 = vpack.c.bf16 %v4586, %v4586
  %4812 = vst [vmem:[%s3] sm:$0xf] %v4587
  %4813 = vst [vmem:[%s3 + $0x4] sm:$0xf] %v4588
  %4814 = vst [vmem:[%s3 + $0x8] sm:$0xf] %v4589
  %4815 = vst [vmem:[%s3 + $0xc] sm:$0xf] %v4590
  %4816 = vst [vmem:[%s3 + $0x10] sm:$0xf] %v4591
  %4817 = vst [vmem:[%s3 + $0x14] sm:$0xf] %v4592
  %4818 = vst [vmem:[%s3 + $0x18] sm:$0xf] %v4593
  %4819 = vst [vmem:[%s3 + $0x1c] sm:$0xf] %v4594
  %4820 = vst [vmem:[%s3 + $0x20] sm:$0xf] %v4595
  %4821 = vst [vmem:[%s3 + $0x24] sm:$0xf] %v4596
  %4822 = vst [vmem:[%s3 + $0x28] sm:$0xf] %v4597
  %4823 = vst [vmem:[%s3 + $0x2c] sm:$0xf] %v4598
  %4824 = vst [vmem:[%s3 + $0x30] sm:$0xf] %v4599
  %4825 = vst [vmem:[%s3 + $0x34] sm:$0xf] %v4600
  %4826 = vst [vmem:[%s3 + $0x38] sm:$0xf] %v4601
  %4827 = vst [vmem:[%s3 + $0x3c] sm:$0xf] %v4602
  %4828 = vst [vmem:[%s3 + $0x40] sm:$0xf] %v4603
  %4829 = vst [vmem:[%s3 + $0x44] sm:$0xf] %v4604
  %4830 = vst [vmem:[%s3 + $0x48] sm:$0xf] %v4605
  %4831 = vst [vmem:[%s3 + $0x4c] sm:$0xf] %v4606
  %4832 = vst [vmem:[%s3 + $0x50] sm:$0xf] %v4607
  %4833 = vst [vmem:[%s3 + $0x54] sm:$0xf] %v4608
  %4834 = vst [vmem:[%s3 + $0x58] sm:$0xf] %v4609
  %4835 = vst [vmem:[%s3 + $0x5c] sm:$0xf] %v4610
  %4836 = vst [vmem:[%s3 + $0x60] sm:$0xf] %v4611
  %4837 = vst [vmem:[%s3 + $0x64] sm:$0xf] %v4612
  %4838 = vst [vmem:[%s3 + $0x68] sm:$0xf] %v4613
  %4839 = vst [vmem:[%s3 + $0x6c] sm:$0xf] %v4614
  %4840 = vst [vmem:[%s3 + $0x70] sm:$0xf] %v4615
  %4841 = vst [vmem:[%s3 + $0x74] sm:$0xf] %v4616
  %4842 = vst [vmem:[%s3 + $0x78] sm:$0xf] %v4617
  %4843 = vst [vmem:[%s3 + $0x7c] sm:$0xf] %v4618
  %4844 = vst [vmem:[%s3 + $0x80] sm:$0xf] %v4619
  %4845 = vst [vmem:[%s3 + $0x84] sm:$0xf] %v4620
  %4846 = vst [vmem:[%s3 + $0x88] sm:$0xf] %v4621
  %4847 = vst [vmem:[%s3 + $0x8c] sm:$0xf] %v4622
  %4848 = vst [vmem:[%s3 + $0x90] sm:$0xf] %v4623
  %4849 = vst [vmem:[%s3 + $0x94] sm:$0xf] %v4624
  %4850 = vst [vmem:[%s3 + $0x98] sm:$0xf] %v4625
  %4851 = vst [vmem:[%s3 + $0x9c] sm:$0xf] %v4626
  %4852 = vst [vmem:[%s3 + $0xa0] sm:$0xf] %v4627
  %4853 = vst [vmem:[%s3 + $0xa4] sm:$0xf] %v4628
  %4854 = vst [vmem:[%s3 + $0xa8] sm:$0xf] %v4629
  %4855 = vst [vmem:[%s3 + $0xac] sm:$0xf] %v4630
  %4856 = vst [vmem:[%s3 + $0xb0] sm:$0xf] %v4631
  %4857 = vst [vmem:[%s3 + $0xb4] sm:$0xf] %v4632
  %4858 = vst [vmem:[%s3 + $0xb8] sm:$0xf] %v4633
  %4859 = vst [vmem:[%s3 + $0xbc] sm:$0xf] %v4634
  %4860 = vst [vmem:[%s3 + $0xc0] sm:$0xf] %v4635
  %4861 = vst [vmem:[%s3 + $0xc4] sm:$0xf] %v4636
  %4862 = vst [vmem:[%s3 + $0xc8] sm:$0xf] %v4637
  %4863 = vst [vmem:[%s3 + $0xcc] sm:$0xf] %v4638
  %4864 = vst [vmem:[%s3 + $0xd0] sm:$0xf] %v4639
  %4865 = vst [vmem:[%s3 + $0xd4] sm:$0xf] %v4640
  %4866 = vst [vmem:[%s3 + $0xd8] sm:$0xf] %v4641
  %4867 = vst [vmem:[%s3 + $0xdc] sm:$0xf] %v4642
  %4868 = vst [vmem:[%s3 + $0xe0] sm:$0xf] %v4643
  %4869 = vst [vmem:[%s3 + $0xe4] sm:$0xf] %v4644
  %4870 = vst [vmem:[%s3 + $0xe8] sm:$0xf] %v4645
  %4871 = vst [vmem:[%s3 + $0xec] sm:$0xf] %v4646
  %4872 = vst [vmem:[%s3 + $0xf0] sm:$0xf] %v4647
  %4873 = vst [vmem:[%s3 + $0xf4] sm:$0xf] %v4648
  %4874 = vst [vmem:[%s3 + $0xf8] sm:$0xf] %v4649
  %4875 = vst [vmem:[%s3 + $0xfc] sm:$0xf] %v4650
  %4876 = vst [vmem:[%s3 + $0x100] sm:$0xf] %v4651
  %4877 = vst [vmem:[%s3 + $0x104] sm:$0xf] %v4652
  %4878 = vst [vmem:[%s3 + $0x108] sm:$0xf] %v4653
  %4879 = vst [vmem:[%s3 + $0x10c] sm:$0xf] %v4654
  %4880 = vst [vmem:[%s3 + $0x110] sm:$0xf] %v4655
  %4881 = vst [vmem:[%s3 + $0x114] sm:$0xf] %v4656
  %4882 = vst [vmem:[%s3 + $0x118] sm:$0xf] %v4657
  %4883 = vst [vmem:[%s3 + $0x11c] sm:$0xf] %v4658
  %4884 = vst [vmem:[%s3 + $0x120] sm:$0xf] %v4659
  %4885 = vst [vmem:[%s3 + $0x124] sm:$0xf] %v4660
  %4886 = vst [vmem:[%s3 + $0x128] sm:$0xf] %v4661
  %4887 = vst [vmem:[%s3 + $0x12c] sm:$0xf] %v4662
  %4888 = vst [vmem:[%s3 + $0x130] sm:$0xf] %v4663
  %4889 = vst [vmem:[%s3 + $0x134] sm:$0xf] %v4664
  %4890 = vst [vmem:[%s3 + $0x138] sm:$0xf] %v4665
  %4891 = vst [vmem:[%s3 + $0x13c] sm:$0xf] %v4666
  %4892 = vst [vmem:[%s3 + $0x140] sm:$0xf] %v4667
  %4893 = vst [vmem:[%s3 + $0x144] sm:$0xf] %v4668
  %4894 = vst [vmem:[%s3 + $0x148] sm:$0xf] %v4669
  %4895 = vst [vmem:[%s3 + $0x14c] sm:$0xf] %v4670
  %4896 = vst [vmem:[%s3 + $0x150] sm:$0xf] %v4671
  %4897 = vst [vmem:[%s3 + $0x154] sm:$0xf] %v4672
  %4898 = vst [vmem:[%s3 + $0x158] sm:$0xf] %v4673
  %4899 = vst [vmem:[%s3 + $0x15c] sm:$0xf] %v4674
  %4900 = vst [vmem:[%s3 + $0x160] sm:$0xf] %v4675
  %4901 = vst [vmem:[%s3 + $0x164] sm:$0xf] %v4676
  %4902 = vst [vmem:[%s3 + $0x168] sm:$0xf] %v4677
  %4903 = vst [vmem:[%s3 + $0x16c] sm:$0xf] %v4678
  %4904 = vst [vmem:[%s3 + $0x170] sm:$0xf] %v4679
  %4905 = vst [vmem:[%s3 + $0x174] sm:$0xf] %v4680
  %4906 = vst [vmem:[%s3 + $0x178] sm:$0xf] %v4681
  %4907 = vst [vmem:[%s3 + $0x17c] sm:$0xf] %v4682
  %4908 = vst [vmem:[%s3 + $0x180] sm:$0xf] %v4683
  %4909 = vst [vmem:[%s3 + $0x184] sm:$0xf] %v4684
  %4910 = vst [vmem:[%s3 + $0x188] sm:$0xf] %v4685
  %4911 = vst [vmem:[%s3 + $0x18c] sm:$0xf] %v4686
  %4912 = vst [vmem:[%s3 + $0x190] sm:$0xf] %v4687
  %4913 = vst [vmem:[%s3 + $0x194] sm:$0xf] %v4688
  %4914 = vst [vmem:[%s3 + $0x198] sm:$0xf] %v4689
  %4915 = vst [vmem:[%s3 + $0x19c] sm:$0xf] %v4690
  %4916 = vst [vmem:[%s3 + $0x1a0] sm:$0xf] %v4691
  %4917 = vst [vmem:[%s3 + $0x1a4] sm:$0xf] %v4692
  %4918 = vst [vmem:[%s3 + $0x1a8] sm:$0xf] %v4693
  %4919 = vst [vmem:[%s3 + $0x1ac] sm:$0xf] %v4694
  %4920 = vst [vmem:[%s3 + $0x1b0] sm:$0xf] %v4695
  %4921 = vst [vmem:[%s3 + $0x1b4] sm:$0xf] %v4696
  %4922 = vst [vmem:[%s3 + $0x1b8] sm:$0xf] %v4697
  %4923 = vst [vmem:[%s3 + $0x1bc] sm:$0xf] %v4698
  %4924 = vst [vmem:[%s3 + $0x1c0] sm:$0xf] %v4699
  %4925 = vst [vmem:[%s3 + $0x1c4] sm:$0xf] %v4700
  %4926 = vst [vmem:[%s3 + $0x1c8] sm:$0xf] %v4701
  %4927 = vst [vmem:[%s3 + $0x1cc] sm:$0xf] %v4702
  %4928 = vst [vmem:[%s3 + $0x1d0] sm:$0xf] %v4703
  %4929 = vst [vmem:[%s3 + $0x1d4] sm:$0xf] %v4704
  %4930 = vst [vmem:[%s3 + $0x1d8] sm:$0xf] %v4705
  %4931 = vst [vmem:[%s3 + $0x1dc] sm:$0xf] %v4706
  %4932 = vst [vmem:[%s3 + $0x1e0] sm:$0xf] %v4707
  %4933 = vst [vmem:[%s3 + $0x1e4] sm:$0xf] %v4708
  %4934 = vst [vmem:[%s3 + $0x1e8] sm:$0xf] %v4709
  %4935 = vst [vmem:[%s3 + $0x1ec] sm:$0xf] %v4710
  %4936 = vst [vmem:[%s3 + $0x1f0] sm:$0xf] %v4711
  %4937 = vst [vmem:[%s3 + $0x1f4] sm:$0xf] %v4712
  %4938 = vst [vmem:[%s3 + $0x1f8] sm:$0xf] %v4713
  %4939 = vst [vmem:[%s3 + $0x1fc] sm:$0xf] %v4714
  %4940 = vst [vmem:[%s3 + $0x200] sm:$0xf] %v4715
  %4941 = vst [vmem:[%s3 + $0x204] sm:$0xf] %v4716
  %4942 = vst [vmem:[%s3 + $0x208] sm:$0xf] %v4717
  %4943 = vst [vmem:[%s3 + $0x20c] sm:$0xf] %v4718
  %4944 = vst [vmem:[%s3 + $0x210] sm:$0xf] %v4719
  %4945 = vst [vmem:[%s3 + $0x214] sm:$0xf] %v4720
  %4946 = vst [vmem:[%s3 + $0x218] sm:$0xf] %v4721
  %4947 = vst [vmem:[%s3 + $0x21c] sm:$0xf] %v4722
  %4948 = vst [vmem:[%s3 + $0x220] sm:$0xf] %v4723
  %4949 = vst [vmem:[%s3 + $0x224] sm:$0xf] %v4724
  %4950 = vst [vmem:[%s3 + $0x228] sm:$0xf] %v4725
  %4951 = vst [vmem:[%s3 + $0x22c] sm:$0xf] %v4726
  %4952 = vst [vmem:[%s3 + $0x230] sm:$0xf] %v4727
  %4953 = vst [vmem:[%s3 + $0x234] sm:$0xf] %v4728
  %4954 = vst [vmem:[%s3 + $0x238] sm:$0xf] %v4729
  %4955 = vst [vmem:[%s3 + $0x23c] sm:$0xf] %v4730
  %4956 = vst [vmem:[%s3 + $0x240] sm:$0xf] %v4731
  %4957 = vst [vmem:[%s3 + $0x244] sm:$0xf] %v4732
  %4958 = vst [vmem:[%s3 + $0x248] sm:$0xf] %v4733
  %4959 = vst [vmem:[%s3 + $0x24c] sm:$0xf] %v4734
  %4960 = vst [vmem:[%s3 + $0x250] sm:$0xf] %v4735
  %4961 = vst [vmem:[%s3 + $0x254] sm:$0xf] %v4736
  %4962 = vst [vmem:[%s3 + $0x258] sm:$0xf] %v4737
  %4963 = vst [vmem:[%s3 + $0x25c] sm:$0xf] %v4738
  %4964 = vst [vmem:[%s3 + $0x260] sm:$0xf] %v4739
  %4965 = vst [vmem:[%s3 + $0x264] sm:$0xf] %v4740
  %4966 = vst [vmem:[%s3 + $0x268] sm:$0xf] %v4741
  %4967 = vst [vmem:[%s3 + $0x26c] sm:$0xf] %v4742
  %4968 = vst [vmem:[%s3 + $0x270] sm:$0xf] %v4743
  %4969 = vst [vmem:[%s3 + $0x274] sm:$0xf] %v4744
  %4970 = vst [vmem:[%s3 + $0x278] sm:$0xf] %v4745
  %4971 = vst [vmem:[%s3 + $0x27c] sm:$0xf] %v4746
  %4972 = vst [vmem:[%s3 + $0x280] sm:$0xf] %v4747
  %4973 = vst [vmem:[%s3 + $0x284] sm:$0xf] %v4748
  %4974 = vst [vmem:[%s3 + $0x288] sm:$0xf] %v4749
  %4975 = vst [vmem:[%s3 + $0x28c] sm:$0xf] %v4750
  %4976 = vst [vmem:[%s3 + $0x290] sm:$0xf] %v4751
  %4977 = vst [vmem:[%s3 + $0x294] sm:$0xf] %v4752
  %4978 = vst [vmem:[%s3 + $0x298] sm:$0xf] %v4753
  %4979 = vst [vmem:[%s3 + $0x29c] sm:$0xf] %v4754
  %4980 = vst [vmem:[%s3 + $0x2a0] sm:$0xf] %v4755
  %4981 = vst [vmem:[%s3 + $0x2a4] sm:$0xf] %v4756
  %4982 = vst [vmem:[%s3 + $0x2a8] sm:$0xf] %v4757
  %4983 = vst [vmem:[%s3 + $0x2ac] sm:$0xf] %v4758
  %4984 = vst [vmem:[%s3 + $0x2b0] sm:$0xf] %v4759
  %4985 = vst [vmem:[%s3 + $0x2b4] sm:$0xf] %v4760
  %4986 = vst [vmem:[%s3 + $0x2b8] sm:$0xf] %v4761
  %4987 = vst [vmem:[%s3 + $0x2bc] sm:$0xf] %v4762
  %4988 = vst [vmem:[%s3 + $0x2c0] sm:$0xf] %v4763
  %4989 = vst [vmem:[%s3 + $0x2c4] sm:$0xf] %v4764
  %4990 = vst [vmem:[%s3 + $0x2c8] sm:$0xf] %v4765
  %4991 = vst [vmem:[%s3 + $0x2cc] sm:$0xf] %v4766
  %4992 = vst [vmem:[%s3 + $0x2d0] sm:$0xf] %v4767
  %4993 = vst [vmem:[%s3 + $0x2d4] sm:$0xf] %v4768
  %4994 = vst [vmem:[%s3 + $0x2d8] sm:$0xf] %v4769
  %4995 = vst [vmem:[%s3 + $0x2dc] sm:$0xf] %v4770
  %4996 = vst [vmem:[%s3 + $0x2e0] sm:$0xf] %v4771
  %4997 = vst [vmem:[%s3 + $0x2e4] sm:$0xf] %v4772
  %4998 = vst [vmem:[%s3 + $0x2e8] sm:$0xf] %v4773
  %4999 = vst [vmem:[%s3 + $0x2ec] sm:$0xf] %v4774
  %5000 = vst [vmem:[%s3 + $0x2f0] sm:$0xf] %v4775
  %5001 = vst [vmem:[%s3 + $0x2f4] sm:$0xf] %v4776
  %5002 = vst [vmem:[%s3 + $0x2f8] sm:$0xf] %v4777
  %5003 = vst [vmem:[%s3 + $0x2fc] sm:$0xf] %v4778
  %5004 = vst [vmem:[%s3 + $0x300] sm:$0xf] %v4779
  %5005 = vst [vmem:[%s3 + $0x304] sm:$0xf] %v4780
  %5006 = vst [vmem:[%s3 + $0x308] sm:$0xf] %v4781
  %5007 = vst [vmem:[%s3 + $0x30c] sm:$0xf] %v4782
  %5008 = vst [vmem:[%s3 + $0x310] sm:$0xf] %v4783
  %5009 = vst [vmem:[%s3 + $0x314] sm:$0xf] %v4784
  %5010 = vst [vmem:[%s3 + $0x318] sm:$0xf] %v4785
  %5011 = vst [vmem:[%s3 + $0x31c] sm:$0xf] %v4786
  %5012 = vst [vmem:[%s3 + $0x320] sm:$0xf] %v4787
  %5013 = vst [vmem:[%s3 + $0x324] sm:$0xf] %v4788
  %5014 = vst [vmem:[%s3 + $0x328] sm:$0xf] %v4789
  %5015 = vst [vmem:[%s3 + $0x32c] sm:$0xf] %v4790
  %5016 = vst [vmem:[%s3 + $0x330] sm:$0xf] %v4791
  %5017 = vst [vmem:[%s3 + $0x334] sm:$0xf] %v4792
  %5018 = vst [vmem:[%s3 + $0x338] sm:$0xf] %v4793
  %5019 = vst [vmem:[%s3 + $0x33c] sm:$0xf] %v4794
  %5020 = vst [vmem:[%s3 + $0x340] sm:$0xf] %v4795
  %5021 = vst [vmem:[%s3 + $0x344] sm:$0xf] %v4796
  %5022 = vst [vmem:[%s3 + $0x348] sm:$0xf] %v4797
  %5023 = vst [vmem:[%s3 + $0x34c] sm:$0xf] %v4798
  %5024 = vst [vmem:[%s3 + $0x350] sm:$0xf] %v4799
  %5025 = vst [vmem:[%s3 + $0x354] sm:$0xf] %v4800
  %5026 = vst [vmem:[%s3 + $0x358] sm:$0xf] %v4801
  %5027 = vst [vmem:[%s3 + $0x35c] sm:$0xf] %v4802
  %5028 = vst [vmem:[%s3 + $0x360] sm:$0xf] %v4803
  %5029 = vst [vmem:[%s3 + $0x364] sm:$0xf] %v4804
  %5030 = vst [vmem:[%s3 + $0x368] sm:$0xf] %v4805
  %5031 = vst [vmem:[%s3 + $0x36c] sm:$0xf] %v4806
  %5032 = vst [vmem:[%s3 + $0x370] sm:$0xf] %v4807
  %5033 = vst [vmem:[%s3 + $0x374] sm:$0xf] %v4808
  %5034 = vst [vmem:[%s3 + $0x378] sm:$0xf] %v4809
  %5035 = vst [vmem:[%s3 + $0x37c] sm:$0xf] %v4810
  %5036 = vst [vmem:[%s3 + $0x380] sm:$0xf] %v4811
  // Predicated region
  $region14: #{forward.5} parent=0 // pred_check
    _
  $region15: #{forward.5} parent=0 // pred_check_branch
    %5038 = sbr.rel (0) target = $region17
  $region16: #{forward.5} parent=0 // pred_region
    _
  $region17: #{forward.5} parent=0 // pred_fallthru
    _
  // Predicated region
  $region18: #{forward.5} parent=0 // pred_check
    _
  $region19: #{forward.5} parent=0 // pred_check_branch
    %5040 = sbr.rel (0) target = $region21
  $region20: #{forward.5} parent=0 // pred_region
    _
  $region21: #{forward.5} parent=0 // pred_fallthru
    _

// kernel: forward.6
$region0: #{forward.6}
  #allocation0 [shape = 'u32[]', space=smem, size = 0x4, offset = 0x4, fixed_abs, tag = 'smem constant byte address 0x4 - core index']
  #allocation1 [shape = 'u32[72,128]{1,0:T(1,128)}', space=vmem, size = 0x9000, scoped, tag = 'internal scratch']
  %s0 = inlined_call_operand.vmem [shape: bf16[338,576], index: 0, kind: input, shape index: {}]
  %s1 = inlined_call_operand.vmem [shape: bf16[576,128], index: 1, kind: input, shape index: {}]
  %s2 = inlined_call_operand.vmem [shape: f32[1,128], index: 2, kind: input, shape index: {}]
  %s3 = inlined_call_operand.vmem [shape: bf16[338,128], index: 3, kind: output, shape index: {}]
  %s4 = sld [smem:[#allocation0]]
  $region22: #{forward.6} parent=0
    _
  %s6 = ssub.s32 1, %s4
  %s7 = scalar_select 0, %s6, %s4
  // Predicated region
  $region2: #{forward.6} parent=0 // pred_check
    _
  $region3: #{forward.6} parent=0 // pred_check_branch
    %9 = sbr.rel (0) target = $region5
  $region4: #{forward.6} parent=0 // pred_region
    _
  $region5: #{forward.6} parent=0 // pred_fallthru
    _
  // Predicated region
  $region6: #{forward.6} parent=0 // pred_check
    _
  $region7: #{forward.6} parent=0 // pred_check_branch
    %11 = sbr.rel (0) target = $region9
  $region8: #{forward.6} parent=0 // pred_region
    _
  $region9: #{forward.6} parent=0 // pred_fallthru
    _
  // Predicated region
  $region10: #{forward.6} parent=0 // pred_check
    _
  $region11: #{forward.6} parent=0 // pred_check_branch
    %13 = sbr.rel (0) target = $region13
  $region12: #{forward.6} parent=0 // pred_region
    _
  $region13: #{forward.6} parent=0 // pred_fallthru
    _
  %v15 = vld [vmem:[%s0] sm:$0xff]
  %v16 = vld [vmem:[%s0 + $0x8] sm:$0xff]
  %v17 = vld [vmem:[%s0 + $0x10] sm:$0xf]
  %v18 = vld [vmem:[%s0 + $0x14] sm:$0xff]
  %v19 = vld [vmem:[%s0 + $0x1c] sm:$0xff]
  %v20 = vld [vmem:[%s0 + $0x24] sm:$0xf]
  %v21 = vld [vmem:[%s0 + $0x28] sm:$0xff]
  %v22 = vld [vmem:[%s0 + $0x30] sm:$0xff]
  %v23 = vld [vmem:[%s0 + $0x38] sm:$0xf]
  %v24 = vld [vmem:[%s0 + $0x3c] sm:$0xff]
  %v25 = vld [vmem:[%s0 + $0x44] sm:$0xff]
  %v26 = vld [vmem:[%s0 + $0x4c] sm:$0xf]
  %v27 = vld [vmem:[%s0 + $0x50] sm:$0xff]
  %v28 = vld [vmem:[%s0 + $0x58] sm:$0xff]
  %v29 = vld [vmem:[%s0 + $0x60] sm:$0xf]
  %v30 = vld [vmem:[%s0 + $0x64] sm:$0xff]
  %v31 = vld [vmem:[%s0 + $0x6c] sm:$0xff]
  %v32 = vld [vmem:[%s0 + $0x74] sm:$0xf]
  %v33 = vld [vmem:[%s0 + $0x78] sm:$0xff]
  %v34 = vld [vmem:[%s0 + $0x80] sm:$0xff]
  %v35 = vld [vmem:[%s0 + $0x88] sm:$0xf]
  %v36 = vld [vmem:[%s0 + $0x8c] sm:$0xff]
  %v37 = vld [vmem:[%s0 + $0x94] sm:$0xff]
  %v38 = vld [vmem:[%s0 + $0x9c] sm:$0xf]
  %v39 = vld [vmem:[%s0 + $0xa0] sm:$0xff]
  %v40 = vld [vmem:[%s0 + $0xa8] sm:$0xff]
  %v41 = vld [vmem:[%s0 + $0xb0] sm:$0xf]
  %v42 = vld [vmem:[%s0 + $0xb4] sm:$0xff]
  %v43 = vld [vmem:[%s0 + $0xbc] sm:$0xff]
  %v44 = vld [vmem:[%s0 + $0xc4] sm:$0xf]
  %v45 = vld [vmem:[%s0 + $0xc8] sm:$0xff]
  %v46 = vld [vmem:[%s0 + $0xd0] sm:$0xff]
  %v47 = vld [vmem:[%s0 + $0xd8] sm:$0xf]
  %v48 = vld [vmem:[%s0 + $0xdc] sm:$0xff]
  %v49 = vld [vmem:[%s0 + $0xe4] sm:$0xff]
  %v50 = vld [vmem:[%s0 + $0xec] sm:$0xf]
  %v51 = vld [vmem:[%s0 + $0xf0] sm:$0xff]
  %v52 = vld [vmem:[%s0 + $0xf8] sm:$0xff]
  %v53 = vld [vmem:[%s0 + $0x100] sm:$0xf]
  %v54 = vld [vmem:[%s0 + $0x104] sm:$0xff]
  %v55 = vld [vmem:[%s0 + $0x10c] sm:$0xff]
  %v56 = vld [vmem:[%s0 + $0x114] sm:$0xf]
  %v57 = vld [vmem:[%s0 + $0x118] sm:$0xff]
  %v58 = vld [vmem:[%s0 + $0x120] sm:$0xff]
  %v59 = vld [vmem:[%s0 + $0x128] sm:$0xf]
  %v60 = vld [vmem:[%s0 + $0x12c] sm:$0xff]
  %v61 = vld [vmem:[%s0 + $0x134] sm:$0xff]
  %v62 = vld [vmem:[%s0 + $0x13c] sm:$0xf]
  %v63 = vld [vmem:[%s0 + $0x140] sm:$0xff]
  %v64 = vld [vmem:[%s0 + $0x148] sm:$0xff]
  %v65 = vld [vmem:[%s0 + $0x150] sm:$0xf]
  %v66 = vld [vmem:[%s0 + $0x154] sm:$0xff]
  %v67 = vld [vmem:[%s0 + $0x15c] sm:$0xff]
  %v68 = vld [vmem:[%s0 + $0x164] sm:$0xf]
  %v69 = vld [vmem:[%s0 + $0x168] sm:$0xff]
  %v70 = vld [vmem:[%s0 + $0x170] sm:$0xff]
  %v71 = vld [vmem:[%s0 + $0x178] sm:$0xf]
  %v72 = vld [vmem:[%s0 + $0x17c] sm:$0xff]
  %v73 = vld [vmem:[%s0 + $0x184] sm:$0xff]
  %v74 = vld [vmem:[%s0 + $0x18c] sm:$0xf]
  %v75 = vld [vmem:[%s0 + $0x190] sm:$0xff]
  %v76 = vld [vmem:[%s0 + $0x198] sm:$0xff]
  %v77 = vld [vmem:[%s0 + $0x1a0] sm:$0xf]
  %v78 = vld [vmem:[%s0 + $0x1a4] sm:$0xff]
  %v79 = vld [vmem:[%s0 + $0x1ac] sm:$0xff]
  %v80 = vld [vmem:[%s0 + $0x1b4] sm:$0xf]
  %v81 = vld [vmem:[%s0 + $0x1b8] sm:$0xff]
  %v82 = vld [vmem:[%s0 + $0x1c0] sm:$0xff]
  %v83 = vld [vmem:[%s0 + $0x1c8] sm:$0xf]
  %v84 = vld [vmem:[%s0 + $0x1cc] sm:$0xff]
  %v85 = vld [vmem:[%s0 + $0x1d4] sm:$0xff]
  %v86 = vld [vmem:[%s0 + $0x1dc] sm:$0xf]
  %v87 = vld [vmem:[%s0 + $0x1e0] sm:$0xff]
  %v88 = vld [vmem:[%s0 + $0x1e8] sm:$0xff]
  %v89 = vld [vmem:[%s0 + $0x1f0] sm:$0xf]
  %v90 = vld [vmem:[%s0 + $0x1f4] sm:$0xff]
  %v91 = vld [vmem:[%s0 + $0x1fc] sm:$0xff]
  %v92 = vld [vmem:[%s0 + $0x204] sm:$0xf]
  %v93 = vld [vmem:[%s0 + $0x208] sm:$0xff]
  %v94 = vld [vmem:[%s0 + $0x210] sm:$0xff]
  %v95 = vld [vmem:[%s0 + $0x218] sm:$0xf]
  %v96 = vld [vmem:[%s0 + $0x21c] sm:$0xff]
  %v97 = vld [vmem:[%s0 + $0x224] sm:$0xff]
  %v98 = vld [vmem:[%s0 + $0x22c] sm:$0xf]
  %v99 = vld [vmem:[%s0 + $0x230] sm:$0xff]
  %v100 = vld [vmem:[%s0 + $0x238] sm:$0xff]
  %v101 = vld [vmem:[%s0 + $0x240] sm:$0xf]
  %v102 = vld [vmem:[%s0 + $0x244] sm:$0xff]
  %v103 = vld [vmem:[%s0 + $0x24c] sm:$0xff]
  %v104 = vld [vmem:[%s0 + $0x254] sm:$0xf]
  %v105 = vld [vmem:[%s0 + $0x258] sm:$0xff]
  %v106 = vld [vmem:[%s0 + $0x260] sm:$0xff]
  %v107 = vld [vmem:[%s0 + $0x268] sm:$0xf]
  %v108 = vld [vmem:[%s0 + $0x26c] sm:$0xff]
  %v109 = vld [vmem:[%s0 + $0x274] sm:$0xff]
  %v110 = vld [vmem:[%s0 + $0x27c] sm:$0xf]
  %v111 = vld [vmem:[%s0 + $0x280] sm:$0xff]
  %v112 = vld [vmem:[%s0 + $0x288] sm:$0xff]
  %v113 = vld [vmem:[%s0 + $0x290] sm:$0xf]
  %v114 = vld [vmem:[%s0 + $0x294] sm:$0xff]
  %v115 = vld [vmem:[%s0 + $0x29c] sm:$0xff]
  %v116 = vld [vmem:[%s0 + $0x2a4] sm:$0xf]
  %v117 = vld [vmem:[%s0 + $0x2a8] sm:$0xff]
  %v118 = vld [vmem:[%s0 + $0x2b0] sm:$0xff]
  %v119 = vld [vmem:[%s0 + $0x2b8] sm:$0xf]
  %v120 = vld [vmem:[%s0 + $0x2bc] sm:$0xff]
  %v121 = vld [vmem:[%s0 + $0x2c4] sm:$0xff]
  %v122 = vld [vmem:[%s0 + $0x2cc] sm:$0xf]
  %v123 = vld [vmem:[%s0 + $0x2d0] sm:$0xff]
  %v124 = vld [vmem:[%s0 + $0x2d8] sm:$0xff]
  %v125 = vld [vmem:[%s0 + $0x2e0] sm:$0xf]
  %v126 = vld [vmem:[%s0 + $0x2e4] sm:$0xff]
  %v127 = vld [vmem:[%s0 + $0x2ec] sm:$0xff]
  %v128 = vld [vmem:[%s0 + $0x2f4] sm:$0xf]
  %v129 = vld [vmem:[%s0 + $0x2f8] sm:$0xff]
  %v130 = vld [vmem:[%s0 + $0x300] sm:$0xff]
  %v131 = vld [vmem:[%s0 + $0x308] sm:$0xf]
  %v132 = vld [vmem:[%s0 + $0x30c] sm:$0xff]
  %v133 = vld [vmem:[%s0 + $0x314] sm:$0xff]
  %v134 = vld [vmem:[%s0 + $0x31c] sm:$0xf]
  %v135 = vld [vmem:[%s0 + $0x320] sm:$0xff]
  %v136 = vld [vmem:[%s0 + $0x328] sm:$0xff]
  %v137 = vld [vmem:[%s0 + $0x330] sm:$0xf]
  %v138 = vld [vmem:[%s0 + $0x334] sm:$0xff]
  %v139 = vld [vmem:[%s0 + $0x33c] sm:$0xff]
  %v140 = vld [vmem:[%s0 + $0x344] sm:$0xf]
  %v141 = vld [vmem:[%s0 + $0x348] sm:$0x11]
  %v142 = vld [vmem:[%s0 + $0x350] sm:$0x11]
  %v143 = vld [vmem:[%s0 + $0x358] sm:$0x1]
  %v144 = vld [vmem:[%s1] sm:$0xf]
  %v145 = vld [vmem:[%s1 + $0x4] sm:$0xf]
  %v146 = vld [vmem:[%s1 + $0x8] sm:$0xf]
  %v147 = vld [vmem:[%s1 + $0xc] sm:$0xf]
  %v148 = vld [vmem:[%s1 + $0x10] sm:$0xf]
  %v149 = vld [vmem:[%s1 + $0x14] sm:$0xf]
  %v150 = vld [vmem:[%s1 + $0x18] sm:$0xf]
  %v151 = vld [vmem:[%s1 + $0x1c] sm:$0xf]
  %v152 = vld [vmem:[%s1 + $0x20] sm:$0xf]
  %v153 = vld [vmem:[%s1 + $0x24] sm:$0xf]
  %v154 = vld [vmem:[%s1 + $0x28] sm:$0xf]
  %v155 = vld [vmem:[%s1 + $0x2c] sm:$0xf]
  %v156 = vld [vmem:[%s1 + $0x30] sm:$0xf]
  %v157 = vld [vmem:[%s1 + $0x34] sm:$0xf]
  %v158 = vld [vmem:[%s1 + $0x38] sm:$0xf]
  %v159 = vld [vmem:[%s1 + $0x3c] sm:$0xf]
  %v160 = vld [vmem:[%s1 + $0x40] sm:$0xf]
  %v161 = vld [vmem:[%s1 + $0x44] sm:$0xf]
  %v162 = vld [vmem:[%s1 + $0x48] sm:$0xf]
  %v163 = vld [vmem:[%s1 + $0x4c] sm:$0xf]
  %v164 = vld [vmem:[%s1 + $0x50] sm:$0xf]
  %v165 = vld [vmem:[%s1 + $0x54] sm:$0xf]
  %v166 = vld [vmem:[%s1 + $0x58] sm:$0xf]
  %v167 = vld [vmem:[%s1 + $0x5c] sm:$0xf]
  %v168 = vld [vmem:[%s1 + $0x60] sm:$0xf]
  %v169 = vld [vmem:[%s1 + $0x64] sm:$0xf]
  %v170 = vld [vmem:[%s1 + $0x68] sm:$0xf]
  %v171 = vld [vmem:[%s1 + $0x6c] sm:$0xf]
  %v172 = vld [vmem:[%s1 + $0x70] sm:$0xf]
  %v173 = vld [vmem:[%s1 + $0x74] sm:$0xf]
  %v174 = vld [vmem:[%s1 + $0x78] sm:$0xf]
  %v175 = vld [vmem:[%s1 + $0x7c] sm:$0xf]
  %v176 = vld [vmem:[%s1 + $0x80] sm:$0xf]
  %v177 = vld [vmem:[%s1 + $0x84] sm:$0xf]
  %v178 = vld [vmem:[%s1 + $0x88] sm:$0xf]
  %v179 = vld [vmem:[%s1 + $0x8c] sm:$0xf]
  %v180 = vld [vmem:[%s1 + $0x90] sm:$0xf]
  %v181 = vld [vmem:[%s1 + $0x94] sm:$0xf]
  %v182 = vld [vmem:[%s1 + $0x98] sm:$0xf]
  %v183 = vld [vmem:[%s1 + $0x9c] sm:$0xf]
  %v184 = vld [vmem:[%s1 + $0xa0] sm:$0xf]
  %v185 = vld [vmem:[%s1 + $0xa4] sm:$0xf]
  %v186 = vld [vmem:[%s1 + $0xa8] sm:$0xf]
  %v187 = vld [vmem:[%s1 + $0xac] sm:$0xf]
  %v188 = vld [vmem:[%s1 + $0xb0] sm:$0xf]
  %v189 = vld [vmem:[%s1 + $0xb4] sm:$0xf]
  %v190 = vld [vmem:[%s1 + $0xb8] sm:$0xf]
  %v191 = vld [vmem:[%s1 + $0xbc] sm:$0xf]
  %v192 = vld [vmem:[%s1 + $0xc0] sm:$0xf]
  %v193 = vld [vmem:[%s1 + $0xc4] sm:$0xf]
  %v194 = vld [vmem:[%s1 + $0xc8] sm:$0xf]
  %v195 = vld [vmem:[%s1 + $0xcc] sm:$0xf]
  %v196 = vld [vmem:[%s1 + $0xd0] sm:$0xf]
  %v197 = vld [vmem:[%s1 + $0xd4] sm:$0xf]
  %v198 = vld [vmem:[%s1 + $0xd8] sm:$0xf]
  %v199 = vld [vmem:[%s1 + $0xdc] sm:$0xf]
  %v200 = vld [vmem:[%s1 + $0xe0] sm:$0xf]
  %v201 = vld [vmem:[%s1 + $0xe4] sm:$0xf]
  %v202 = vld [vmem:[%s1 + $0xe8] sm:$0xf]
  %v203 = vld [vmem:[%s1 + $0xec] sm:$0xf]
  %v204 = vld [vmem:[%s1 + $0xf0] sm:$0xf]
  %v205 = vld [vmem:[%s1 + $0xf4] sm:$0xf]
  %v206 = vld [vmem:[%s1 + $0xf8] sm:$0xf]
  %v207 = vld [vmem:[%s1 + $0xfc] sm:$0xf]
  %v208 = vld [vmem:[%s1 + $0x100] sm:$0xf]
  %v209 = vld [vmem:[%s1 + $0x104] sm:$0xf]
  %v210 = vld [vmem:[%s1 + $0x108] sm:$0xf]
  %v211 = vld [vmem:[%s1 + $0x10c] sm:$0xf]
  %v212 = vld [vmem:[%s1 + $0x110] sm:$0xf]
  %v213 = vld [vmem:[%s1 + $0x114] sm:$0xf]
  %v214 = vld [vmem:[%s1 + $0x118] sm:$0xf]
  %v215 = vld [vmem:[%s1 + $0x11c] sm:$0xf]
  %v216 = vld [vmem:[%s2] sm:$0x1]
  %v218 = vperm.slane %v216, 0
  %v349 = vunpack.c.l.b16 %v15
  %v350 = vunpack.c.h.b16 %v15
  %v351 = vunpack.c.l.b16 %v16
  %v352 = vunpack.c.h.b16 %v16
  %v353 = vunpack.c.l.b16 %v17
  %v354 = vunpack.c.l.b16 %v18
  %v355 = vunpack.c.h.b16 %v18
  %v356 = vunpack.c.l.b16 %v19
  %v357 = vunpack.c.h.b16 %v19
  %v358 = vunpack.c.l.b16 %v20
  %v359 = vunpack.c.l.b16 %v21
  %v360 = vunpack.c.h.b16 %v21
  %v361 = vunpack.c.l.b16 %v22
  %v362 = vunpack.c.h.b16 %v22
  %v363 = vunpack.c.l.b16 %v23
  %v364 = vunpack.c.l.b16 %v24
  %v365 = vunpack.c.h.b16 %v24
  %v366 = vunpack.c.l.b16 %v25
  %v367 = vunpack.c.h.b16 %v25
  %v368 = vunpack.c.l.b16 %v26
  %v369 = vunpack.c.l.b16 %v27
  %v370 = vunpack.c.h.b16 %v27
  %v371 = vunpack.c.l.b16 %v28
  %v372 = vunpack.c.h.b16 %v28
  %v373 = vunpack.c.l.b16 %v29
  %v374 = vunpack.c.l.b16 %v30
  %v375 = vunpack.c.h.b16 %v30
  %v376 = vunpack.c.l.b16 %v31
  %v377 = vunpack.c.h.b16 %v31
  %v378 = vunpack.c.l.b16 %v32
  %v379 = vunpack.c.l.b16 %v33
  %v380 = vunpack.c.h.b16 %v33
  %v381 = vunpack.c.l.b16 %v34
  %v382 = vunpack.c.h.b16 %v34
  %v383 = vunpack.c.l.b16 %v35
  %v384 = vunpack.c.l.b16 %v36
  %v385 = vunpack.c.h.b16 %v36
  %v386 = vunpack.c.l.b16 %v37
  %v387 = vunpack.c.h.b16 %v37
  %v388 = vunpack.c.l.b16 %v38
  %v389 = vunpack.c.l.b16 %v39
  %v390 = vunpack.c.h.b16 %v39
  %v391 = vunpack.c.l.b16 %v40
  %v392 = vunpack.c.h.b16 %v40
  %v393 = vunpack.c.l.b16 %v41
  %v394 = vunpack.c.l.b16 %v42
  %v395 = vunpack.c.h.b16 %v42
  %v396 = vunpack.c.l.b16 %v43
  %v397 = vunpack.c.h.b16 %v43
  %v398 = vunpack.c.l.b16 %v44
  %v399 = vunpack.c.l.b16 %v45
  %v400 = vunpack.c.h.b16 %v45
  %v401 = vunpack.c.l.b16 %v46
  %v402 = vunpack.c.h.b16 %v46
  %v403 = vunpack.c.l.b16 %v47
  %v404 = vunpack.c.l.b16 %v48
  %v405 = vunpack.c.h.b16 %v48
  %v406 = vunpack.c.l.b16 %v49
  %v407 = vunpack.c.h.b16 %v49
  %v408 = vunpack.c.l.b16 %v50
  %v409 = vunpack.c.l.b16 %v51
  %v410 = vunpack.c.h.b16 %v51
  %v411 = vunpack.c.l.b16 %v52
  %v412 = vunpack.c.h.b16 %v52
  %v413 = vunpack.c.l.b16 %v53
  %v414 = vunpack.c.l.b16 %v54
  %v415 = vunpack.c.h.b16 %v54
  %v416 = vunpack.c.l.b16 %v55
  %v417 = vunpack.c.h.b16 %v55
  %v418 = vunpack.c.l.b16 %v56
  %v419 = vunpack.c.l.b16 %v57
  %v420 = vunpack.c.h.b16 %v57
  %v421 = vunpack.c.l.b16 %v58
  %v422 = vunpack.c.h.b16 %v58
  %v423 = vunpack.c.l.b16 %v59
  %v424 = vunpack.c.l.b16 %v60
  %v425 = vunpack.c.h.b16 %v60
  %v426 = vunpack.c.l.b16 %v61
  %v427 = vunpack.c.h.b16 %v61
  %v428 = vunpack.c.l.b16 %v62
  %v429 = vunpack.c.l.b16 %v63
  %v430 = vunpack.c.h.b16 %v63
  %v431 = vunpack.c.l.b16 %v64
  %v432 = vunpack.c.h.b16 %v64
  %v433 = vunpack.c.l.b16 %v65
  %v434 = vunpack.c.l.b16 %v66
  %v435 = vunpack.c.h.b16 %v66
  %v436 = vunpack.c.l.b16 %v67
  %v437 = vunpack.c.h.b16 %v67
  %v438 = vunpack.c.l.b16 %v68
  %v439 = vunpack.c.l.b16 %v69
  %v440 = vunpack.c.h.b16 %v69
  %v441 = vunpack.c.l.b16 %v70
  %v442 = vunpack.c.h.b16 %v70
  %v443 = vunpack.c.l.b16 %v71
  %v444 = vunpack.c.l.b16 %v72
  %v445 = vunpack.c.h.b16 %v72
  %v446 = vunpack.c.l.b16 %v73
  %v447 = vunpack.c.h.b16 %v73
  %v448 = vunpack.c.l.b16 %v74
  %v449 = vunpack.c.l.b16 %v75
  %v450 = vunpack.c.h.b16 %v75
  %v451 = vunpack.c.l.b16 %v76
  %v452 = vunpack.c.h.b16 %v76
  %v453 = vunpack.c.l.b16 %v77
  %v454 = vunpack.c.l.b16 %v78
  %v455 = vunpack.c.h.b16 %v78
  %v456 = vunpack.c.l.b16 %v79
  %v457 = vunpack.c.h.b16 %v79
  %v458 = vunpack.c.l.b16 %v80
  %v459 = vunpack.c.l.b16 %v81
  %v460 = vunpack.c.h.b16 %v81
  %v461 = vunpack.c.l.b16 %v82
  %v462 = vunpack.c.h.b16 %v82
  %v463 = vunpack.c.l.b16 %v83
  %v464 = vunpack.c.l.b16 %v84
  %v465 = vunpack.c.h.b16 %v84
  %v466 = vunpack.c.l.b16 %v85
  %v467 = vunpack.c.h.b16 %v85
  %v468 = vunpack.c.l.b16 %v86
  %v469 = vunpack.c.l.b16 %v87
  %v470 = vunpack.c.h.b16 %v87
  %v471 = vunpack.c.l.b16 %v88
  %v472 = vunpack.c.h.b16 %v88
  %v473 = vunpack.c.l.b16 %v89
  %v474 = vunpack.c.l.b16 %v90
  %v475 = vunpack.c.h.b16 %v90
  %v476 = vunpack.c.l.b16 %v91
  %v477 = vunpack.c.h.b16 %v91
  %v478 = vunpack.c.l.b16 %v92
  %v479 = vunpack.c.l.b16 %v93
  %v480 = vunpack.c.h.b16 %v93
  %v481 = vunpack.c.l.b16 %v94
  %v482 = vunpack.c.h.b16 %v94
  %v483 = vunpack.c.l.b16 %v95
  %v484 = vunpack.c.l.b16 %v96
  %v485 = vunpack.c.h.b16 %v96
  %v486 = vunpack.c.l.b16 %v97
  %v487 = vunpack.c.h.b16 %v97
  %v488 = vunpack.c.l.b16 %v98
  %v489 = vunpack.c.l.b16 %v99
  %v490 = vunpack.c.h.b16 %v99
  %v491 = vunpack.c.l.b16 %v100
  %v492 = vunpack.c.h.b16 %v100
  %v493 = vunpack.c.l.b16 %v101
  %v494 = vunpack.c.l.b16 %v102
  %v495 = vunpack.c.h.b16 %v102
  %v496 = vunpack.c.l.b16 %v103
  %v497 = vunpack.c.h.b16 %v103
  %v498 = vunpack.c.l.b16 %v104
  %v499 = vunpack.c.l.b16 %v105
  %v500 = vunpack.c.h.b16 %v105
  %v501 = vunpack.c.l.b16 %v106
  %v502 = vunpack.c.h.b16 %v106
  %v503 = vunpack.c.l.b16 %v107
  %v504 = vunpack.c.l.b16 %v108
  %v505 = vunpack.c.h.b16 %v108
  %v506 = vunpack.c.l.b16 %v109
  %v507 = vunpack.c.h.b16 %v109
  %v508 = vunpack.c.l.b16 %v110
  %v509 = vunpack.c.l.b16 %v111
  %v510 = vunpack.c.h.b16 %v111
  %v511 = vunpack.c.l.b16 %v112
  %v512 = vunpack.c.h.b16 %v112
  %v513 = vunpack.c.l.b16 %v113
  %v514 = vunpack.c.l.b16 %v114
  %v515 = vunpack.c.h.b16 %v114
  %v516 = vunpack.c.l.b16 %v115
  %v517 = vunpack.c.h.b16 %v115
  %v518 = vunpack.c.l.b16 %v116
  %v519 = vunpack.c.l.b16 %v117
  %v520 = vunpack.c.h.b16 %v117
  %v521 = vunpack.c.l.b16 %v118
  %v522 = vunpack.c.h.b16 %v118
  %v523 = vunpack.c.l.b16 %v119
  %v524 = vunpack.c.l.b16 %v120
  %v525 = vunpack.c.h.b16 %v120
  %v526 = vunpack.c.l.b16 %v121
  %v527 = vunpack.c.h.b16 %v121
  %v528 = vunpack.c.l.b16 %v122
  %v529 = vunpack.c.l.b16 %v123
  %v530 = vunpack.c.h.b16 %v123
  %v531 = vunpack.c.l.b16 %v124
  %v532 = vunpack.c.h.b16 %v124
  %v533 = vunpack.c.l.b16 %v125
  %v534 = vunpack.c.l.b16 %v126
  %v535 = vunpack.c.h.b16 %v126
  %v536 = vunpack.c.l.b16 %v127
  %v537 = vunpack.c.h.b16 %v127
  %v538 = vunpack.c.l.b16 %v128
  %v539 = vunpack.c.l.b16 %v129
  %v540 = vunpack.c.h.b16 %v129
  %v541 = vunpack.c.l.b16 %v130
  %v542 = vunpack.c.h.b16 %v130
  %v543 = vunpack.c.l.b16 %v131
  %v544 = vunpack.c.l.b16 %v132
  %v545 = vunpack.c.h.b16 %v132
  %v546 = vunpack.c.l.b16 %v133
  %v547 = vunpack.c.h.b16 %v133
  %v548 = vunpack.c.l.b16 %v134
  %v549 = vunpack.c.l.b16 %v135
  %v550 = vunpack.c.h.b16 %v135
  %v551 = vunpack.c.l.b16 %v136
  %v552 = vunpack.c.h.b16 %v136
  %v553 = vunpack.c.l.b16 %v137
  %v554 = vunpack.c.l.b16 %v138
  %v555 = vunpack.c.h.b16 %v138
  %v556 = vunpack.c.l.b16 %v139
  %v557 = vunpack.c.h.b16 %v139
  %v558 = vunpack.c.l.b16 %v140
  %v559 = vunpack.c.l.b16 %v141
  %v560 = vunpack.c.h.b16 %v141
  %v561 = vunpack.c.l.b16 %v142
  %v562 = vunpack.c.h.b16 %v142
  %v563 = vunpack.c.l.b16 %v143
  %v564 = vpack.c.b16 %v354, %v349
  %v565 = vpack.c.b16 %v355, %v350
  %v566 = vpack.c.b16 %v356, %v351
  %v567 = vpack.c.b16 %v357, %v352
  %v568 = vpack.c.b16 %v358, %v353
  %v569 = vpack.c.b16 %v364, %v359
  %v570 = vpack.c.b16 %v365, %v360
  %v571 = vpack.c.b16 %v366, %v361
  %v572 = vpack.c.b16 %v367, %v362
  %v573 = vpack.c.b16 %v368, %v363
  %v574 = vpack.c.b16 %v374, %v369
  %v575 = vpack.c.b16 %v375, %v370
  %v576 = vpack.c.b16 %v376, %v371
  %v577 = vpack.c.b16 %v377, %v372
  %v578 = vpack.c.b16 %v378, %v373
  %v579 = vpack.c.b16 %v384, %v379
  %v580 = vpack.c.b16 %v385, %v380
  %v581 = vpack.c.b16 %v386, %v381
  %v582 = vpack.c.b16 %v387, %v382
  %v583 = vpack.c.b16 %v388, %v383
  %v584 = vpack.c.b16 %v394, %v389
  %v585 = vpack.c.b16 %v395, %v390
  %v586 = vpack.c.b16 %v396, %v391
  %v587 = vpack.c.b16 %v397, %v392
  %v588 = vpack.c.b16 %v398, %v393
  %v589 = vpack.c.b16 %v404, %v399
  %v590 = vpack.c.b16 %v405, %v400
  %v591 = vpack.c.b16 %v406, %v401
  %v592 = vpack.c.b16 %v407, %v402
  %v593 = vpack.c.b16 %v408, %v403
  %v594 = vpack.c.b16 %v414, %v409
  %v595 = vpack.c.b16 %v415, %v410
  %v596 = vpack.c.b16 %v416, %v411
  %v597 = vpack.c.b16 %v417, %v412
  %v598 = vpack.c.b16 %v418, %v413
  %v599 = vpack.c.b16 %v424, %v419
  %v600 = vpack.c.b16 %v425, %v420
  %v601 = vpack.c.b16 %v426, %v421
  %v602 = vpack.c.b16 %v427, %v422
  %v603 = vpack.c.b16 %v428, %v423
  %v604 = vpack.c.b16 %v434, %v429
  %v605 = vpack.c.b16 %v435, %v430
  %v606 = vpack.c.b16 %v436, %v431
  %v607 = vpack.c.b16 %v437, %v432
  %v608 = vpack.c.b16 %v438, %v433
  %v609 = vpack.c.b16 %v444, %v439
  %v610 = vpack.c.b16 %v445, %v440
  %v611 = vpack.c.b16 %v446, %v441
  %v612 = vpack.c.b16 %v447, %v442
  %v613 = vpack.c.b16 %v448, %v443
  %v614 = vpack.c.b16 %v454, %v449
  %v615 = vpack.c.b16 %v455, %v450
  %v616 = vpack.c.b16 %v456, %v451
  %v617 = vpack.c.b16 %v457, %v452
  %v618 = vpack.c.b16 %v458, %v453
  %v619 = vpack.c.b16 %v464, %v459
  %v620 = vpack.c.b16 %v465, %v460
  %v621 = vpack.c.b16 %v466, %v461
  %v622 = vpack.c.b16 %v467, %v462
  %v623 = vpack.c.b16 %v468, %v463
  %v624 = vpack.c.b16 %v474, %v469
  %v625 = vpack.c.b16 %v475, %v470
  %v626 = vpack.c.b16 %v476, %v471
  %v627 = vpack.c.b16 %v477, %v472
  %v628 = vpack.c.b16 %v478, %v473
  %v629 = vpack.c.b16 %v484, %v479
  %v630 = vpack.c.b16 %v485, %v480
  %v631 = vpack.c.b16 %v486, %v481
  %v632 = vpack.c.b16 %v487, %v482
  %v633 = vpack.c.b16 %v488, %v483
  %v634 = vpack.c.b16 %v494, %v489
  %v635 = vpack.c.b16 %v495, %v490
  %v636 = vpack.c.b16 %v496, %v491
  %v637 = vpack.c.b16 %v497, %v492
  %v638 = vpack.c.b16 %v498, %v493
  %v639 = vpack.c.b16 %v504, %v499
  %v640 = vpack.c.b16 %v505, %v500
  %v641 = vpack.c.b16 %v506, %v501
  %v642 = vpack.c.b16 %v507, %v502
  %v643 = vpack.c.b16 %v508, %v503
  %v644 = vpack.c.b16 %v514, %v509
  %v645 = vpack.c.b16 %v515, %v510
  %v646 = vpack.c.b16 %v516, %v511
  %v647 = vpack.c.b16 %v517, %v512
  %v648 = vpack.c.b16 %v518, %v513
  %v649 = vpack.c.b16 %v524, %v519
  %v650 = vpack.c.b16 %v525, %v520
  %v651 = vpack.c.b16 %v526, %v521
  %v652 = vpack.c.b16 %v527, %v522
  %v653 = vpack.c.b16 %v528, %v523
  %v654 = vpack.c.b16 %v534, %v529
  %v655 = vpack.c.b16 %v535, %v530
  %v656 = vpack.c.b16 %v536, %v531
  %v657 = vpack.c.b16 %v537, %v532
  %v658 = vpack.c.b16 %v538, %v533
  %v659 = vpack.c.b16 %v544, %v539
  %v660 = vpack.c.b16 %v545, %v540
  %v661 = vpack.c.b16 %v546, %v541
  %v662 = vpack.c.b16 %v547, %v542
  %v663 = vpack.c.b16 %v548, %v543
  %v664 = vpack.c.b16 %v554, %v549
  %v665 = vpack.c.b16 %v555, %v550
  %v666 = vpack.c.b16 %v556, %v551
  %v667 = vpack.c.b16 %v557, %v552
  %v668 = vpack.c.b16 %v558, %v553
  %v669 = vpack.c.b16 %v559, %v559
  %v670 = vpack.c.b16 %v560, %v560
  %v671 = vpack.c.b16 %v561, %v561
  %v672 = vpack.c.b16 %v562, %v562
  %v673 = vpack.c.b16 %v563, %v563
  %v834 = vunpack.c.l.b16 %v144
  %v835 = vunpack.c.l.b16 %v145
  %v836 = vunpack.c.l.b16 %v146
  %v837 = vunpack.c.l.b16 %v147
  %v838 = vunpack.c.l.b16 %v148
  %v839 = vunpack.c.l.b16 %v149
  %v840 = vunpack.c.l.b16 %v150
  %v841 = vunpack.c.l.b16 %v151
  %v842 = vunpack.c.l.b16 %v152
  %v843 = vunpack.c.l.b16 %v153
  %v844 = vunpack.c.l.b16 %v154
  %v845 = vunpack.c.l.b16 %v155
  %v846 = vunpack.c.l.b16 %v156
  %v847 = vunpack.c.l.b16 %v157
  %v848 = vunpack.c.l.b16 %v158
  %v849 = vunpack.c.l.b16 %v159
  %v850 = vunpack.c.l.b16 %v160
  %v851 = vunpack.c.l.b16 %v161
  %v852 = vunpack.c.l.b16 %v162
  %v853 = vunpack.c.l.b16 %v163
  %v854 = vunpack.c.l.b16 %v164
  %v855 = vunpack.c.l.b16 %v165
  %v856 = vunpack.c.l.b16 %v166
  %v857 = vunpack.c.l.b16 %v167
  %v858 = vunpack.c.l.b16 %v168
  %v859 = vunpack.c.l.b16 %v169
  %v860 = vunpack.c.l.b16 %v170
  %v861 = vunpack.c.l.b16 %v171
  %v862 = vunpack.c.l.b16 %v172
  %v863 = vunpack.c.l.b16 %v173
  %v864 = vunpack.c.l.b16 %v174
  %v865 = vunpack.c.l.b16 %v175
  %v866 = vunpack.c.l.b16 %v176
  %v867 = vunpack.c.l.b16 %v177
  %v868 = vunpack.c.l.b16 %v178
  %v869 = vunpack.c.l.b16 %v179
  %v870 = vunpack.c.l.b16 %v180
  %v871 = vunpack.c.l.b16 %v181
  %v872 = vunpack.c.l.b16 %v182
  %v873 = vunpack.c.l.b16 %v183
  %v874 = vunpack.c.l.b16 %v184
  %v875 = vunpack.c.l.b16 %v185
  %v876 = vunpack.c.l.b16 %v186
  %v877 = vunpack.c.l.b16 %v187
  %v878 = vunpack.c.l.b16 %v188
  %v879 = vunpack.c.l.b16 %v189
  %v880 = vunpack.c.l.b16 %v190
  %v881 = vunpack.c.l.b16 %v191
  %v882 = vunpack.c.l.b16 %v192
  %v883 = vunpack.c.l.b16 %v193
  %v884 = vunpack.c.l.b16 %v194
  %v885 = vunpack.c.l.b16 %v195
  %v886 = vunpack.c.l.b16 %v196
  %v887 = vunpack.c.l.b16 %v197
  %v888 = vunpack.c.l.b16 %v198
  %v889 = vunpack.c.l.b16 %v199
  %v890 = vunpack.c.l.b16 %v200
  %v891 = vunpack.c.l.b16 %v201
  %v892 = vunpack.c.l.b16 %v202
  %v893 = vunpack.c.l.b16 %v203
  %v894 = vunpack.c.l.b16 %v204
  %v895 = vunpack.c.l.b16 %v205
  %v896 = vunpack.c.l.b16 %v206
  %v897 = vunpack.c.l.b16 %v207
  %v898 = vunpack.c.l.b16 %v208
  %v899 = vunpack.c.l.b16 %v209
  %v900 = vunpack.c.l.b16 %v210
  %v901 = vunpack.c.l.b16 %v211
  %v902 = vunpack.c.l.b16 %v212
  %v903 = vunpack.c.l.b16 %v213
  %v904 = vunpack.c.l.b16 %v214
  %v905 = vunpack.c.l.b16 %v215
  %v906 = vpack.c.b16 %v835, %v834
  %v907 = vpack.c.b16 %v837, %v836
  %v908 = vpack.c.b16 %v839, %v838
  %v909 = vpack.c.b16 %v841, %v840
  %v910 = vpack.c.b16 %v843, %v842
  %v911 = vpack.c.b16 %v845, %v844
  %v912 = vpack.c.b16 %v847, %v846
  %v913 = vpack.c.b16 %v849, %v848
  %v914 = vpack.c.b16 %v851, %v850
  %v915 = vpack.c.b16 %v853, %v852
  %v916 = vpack.c.b16 %v855, %v854
  %v917 = vpack.c.b16 %v857, %v856
  %v918 = vpack.c.b16 %v859, %v858
  %v919 = vpack.c.b16 %v861, %v860
  %v920 = vpack.c.b16 %v863, %v862
  %v921 = vpack.c.b16 %v865, %v864
  %v922 = vpack.c.b16 %v867, %v866
  %v923 = vpack.c.b16 %v869, %v868
  %v924 = vpack.c.b16 %v871, %v870
  %v925 = vpack.c.b16 %v873, %v872
  %v926 = vpack.c.b16 %v875, %v874
  %v927 = vpack.c.b16 %v877, %v876
  %v928 = vpack.c.b16 %v879, %v878
  %v929 = vpack.c.b16 %v881, %v880
  %v930 = vpack.c.b16 %v883, %v882
  %v931 = vpack.c.b16 %v885, %v884
  %v932 = vpack.c.b16 %v887, %v886
  %v933 = vpack.c.b16 %v889, %v888
  %v934 = vpack.c.b16 %v891, %v890
  %v935 = vpack.c.b16 %v893, %v892
  %v936 = vpack.c.b16 %v895, %v894
  %v937 = vpack.c.b16 %v897, %v896
  %v938 = vpack.c.b16 %v899, %v898
  %v939 = vpack.c.b16 %v901, %v900
  %v940 = vpack.c.b16 %v903, %v902
  %v941 = vpack.c.b16 %v905, %v904
  %vm978 = vcmask 523264
  %v980 = vsel %vm978, %v568, 0
  %v983 = vsel %vm978, %v573, 0
  %v986 = vsel %vm978, %v578, 0
  %v989 = vsel %vm978, %v583, 0
  %v992 = vsel %vm978, %v588, 0
  %v995 = vsel %vm978, %v593, 0
  %v998 = vsel %vm978, %v598, 0
  %v1001 = vsel %vm978, %v603, 0
  %v1004 = vsel %vm978, %v608, 0
  %v1007 = vsel %vm978, %v613, 0
  %v1010 = vsel %vm978, %v618, 0
  %v1013 = vsel %vm978, %v623, 0
  %v1016 = vsel %vm978, %v628, 0
  %v1019 = vsel %vm978, %v633, 0
  %v1022 = vsel %vm978, %v638, 0
  %v1025 = vsel %vm978, %v643, 0
  %v1028 = vsel %vm978, %v648, 0
  %v1031 = vsel %vm978, %v653, 0
  %v1034 = vsel %vm978, %v658, 0
  %v1037 = vsel %vm978, %v663, 0
  %v1040 = vsel %vm978, %v668, 0
  %v1043 = vsel %vm978, %v673, 0
  %1045 = vmatpush.bf16.msra.mxu0 %v913
  %1046 = vmatpush.bf16.msra.mxu0 %v912
  %1047 = vmatpush.bf16.msra.mxu0 %v911
  %1048 = vmatpush.bf16.msra.mxu0 %v910
  %1049 = vmatpush.bf16.msra.mxu0 %v909
  %1050 = vmatpush.bf16.msra.mxu0 %v908
  %1051 = vmatpush.bf16.msra.mxu0 %v907
  %1052 = vmatpush.bf16.msra.mxu0 %v906
  %1053 = vmatmul.bf16.gmra.mxu0 %v564
  %v1054 = vpop.f32.mrf.mxu0
  %v1055 = vadd.f32 %v218, %v1054
  %v1056 = vpop.f32.mrf.mxu0
  %v1057 = vadd.f32 %v218, %v1056
  %1058 = vmatmul.bf16.gmra.mxu0 %v569
  %v1059 = vpop.f32.mrf.mxu0
  %v1060 = vadd.f32 %v218, %v1059
  %v1061 = vpop.f32.mrf.mxu0
  %v1062 = vadd.f32 %v218, %v1061
  %1063 = vmatmul.bf16.gmra.mxu0 %v574
  %v1064 = vpop.f32.mrf.mxu0
  %v1065 = vadd.f32 %v218, %v1064
  %v1066 = vpop.f32.mrf.mxu0
  %v1067 = vadd.f32 %v218, %v1066
  %1068 = vmatmul.bf16.gmra.mxu0 %v579
  %v1069 = vpop.f32.mrf.mxu0
  %v1070 = vadd.f32 %v218, %v1069
  %v1071 = vpop.f32.mrf.mxu0
  %v1072 = vadd.f32 %v218, %v1071
  %1073 = vmatmul.bf16.gmra.mxu0 %v584
  %v1074 = vpop.f32.mrf.mxu0
  %v1075 = vadd.f32 %v218, %v1074
  %v1076 = vpop.f32.mrf.mxu0
  %v1077 = vadd.f32 %v218, %v1076
  %1078 = vmatmul.bf16.gmra.mxu0 %v589
  %v1079 = vpop.f32.mrf.mxu0
  %v1080 = vadd.f32 %v218, %v1079
  %v1081 = vpop.f32.mrf.mxu0
  %v1082 = vadd.f32 %v218, %v1081
  %1083 = vmatmul.bf16.gmra.mxu0 %v594
  %v1084 = vpop.f32.mrf.mxu0
  %v1085 = vadd.f32 %v218, %v1084
  %v1086 = vpop.f32.mrf.mxu0
  %v1087 = vadd.f32 %v218, %v1086
  %1088 = vmatmul.bf16.gmra.mxu0 %v599
  %v1089 = vpop.f32.mrf.mxu0
  %v1090 = vadd.f32 %v218, %v1089
  %v1091 = vpop.f32.mrf.mxu0
  %v1092 = vadd.f32 %v218, %v1091
  %1093 = vmatmul.bf16.gmra.mxu0 %v604
  %v1094 = vpop.f32.mrf.mxu0
  %v1095 = vadd.f32 %v218, %v1094
  %v1096 = vpop.f32.mrf.mxu0
  %v1097 = vadd.f32 %v218, %v1096
  %1098 = vmatmul.bf16.gmra.mxu0 %v609
  %v1099 = vpop.f32.mrf.mxu0
  %v1100 = vadd.f32 %v218, %v1099
  %v1101 = vpop.f32.mrf.mxu0
  %v1102 = vadd.f32 %v218, %v1101
  %1103 = vmatmul.bf16.gmra.mxu0 %v614
  %v1104 = vpop.f32.mrf.mxu0
  %v1105 = vadd.f32 %v218, %v1104
  %v1106 = vpop.f32.mrf.mxu0
  %v1107 = vadd.f32 %v218, %v1106
  %1108 = vmatmul.bf16.gmra.mxu0 %v619
  %v1109 = vpop.f32.mrf.mxu0
  %v1110 = vadd.f32 %v218, %v1109
  %v1111 = vpop.f32.mrf.mxu0
  %v1112 = vadd.f32 %v218, %v1111
  %1113 = vmatmul.bf16.gmra.mxu0 %v624
  %v1114 = vpop.f32.mrf.mxu0
  %v1115 = vadd.f32 %v218, %v1114
  %v1116 = vpop.f32.mrf.mxu0
  %v1117 = vadd.f32 %v218, %v1116
  %1118 = vmatmul.bf16.gmra.mxu0 %v629
  %v1119 = vpop.f32.mrf.mxu0
  %v1120 = vadd.f32 %v218, %v1119
  %v1121 = vpop.f32.mrf.mxu0
  %v1122 = vadd.f32 %v218, %v1121
  %1123 = vmatmul.bf16.gmra.mxu0 %v634
  %v1124 = vpop.f32.mrf.mxu0
  %v1125 = vadd.f32 %v218, %v1124
  %v1126 = vpop.f32.mrf.mxu0
  %v1127 = vadd.f32 %v218, %v1126
  %1128 = vmatmul.bf16.gmra.mxu0 %v639
  %v1129 = vpop.f32.mrf.mxu0
  %v1130 = vadd.f32 %v218, %v1129
  %v1131 = vpop.f32.mrf.mxu0
  %v1132 = vadd.f32 %v218, %v1131
  %1133 = vmatmul.bf16.gmra.mxu0 %v644
  %v1134 = vpop.f32.mrf.mxu0
  %v1135 = vadd.f32 %v218, %v1134
  %v1136 = vpop.f32.mrf.mxu0
  %v1137 = vadd.f32 %v218, %v1136
  %1138 = vmatmul.bf16.gmra.mxu0 %v649
  %v1139 = vpop.f32.mrf.mxu0
  %v1140 = vadd.f32 %v218, %v1139
  %v1141 = vpop.f32.mrf.mxu0
  %v1142 = vadd.f32 %v218, %v1141
  %1143 = vmatmul.bf16.gmra.mxu0 %v654
  %v1144 = vpop.f32.mrf.mxu0
  %v1145 = vadd.f32 %v218, %v1144
  %v1146 = vpop.f32.mrf.mxu0
  %v1147 = vadd.f32 %v218, %v1146
  %1148 = vmatmul.bf16.gmra.mxu0 %v659
  %v1149 = vpop.f32.mrf.mxu0
  %v1150 = vadd.f32 %v218, %v1149
  %v1151 = vpop.f32.mrf.mxu0
  %v1152 = vadd.f32 %v218, %v1151
  %1153 = vmatmul.bf16.gmra.mxu0 %v664
  %v1154 = vpop.f32.mrf.mxu0
  %v1155 = vadd.f32 %v218, %v1154
  %v1156 = vpop.f32.mrf.mxu0
  %v1157 = vadd.f32 %v218, %v1156
  %1158 = vmatmul.bf16.gmra.mxu0 %v669
  %v1159 = vpop.f32.mrf.mxu0
  %v1160 = vadd.f32 %v218, %v1159
  %v1161 = vpop.f32.mrf.mxu0
  %1162 = vdwg.mxu0
  %1163 = vmatpush.bf16.msra.mxu0 %v921
  %1164 = vmatpush.bf16.msra.mxu0 %v920
  %1165 = vmatpush.bf16.msra.mxu0 %v919
  %1166 = vmatpush.bf16.msra.mxu0 %v918
  %1167 = vmatpush.bf16.msra.mxu0 %v917
  %1168 = vmatpush.bf16.msra.mxu0 %v916
  %1169 = vmatpush.bf16.msra.mxu0 %v915
  %1170 = vmatpush.bf16.msra.mxu0 %v914
  %1171 = vmatmul.bf16.gmra.mxu0 %v565
  %v1172 = vpop.f32.mrf.mxu0
  %v1173 = vadd.f32 %v1055, %v1172
  %v1174 = vpop.f32.mrf.mxu0
  %v1175 = vadd.f32 %v1057, %v1174
  %1176 = vmatmul.bf16.gmra.mxu0 %v570
  %v1177 = vpop.f32.mrf.mxu0
  %v1178 = vadd.f32 %v1060, %v1177
  %v1179 = vpop.f32.mrf.mxu0
  %v1180 = vadd.f32 %v1062, %v1179
  %1181 = vmatmul.bf16.gmra.mxu0 %v575
  %v1182 = vpop.f32.mrf.mxu0
  %v1183 = vadd.f32 %v1065, %v1182
  %v1184 = vpop.f32.mrf.mxu0
  %v1185 = vadd.f32 %v1067, %v1184
  %1186 = vmatmul.bf16.gmra.mxu0 %v580
  %v1187 = vpop.f32.mrf.mxu0
  %v1188 = vadd.f32 %v1070, %v1187
  %v1189 = vpop.f32.mrf.mxu0
  %v1190 = vadd.f32 %v1072, %v1189
  %1191 = vmatmul.bf16.gmra.mxu0 %v585
  %v1192 = vpop.f32.mrf.mxu0
  %v1193 = vadd.f32 %v1075, %v1192
  %v1194 = vpop.f32.mrf.mxu0
  %v1195 = vadd.f32 %v1077, %v1194
  %1196 = vmatmul.bf16.gmra.mxu0 %v590
  %v1197 = vpop.f32.mrf.mxu0
  %v1198 = vadd.f32 %v1080, %v1197
  %v1199 = vpop.f32.mrf.mxu0
  %v1200 = vadd.f32 %v1082, %v1199
  %1201 = vmatmul.bf16.gmra.mxu0 %v595
  %v1202 = vpop.f32.mrf.mxu0
  %v1203 = vadd.f32 %v1085, %v1202
  %v1204 = vpop.f32.mrf.mxu0
  %v1205 = vadd.f32 %v1087, %v1204
  %1206 = vmatmul.bf16.gmra.mxu0 %v600
  %v1207 = vpop.f32.mrf.mxu0
  %v1208 = vadd.f32 %v1090, %v1207
  %v1209 = vpop.f32.mrf.mxu0
  %v1210 = vadd.f32 %v1092, %v1209
  %1211 = vmatmul.bf16.gmra.mxu0 %v605
  %v1212 = vpop.f32.mrf.mxu0
  %v1213 = vadd.f32 %v1095, %v1212
  %v1214 = vpop.f32.mrf.mxu0
  %v1215 = vadd.f32 %v1097, %v1214
  %1216 = vmatmul.bf16.gmra.mxu0 %v610
  %v1217 = vpop.f32.mrf.mxu0
  %v1218 = vadd.f32 %v1100, %v1217
  %v1219 = vpop.f32.mrf.mxu0
  %v1220 = vadd.f32 %v1102, %v1219
  %1221 = vmatmul.bf16.gmra.mxu0 %v615
  %v1222 = vpop.f32.mrf.mxu0
  %v1223 = vadd.f32 %v1105, %v1222
  %v1224 = vpop.f32.mrf.mxu0
  %v1225 = vadd.f32 %v1107, %v1224
  %1226 = vmatmul.bf16.gmra.mxu0 %v620
  %v1227 = vpop.f32.mrf.mxu0
  %v1228 = vadd.f32 %v1110, %v1227
  %v1229 = vpop.f32.mrf.mxu0
  %v1230 = vadd.f32 %v1112, %v1229
  %1231 = vmatmul.bf16.gmra.mxu0 %v625
  %v1232 = vpop.f32.mrf.mxu0
  %v1233 = vadd.f32 %v1115, %v1232
  %v1234 = vpop.f32.mrf.mxu0
  %v1235 = vadd.f32 %v1117, %v1234
  %1236 = vmatmul.bf16.gmra.mxu0 %v630
  %v1237 = vpop.f32.mrf.mxu0
  %v1238 = vadd.f32 %v1120, %v1237
  %v1239 = vpop.f32.mrf.mxu0
  %v1240 = vadd.f32 %v1122, %v1239
  %1241 = vmatmul.bf16.gmra.mxu0 %v635
  %v1242 = vpop.f32.mrf.mxu0
  %v1243 = vadd.f32 %v1125, %v1242
  %v1244 = vpop.f32.mrf.mxu0
  %v1245 = vadd.f32 %v1127, %v1244
  %1246 = vmatmul.bf16.gmra.mxu0 %v640
  %v1247 = vpop.f32.mrf.mxu0
  %v1248 = vadd.f32 %v1130, %v1247
  %v1249 = vpop.f32.mrf.mxu0
  %v1250 = vadd.f32 %v1132, %v1249
  %1251 = vmatmul.bf16.gmra.mxu0 %v645
  %v1252 = vpop.f32.mrf.mxu0
  %v1253 = vadd.f32 %v1135, %v1252
  %v1254 = vpop.f32.mrf.mxu0
  %v1255 = vadd.f32 %v1137, %v1254
  %1256 = vmatmul.bf16.gmra.mxu0 %v650
  %v1257 = vpop.f32.mrf.mxu0
  %v1258 = vadd.f32 %v1140, %v1257
  %v1259 = vpop.f32.mrf.mxu0
  %v1260 = vadd.f32 %v1142, %v1259
  %1261 = vmatmul.bf16.gmra.mxu0 %v655
  %v1262 = vpop.f32.mrf.mxu0
  %v1263 = vadd.f32 %v1145, %v1262
  %v1264 = vpop.f32.mrf.mxu0
  %v1265 = vadd.f32 %v1147, %v1264
  %1266 = vmatmul.bf16.gmra.mxu0 %v660
  %v1267 = vpop.f32.mrf.mxu0
  %v1268 = vadd.f32 %v1150, %v1267
  %v1269 = vpop.f32.mrf.mxu0
  %v1270 = vadd.f32 %v1152, %v1269
  %1271 = vmatmul.bf16.gmra.mxu0 %v665
  %v1272 = vpop.f32.mrf.mxu0
  %v1273 = vadd.f32 %v1155, %v1272
  %v1274 = vpop.f32.mrf.mxu0
  %v1275 = vadd.f32 %v1157, %v1274
  %1276 = vmatmul.bf16.gmra.mxu0 %v670
  %v1277 = vpop.f32.mrf.mxu0
  %v1278 = vadd.f32 %v1160, %v1277
  %v1279 = vpop.f32.mrf.mxu0
  %1280 = vdwg.mxu0
  %1281 = vmatpush.bf16.msra.mxu0 %v929
  %1282 = vmatpush.bf16.msra.mxu0 %v928
  %1283 = vmatpush.bf16.msra.mxu0 %v927
  %1284 = vmatpush.bf16.msra.mxu0 %v926
  %1285 = vmatpush.bf16.msra.mxu0 %v925
  %1286 = vmatpush.bf16.msra.mxu0 %v924
  %1287 = vmatpush.bf16.msra.mxu0 %v923
  %1288 = vmatpush.bf16.msra.mxu0 %v922
  %1289 = vmatmul.bf16.gmra.mxu0 %v566
  %v1290 = vpop.f32.mrf.mxu0
  %v1291 = vadd.f32 %v1173, %v1290
  %v1292 = vpop.f32.mrf.mxu0
  %v1293 = vadd.f32 %v1175, %v1292
  %1294 = vmatmul.bf16.gmra.mxu0 %v571
  %v1295 = vpop.f32.mrf.mxu0
  %v1296 = vadd.f32 %v1178, %v1295
  %v1297 = vpop.f32.mrf.mxu0
  %v1298 = vadd.f32 %v1180, %v1297
  %1299 = vmatmul.bf16.gmra.mxu0 %v576
  %v1300 = vpop.f32.mrf.mxu0
  %v1301 = vadd.f32 %v1183, %v1300
  %v1302 = vpop.f32.mrf.mxu0
  %v1303 = vadd.f32 %v1185, %v1302
  %1304 = vmatmul.bf16.gmra.mxu0 %v581
  %v1305 = vpop.f32.mrf.mxu0
  %v1306 = vadd.f32 %v1188, %v1305
  %v1307 = vpop.f32.mrf.mxu0
  %v1308 = vadd.f32 %v1190, %v1307
  %1309 = vmatmul.bf16.gmra.mxu0 %v586
  %v1310 = vpop.f32.mrf.mxu0
  %v1311 = vadd.f32 %v1193, %v1310
  %v1312 = vpop.f32.mrf.mxu0
  %v1313 = vadd.f32 %v1195, %v1312
  %1314 = vmatmul.bf16.gmra.mxu0 %v591
  %v1315 = vpop.f32.mrf.mxu0
  %v1316 = vadd.f32 %v1198, %v1315
  %v1317 = vpop.f32.mrf.mxu0
  %v1318 = vadd.f32 %v1200, %v1317
  %1319 = vmatmul.bf16.gmra.mxu0 %v596
  %v1320 = vpop.f32.mrf.mxu0
  %v1321 = vadd.f32 %v1203, %v1320
  %v1322 = vpop.f32.mrf.mxu0
  %v1323 = vadd.f32 %v1205, %v1322
  %1324 = vmatmul.bf16.gmra.mxu0 %v601
  %v1325 = vpop.f32.mrf.mxu0
  %v1326 = vadd.f32 %v1208, %v1325
  %v1327 = vpop.f32.mrf.mxu0
  %v1328 = vadd.f32 %v1210, %v1327
  %1329 = vmatmul.bf16.gmra.mxu0 %v606
  %v1330 = vpop.f32.mrf.mxu0
  %v1331 = vadd.f32 %v1213, %v1330
  %v1332 = vpop.f32.mrf.mxu0
  %v1333 = vadd.f32 %v1215, %v1332
  %1334 = vmatmul.bf16.gmra.mxu0 %v611
  %v1335 = vpop.f32.mrf.mxu0
  %v1336 = vadd.f32 %v1218, %v1335
  %v1337 = vpop.f32.mrf.mxu0
  %v1338 = vadd.f32 %v1220, %v1337
  %1339 = vmatmul.bf16.gmra.mxu0 %v616
  %v1340 = vpop.f32.mrf.mxu0
  %v1341 = vadd.f32 %v1223, %v1340
  %v1342 = vpop.f32.mrf.mxu0
  %v1343 = vadd.f32 %v1225, %v1342
  %1344 = vmatmul.bf16.gmra.mxu0 %v621
  %v1345 = vpop.f32.mrf.mxu0
  %v1346 = vadd.f32 %v1228, %v1345
  %v1347 = vpop.f32.mrf.mxu0
  %v1348 = vadd.f32 %v1230, %v1347
  %1349 = vmatmul.bf16.gmra.mxu0 %v626
  %v1350 = vpop.f32.mrf.mxu0
  %v1351 = vadd.f32 %v1233, %v1350
  %v1352 = vpop.f32.mrf.mxu0
  %v1353 = vadd.f32 %v1235, %v1352
  %1354 = vmatmul.bf16.gmra.mxu0 %v631
  %v1355 = vpop.f32.mrf.mxu0
  %v1356 = vadd.f32 %v1238, %v1355
  %v1357 = vpop.f32.mrf.mxu0
  %v1358 = vadd.f32 %v1240, %v1357
  %1359 = vmatmul.bf16.gmra.mxu0 %v636
  %v1360 = vpop.f32.mrf.mxu0
  %v1361 = vadd.f32 %v1243, %v1360
  %v1362 = vpop.f32.mrf.mxu0
  %v1363 = vadd.f32 %v1245, %v1362
  %1364 = vmatmul.bf16.gmra.mxu0 %v641
  %v1365 = vpop.f32.mrf.mxu0
  %v1366 = vadd.f32 %v1248, %v1365
  %v1367 = vpop.f32.mrf.mxu0
  %v1368 = vadd.f32 %v1250, %v1367
  %1369 = vmatmul.bf16.gmra.mxu0 %v646
  %v1370 = vpop.f32.mrf.mxu0
  %v1371 = vadd.f32 %v1253, %v1370
  %v1372 = vpop.f32.mrf.mxu0
  %v1373 = vadd.f32 %v1255, %v1372
  %1374 = vmatmul.bf16.gmra.mxu0 %v651
  %v1375 = vpop.f32.mrf.mxu0
  %v1376 = vadd.f32 %v1258, %v1375
  %v1377 = vpop.f32.mrf.mxu0
  %v1378 = vadd.f32 %v1260, %v1377
  %1379 = vmatmul.bf16.gmra.mxu0 %v656
  %v1380 = vpop.f32.mrf.mxu0
  %v1381 = vadd.f32 %v1263, %v1380
  %v1382 = vpop.f32.mrf.mxu0
  %v1383 = vadd.f32 %v1265, %v1382
  %1384 = vmatmul.bf16.gmra.mxu0 %v661
  %v1385 = vpop.f32.mrf.mxu0
  %v1386 = vadd.f32 %v1268, %v1385
  %v1387 = vpop.f32.mrf.mxu0
  %v1388 = vadd.f32 %v1270, %v1387
  %1389 = vmatmul.bf16.gmra.mxu0 %v666
  %v1390 = vpop.f32.mrf.mxu0
  %v1391 = vadd.f32 %v1273, %v1390
  %v1392 = vpop.f32.mrf.mxu0
  %v1393 = vadd.f32 %v1275, %v1392
  %1394 = vmatmul.bf16.gmra.mxu0 %v671
  %v1395 = vpop.f32.mrf.mxu0
  %v1396 = vadd.f32 %v1278, %v1395
  %v1397 = vpop.f32.mrf.mxu0
  %1398 = vdwg.mxu0
  %1399 = vmatpush.bf16.msra.mxu0 %v937
  %1400 = vmatpush.bf16.msra.mxu0 %v936
  %1401 = vmatpush.bf16.msra.mxu0 %v935
  %1402 = vmatpush.bf16.msra.mxu0 %v934
  %1403 = vmatpush.bf16.msra.mxu0 %v933
  %1404 = vmatpush.bf16.msra.mxu0 %v932
  %1405 = vmatpush.bf16.msra.mxu0 %v931
  %1406 = vmatpush.bf16.msra.mxu0 %v930
  %1407 = vmatmul.bf16.gmra.mxu0 %v567
  %v1408 = vpop.f32.mrf.mxu0
  %v1409 = vadd.f32 %v1291, %v1408
  %v1410 = vpop.f32.mrf.mxu0
  %v1411 = vadd.f32 %v1293, %v1410
  %1412 = vmatmul.bf16.gmra.mxu0 %v572
  %v1413 = vpop.f32.mrf.mxu0
  %v1414 = vadd.f32 %v1296, %v1413
  %v1415 = vpop.f32.mrf.mxu0
  %v1416 = vadd.f32 %v1298, %v1415
  %1417 = vmatmul.bf16.gmra.mxu0 %v577
  %v1418 = vpop.f32.mrf.mxu0
  %v1419 = vadd.f32 %v1301, %v1418
  %v1420 = vpop.f32.mrf.mxu0
  %v1421 = vadd.f32 %v1303, %v1420
  %1422 = vmatmul.bf16.gmra.mxu0 %v582
  %v1423 = vpop.f32.mrf.mxu0
  %v1424 = vadd.f32 %v1306, %v1423
  %v1425 = vpop.f32.mrf.mxu0
  %v1426 = vadd.f32 %v1308, %v1425
  %1427 = vmatmul.bf16.gmra.mxu0 %v587
  %v1428 = vpop.f32.mrf.mxu0
  %v1429 = vadd.f32 %v1311, %v1428
  %v1430 = vpop.f32.mrf.mxu0
  %v1431 = vadd.f32 %v1313, %v1430
  %1432 = vmatmul.bf16.gmra.mxu0 %v592
  %v1433 = vpop.f32.mrf.mxu0
  %v1434 = vadd.f32 %v1316, %v1433
  %v1435 = vpop.f32.mrf.mxu0
  %v1436 = vadd.f32 %v1318, %v1435
  %1437 = vmatmul.bf16.gmra.mxu0 %v597
  %v1438 = vpop.f32.mrf.mxu0
  %v1439 = vadd.f32 %v1321, %v1438
  %v1440 = vpop.f32.mrf.mxu0
  %v1441 = vadd.f32 %v1323, %v1440
  %1442 = vmatmul.bf16.gmra.mxu0 %v602
  %v1443 = vpop.f32.mrf.mxu0
  %v1444 = vadd.f32 %v1326, %v1443
  %v1445 = vpop.f32.mrf.mxu0
  %v1446 = vadd.f32 %v1328, %v1445
  %1447 = vmatmul.bf16.gmra.mxu0 %v607
  %v1448 = vpop.f32.mrf.mxu0
  %v1449 = vadd.f32 %v1331, %v1448
  %v1450 = vpop.f32.mrf.mxu0
  %v1451 = vadd.f32 %v1333, %v1450
  %1452 = vmatmul.bf16.gmra.mxu0 %v612
  %v1453 = vpop.f32.mrf.mxu0
  %v1454 = vadd.f32 %v1336, %v1453
  %v1455 = vpop.f32.mrf.mxu0
  %v1456 = vadd.f32 %v1338, %v1455
  %1457 = vmatmul.bf16.gmra.mxu0 %v617
  %v1458 = vpop.f32.mrf.mxu0
  %v1459 = vadd.f32 %v1341, %v1458
  %v1460 = vpop.f32.mrf.mxu0
  %v1461 = vadd.f32 %v1343, %v1460
  %1462 = vmatmul.bf16.gmra.mxu0 %v622
  %v1463 = vpop.f32.mrf.mxu0
  %v1464 = vadd.f32 %v1346, %v1463
  %v1465 = vpop.f32.mrf.mxu0
  %v1466 = vadd.f32 %v1348, %v1465
  %1467 = vmatmul.bf16.gmra.mxu0 %v627
  %v1468 = vpop.f32.mrf.mxu0
  %v1469 = vadd.f32 %v1351, %v1468
  %v1470 = vpop.f32.mrf.mxu0
  %v1471 = vadd.f32 %v1353, %v1470
  %1472 = vmatmul.bf16.gmra.mxu0 %v632
  %v1473 = vpop.f32.mrf.mxu0
  %v1474 = vadd.f32 %v1356, %v1473
  %v1475 = vpop.f32.mrf.mxu0
  %v1476 = vadd.f32 %v1358, %v1475
  %1477 = vmatmul.bf16.gmra.mxu0 %v637
  %v1478 = vpop.f32.mrf.mxu0
  %v1479 = vadd.f32 %v1361, %v1478
  %v1480 = vpop.f32.mrf.mxu0
  %v1481 = vadd.f32 %v1363, %v1480
  %1482 = vmatmul.bf16.gmra.mxu0 %v642
  %v1483 = vpop.f32.mrf.mxu0
  %v1484 = vadd.f32 %v1366, %v1483
  %v1485 = vpop.f32.mrf.mxu0
  %v1486 = vadd.f32 %v1368, %v1485
  %1487 = vmatmul.bf16.gmra.mxu0 %v647
  %v1488 = vpop.f32.mrf.mxu0
  %v1489 = vadd.f32 %v1371, %v1488
  %v1490 = vpop.f32.mrf.mxu0
  %v1491 = vadd.f32 %v1373, %v1490
  %1492 = vmatmul.bf16.gmra.mxu0 %v652
  %v1493 = vpop.f32.mrf.mxu0
  %v1494 = vadd.f32 %v1376, %v1493
  %v1495 = vpop.f32.mrf.mxu0
  %v1496 = vadd.f32 %v1378, %v1495
  %1497 = vmatmul.bf16.gmra.mxu0 %v657
  %v1498 = vpop.f32.mrf.mxu0
  %v1499 = vadd.f32 %v1381, %v1498
  %v1500 = vpop.f32.mrf.mxu0
  %v1501 = vadd.f32 %v1383, %v1500
  %1502 = vmatmul.bf16.gmra.mxu0 %v662
  %v1503 = vpop.f32.mrf.mxu0
  %v1504 = vadd.f32 %v1386, %v1503
  %v1505 = vpop.f32.mrf.mxu0
  %v1506 = vadd.f32 %v1388, %v1505
  %1507 = vmatmul.bf16.gmra.mxu0 %v667
  %v1508 = vpop.f32.mrf.mxu0
  %v1509 = vadd.f32 %v1391, %v1508
  %v1510 = vpop.f32.mrf.mxu0
  %v1511 = vadd.f32 %v1393, %v1510
  %1512 = vmatmul.bf16.gmra.mxu0 %v672
  %v1513 = vpop.f32.mrf.mxu0
  %v1514 = vadd.f32 %v1396, %v1513
  %v1515 = vpop.f32.mrf.mxu0
  %1516 = vdwg.mxu0
  %1517 = vmatpush.bf16.msra.mxu0 0
  %1518 = vmatpush.bf16.msra.mxu0 0
  %1519 = vmatpush.bf16.msra.mxu0 0
  %1520 = vmatpush.bf16.msra.mxu0 0
  %1521 = vmatpush.bf16.msra.mxu0 %v941
  %1522 = vmatpush.bf16.msra.mxu0 %v940
  %1523 = vmatpush.bf16.msra.mxu0 %v939
  %1524 = vmatpush.bf16.msra.mxu0 %v938
  %1525 = vmatmul.bf16.gmra.mxu0 %v980
  %v1526 = vpop.f32.mrf.mxu0
  %v1527 = vadd.f32 %v1409, %v1526
  %v1528 = vpop.f32.mrf.mxu0
  %v1529 = vadd.f32 %v1411, %v1528
  %1530 = vmatmul.bf16.gmra.mxu0 %v983
  %v1531 = vpop.f32.mrf.mxu0
  %v1532 = vadd.f32 %v1414, %v1531
  %v1533 = vpop.f32.mrf.mxu0
  %v1534 = vadd.f32 %v1416, %v1533
  %1535 = vmatmul.bf16.gmra.mxu0 %v986
  %v1536 = vpop.f32.mrf.mxu0
  %v1537 = vadd.f32 %v1419, %v1536
  %v1538 = vpop.f32.mrf.mxu0
  %v1539 = vadd.f32 %v1421, %v1538
  %1540 = vmatmul.bf16.gmra.mxu0 %v989
  %v1541 = vpop.f32.mrf.mxu0
  %v1542 = vadd.f32 %v1424, %v1541
  %v1543 = vpop.f32.mrf.mxu0
  %v1544 = vadd.f32 %v1426, %v1543
  %1545 = vmatmul.bf16.gmra.mxu0 %v992
  %v1546 = vpop.f32.mrf.mxu0
  %v1547 = vadd.f32 %v1429, %v1546
  %v1548 = vpop.f32.mrf.mxu0
  %v1549 = vadd.f32 %v1431, %v1548
  %1550 = vmatmul.bf16.gmra.mxu0 %v995
  %v1551 = vpop.f32.mrf.mxu0
  %v1552 = vadd.f32 %v1434, %v1551
  %v1553 = vpop.f32.mrf.mxu0
  %v1554 = vadd.f32 %v1436, %v1553
  %1555 = vmatmul.bf16.gmra.mxu0 %v998
  %v1556 = vpop.f32.mrf.mxu0
  %v1557 = vadd.f32 %v1439, %v1556
  %v1558 = vpop.f32.mrf.mxu0
  %v1559 = vadd.f32 %v1441, %v1558
  %1560 = vmatmul.bf16.gmra.mxu0 %v1001
  %v1561 = vpop.f32.mrf.mxu0
  %v1562 = vadd.f32 %v1444, %v1561
  %v1563 = vpop.f32.mrf.mxu0
  %v1564 = vadd.f32 %v1446, %v1563
  %1565 = vmatmul.bf16.gmra.mxu0 %v1004
  %v1566 = vpop.f32.mrf.mxu0
  %v1567 = vadd.f32 %v1449, %v1566
  %v1568 = vpop.f32.mrf.mxu0
  %v1569 = vadd.f32 %v1451, %v1568
  %1570 = vmatmul.bf16.gmra.mxu0 %v1007
  %v1571 = vpop.f32.mrf.mxu0
  %v1572 = vadd.f32 %v1454, %v1571
  %v1573 = vpop.f32.mrf.mxu0
  %v1574 = vadd.f32 %v1456, %v1573
  %1575 = vmatmul.bf16.gmra.mxu0 %v1010
  %v1576 = vpop.f32.mrf.mxu0
  %v1577 = vadd.f32 %v1459, %v1576
  %v1578 = vpop.f32.mrf.mxu0
  %v1579 = vadd.f32 %v1461, %v1578
  %1580 = vmatmul.bf16.gmra.mxu0 %v1013
  %v1581 = vpop.f32.mrf.mxu0
  %v1582 = vadd.f32 %v1464, %v1581
  %v1583 = vpop.f32.mrf.mxu0
  %v1584 = vadd.f32 %v1466, %v1583
  %1585 = vmatmul.bf16.gmra.mxu0 %v1016
  %v1586 = vpop.f32.mrf.mxu0
  %v1587 = vadd.f32 %v1469, %v1586
  %v1588 = vpop.f32.mrf.mxu0
  %v1589 = vadd.f32 %v1471, %v1588
  %1590 = vmatmul.bf16.gmra.mxu0 %v1019
  %v1591 = vpop.f32.mrf.mxu0
  %v1592 = vadd.f32 %v1474, %v1591
  %v1593 = vpop.f32.mrf.mxu0
  %v1594 = vadd.f32 %v1476, %v1593
  %1595 = vmatmul.bf16.gmra.mxu0 %v1022
  %v1596 = vpop.f32.mrf.mxu0
  %v1597 = vadd.f32 %v1479, %v1596
  %v1598 = vpop.f32.mrf.mxu0
  %v1599 = vadd.f32 %v1481, %v1598
  %1600 = vmatmul.bf16.gmra.mxu0 %v1025
  %v1601 = vpop.f32.mrf.mxu0
  %v1602 = vadd.f32 %v1484, %v1601
  %v1603 = vpop.f32.mrf.mxu0
  %v1604 = vadd.f32 %v1486, %v1603
  %1605 = vmatmul.bf16.gmra.mxu0 %v1028
  %v1606 = vpop.f32.mrf.mxu0
  %v1607 = vadd.f32 %v1489, %v1606
  %v1608 = vpop.f32.mrf.mxu0
  %v1609 = vadd.f32 %v1491, %v1608
  %1610 = vmatmul.bf16.gmra.mxu0 %v1031
  %v1611 = vpop.f32.mrf.mxu0
  %v1612 = vadd.f32 %v1494, %v1611
  %v1613 = vpop.f32.mrf.mxu0
  %v1614 = vadd.f32 %v1496, %v1613
  %1615 = vmatmul.bf16.gmra.mxu0 %v1034
  %v1616 = vpop.f32.mrf.mxu0
  %v1617 = vadd.f32 %v1499, %v1616
  %v1618 = vpop.f32.mrf.mxu0
  %v1619 = vadd.f32 %v1501, %v1618
  %1620 = vmatmul.bf16.gmra.mxu0 %v1037
  %v1621 = vpop.f32.mrf.mxu0
  %v1622 = vadd.f32 %v1504, %v1621
  %v1623 = vpop.f32.mrf.mxu0
  %v1624 = vadd.f32 %v1506, %v1623
  %1625 = vmatmul.bf16.gmra.mxu0 %v1040
  %v1626 = vpop.f32.mrf.mxu0
  %v1627 = vadd.f32 %v1509, %v1626
  %v1628 = vpop.f32.mrf.mxu0
  %v1629 = vadd.f32 %v1511, %v1628
  %1630 = vmatmul.bf16.gmra.mxu0 %v1043
  %v1631 = vpop.f32.mrf.mxu0
  %v1632 = vadd.f32 %v1514, %v1631
  %v1633 = vpop.f32.mrf.mxu0
  %1634 = vdwg.mxu0
  %v1635 = vmax.f32 %v1527, 0.0
  %v1636 = vmax.f32 %v1529, 0.0
  %v1637 = vmax.f32 %v1532, 0.0
  %v1638 = vmax.f32 %v1534, 0.0
  %v1639 = vmax.f32 %v1537, 0.0
  %v1640 = vmax.f32 %v1539, 0.0
  %v1641 = vmax.f32 %v1542, 0.0
  %v1642 = vmax.f32 %v1544, 0.0
  %v1643 = vmax.f32 %v1547, 0.0
  %v1644 = vmax.f32 %v1549, 0.0
  %v1645 = vmax.f32 %v1552, 0.0
  %v1646 = vmax.f32 %v1554, 0.0
  %v1647 = vmax.f32 %v1557, 0.0
  %v1648 = vmax.f32 %v1559, 0.0
  %v1649 = vmax.f32 %v1562, 0.0
  %v1650 = vmax.f32 %v1564, 0.0
  %v1651 = vmax.f32 %v1567, 0.0
  %v1652 = vmax.f32 %v1569, 0.0
  %v1653 = vmax.f32 %v1572, 0.0
  %v1654 = vmax.f32 %v1574, 0.0
  %v1655 = vmax.f32 %v1577, 0.0
  %v1656 = vmax.f32 %v1579, 0.0
  %v1657 = vmax.f32 %v1582, 0.0
  %v1658 = vmax.f32 %v1584, 0.0
  %v1659 = vmax.f32 %v1587, 0.0
  %v1660 = vmax.f32 %v1589, 0.0
  %v1661 = vmax.f32 %v1592, 0.0
  %v1662 = vmax.f32 %v1594, 0.0
  %v1663 = vmax.f32 %v1597, 0.0
  %v1664 = vmax.f32 %v1599, 0.0
  %v1665 = vmax.f32 %v1602, 0.0
  %v1666 = vmax.f32 %v1604, 0.0
  %v1667 = vmax.f32 %v1607, 0.0
  %v1668 = vmax.f32 %v1609, 0.0
  %v1669 = vmax.f32 %v1612, 0.0
  %v1670 = vmax.f32 %v1614, 0.0
  %v1671 = vmax.f32 %v1617, 0.0
  %v1672 = vmax.f32 %v1619, 0.0
  %v1673 = vmax.f32 %v1622, 0.0
  %v1674 = vmax.f32 %v1624, 0.0
  %v1675 = vmax.f32 %v1627, 0.0
  %v1676 = vmax.f32 %v1629, 0.0
  %v1677 = vmax.f32 %v1632, 0.0
  %v1678 = vpack.c.bf16 %v1635, %v1635
  %v1679 = vpack.c.bf16 %v1636, %v1636
  %v1680 = vpack.c.bf16 %v1637, %v1637
  %v1681 = vpack.c.bf16 %v1638, %v1638
  %v1682 = vpack.c.bf16 %v1639, %v1639
  %v1683 = vpack.c.bf16 %v1640, %v1640
  %v1684 = vpack.c.bf16 %v1641, %v1641
  %v1685 = vpack.c.bf16 %v1642, %v1642
  %v1686 = vpack.c.bf16 %v1643, %v1643
  %v1687 = vpack.c.bf16 %v1644, %v1644
  %v1688 = vpack.c.bf16 %v1645, %v1645
  %v1689 = vpack.c.bf16 %v1646, %v1646
  %v1690 = vpack.c.bf16 %v1647, %v1647
  %v1691 = vpack.c.bf16 %v1648, %v1648
  %v1692 = vpack.c.bf16 %v1649, %v1649
  %v1693 = vpack.c.bf16 %v1650, %v1650
  %v1694 = vpack.c.bf16 %v1651, %v1651
  %v1695 = vpack.c.bf16 %v1652, %v1652
  %v1696 = vpack.c.bf16 %v1653, %v1653
  %v1697 = vpack.c.bf16 %v1654, %v1654
  %v1698 = vpack.c.bf16 %v1655, %v1655
  %v1699 = vpack.c.bf16 %v1656, %v1656
  %v1700 = vpack.c.bf16 %v1657, %v1657
  %v1701 = vpack.c.bf16 %v1658, %v1658
  %v1702 = vpack.c.bf16 %v1659, %v1659
  %v1703 = vpack.c.bf16 %v1660, %v1660
  %v1704 = vpack.c.bf16 %v1661, %v1661
  %v1705 = vpack.c.bf16 %v1662, %v1662
  %v1706 = vpack.c.bf16 %v1663, %v1663
  %v1707 = vpack.c.bf16 %v1664, %v1664
  %v1708 = vpack.c.bf16 %v1665, %v1665
  %v1709 = vpack.c.bf16 %v1666, %v1666
  %v1710 = vpack.c.bf16 %v1667, %v1667
  %v1711 = vpack.c.bf16 %v1668, %v1668
  %v1712 = vpack.c.bf16 %v1669, %v1669
  %v1713 = vpack.c.bf16 %v1670, %v1670
  %v1714 = vpack.c.bf16 %v1671, %v1671
  %v1715 = vpack.c.bf16 %v1672, %v1672
  %v1716 = vpack.c.bf16 %v1673, %v1673
  %v1717 = vpack.c.bf16 %v1674, %v1674
  %v1718 = vpack.c.bf16 %v1675, %v1675
  %v1719 = vpack.c.bf16 %v1676, %v1676
  %v1720 = vpack.c.bf16 %v1677, %v1677
  %1721 = vst [vmem:[%s3] sm:$0xf] %v1678
  %1722 = vst [vmem:[%s3 + $0x4] sm:$0xf] %v1679
  %1723 = vst [vmem:[%s3 + $0x8] sm:$0xf] %v1680
  %1724 = vst [vmem:[%s3 + $0xc] sm:$0xf] %v1681
  %1725 = vst [vmem:[%s3 + $0x10] sm:$0xf] %v1682
  %1726 = vst [vmem:[%s3 + $0x14] sm:$0xf] %v1683
  %1727 = vst [vmem:[%s3 + $0x18] sm:$0xf] %v1684
  %1728 = vst [vmem:[%s3 + $0x1c] sm:$0xf] %v1685
  %1729 = vst [vmem:[%s3 + $0x20] sm:$0xf] %v1686
  %1730 = vst [vmem:[%s3 + $0x24] sm:$0xf] %v1687
  %1731 = vst [vmem:[%s3 + $0x28] sm:$0xf] %v1688
  %1732 = vst [vmem:[%s3 + $0x2c] sm:$0xf] %v1689
  %1733 = vst [vmem:[%s3 + $0x30] sm:$0xf] %v1690
  %1734 = vst [vmem:[%s3 + $0x34] sm:$0xf] %v1691
  %1735 = vst [vmem:[%s3 + $0x38] sm:$0xf] %v1692
  %1736 = vst [vmem:[%s3 + $0x3c] sm:$0xf] %v1693
  %1737 = vst [vmem:[%s3 + $0x40] sm:$0xf] %v1694
  %1738 = vst [vmem:[%s3 + $0x44] sm:$0xf] %v1695
  %1739 = vst [vmem:[%s3 + $0x48] sm:$0xf] %v1696
  %1740 = vst [vmem:[%s3 + $0x4c] sm:$0xf] %v1697
  %1741 = vst [vmem:[%s3 + $0x50] sm:$0xf] %v1698
  %1742 = vst [vmem:[%s3 + $0x54] sm:$0xf] %v1699
  %1743 = vst [vmem:[%s3 + $0x58] sm:$0xf] %v1700
  %1744 = vst [vmem:[%s3 + $0x5c] sm:$0xf] %v1701
  %1745 = vst [vmem:[%s3 + $0x60] sm:$0xf] %v1702
  %1746 = vst [vmem:[%s3 + $0x64] sm:$0xf] %v1703
  %1747 = vst [vmem:[%s3 + $0x68] sm:$0xf] %v1704
  %1748 = vst [vmem:[%s3 + $0x6c] sm:$0xf] %v1705
  %1749 = vst [vmem:[%s3 + $0x70] sm:$0xf] %v1706
  %1750 = vst [vmem:[%s3 + $0x74] sm:$0xf] %v1707
  %1751 = vst [vmem:[%s3 + $0x78] sm:$0xf] %v1708
  %1752 = vst [vmem:[%s3 + $0x7c] sm:$0xf] %v1709
  %1753 = vst [vmem:[%s3 + $0x80] sm:$0xf] %v1710
  %1754 = vst [vmem:[%s3 + $0x84] sm:$0xf] %v1711
  %1755 = vst [vmem:[%s3 + $0x88] sm:$0xf] %v1712
  %1756 = vst [vmem:[%s3 + $0x8c] sm:$0xf] %v1713
  %1757 = vst [vmem:[%s3 + $0x90] sm:$0xf] %v1714
  %1758 = vst [vmem:[%s3 + $0x94] sm:$0xf] %v1715
  %1759 = vst [vmem:[%s3 + $0x98] sm:$0xf] %v1716
  %1760 = vst [vmem:[%s3 + $0x9c] sm:$0xf] %v1717
  %1761 = vst [vmem:[%s3 + $0xa0] sm:$0xf] %v1718
  %1762 = vst [vmem:[%s3 + $0xa4] sm:$0xf] %v1719
  %1763 = vst [vmem:[%s3 + $0xa8] sm:$0x1] %v1720
  // Predicated region
  $region14: #{forward.6} parent=0 // pred_check
    _
  $region15: #{forward.6} parent=0 // pred_check_branch
    %1765 = sbr.rel (0) target = $region17
  $region16: #{forward.6} parent=0 // pred_region
    _
  $region17: #{forward.6} parent=0 // pred_fallthru
    _
  // Predicated region
  $region18: #{forward.6} parent=0 // pred_check
    _
  $region19: #{forward.6} parent=0 // pred_check_branch
    %1767 = sbr.rel (0) target = $region21
  $region20: #{forward.6} parent=0 // pred_region
    _
  $region21: #{forward.6} parent=0 // pred_fallthru
    _

// kernel: forward.7
$region0: #{forward.7}
  #allocation0 [shape = 'u32[]', space=smem, size = 0x4, offset = 0x4, fixed_abs, tag = 'smem constant byte address 0x4 - core index']
  #allocation1 [shape = 'u32[72,128]{1,0:T(1,128)}', space=vmem, size = 0x9000, scoped, tag = 'internal scratch']
  %s0 = inlined_call_operand.vmem [shape: bf16[2,4608], index: 0, kind: input, shape index: {}]
  %s1 = inlined_call_operand.vmem [shape: bf16[4608,256], index: 1, kind: input, shape index: {}]
  %s2 = inlined_call_operand.vmem [shape: f32[1,256], index: 2, kind: input, shape index: {}]
  %s3 = inlined_call_operand.vmem [shape: bf16[256,128], index: 3, kind: input, shape index: {}]
  %s4 = inlined_call_operand.vmem [shape: f32[1,128], index: 4, kind: input, shape index: {}]
  %s5 = inlined_call_operand.hbm [shape: f32[2,128], index: 5, kind: output, shape index: {}]
  %s6 = sld [smem:[#allocation0]]
  $region30: #{forward.7} parent=0
    _
  %s8 = ssub.s32 1, %s6
  %s9 = scalar_select 0, %s8, %s6
  $region1: #{forward.7} parent=0
    #allocation2 [shape = 'u8[1024]{0}', space=vmem, size = 0x400, scoped, tag = 'output window, operand 0, single buffered']
    #allocation3 [shape = 's32[1]{0}', space=sflag, size = 0x4, scoped, tag = 'scoped memory for forward.7']
    %10 = vsyncpa [#allocation3], 0
    // Predicated region
    $region2: #{forward.7} parent=1 // pred_check
      _
    $region3: #{forward.7} parent=1 // pred_check_branch
      %12 = sbr.rel (0) target = $region5
    $region4: #{forward.7} parent=1 // pred_region
      _
    $region5: #{forward.7} parent=1 // pred_fallthru
      _
    // Predicated region
    $region6: #{forward.7} parent=1 // pred_check
      _
    $region7: #{forward.7} parent=1 // pred_check_branch
      %14 = sbr.rel (0) target = $region9
    $region8: #{forward.7} parent=1 // pred_region
      _
    $region9: #{forward.7} parent=1 // pred_fallthru
      _
    // Predicated region
    $region10: #{forward.7} parent=1 // pred_check
      _
    $region11: #{forward.7} parent=1 // pred_check_branch
      %16 = sbr.rel (0) target = $region13
    $region12: #{forward.7} parent=1 // pred_region
      _
    $region13: #{forward.7} parent=1 // pred_fallthru
      _
    // Predicated region
    $region14: #{forward.7} parent=1 // pred_check
      _
    $region15: #{forward.7} parent=1 // pred_check_branch
      %18 = sbr.rel (0) target = $region17
    $region16: #{forward.7} parent=1 // pred_region
      _
    $region17: #{forward.7} parent=1 // pred_fallthru
      _
    // Predicated region
    $region18: #{forward.7} parent=1 // pred_check
      _
    $region19: #{forward.7} parent=1 // pred_check_branch
      %20 = sbr.rel (0) target = $region21
    $region20: #{forward.7} parent=1 // pred_region
      _
    $region21: #{forward.7} parent=1 // pred_fallthru
      _
    %v21 = vld [vmem:[%s0] sm:$0xff]
    %v22 = vld [vmem:[%s0 + $0x8] sm:$0xff]
    %v23 = vld [vmem:[%s0 + $0x10] sm:$0xff]
    %v24 = vld [vmem:[%s0 + $0x18] sm:$0xff]
    %v25 = vld [vmem:[%s0 + $0x20] sm:$0xf]
    %v26 = vld [vmem:[%s1] sm:$0xff]
    %v27 = vld [vmem:[%s1 + $0x8] sm:$0xff]
    %v28 = vld [vmem:[%s1 + $0x10] sm:$0xff]
    %v29 = vld [vmem:[%s1 + $0x18] sm:$0xff]
    %v30 = vld [vmem:[%s1 + $0x20] sm:$0xff]
    %v31 = vld [vmem:[%s1 + $0x28] sm:$0xff]
    %v32 = vld [vmem:[%s1 + $0x30] sm:$0xff]
    %v33 = vld [vmem:[%s1 + $0x38] sm:$0xff]
    %v34 = vld [vmem:[%s1 + $0x40] sm:$0xff]
    %v35 = vld [vmem:[%s1 + $0x48] sm:$0xff]
    %v36 = vld [vmem:[%s1 + $0x50] sm:$0xff]
    %v37 = vld [vmem:[%s1 + $0x58] sm:$0xff]
    %v38 = vld [vmem:[%s1 + $0x60] sm:$0xff]
    %v39 = vld [vmem:[%s1 + $0x68] sm:$0xff]
    %v40 = vld [vmem:[%s1 + $0x70] sm:$0xff]
    %v41 = vld [vmem:[%s1 + $0x78] sm:$0xff]
    %v42 = vld [vmem:[%s1 + $0x80] sm:$0xff]
    %v43 = vld [vmem:[%s1 + $0x88] sm:$0xff]
    %v44 = vld [vmem:[%s1 + $0x90] sm:$0xff]
    %v45 = vld [vmem:[%s1 + $0x98] sm:$0xff]
    %v46 = vld [vmem:[%s1 + $0xa0] sm:$0xff]
    %v47 = vld [vmem:[%s1 + $0xa8] sm:$0xff]
    %v48 = vld [vmem:[%s1 + $0xb0] sm:$0xff]
    %v49 = vld [vmem:[%s1 + $0xb8] sm:$0xff]
    %v50 = vld [vmem:[%s1 + $0xc0] sm:$0xff]
    %v51 = vld [vmem:[%s1 + $0xc8] sm:$0xff]
    %v52 = vld [vmem:[%s1 + $0xd0] sm:$0xff]
    %v53 = vld [vmem:[%s1 + $0xd8] sm:$0xff]
    %v54 = vld [vmem:[%s1 + $0xe0] sm:$0xff]
    %v55 = vld [vmem:[%s1 + $0xe8] sm:$0xff]
    %v56 = vld [vmem:[%s1 + $0xf0] sm:$0xff]
    %v57 = vld [vmem:[%s1 + $0xf8] sm:$0xff]
    %v58 = vld [vmem:[%s1 + $0x100] sm:$0xff]
    %v59 = vld [vmem:[%s1 + $0x108] sm:$0xff]
    %v60 = vld [vmem:[%s1 + $0x110] sm:$0xff]
    %v61 = vld [vmem:[%s1 + $0x118] sm:$0xff]
    %v62 = vld [vmem:[%s1 + $0x120] sm:$0xff]
    %v63 = vld [vmem:[%s1 + $0x128] sm:$0xff]
    %v64 = vld [vmem:[%s1 + $0x130] sm:$0xff]
    %v65 = vld [vmem:[%s1 + $0x138] sm:$0xff]
    %v66 = vld [vmem:[%s1 + $0x140] sm:$0xff]
    %v67 = vld [vmem:[%s1 + $0x148] sm:$0xff]
    %v68 = vld [vmem:[%s1 + $0x150] sm:$0xff]
    %v69 = vld [vmem:[%s1 + $0x158] sm:$0xff]
    %v70 = vld [vmem:[%s1 + $0x160] sm:$0xff]
    %v71 = vld [vmem:[%s1 + $0x168] sm:$0xff]
    %v72 = vld [vmem:[%s1 + $0x170] sm:$0xff]
    %v73 = vld [vmem:[%s1 + $0x178] sm:$0xff]
    %v74 = vld [vmem:[%s1 + $0x180] sm:$0xff]
    %v75 = vld [vmem:[%s1 + $0x188] sm:$0xff]
    %v76 = vld [vmem:[%s1 + $0x190] sm:$0xff]
    %v77 = vld [vmem:[%s1 + $0x198] sm:$0xff]
    %v78 = vld [vmem:[%s1 + $0x1a0] sm:$0xff]
    %v79 = vld [vmem:[%s1 + $0x1a8] sm:$0xff]
    %v80 = vld [vmem:[%s1 + $0x1b0] sm:$0xff]
    %v81 = vld [vmem:[%s1 + $0x1b8] sm:$0xff]
    %v82 = vld [vmem:[%s1 + $0x1c0] sm:$0xff]
    %v83 = vld [vmem:[%s1 + $0x1c8] sm:$0xff]
    %v84 = vld [vmem:[%s1 + $0x1d0] sm:$0xff]
    %v85 = vld [vmem:[%s1 + $0x1d8] sm:$0xff]
    %v86 = vld [vmem:[%s1 + $0x1e0] sm:$0xff]
    %v87 = vld [vmem:[%s1 + $0x1e8] sm:$0xff]
    %v88 = vld [vmem:[%s1 + $0x1f0] sm:$0xff]
    %v89 = vld [vmem:[%s1 + $0x1f8] sm:$0xff]
    %v90 = vld [vmem:[%s1 + $0x200] sm:$0xff]
    %v91 = vld [vmem:[%s1 + $0x208] sm:$0xff]
    %v92 = vld [vmem:[%s1 + $0x210] sm:$0xff]
    %v93 = vld [vmem:[%s1 + $0x218] sm:$0xff]
    %v94 = vld [vmem:[%s1 + $0x220] sm:$0xff]
    %v95 = vld [vmem:[%s1 + $0x228] sm:$0xff]
    %v96 = vld [vmem:[%s1 + $0x230] sm:$0xff]
    %v97 = vld [vmem:[%s1 + $0x238] sm:$0xff]
    %v98 = vld [vmem:[%s1 + $0x240] sm:$0xff]
    %v99 = vld [vmem:[%s1 + $0x248] sm:$0xff]
    %v100 = vld [vmem:[%s1 + $0x250] sm:$0xff]
    %v101 = vld [vmem:[%s1 + $0x258] sm:$0xff]
    %v102 = vld [vmem:[%s1 + $0x260] sm:$0xff]
    %v103 = vld [vmem:[%s1 + $0x268] sm:$0xff]
    %v104 = vld [vmem:[%s1 + $0x270] sm:$0xff]
    %v105 = vld [vmem:[%s1 + $0x278] sm:$0xff]
    %v106 = vld [vmem:[%s1 + $0x280] sm:$0xff]
    %v107 = vld [vmem:[%s1 + $0x288] sm:$0xff]
    %v108 = vld [vmem:[%s1 + $0x290] sm:$0xff]
    %v109 = vld [vmem:[%s1 + $0x298] sm:$0xff]
    %v110 = vld [vmem:[%s1 + $0x2a0] sm:$0xff]
    %v111 = vld [vmem:[%s1 + $0x2a8] sm:$0xff]
    %v112 = vld [vmem:[%s1 + $0x2b0] sm:$0xff]
    %v113 = vld [vmem:[%s1 + $0x2b8] sm:$0xff]
    %v114 = vld [vmem:[%s1 + $0x2c0] sm:$0xff]
    %v115 = vld [vmem:[%s1 + $0x2c8] sm:$0xff]
    %v116 = vld [vmem:[%s1 + $0x2d0] sm:$0xff]
    %v117 = vld [vmem:[%s1 + $0x2d8] sm:$0xff]
    %v118 = vld [vmem:[%s1 + $0x2e0] sm:$0xff]
    %v119 = vld [vmem:[%s1 + $0x2e8] sm:$0xff]
    %v120 = vld [vmem:[%s1 + $0x2f0] sm:$0xff]
    %v121 = vld [vmem:[%s1 + $0x2f8] sm:$0xff]
    %v122 = vld [vmem:[%s1 + $0x300] sm:$0xff]
    %v123 = vld [vmem:[%s1 + $0x308] sm:$0xff]
    %v124 = vld [vmem:[%s1 + $0x310] sm:$0xff]
    %v125 = vld [vmem:[%s1 + $0x318] sm:$0xff]
    %v126 = vld [vmem:[%s1 + $0x320] sm:$0xff]
    %v127 = vld [vmem:[%s1 + $0x328] sm:$0xff]
    %v128 = vld [vmem:[%s1 + $0x330] sm:$0xff]
    %v129 = vld [vmem:[%s1 + $0x338] sm:$0xff]
    %v130 = vld [vmem:[%s1 + $0x340] sm:$0xff]
    %v131 = vld [vmem:[%s1 + $0x348] sm:$0xff]
    %v132 = vld [vmem:[%s1 + $0x350] sm:$0xff]
    %v133 = vld [vmem:[%s1 + $0x358] sm:$0xff]
    %v134 = vld [vmem:[%s1 + $0x360] sm:$0xff]
    %v135 = vld [vmem:[%s1 + $0x368] sm:$0xff]
    %v136 = vld [vmem:[%s1 + $0x370] sm:$0xff]
    %v137 = vld [vmem:[%s1 + $0x378] sm:$0xff]
    %v138 = vld [vmem:[%s1 + $0x380] sm:$0xff]
    %v139 = vld [vmem:[%s1 + $0x388] sm:$0xff]
    %v140 = vld [vmem:[%s1 + $0x390] sm:$0xff]
    %v141 = vld [vmem:[%s1 + $0x398] sm:$0xff]
    %v142 = vld [vmem:[%s1 + $0x3a0] sm:$0xff]
    %v143 = vld [vmem:[%s1 + $0x3a8] sm:$0xff]
    %v144 = vld [vmem:[%s1 + $0x3b0] sm:$0xff]
    %v145 = vld [vmem:[%s1 + $0x3b8] sm:$0xff]
    %v146 = vld [vmem:[%s1 + $0x3c0] sm:$0xff]
    %v147 = vld [vmem:[%s1 + $0x3c8] sm:$0xff]
    %v148 = vld [vmem:[%s1 + $0x3d0] sm:$0xff]
    %v149 = vld [vmem:[%s1 + $0x3d8] sm:$0xff]
    %v150 = vld [vmem:[%s1 + $0x3e0] sm:$0xff]
    %v151 = vld [vmem:[%s1 + $0x3e8] sm:$0xff]
    %v152 = vld [vmem:[%s1 + $0x3f0] sm:$0xff]
    %v153 = vld [vmem:[%s1 + $0x3f8] sm:$0xff]
    %v154 = vld [vmem:[%s1 + $0x400] sm:$0xff]
    %v155 = vld [vmem:[%s1 + $0x408] sm:$0xff]
    %v156 = vld [vmem:[%s1 + $0x410] sm:$0xff]
    %v157 = vld [vmem:[%s1 + $0x418] sm:$0xff]
    %v158 = vld [vmem:[%s1 + $0x420] sm:$0xff]
    %v159 = vld [vmem:[%s1 + $0x428] sm:$0xff]
    %v160 = vld [vmem:[%s1 + $0x430] sm:$0xff]
    %v161 = vld [vmem:[%s1 + $0x438] sm:$0xff]
    %v162 = vld [vmem:[%s1 + $0x440] sm:$0xff]
    %v163 = vld [vmem:[%s1 + $0x448] sm:$0xff]
    %v164 = vld [vmem:[%s1 + $0x450] sm:$0xff]
    %v165 = vld [vmem:[%s1 + $0x458] sm:$0xff]
    %v166 = vld [vmem:[%s1 + $0x460] sm:$0xff]
    %v167 = vld [vmem:[%s1 + $0x468] sm:$0xff]
    %v168 = vld [vmem:[%s1 + $0x470] sm:$0xff]
    %v169 = vld [vmem:[%s1 + $0x478] sm:$0xff]
    %v170 = vld [vmem:[%s1 + $0x480] sm:$0xff]
    %v171 = vld [vmem:[%s1 + $0x488] sm:$0xff]
    %v172 = vld [vmem:[%s1 + $0x490] sm:$0xff]
    %v173 = vld [vmem:[%s1 + $0x498] sm:$0xff]
    %v174 = vld [vmem:[%s1 + $0x4a0] sm:$0xff]
    %v175 = vld [vmem:[%s1 + $0x4a8] sm:$0xff]
    %v176 = vld [vmem:[%s1 + $0x4b0] sm:$0xff]
    %v177 = vld [vmem:[%s1 + $0x4b8] sm:$0xff]
    %v178 = vld [vmem:[%s1 + $0x4c0] sm:$0xff]
    %v179 = vld [vmem:[%s1 + $0x4c8] sm:$0xff]
    %v180 = vld [vmem:[%s1 + $0x4d0] sm:$0xff]
    %v181 = vld [vmem:[%s1 + $0x4d8] sm:$0xff]
    %v182 = vld [vmem:[%s1 + $0x4e0] sm:$0xff]
    %v183 = vld [vmem:[%s1 + $0x4e8] sm:$0xff]
    %v184 = vld [vmem:[%s1 + $0x4f0] sm:$0xff]
    %v185 = vld [vmem:[%s1 + $0x4f8] sm:$0xff]
    %v186 = vld [vmem:[%s1 + $0x500] sm:$0xff]
    %v187 = vld [vmem:[%s1 + $0x508] sm:$0xff]
    %v188 = vld [vmem:[%s1 + $0x510] sm:$0xff]
    %v189 = vld [vmem:[%s1 + $0x518] sm:$0xff]
    %v190 = vld [vmem:[%s1 + $0x520] sm:$0xff]
    %v191 = vld [vmem:[%s1 + $0x528] sm:$0xff]
    %v192 = vld [vmem:[%s1 + $0x530] sm:$0xff]
    %v193 = vld [vmem:[%s1 + $0x538] sm:$0xff]
    %v194 = vld [vmem:[%s1 + $0x540] sm:$0xff]
    %v195 = vld [vmem:[%s1 + $0x548] sm:$0xff]
    %v196 = vld [vmem:[%s1 + $0x550] sm:$0xff]
    %v197 = vld [vmem:[%s1 + $0x558] sm:$0xff]
    %v198 = vld [vmem:[%s1 + $0x560] sm:$0xff]
    %v199 = vld [vmem:[%s1 + $0x568] sm:$0xff]
    %v200 = vld [vmem:[%s1 + $0x570] sm:$0xff]
    %v201 = vld [vmem:[%s1 + $0x578] sm:$0xff]
    %v202 = vld [vmem:[%s1 + $0x580] sm:$0xff]
    %v203 = vld [vmem:[%s1 + $0x588] sm:$0xff]
    %v204 = vld [vmem:[%s1 + $0x590] sm:$0xff]
    %v205 = vld [vmem:[%s1 + $0x598] sm:$0xff]
    %v206 = vld [vmem:[%s1 + $0x5a0] sm:$0xff]
    %v207 = vld [vmem:[%s1 + $0x5a8] sm:$0xff]
    %v208 = vld [vmem:[%s1 + $0x5b0] sm:$0xff]
    %v209 = vld [vmem:[%s1 + $0x5b8] sm:$0xff]
    %v210 = vld [vmem:[%s1 + $0x5c0] sm:$0xff]
    %v211 = vld [vmem:[%s1 + $0x5c8] sm:$0xff]
    %v212 = vld [vmem:[%s1 + $0x5d0] sm:$0xff]
    %v213 = vld [vmem:[%s1 + $0x5d8] sm:$0xff]
    %v214 = vld [vmem:[%s1 + $0x5e0] sm:$0xff]
    %v215 = vld [vmem:[%s1 + $0x5e8] sm:$0xff]
    %v216 = vld [vmem:[%s1 + $0x5f0] sm:$0xff]
    %v217 = vld [vmem:[%s1 + $0x5f8] sm:$0xff]
    %v218 = vld [vmem:[%s1 + $0x600] sm:$0xff]
    %v219 = vld [vmem:[%s1 + $0x608] sm:$0xff]
    %v220 = vld [vmem:[%s1 + $0x610] sm:$0xff]
    %v221 = vld [vmem:[%s1 + $0x618] sm:$0xff]
    %v222 = vld [vmem:[%s1 + $0x620] sm:$0xff]
    %v223 = vld [vmem:[%s1 + $0x628] sm:$0xff]
    %v224 = vld [vmem:[%s1 + $0x630] sm:$0xff]
    %v225 = vld [vmem:[%s1 + $0x638] sm:$0xff]
    %v226 = vld [vmem:[%s1 + $0x640] sm:$0xff]
    %v227 = vld [vmem:[%s1 + $0x648] sm:$0xff]
    %v228 = vld [vmem:[%s1 + $0x650] sm:$0xff]
    %v229 = vld [vmem:[%s1 + $0x658] sm:$0xff]
    %v230 = vld [vmem:[%s1 + $0x660] sm:$0xff]
    %v231 = vld [vmem:[%s1 + $0x668] sm:$0xff]
    %v232 = vld [vmem:[%s1 + $0x670] sm:$0xff]
    %v233 = vld [vmem:[%s1 + $0x678] sm:$0xff]
    %v234 = vld [vmem:[%s1 + $0x680] sm:$0xff]
    %v235 = vld [vmem:[%s1 + $0x688] sm:$0xff]
    %v236 = vld [vmem:[%s1 + $0x690] sm:$0xff]
    %v237 = vld [vmem:[%s1 + $0x698] sm:$0xff]
    %v238 = vld [vmem:[%s1 + $0x6a0] sm:$0xff]
    %v239 = vld [vmem:[%s1 + $0x6a8] sm:$0xff]
    %v240 = vld [vmem:[%s1 + $0x6b0] sm:$0xff]
    %v241 = vld [vmem:[%s1 + $0x6b8] sm:$0xff]
    %v242 = vld [vmem:[%s1 + $0x6c0] sm:$0xff]
    %v243 = vld [vmem:[%s1 + $0x6c8] sm:$0xff]
    %v244 = vld [vmem:[%s1 + $0x6d0] sm:$0xff]
    %v245 = vld [vmem:[%s1 + $0x6d8] sm:$0xff]
    %v246 = vld [vmem:[%s1 + $0x6e0] sm:$0xff]
    %v247 = vld [vmem:[%s1 + $0x6e8] sm:$0xff]
    %v248 = vld [vmem:[%s1 + $0x6f0] sm:$0xff]
    %v249 = vld [vmem:[%s1 + $0x6f8] sm:$0xff]
    %v250 = vld [vmem:[%s1 + $0x700] sm:$0xff]
    %v251 = vld [vmem:[%s1 + $0x708] sm:$0xff]
    %v252 = vld [vmem:[%s1 + $0x710] sm:$0xff]
    %v253 = vld [vmem:[%s1 + $0x718] sm:$0xff]
    %v254 = vld [vmem:[%s1 + $0x720] sm:$0xff]
    %v255 = vld [vmem:[%s1 + $0x728] sm:$0xff]
    %v256 = vld [vmem:[%s1 + $0x730] sm:$0xff]
    %v257 = vld [vmem:[%s1 + $0x738] sm:$0xff]
    %v258 = vld [vmem:[%s1 + $0x740] sm:$0xff]
    %v259 = vld [vmem:[%s1 + $0x748] sm:$0xff]
    %v260 = vld [vmem:[%s1 + $0x750] sm:$0xff]
    %v261 = vld [vmem:[%s1 + $0x758] sm:$0xff]
    %v262 = vld [vmem:[%s1 + $0x760] sm:$0xff]
    %v263 = vld [vmem:[%s1 + $0x768] sm:$0xff]
    %v264 = vld [vmem:[%s1 + $0x770] sm:$0xff]
    %v265 = vld [vmem:[%s1 + $0x778] sm:$0xff]
    %v266 = vld [vmem:[%s1 + $0x780] sm:$0xff]
    %v267 = vld [vmem:[%s1 + $0x788] sm:$0xff]
    %v268 = vld [vmem:[%s1 + $0x790] sm:$0xff]
    %v269 = vld [vmem:[%s1 + $0x798] sm:$0xff]
    %v270 = vld [vmem:[%s1 + $0x7a0] sm:$0xff]
    %v271 = vld [vmem:[%s1 + $0x7a8] sm:$0xff]
    %v272 = vld [vmem:[%s1 + $0x7b0] sm:$0xff]
    %v273 = vld [vmem:[%s1 + $0x7b8] sm:$0xff]
    %v274 = vld [vmem:[%s1 + $0x7c0] sm:$0xff]
    %v275 = vld [vmem:[%s1 + $0x7c8] sm:$0xff]
    %v276 = vld [vmem:[%s1 + $0x7d0] sm:$0xff]
    %v277 = vld [vmem:[%s1 + $0x7d8] sm:$0xff]
    %v278 = vld [vmem:[%s1 + $0x7e0] sm:$0xff]
    %v279 = vld [vmem:[%s1 + $0x7e8] sm:$0xff]
    %v280 = vld [vmem:[%s1 + $0x7f0] sm:$0xff]
    %v281 = vld [vmem:[%s1 + $0x7f8] sm:$0xff]
    %v282 = vld [vmem:[%s1 + $0x800] sm:$0xff]
    %v283 = vld [vmem:[%s1 + $0x808] sm:$0xff]
    %v284 = vld [vmem:[%s1 + $0x810] sm:$0xff]
    %v285 = vld [vmem:[%s1 + $0x818] sm:$0xff]
    %v286 = vld [vmem:[%s1 + $0x820] sm:$0xff]
    %v287 = vld [vmem:[%s1 + $0x828] sm:$0xff]
    %v288 = vld [vmem:[%s1 + $0x830] sm:$0xff]
    %v289 = vld [vmem:[%s1 + $0x838] sm:$0xff]
    %v290 = vld [vmem:[%s1 + $0x840] sm:$0xff]
    %v291 = vld [vmem:[%s1 + $0x848] sm:$0xff]
    %v292 = vld [vmem:[%s1 + $0x850] sm:$0xff]
    %v293 = vld [vmem:[%s1 + $0x858] sm:$0xff]
    %v294 = vld [vmem:[%s1 + $0x860] sm:$0xff]
    %v295 = vld [vmem:[%s1 + $0x868] sm:$0xff]
    %v296 = vld [vmem:[%s1 + $0x870] sm:$0xff]
    %v297 = vld [vmem:[%s1 + $0x878] sm:$0xff]
    %v298 = vld [vmem:[%s1 + $0x880] sm:$0xff]
    %v299 = vld [vmem:[%s1 + $0x888] sm:$0xff]
    %v300 = vld [vmem:[%s1 + $0x890] sm:$0xff]
    %v301 = vld [vmem:[%s1 + $0x898] sm:$0xff]
    %v302 = vld [vmem:[%s1 + $0x8a0] sm:$0xff]
    %v303 = vld [vmem:[%s1 + $0x8a8] sm:$0xff]
    %v304 = vld [vmem:[%s1 + $0x8b0] sm:$0xff]
    %v305 = vld [vmem:[%s1 + $0x8b8] sm:$0xff]
    %v306 = vld [vmem:[%s1 + $0x8c0] sm:$0xff]
    %v307 = vld [vmem:[%s1 + $0x8c8] sm:$0xff]
    %v308 = vld [vmem:[%s1 + $0x8d0] sm:$0xff]
    %v309 = vld [vmem:[%s1 + $0x8d8] sm:$0xff]
    %v310 = vld [vmem:[%s1 + $0x8e0] sm:$0xff]
    %v311 = vld [vmem:[%s1 + $0x8e8] sm:$0xff]
    %v312 = vld [vmem:[%s1 + $0x8f0] sm:$0xff]
    %v313 = vld [vmem:[%s1 + $0x8f8] sm:$0xff]
    %v314 = vld [vmem:[%s1 + $0x900] sm:$0xff]
    %v315 = vld [vmem:[%s1 + $0x908] sm:$0xff]
    %v316 = vld [vmem:[%s1 + $0x910] sm:$0xff]
    %v317 = vld [vmem:[%s1 + $0x918] sm:$0xff]
    %v318 = vld [vmem:[%s1 + $0x920] sm:$0xff]
    %v319 = vld [vmem:[%s1 + $0x928] sm:$0xff]
    %v320 = vld [vmem:[%s1 + $0x930] sm:$0xff]
    %v321 = vld [vmem:[%s1 + $0x938] sm:$0xff]
    %v322 = vld [vmem:[%s1 + $0x940] sm:$0xff]
    %v323 = vld [vmem:[%s1 + $0x948] sm:$0xff]
    %v324 = vld [vmem:[%s1 + $0x950] sm:$0xff]
    %v325 = vld [vmem:[%s1 + $0x958] sm:$0xff]
    %v326 = vld [vmem:[%s1 + $0x960] sm:$0xff]
    %v327 = vld [vmem:[%s1 + $0x968] sm:$0xff]
    %v328 = vld [vmem:[%s1 + $0x970] sm:$0xff]
    %v329 = vld [vmem:[%s1 + $0x978] sm:$0xff]
    %v330 = vld [vmem:[%s1 + $0x980] sm:$0xff]
    %v331 = vld [vmem:[%s1 + $0x988] sm:$0xff]
    %v332 = vld [vmem:[%s1 + $0x990] sm:$0xff]
    %v333 = vld [vmem:[%s1 + $0x998] sm:$0xff]
    %v334 = vld [vmem:[%s1 + $0x9a0] sm:$0xff]
    %v335 = vld [vmem:[%s1 + $0x9a8] sm:$0xff]
    %v336 = vld [vmem:[%s1 + $0x9b0] sm:$0xff]
    %v337 = vld [vmem:[%s1 + $0x9b8] sm:$0xff]
    %v338 = vld [vmem:[%s1 + $0x9c0] sm:$0xff]
    %v339 = vld [vmem:[%s1 + $0x9c8] sm:$0xff]
    %v340 = vld [vmem:[%s1 + $0x9d0] sm:$0xff]
    %v341 = vld [vmem:[%s1 + $0x9d8] sm:$0xff]
    %v342 = vld [vmem:[%s1 + $0x9e0] sm:$0xff]
    %v343 = vld [vmem:[%s1 + $0x9e8] sm:$0xff]
    %v344 = vld [vmem:[%s1 + $0x9f0] sm:$0xff]
    %v345 = vld [vmem:[%s1 + $0x9f8] sm:$0xff]
    %v346 = vld [vmem:[%s1 + $0xa00] sm:$0xff]
    %v347 = vld [vmem:[%s1 + $0xa08] sm:$0xff]
    %v348 = vld [vmem:[%s1 + $0xa10] sm:$0xff]
    %v349 = vld [vmem:[%s1 + $0xa18] sm:$0xff]
    %v350 = vld [vmem:[%s1 + $0xa20] sm:$0xff]
    %v351 = vld [vmem:[%s1 + $0xa28] sm:$0xff]
    %v352 = vld [vmem:[%s1 + $0xa30] sm:$0xff]
    %v353 = vld [vmem:[%s1 + $0xa38] sm:$0xff]
    %v354 = vld [vmem:[%s1 + $0xa40] sm:$0xff]
    %v355 = vld [vmem:[%s1 + $0xa48] sm:$0xff]
    %v356 = vld [vmem:[%s1 + $0xa50] sm:$0xff]
    %v357 = vld [vmem:[%s1 + $0xa58] sm:$0xff]
    %v358 = vld [vmem:[%s1 + $0xa60] sm:$0xff]
    %v359 = vld [vmem:[%s1 + $0xa68] sm:$0xff]
    %v360 = vld [vmem:[%s1 + $0xa70] sm:$0xff]
    %v361 = vld [vmem:[%s1 + $0xa78] sm:$0xff]
    %v362 = vld [vmem:[%s1 + $0xa80] sm:$0xff]
    %v363 = vld [vmem:[%s1 + $0xa88] sm:$0xff]
    %v364 = vld [vmem:[%s1 + $0xa90] sm:$0xff]
    %v365 = vld [vmem:[%s1 + $0xa98] sm:$0xff]
    %v366 = vld [vmem:[%s1 + $0xaa0] sm:$0xff]
    %v367 = vld [vmem:[%s1 + $0xaa8] sm:$0xff]
    %v368 = vld [vmem:[%s1 + $0xab0] sm:$0xff]
    %v369 = vld [vmem:[%s1 + $0xab8] sm:$0xff]
    %v370 = vld [vmem:[%s1 + $0xac0] sm:$0xff]
    %v371 = vld [vmem:[%s1 + $0xac8] sm:$0xff]
    %v372 = vld [vmem:[%s1 + $0xad0] sm:$0xff]
    %v373 = vld [vmem:[%s1 + $0xad8] sm:$0xff]
    %v374 = vld [vmem:[%s1 + $0xae0] sm:$0xff]
    %v375 = vld [vmem:[%s1 + $0xae8] sm:$0xff]
    %v376 = vld [vmem:[%s1 + $0xaf0] sm:$0xff]
    %v377 = vld [vmem:[%s1 + $0xaf8] sm:$0xff]
    %v378 = vld [vmem:[%s1 + $0xb00] sm:$0xff]
    %v379 = vld [vmem:[%s1 + $0xb08] sm:$0xff]
    %v380 = vld [vmem:[%s1 + $0xb10] sm:$0xff]
    %v381 = vld [vmem:[%s1 + $0xb18] sm:$0xff]
    %v382 = vld [vmem:[%s1 + $0xb20] sm:$0xff]
    %v383 = vld [vmem:[%s1 + $0xb28] sm:$0xff]
    %v384 = vld [vmem:[%s1 + $0xb30] sm:$0xff]
    %v385 = vld [vmem:[%s1 + $0xb38] sm:$0xff]
    %v386 = vld [vmem:[%s1 + $0xb40] sm:$0xff]
    %v387 = vld [vmem:[%s1 + $0xb48] sm:$0xff]
    %v388 = vld [vmem:[%s1 + $0xb50] sm:$0xff]
    %v389 = vld [vmem:[%s1 + $0xb58] sm:$0xff]
    %v390 = vld [vmem:[%s1 + $0xb60] sm:$0xff]
    %v391 = vld [vmem:[%s1 + $0xb68] sm:$0xff]
    %v392 = vld [vmem:[%s1 + $0xb70] sm:$0xff]
    %v393 = vld [vmem:[%s1 + $0xb78] sm:$0xff]
    %v394 = vld [vmem:[%s1 + $0xb80] sm:$0xff]
    %v395 = vld [vmem:[%s1 + $0xb88] sm:$0xff]
    %v396 = vld [vmem:[%s1 + $0xb90] sm:$0xff]
    %v397 = vld [vmem:[%s1 + $0xb98] sm:$0xff]
    %v398 = vld [vmem:[%s1 + $0xba0] sm:$0xff]
    %v399 = vld [vmem:[%s1 + $0xba8] sm:$0xff]
    %v400 = vld [vmem:[%s1 + $0xbb0] sm:$0xff]
    %v401 = vld [vmem:[%s1 + $0xbb8] sm:$0xff]
    %v402 = vld [vmem:[%s1 + $0xbc0] sm:$0xff]
    %v403 = vld [vmem:[%s1 + $0xbc8] sm:$0xff]
    %v404 = vld [vmem:[%s1 + $0xbd0] sm:$0xff]
    %v405 = vld [vmem:[%s1 + $0xbd8] sm:$0xff]
    %v406 = vld [vmem:[%s1 + $0xbe0] sm:$0xff]
    %v407 = vld [vmem:[%s1 + $0xbe8] sm:$0xff]
    %v408 = vld [vmem:[%s1 + $0xbf0] sm:$0xff]
    %v409 = vld [vmem:[%s1 + $0xbf8] sm:$0xff]
    %v410 = vld [vmem:[%s1 + $0xc00] sm:$0xff]
    %v411 = vld [vmem:[%s1 + $0xc08] sm:$0xff]
    %v412 = vld [vmem:[%s1 + $0xc10] sm:$0xff]
    %v413 = vld [vmem:[%s1 + $0xc18] sm:$0xff]
    %v414 = vld [vmem:[%s1 + $0xc20] sm:$0xff]
    %v415 = vld [vmem:[%s1 + $0xc28] sm:$0xff]
    %v416 = vld [vmem:[%s1 + $0xc30] sm:$0xff]
    %v417 = vld [vmem:[%s1 + $0xc38] sm:$0xff]
    %v418 = vld [vmem:[%s1 + $0xc40] sm:$0xff]
    %v419 = vld [vmem:[%s1 + $0xc48] sm:$0xff]
    %v420 = vld [vmem:[%s1 + $0xc50] sm:$0xff]
    %v421 = vld [vmem:[%s1 + $0xc58] sm:$0xff]
    %v422 = vld [vmem:[%s1 + $0xc60] sm:$0xff]
    %v423 = vld [vmem:[%s1 + $0xc68] sm:$0xff]
    %v424 = vld [vmem:[%s1 + $0xc70] sm:$0xff]
    %v425 = vld [vmem:[%s1 + $0xc78] sm:$0xff]
    %v426 = vld [vmem:[%s1 + $0xc80] sm:$0xff]
    %v427 = vld [vmem:[%s1 + $0xc88] sm:$0xff]
    %v428 = vld [vmem:[%s1 + $0xc90] sm:$0xff]
    %v429 = vld [vmem:[%s1 + $0xc98] sm:$0xff]
    %v430 = vld [vmem:[%s1 + $0xca0] sm:$0xff]
    %v431 = vld [vmem:[%s1 + $0xca8] sm:$0xff]
    %v432 = vld [vmem:[%s1 + $0xcb0] sm:$0xff]
    %v433 = vld [vmem:[%s1 + $0xcb8] sm:$0xff]
    %v434 = vld [vmem:[%s1 + $0xcc0] sm:$0xff]
    %v435 = vld [vmem:[%s1 + $0xcc8] sm:$0xff]
    %v436 = vld [vmem:[%s1 + $0xcd0] sm:$0xff]
    %v437 = vld [vmem:[%s1 + $0xcd8] sm:$0xff]
    %v438 = vld [vmem:[%s1 + $0xce0] sm:$0xff]
    %v439 = vld [vmem:[%s1 + $0xce8] sm:$0xff]
    %v440 = vld [vmem:[%s1 + $0xcf0] sm:$0xff]
    %v441 = vld [vmem:[%s1 + $0xcf8] sm:$0xff]
    %v442 = vld [vmem:[%s1 + $0xd00] sm:$0xff]
    %v443 = vld [vmem:[%s1 + $0xd08] sm:$0xff]
    %v444 = vld [vmem:[%s1 + $0xd10] sm:$0xff]
    %v445 = vld [vmem:[%s1 + $0xd18] sm:$0xff]
    %v446 = vld [vmem:[%s1 + $0xd20] sm:$0xff]
    %v447 = vld [vmem:[%s1 + $0xd28] sm:$0xff]
    %v448 = vld [vmem:[%s1 + $0xd30] sm:$0xff]
    %v449 = vld [vmem:[%s1 + $0xd38] sm:$0xff]
    %v450 = vld [vmem:[%s1 + $0xd40] sm:$0xff]
    %v451 = vld [vmem:[%s1 + $0xd48] sm:$0xff]
    %v452 = vld [vmem:[%s1 + $0xd50] sm:$0xff]
    %v453 = vld [vmem:[%s1 + $0xd58] sm:$0xff]
    %v454 = vld [vmem:[%s1 + $0xd60] sm:$0xff]
    %v455 = vld [vmem:[%s1 + $0xd68] sm:$0xff]
    %v456 = vld [vmem:[%s1 + $0xd70] sm:$0xff]
    %v457 = vld [vmem:[%s1 + $0xd78] sm:$0xff]
    %v458 = vld [vmem:[%s1 + $0xd80] sm:$0xff]
    %v459 = vld [vmem:[%s1 + $0xd88] sm:$0xff]
    %v460 = vld [vmem:[%s1 + $0xd90] sm:$0xff]
    %v461 = vld [vmem:[%s1 + $0xd98] sm:$0xff]
    %v462 = vld [vmem:[%s1 + $0xda0] sm:$0xff]
    %v463 = vld [vmem:[%s1 + $0xda8] sm:$0xff]
    %v464 = vld [vmem:[%s1 + $0xdb0] sm:$0xff]
    %v465 = vld [vmem:[%s1 + $0xdb8] sm:$0xff]
    %v466 = vld [vmem:[%s1 + $0xdc0] sm:$0xff]
    %v467 = vld [vmem:[%s1 + $0xdc8] sm:$0xff]
    %v468 = vld [vmem:[%s1 + $0xdd0] sm:$0xff]
    %v469 = vld [vmem:[%s1 + $0xdd8] sm:$0xff]
    %v470 = vld [vmem:[%s1 + $0xde0] sm:$0xff]
    %v471 = vld [vmem:[%s1 + $0xde8] sm:$0xff]
    %v472 = vld [vmem:[%s1 + $0xdf0] sm:$0xff]
    %v473 = vld [vmem:[%s1 + $0xdf8] sm:$0xff]
    %v474 = vld [vmem:[%s1 + $0xe00] sm:$0xff]
    %v475 = vld [vmem:[%s1 + $0xe08] sm:$0xff]
    %v476 = vld [vmem:[%s1 + $0xe10] sm:$0xff]
    %v477 = vld [vmem:[%s1 + $0xe18] sm:$0xff]
    %v478 = vld [vmem:[%s1 + $0xe20] sm:$0xff]
    %v479 = vld [vmem:[%s1 + $0xe28] sm:$0xff]
    %v480 = vld [vmem:[%s1 + $0xe30] sm:$0xff]
    %v481 = vld [vmem:[%s1 + $0xe38] sm:$0xff]
    %v482 = vld [vmem:[%s1 + $0xe40] sm:$0xff]
    %v483 = vld [vmem:[%s1 + $0xe48] sm:$0xff]
    %v484 = vld [vmem:[%s1 + $0xe50] sm:$0xff]
    %v485 = vld [vmem:[%s1 + $0xe58] sm:$0xff]
    %v486 = vld [vmem:[%s1 + $0xe60] sm:$0xff]
    %v487 = vld [vmem:[%s1 + $0xe68] sm:$0xff]
    %v488 = vld [vmem:[%s1 + $0xe70] sm:$0xff]
    %v489 = vld [vmem:[%s1 + $0xe78] sm:$0xff]
    %v490 = vld [vmem:[%s1 + $0xe80] sm:$0xff]
    %v491 = vld [vmem:[%s1 + $0xe88] sm:$0xff]
    %v492 = vld [vmem:[%s1 + $0xe90] sm:$0xff]
    %v493 = vld [vmem:[%s1 + $0xe98] sm:$0xff]
    %v494 = vld [vmem:[%s1 + $0xea0] sm:$0xff]
    %v495 = vld [vmem:[%s1 + $0xea8] sm:$0xff]
    %v496 = vld [vmem:[%s1 + $0xeb0] sm:$0xff]
    %v497 = vld [vmem:[%s1 + $0xeb8] sm:$0xff]
    %v498 = vld [vmem:[%s1 + $0xec0] sm:$0xff]
    %v499 = vld [vmem:[%s1 + $0xec8] sm:$0xff]
    %v500 = vld [vmem:[%s1 + $0xed0] sm:$0xff]
    %v501 = vld [vmem:[%s1 + $0xed8] sm:$0xff]
    %v502 = vld [vmem:[%s1 + $0xee0] sm:$0xff]
    %v503 = vld [vmem:[%s1 + $0xee8] sm:$0xff]
    %v504 = vld [vmem:[%s1 + $0xef0] sm:$0xff]
    %v505 = vld [vmem:[%s1 + $0xef8] sm:$0xff]
    %v506 = vld [vmem:[%s1 + $0xf00] sm:$0xff]
    %v507 = vld [vmem:[%s1 + $0xf08] sm:$0xff]
    %v508 = vld [vmem:[%s1 + $0xf10] sm:$0xff]
    %v509 = vld [vmem:[%s1 + $0xf18] sm:$0xff]
    %v510 = vld [vmem:[%s1 + $0xf20] sm:$0xff]
    %v511 = vld [vmem:[%s1 + $0xf28] sm:$0xff]
    %v512 = vld [vmem:[%s1 + $0xf30] sm:$0xff]
    %v513 = vld [vmem:[%s1 + $0xf38] sm:$0xff]
    %v514 = vld [vmem:[%s1 + $0xf40] sm:$0xff]
    %v515 = vld [vmem:[%s1 + $0xf48] sm:$0xff]
    %v516 = vld [vmem:[%s1 + $0xf50] sm:$0xff]
    %v517 = vld [vmem:[%s1 + $0xf58] sm:$0xff]
    %v518 = vld [vmem:[%s1 + $0xf60] sm:$0xff]
    %v519 = vld [vmem:[%s1 + $0xf68] sm:$0xff]
    %v520 = vld [vmem:[%s1 + $0xf70] sm:$0xff]
    %v521 = vld [vmem:[%s1 + $0xf78] sm:$0xff]
    %v522 = vld [vmem:[%s1 + $0xf80] sm:$0xff]
    %v523 = vld [vmem:[%s1 + $0xf88] sm:$0xff]
    %v524 = vld [vmem:[%s1 + $0xf90] sm:$0xff]
    %v525 = vld [vmem:[%s1 + $0xf98] sm:$0xff]
    %v526 = vld [vmem:[%s1 + $0xfa0] sm:$0xff]
    %v527 = vld [vmem:[%s1 + $0xfa8] sm:$0xff]
    %v528 = vld [vmem:[%s1 + $0xfb0] sm:$0xff]
    %v529 = vld [vmem:[%s1 + $0xfb8] sm:$0xff]
    %v530 = vld [vmem:[%s1 + $0xfc0] sm:$0xff]
    %v531 = vld [vmem:[%s1 + $0xfc8] sm:$0xff]
    %v532 = vld [vmem:[%s1 + $0xfd0] sm:$0xff]
    %v533 = vld [vmem:[%s1 + $0xfd8] sm:$0xff]
    %v534 = vld [vmem:[%s1 + $0xfe0] sm:$0xff]
    %v535 = vld [vmem:[%s1 + $0xfe8] sm:$0xff]
    %v536 = vld [vmem:[%s1 + $0xff0] sm:$0xff]
    %v537 = vld [vmem:[%s1 + $0xff8] sm:$0xff]
    %v538 = vld [vmem:[%s1 + $0x1000] sm:$0xff]
    %v539 = vld [vmem:[%s1 + $0x1008] sm:$0xff]
    %v540 = vld [vmem:[%s1 + $0x1010] sm:$0xff]
    %v541 = vld [vmem:[%s1 + $0x1018] sm:$0xff]
    %v542 = vld [vmem:[%s1 + $0x1020] sm:$0xff]
    %v543 = vld [vmem:[%s1 + $0x1028] sm:$0xff]
    %v544 = vld [vmem:[%s1 + $0x1030] sm:$0xff]
    %v545 = vld [vmem:[%s1 + $0x1038] sm:$0xff]
    %v546 = vld [vmem:[%s1 + $0x1040] sm:$0xff]
    %v547 = vld [vmem:[%s1 + $0x1048] sm:$0xff]
    %v548 = vld [vmem:[%s1 + $0x1050] sm:$0xff]
    %v549 = vld [vmem:[%s1 + $0x1058] sm:$0xff]
    %v550 = vld [vmem:[%s1 + $0x1060] sm:$0xff]
    %v551 = vld [vmem:[%s1 + $0x1068] sm:$0xff]
    %v552 = vld [vmem:[%s1 + $0x1070] sm:$0xff]
    %v553 = vld [vmem:[%s1 + $0x1078] sm:$0xff]
    %v554 = vld [vmem:[%s1 + $0x1080] sm:$0xff]
    %v555 = vld [vmem:[%s1 + $0x1088] sm:$0xff]
    %v556 = vld [vmem:[%s1 + $0x1090] sm:$0xff]
    %v557 = vld [vmem:[%s1 + $0x1098] sm:$0xff]
    %v558 = vld [vmem:[%s1 + $0x10a0] sm:$0xff]
    %v559 = vld [vmem:[%s1 + $0x10a8] sm:$0xff]
    %v560 = vld [vmem:[%s1 + $0x10b0] sm:$0xff]
    %v561 = vld [vmem:[%s1 + $0x10b8] sm:$0xff]
    %v562 = vld [vmem:[%s1 + $0x10c0] sm:$0xff]
    %v563 = vld [vmem:[%s1 + $0x10c8] sm:$0xff]
    %v564 = vld [vmem:[%s1 + $0x10d0] sm:$0xff]
    %v565 = vld [vmem:[%s1 + $0x10d8] sm:$0xff]
    %v566 = vld [vmem:[%s1 + $0x10e0] sm:$0xff]
    %v567 = vld [vmem:[%s1 + $0x10e8] sm:$0xff]
    %v568 = vld [vmem:[%s1 + $0x10f0] sm:$0xff]
    %v569 = vld [vmem:[%s1 + $0x10f8] sm:$0xff]
    %v570 = vld [vmem:[%s1 + $0x1100] sm:$0xff]
    %v571 = vld [vmem:[%s1 + $0x1108] sm:$0xff]
    %v572 = vld [vmem:[%s1 + $0x1110] sm:$0xff]
    %v573 = vld [vmem:[%s1 + $0x1118] sm:$0xff]
    %v574 = vld [vmem:[%s1 + $0x1120] sm:$0xff]
    %v575 = vld [vmem:[%s1 + $0x1128] sm:$0xff]
    %v576 = vld [vmem:[%s1 + $0x1130] sm:$0xff]
    %v577 = vld [vmem:[%s1 + $0x1138] sm:$0xff]
    %v578 = vld [vmem:[%s1 + $0x1140] sm:$0xff]
    %v579 = vld [vmem:[%s1 + $0x1148] sm:$0xff]
    %v580 = vld [vmem:[%s1 + $0x1150] sm:$0xff]
    %v581 = vld [vmem:[%s1 + $0x1158] sm:$0xff]
    %v582 = vld [vmem:[%s1 + $0x1160] sm:$0xff]
    %v583 = vld [vmem:[%s1 + $0x1168] sm:$0xff]
    %v584 = vld [vmem:[%s1 + $0x1170] sm:$0xff]
    %v585 = vld [vmem:[%s1 + $0x1178] sm:$0xff]
    %v586 = vld [vmem:[%s1 + $0x1180] sm:$0xff]
    %v587 = vld [vmem:[%s1 + $0x1188] sm:$0xff]
    %v588 = vld [vmem:[%s1 + $0x1190] sm:$0xff]
    %v589 = vld [vmem:[%s1 + $0x1198] sm:$0xff]
    %v590 = vld [vmem:[%s1 + $0x11a0] sm:$0xff]
    %v591 = vld [vmem:[%s1 + $0x11a8] sm:$0xff]
    %v592 = vld [vmem:[%s1 + $0x11b0] sm:$0xff]
    %v593 = vld [vmem:[%s1 + $0x11b8] sm:$0xff]
    %v594 = vld [vmem:[%s1 + $0x11c0] sm:$0xff]
    %v595 = vld [vmem:[%s1 + $0x11c8] sm:$0xff]
    %v596 = vld [vmem:[%s1 + $0x11d0] sm:$0xff]
    %v597 = vld [vmem:[%s1 + $0x11d8] sm:$0xff]
    %v598 = vld [vmem:[%s1 + $0x11e0] sm:$0xff]
    %v599 = vld [vmem:[%s1 + $0x11e8] sm:$0xff]
    %v600 = vld [vmem:[%s1 + $0x11f0] sm:$0xff]
    %v601 = vld [vmem:[%s1 + $0x11f8] sm:$0xff]
    %v602 = vld [vmem:[%s2] sm:$0x3]
    %v604 = vperm.slane %v602, 0
    %v605 = vperm.slane %v602, 1
    %609 = vst [vmem:[#allocation1] ss:$9 sm:$0xff] %v21
    %v610 = vld [vmem:[#allocation1] sm:$0xff]
    %v611 = vld [vmem:[#allocation1 + $0x9] sm:$0xff]
    %v612 = vld [vmem:[#allocation1 + $0x12] sm:$0xff]
    %v613 = vld [vmem:[#allocation1 + $0x1b] sm:$0xff]
    %v614 = vld [vmem:[#allocation1 + $0x24] sm:$0xff]
    %v615 = vld [vmem:[#allocation1 + $0x2d] sm:$0xff]
    %v616 = vld [vmem:[#allocation1 + $0x36] sm:$0xff]
    %v617 = vld [vmem:[#allocation1 + $0x3f] sm:$0xff]
    %619 = vst [vmem:[#allocation1] ss:$9 sm:$0xff] %v22
    %v620 = vld [vmem:[#allocation1] sm:$0xff]
    %v621 = vld [vmem:[#allocation1 + $0x9] sm:$0xff]
    %v622 = vld [vmem:[#allocation1 + $0x12] sm:$0xff]
    %v623 = vld [vmem:[#allocation1 + $0x1b] sm:$0xff]
    %v624 = vld [vmem:[#allocation1 + $0x24] sm:$0xff]
    %v625 = vld [vmem:[#allocation1 + $0x2d] sm:$0xff]
    %v626 = vld [vmem:[#allocation1 + $0x36] sm:$0xff]
    %v627 = vld [vmem:[#allocation1 + $0x3f] sm:$0xff]
    %629 = vst [vmem:[#allocation1] ss:$9 sm:$0xff] %v23
    %v630 = vld [vmem:[#allocation1] sm:$0xff]
    %v631 = vld [vmem:[#allocation1 + $0x9] sm:$0xff]
    %v632 = vld [vmem:[#allocation1 + $0x12] sm:$0xff]
    %v633 = vld [vmem:[#allocation1 + $0x1b] sm:$0xff]
    %v634 = vld [vmem:[#allocation1 + $0x24] sm:$0xff]
    %v635 = vld [vmem:[#allocation1 + $0x2d] sm:$0xff]
    %v636 = vld [vmem:[#allocation1 + $0x36] sm:$0xff]
    %v637 = vld [vmem:[#allocation1 + $0x3f] sm:$0xff]
    %639 = vst [vmem:[#allocation1] ss:$9 sm:$0xff] %v24
    %v640 = vld [vmem:[#allocation1] sm:$0xff]
    %v641 = vld [vmem:[#allocation1 + $0x9] sm:$0xff]
    %v642 = vld [vmem:[#allocation1 + $0x12] sm:$0xff]
    %v643 = vld [vmem:[#allocation1 + $0x1b] sm:$0xff]
    %v644 = vld [vmem:[#allocation1 + $0x24] sm:$0xff]
    %v645 = vld [vmem:[#allocation1 + $0x2d] sm:$0xff]
    %v646 = vld [vmem:[#allocation1 + $0x36] sm:$0xff]
    %v647 = vld [vmem:[#allocation1 + $0x3f] sm:$0xff]
    %649 = vst [vmem:[#allocation1] ss:$9 sm:$0xff] %v25
    %v650 = vld [vmem:[#allocation1] sm:$0xff]
    %v651 = vld [vmem:[#allocation1 + $0x9] sm:$0xff]
    %v652 = vld [vmem:[#allocation1 + $0x12] sm:$0xff]
    %v653 = vld [vmem:[#allocation1 + $0x1b] sm:$0xff]
    %v1266 = vunpack.c.l.b16 %v26
    %v1267 = vunpack.c.h.b16 %v26
    %v1268 = vunpack.c.l.b16 %v27
    %v1269 = vunpack.c.h.b16 %v27
    %v1270 = vunpack.c.l.b16 %v28
    %v1271 = vunpack.c.h.b16 %v28
    %v1272 = vunpack.c.l.b16 %v29
    %v1273 = vunpack.c.h.b16 %v29
    %v1274 = vunpack.c.l.b16 %v30
    %v1275 = vunpack.c.h.b16 %v30
    %v1276 = vunpack.c.l.b16 %v31
    %v1277 = vunpack.c.h.b16 %v31
    %v1278 = vunpack.c.l.b16 %v32
    %v1279 = vunpack.c.h.b16 %v32
    %v1280 = vunpack.c.l.b16 %v33
    %v1281 = vunpack.c.h.b16 %v33
    %v1282 = vunpack.c.l.b16 %v34
    %v1283 = vunpack.c.h.b16 %v34
    %v1284 = vunpack.c.l.b16 %v35
    %v1285 = vunpack.c.h.b16 %v35
    %v1286 = vunpack.c.l.b16 %v36
    %v1287 = vunpack.c.h.b16 %v36
    %v1288 = vunpack.c.l.b16 %v37
    %v1289 = vunpack.c.h.b16 %v37
    %v1290 = vunpack.c.l.b16 %v38
    %v1291 = vunpack.c.h.b16 %v38
    %v1292 = vunpack.c.l.b16 %v39
    %v1293 = vunpack.c.h.b16 %v39
    %v1294 = vunpack.c.l.b16 %v40
    %v1295 = vunpack.c.h.b16 %v40
    %v1296 = vunpack.c.l.b16 %v41
    %v1297 = vunpack.c.h.b16 %v41
    %v1298 = vunpack.c.l.b16 %v42
    %v1299 = vunpack.c.h.b16 %v42
    %v1300 = vunpack.c.l.b16 %v43
    %v1301 = vunpack.c.h.b16 %v43
    %v1302 = vunpack.c.l.b16 %v44
    %v1303 = vunpack.c.h.b16 %v44
    %v1304 = vunpack.c.l.b16 %v45
    %v1305 = vunpack.c.h.b16 %v45
    %v1306 = vunpack.c.l.b16 %v46
    %v1307 = vunpack.c.h.b16 %v46
    %v1308 = vunpack.c.l.b16 %v47
    %v1309 = vunpack.c.h.b16 %v47
    %v1310 = vunpack.c.l.b16 %v48
    %v1311 = vunpack.c.h.b16 %v48
    %v1312 = vunpack.c.l.b16 %v49
    %v1313 = vunpack.c.h.b16 %v49
    %v1314 = vunpack.c.l.b16 %v50
    %v1315 = vunpack.c.h.b16 %v50
    %v1316 = vunpack.c.l.b16 %v51
    %v1317 = vunpack.c.h.b16 %v51
    %v1318 = vunpack.c.l.b16 %v52
    %v1319 = vunpack.c.h.b16 %v52
    %v1320 = vunpack.c.l.b16 %v53
    %v1321 = vunpack.c.h.b16 %v53
    %v1322 = vunpack.c.l.b16 %v54
    %v1323 = vunpack.c.h.b16 %v54
    %v1324 = vunpack.c.l.b16 %v55
    %v1325 = vunpack.c.h.b16 %v55
    %v1326 = vunpack.c.l.b16 %v56
    %v1327 = vunpack.c.h.b16 %v56
    %v1328 = vunpack.c.l.b16 %v57
    %v1329 = vunpack.c.h.b16 %v57
    %v1330 = vunpack.c.l.b16 %v58
    %v1331 = vunpack.c.h.b16 %v58
    %v1332 = vunpack.c.l.b16 %v59
    %v1333 = vunpack.c.h.b16 %v59
    %v1334 = vunpack.c.l.b16 %v60
    %v1335 = vunpack.c.h.b16 %v60
    %v1336 = vunpack.c.l.b16 %v61
    %v1337 = vunpack.c.h.b16 %v61
    %v1338 = vunpack.c.l.b16 %v62
    %v1339 = vunpack.c.h.b16 %v62
    %v1340 = vunpack.c.l.b16 %v63
    %v1341 = vunpack.c.h.b16 %v63
    %v1342 = vunpack.c.l.b16 %v64
    %v1343 = vunpack.c.h.b16 %v64
    %v1344 = vunpack.c.l.b16 %v65
    %v1345 = vunpack.c.h.b16 %v65
    %v1346 = vunpack.c.l.b16 %v66
    %v1347 = vunpack.c.h.b16 %v66
    %v1348 = vunpack.c.l.b16 %v67
    %v1349 = vunpack.c.h.b16 %v67
    %v1350 = vunpack.c.l.b16 %v68
    %v1351 = vunpack.c.h.b16 %v68
    %v1352 = vunpack.c.l.b16 %v69
    %v1353 = vunpack.c.h.b16 %v69
    %v1354 = vunpack.c.l.b16 %v70
    %v1355 = vunpack.c.h.b16 %v70
    %v1356 = vunpack.c.l.b16 %v71
    %v1357 = vunpack.c.h.b16 %v71
    %v1358 = vunpack.c.l.b16 %v72
    %v1359 = vunpack.c.h.b16 %v72
    %v1360 = vunpack.c.l.b16 %v73
    %v1361 = vunpack.c.h.b16 %v73
    %v1362 = vunpack.c.l.b16 %v74
    %v1363 = vunpack.c.h.b16 %v74
    %v1364 = vunpack.c.l.b16 %v75
    %v1365 = vunpack.c.h.b16 %v75
    %v1366 = vunpack.c.l.b16 %v76
    %v1367 = vunpack.c.h.b16 %v76
    %v1368 = vunpack.c.l.b16 %v77
    %v1369 = vunpack.c.h.b16 %v77
    %v1370 = vunpack.c.l.b16 %v78
    %v1371 = vunpack.c.h.b16 %v78
    %v1372 = vunpack.c.l.b16 %v79
    %v1373 = vunpack.c.h.b16 %v79
    %v1374 = vunpack.c.l.b16 %v80
    %v1375 = vunpack.c.h.b16 %v80
    %v1376 = vunpack.c.l.b16 %v81
    %v1377 = vunpack.c.h.b16 %v81
    %v1378 = vunpack.c.l.b16 %v82
    %v1379 = vunpack.c.h.b16 %v82
    %v1380 = vunpack.c.l.b16 %v83
    %v1381 = vunpack.c.h.b16 %v83
    %v1382 = vunpack.c.l.b16 %v84
    %v1383 = vunpack.c.h.b16 %v84
    %v1384 = vunpack.c.l.b16 %v85
    %v1385 = vunpack.c.h.b16 %v85
    %v1386 = vunpack.c.l.b16 %v86
    %v1387 = vunpack.c.h.b16 %v86
    %v1388 = vunpack.c.l.b16 %v87
    %v1389 = vunpack.c.h.b16 %v87
    %v1390 = vunpack.c.l.b16 %v88
    %v1391 = vunpack.c.h.b16 %v88
    %v1392 = vunpack.c.l.b16 %v89
    %v1393 = vunpack.c.h.b16 %v89
    %v1394 = vunpack.c.l.b16 %v90
    %v1395 = vunpack.c.h.b16 %v90
    %v1396 = vunpack.c.l.b16 %v91
    %v1397 = vunpack.c.h.b16 %v91
    %v1398 = vunpack.c.l.b16 %v92
    %v1399 = vunpack.c.h.b16 %v92
    %v1400 = vunpack.c.l.b16 %v93
    %v1401 = vunpack.c.h.b16 %v93
    %v1402 = vunpack.c.l.b16 %v94
    %v1403 = vunpack.c.h.b16 %v94
    %v1404 = vunpack.c.l.b16 %v95
    %v1405 = vunpack.c.h.b16 %v95
    %v1406 = vunpack.c.l.b16 %v96
    %v1407 = vunpack.c.h.b16 %v96
    %v1408 = vunpack.c.l.b16 %v97
    %v1409 = vunpack.c.h.b16 %v97
    %v1410 = vunpack.c.l.b16 %v98
    %v1411 = vunpack.c.h.b16 %v98
    %v1412 = vunpack.c.l.b16 %v99
    %v1413 = vunpack.c.h.b16 %v99
    %v1414 = vunpack.c.l.b16 %v100
    %v1415 = vunpack.c.h.b16 %v100
    %v1416 = vunpack.c.l.b16 %v101
    %v1417 = vunpack.c.h.b16 %v101
    %v1418 = vunpack.c.l.b16 %v102
    %v1419 = vunpack.c.h.b16 %v102
    %v1420 = vunpack.c.l.b16 %v103
    %v1421 = vunpack.c.h.b16 %v103
    %v1422 = vunpack.c.l.b16 %v104
    %v1423 = vunpack.c.h.b16 %v104
    %v1424 = vunpack.c.l.b16 %v105
    %v1425 = vunpack.c.h.b16 %v105
    %v1426 = vunpack.c.l.b16 %v106
    %v1427 = vunpack.c.h.b16 %v106
    %v1428 = vunpack.c.l.b16 %v107
    %v1429 = vunpack.c.h.b16 %v107
    %v1430 = vunpack.c.l.b16 %v108
    %v1431 = vunpack.c.h.b16 %v108
    %v1432 = vunpack.c.l.b16 %v109
    %v1433 = vunpack.c.h.b16 %v109
    %v1434 = vunpack.c.l.b16 %v110
    %v1435 = vunpack.c.h.b16 %v110
    %v1436 = vunpack.c.l.b16 %v111
    %v1437 = vunpack.c.h.b16 %v111
    %v1438 = vunpack.c.l.b16 %v112
    %v1439 = vunpack.c.h.b16 %v112
    %v1440 = vunpack.c.l.b16 %v113
    %v1441 = vunpack.c.h.b16 %v113
    %v1442 = vunpack.c.l.b16 %v114
    %v1443 = vunpack.c.h.b16 %v114
    %v1444 = vunpack.c.l.b16 %v115
    %v1445 = vunpack.c.h.b16 %v115
    %v1446 = vunpack.c.l.b16 %v116
    %v1447 = vunpack.c.h.b16 %v116
    %v1448 = vunpack.c.l.b16 %v117
    %v1449 = vunpack.c.h.b16 %v117
    %v1450 = vunpack.c.l.b16 %v118
    %v1451 = vunpack.c.h.b16 %v118
    %v1452 = vunpack.c.l.b16 %v119
    %v1453 = vunpack.c.h.b16 %v119
    %v1454 = vunpack.c.l.b16 %v120
    %v1455 = vunpack.c.h.b16 %v120
    %v1456 = vunpack.c.l.b16 %v121
    %v1457 = vunpack.c.h.b16 %v121
    %v1458 = vunpack.c.l.b16 %v122
    %v1459 = vunpack.c.h.b16 %v122
    %v1460 = vunpack.c.l.b16 %v123
    %v1461 = vunpack.c.h.b16 %v123
    %v1462 = vunpack.c.l.b16 %v124
    %v1463 = vunpack.c.h.b16 %v124
    %v1464 = vunpack.c.l.b16 %v125
    %v1465 = vunpack.c.h.b16 %v125
    %v1466 = vunpack.c.l.b16 %v126
    %v1467 = vunpack.c.h.b16 %v126
    %v1468 = vunpack.c.l.b16 %v127
    %v1469 = vunpack.c.h.b16 %v127
    %v1470 = vunpack.c.l.b16 %v128
    %v1471 = vunpack.c.h.b16 %v128
    %v1472 = vunpack.c.l.b16 %v129
    %v1473 = vunpack.c.h.b16 %v129
    %v1474 = vunpack.c.l.b16 %v130
    %v1475 = vunpack.c.h.b16 %v130
    %v1476 = vunpack.c.l.b16 %v131
    %v1477 = vunpack.c.h.b16 %v131
    %v1478 = vunpack.c.l.b16 %v132
    %v1479 = vunpack.c.h.b16 %v132
    %v1480 = vunpack.c.l.b16 %v133
    %v1481 = vunpack.c.h.b16 %v133
    %v1482 = vunpack.c.l.b16 %v134
    %v1483 = vunpack.c.h.b16 %v134
    %v1484 = vunpack.c.l.b16 %v135
    %v1485 = vunpack.c.h.b16 %v135
    %v1486 = vunpack.c.l.b16 %v136
    %v1487 = vunpack.c.h.b16 %v136
    %v1488 = vunpack.c.l.b16 %v137
    %v1489 = vunpack.c.h.b16 %v137
    %v1490 = vunpack.c.l.b16 %v138
    %v1491 = vunpack.c.h.b16 %v138
    %v1492 = vunpack.c.l.b16 %v139
    %v1493 = vunpack.c.h.b16 %v139
    %v1494 = vunpack.c.l.b16 %v140
    %v1495 = vunpack.c.h.b16 %v140
    %v1496 = vunpack.c.l.b16 %v141
    %v1497 = vunpack.c.h.b16 %v141
    %v1498 = vunpack.c.l.b16 %v142
    %v1499 = vunpack.c.h.b16 %v142
    %v1500 = vunpack.c.l.b16 %v143
    %v1501 = vunpack.c.h.b16 %v143
    %v1502 = vunpack.c.l.b16 %v144
    %v1503 = vunpack.c.h.b16 %v144
    %v1504 = vunpack.c.l.b16 %v145
    %v1505 = vunpack.c.h.b16 %v145
    %v1506 = vunpack.c.l.b16 %v146
    %v1507 = vunpack.c.h.b16 %v146
    %v1508 = vunpack.c.l.b16 %v147
    %v1509 = vunpack.c.h.b16 %v147
    %v1510 = vunpack.c.l.b16 %v148
    %v1511 = vunpack.c.h.b16 %v148
    %v1512 = vunpack.c.l.b16 %v149
    %v1513 = vunpack.c.h.b16 %v149
    %v1514 = vunpack.c.l.b16 %v150
    %v1515 = vunpack.c.h.b16 %v150
    %v1516 = vunpack.c.l.b16 %v151
    %v1517 = vunpack.c.h.b16 %v151
    %v1518 = vunpack.c.l.b16 %v152
    %v1519 = vunpack.c.h.b16 %v152
    %v1520 = vunpack.c.l.b16 %v153
    %v1521 = vunpack.c.h.b16 %v153
    %v1522 = vunpack.c.l.b16 %v154
    %v1523 = vunpack.c.h.b16 %v154
    %v1524 = vunpack.c.l.b16 %v155
    %v1525 = vunpack.c.h.b16 %v155
    %v1526 = vunpack.c.l.b16 %v156
    %v1527 = vunpack.c.h.b16 %v156
    %v1528 = vunpack.c.l.b16 %v157
    %v1529 = vunpack.c.h.b16 %v157
    %v1530 = vunpack.c.l.b16 %v158
    %v1531 = vunpack.c.h.b16 %v158
    %v1532 = vunpack.c.l.b16 %v159
    %v1533 = vunpack.c.h.b16 %v159
    %v1534 = vunpack.c.l.b16 %v160
    %v1535 = vunpack.c.h.b16 %v160
    %v1536 = vunpack.c.l.b16 %v161
    %v1537 = vunpack.c.h.b16 %v161
    %v1538 = vunpack.c.l.b16 %v162
    %v1539 = vunpack.c.h.b16 %v162
    %v1540 = vunpack.c.l.b16 %v163
    %v1541 = vunpack.c.h.b16 %v163
    %v1542 = vunpack.c.l.b16 %v164
    %v1543 = vunpack.c.h.b16 %v164
    %v1544 = vunpack.c.l.b16 %v165
    %v1545 = vunpack.c.h.b16 %v165
    %v1546 = vunpack.c.l.b16 %v166
    %v1547 = vunpack.c.h.b16 %v166
    %v1548 = vunpack.c.l.b16 %v167
    %v1549 = vunpack.c.h.b16 %v167
    %v1550 = vunpack.c.l.b16 %v168
    %v1551 = vunpack.c.h.b16 %v168
    %v1552 = vunpack.c.l.b16 %v169
    %v1553 = vunpack.c.h.b16 %v169
    %v1554 = vunpack.c.l.b16 %v170
    %v1555 = vunpack.c.h.b16 %v170
    %v1556 = vunpack.c.l.b16 %v171
    %v1557 = vunpack.c.h.b16 %v171
    %v1558 = vunpack.c.l.b16 %v172
    %v1559 = vunpack.c.h.b16 %v172
    %v1560 = vunpack.c.l.b16 %v173
    %v1561 = vunpack.c.h.b16 %v173
    %v1562 = vunpack.c.l.b16 %v174
    %v1563 = vunpack.c.h.b16 %v174
    %v1564 = vunpack.c.l.b16 %v175
    %v1565 = vunpack.c.h.b16 %v175
    %v1566 = vunpack.c.l.b16 %v176
    %v1567 = vunpack.c.h.b16 %v176
    %v1568 = vunpack.c.l.b16 %v177
    %v1569 = vunpack.c.h.b16 %v177
    %v1570 = vunpack.c.l.b16 %v178
    %v1571 = vunpack.c.h.b16 %v178
    %v1572 = vunpack.c.l.b16 %v179
    %v1573 = vunpack.c.h.b16 %v179
    %v1574 = vunpack.c.l.b16 %v180
    %v1575 = vunpack.c.h.b16 %v180
    %v1576 = vunpack.c.l.b16 %v181
    %v1577 = vunpack.c.h.b16 %v181
    %v1578 = vunpack.c.l.b16 %v182
    %v1579 = vunpack.c.h.b16 %v182
    %v1580 = vunpack.c.l.b16 %v183
    %v1581 = vunpack.c.h.b16 %v183
    %v1582 = vunpack.c.l.b16 %v184
    %v1583 = vunpack.c.h.b16 %v184
    %v1584 = vunpack.c.l.b16 %v185
    %v1585 = vunpack.c.h.b16 %v185
    %v1586 = vunpack.c.l.b16 %v186
    %v1587 = vunpack.c.h.b16 %v186
    %v1588 = vunpack.c.l.b16 %v187
    %v1589 = vunpack.c.h.b16 %v187
    %v1590 = vunpack.c.l.b16 %v188
    %v1591 = vunpack.c.h.b16 %v188
    %v1592 = vunpack.c.l.b16 %v189
    %v1593 = vunpack.c.h.b16 %v189
    %v1594 = vunpack.c.l.b16 %v190
    %v1595 = vunpack.c.h.b16 %v190
    %v1596 = vunpack.c.l.b16 %v191
    %v1597 = vunpack.c.h.b16 %v191
    %v1598 = vunpack.c.l.b16 %v192
    %v1599 = vunpack.c.h.b16 %v192
    %v1600 = vunpack.c.l.b16 %v193
    %v1601 = vunpack.c.h.b16 %v193
    %v1602 = vunpack.c.l.b16 %v194
    %v1603 = vunpack.c.h.b16 %v194
    %v1604 = vunpack.c.l.b16 %v195
    %v1605 = vunpack.c.h.b16 %v195
    %v1606 = vunpack.c.l.b16 %v196
    %v1607 = vunpack.c.h.b16 %v196
    %v1608 = vunpack.c.l.b16 %v197
    %v1609 = vunpack.c.h.b16 %v197
    %v1610 = vunpack.c.l.b16 %v198
    %v1611 = vunpack.c.h.b16 %v198
    %v1612 = vunpack.c.l.b16 %v199
    %v1613 = vunpack.c.h.b16 %v199
    %v1614 = vunpack.c.l.b16 %v200
    %v1615 = vunpack.c.h.b16 %v200
    %v1616 = vunpack.c.l.b16 %v201
    %v1617 = vunpack.c.h.b16 %v201
    %v1618 = vunpack.c.l.b16 %v202
    %v1619 = vunpack.c.h.b16 %v202
    %v1620 = vunpack.c.l.b16 %v203
    %v1621 = vunpack.c.h.b16 %v203
    %v1622 = vunpack.c.l.b16 %v204
    %v1623 = vunpack.c.h.b16 %v204
    %v1624 = vunpack.c.l.b16 %v205
    %v1625 = vunpack.c.h.b16 %v205
    %v1626 = vunpack.c.l.b16 %v206
    %v1627 = vunpack.c.h.b16 %v206
    %v1628 = vunpack.c.l.b16 %v207
    %v1629 = vunpack.c.h.b16 %v207
    %v1630 = vunpack.c.l.b16 %v208
    %v1631 = vunpack.c.h.b16 %v208
    %v1632 = vunpack.c.l.b16 %v209
    %v1633 = vunpack.c.h.b16 %v209
    %v1634 = vunpack.c.l.b16 %v210
    %v1635 = vunpack.c.h.b16 %v210
    %v1636 = vunpack.c.l.b16 %v211
    %v1637 = vunpack.c.h.b16 %v211
    %v1638 = vunpack.c.l.b16 %v212
    %v1639 = vunpack.c.h.b16 %v212
    %v1640 = vunpack.c.l.b16 %v213
    %v1641 = vunpack.c.h.b16 %v213
    %v1642 = vunpack.c.l.b16 %v214
    %v1643 = vunpack.c.h.b16 %v214
    %v1644 = vunpack.c.l.b16 %v215
    %v1645 = vunpack.c.h.b16 %v215
    %v1646 = vunpack.c.l.b16 %v216
    %v1647 = vunpack.c.h.b16 %v216
    %v1648 = vunpack.c.l.b16 %v217
    %v1649 = vunpack.c.h.b16 %v217
    %v1650 = vunpack.c.l.b16 %v218
    %v1651 = vunpack.c.h.b16 %v218
    %v1652 = vunpack.c.l.b16 %v219
    %v1653 = vunpack.c.h.b16 %v219
    %v1654 = vunpack.c.l.b16 %v220
    %v1655 = vunpack.c.h.b16 %v220
    %v1656 = vunpack.c.l.b16 %v221
    %v1657 = vunpack.c.h.b16 %v221
    %v1658 = vunpack.c.l.b16 %v222
    %v1659 = vunpack.c.h.b16 %v222
    %v1660 = vunpack.c.l.b16 %v223
    %v1661 = vunpack.c.h.b16 %v223
    %v1662 = vunpack.c.l.b16 %v224
    %v1663 = vunpack.c.h.b16 %v224
    %v1664 = vunpack.c.l.b16 %v225
    %v1665 = vunpack.c.h.b16 %v225
    %v1666 = vunpack.c.l.b16 %v226
    %v1667 = vunpack.c.h.b16 %v226
    %v1668 = vunpack.c.l.b16 %v227
    %v1669 = vunpack.c.h.b16 %v227
    %v1670 = vunpack.c.l.b16 %v228
    %v1671 = vunpack.c.h.b16 %v228
    %v1672 = vunpack.c.l.b16 %v229
    %v1673 = vunpack.c.h.b16 %v229
    %v1674 = vunpack.c.l.b16 %v230
    %v1675 = vunpack.c.h.b16 %v230
    %v1676 = vunpack.c.l.b16 %v231
    %v1677 = vunpack.c.h.b16 %v231
    %v1678 = vunpack.c.l.b16 %v232
    %v1679 = vunpack.c.h.b16 %v232
    %v1680 = vunpack.c.l.b16 %v233
    %v1681 = vunpack.c.h.b16 %v233
    %v1682 = vunpack.c.l.b16 %v234
    %v1683 = vunpack.c.h.b16 %v234
    %v1684 = vunpack.c.l.b16 %v235
    %v1685 = vunpack.c.h.b16 %v235
    %v1686 = vunpack.c.l.b16 %v236
    %v1687 = vunpack.c.h.b16 %v236
    %v1688 = vunpack.c.l.b16 %v237
    %v1689 = vunpack.c.h.b16 %v237
    %v1690 = vunpack.c.l.b16 %v238
    %v1691 = vunpack.c.h.b16 %v238
    %v1692 = vunpack.c.l.b16 %v239
    %v1693 = vunpack.c.h.b16 %v239
    %v1694 = vunpack.c.l.b16 %v240
    %v1695 = vunpack.c.h.b16 %v240
    %v1696 = vunpack.c.l.b16 %v241
    %v1697 = vunpack.c.h.b16 %v241
    %v1698 = vunpack.c.l.b16 %v242
    %v1699 = vunpack.c.h.b16 %v242
    %v1700 = vunpack.c.l.b16 %v243
    %v1701 = vunpack.c.h.b16 %v243
    %v1702 = vunpack.c.l.b16 %v244
    %v1703 = vunpack.c.h.b16 %v244
    %v1704 = vunpack.c.l.b16 %v245
    %v1705 = vunpack.c.h.b16 %v245
    %v1706 = vunpack.c.l.b16 %v246
    %v1707 = vunpack.c.h.b16 %v246
    %v1708 = vunpack.c.l.b16 %v247
    %v1709 = vunpack.c.h.b16 %v247
    %v1710 = vunpack.c.l.b16 %v248
    %v1711 = vunpack.c.h.b16 %v248
    %v1712 = vunpack.c.l.b16 %v249
    %v1713 = vunpack.c.h.b16 %v249
    %v1714 = vunpack.c.l.b16 %v250
    %v1715 = vunpack.c.h.b16 %v250
    %v1716 = vunpack.c.l.b16 %v251
    %v1717 = vunpack.c.h.b16 %v251
    %v1718 = vunpack.c.l.b16 %v252
    %v1719 = vunpack.c.h.b16 %v252
    %v1720 = vunpack.c.l.b16 %v253
    %v1721 = vunpack.c.h.b16 %v253
    %v1722 = vunpack.c.l.b16 %v254
    %v1723 = vunpack.c.h.b16 %v254
    %v1724 = vunpack.c.l.b16 %v255
    %v1725 = vunpack.c.h.b16 %v255
    %v1726 = vunpack.c.l.b16 %v256
    %v1727 = vunpack.c.h.b16 %v256
    %v1728 = vunpack.c.l.b16 %v257
    %v1729 = vunpack.c.h.b16 %v257
    %v1730 = vunpack.c.l.b16 %v258
    %v1731 = vunpack.c.h.b16 %v258
    %v1732 = vunpack.c.l.b16 %v259
    %v1733 = vunpack.c.h.b16 %v259
    %v1734 = vunpack.c.l.b16 %v260
    %v1735 = vunpack.c.h.b16 %v260
    %v1736 = vunpack.c.l.b16 %v261
    %v1737 = vunpack.c.h.b16 %v261
    %v1738 = vunpack.c.l.b16 %v262
    %v1739 = vunpack.c.h.b16 %v262
    %v1740 = vunpack.c.l.b16 %v263
    %v1741 = vunpack.c.h.b16 %v263
    %v1742 = vunpack.c.l.b16 %v264
    %v1743 = vunpack.c.h.b16 %v264
    %v1744 = vunpack.c.l.b16 %v265
    %v1745 = vunpack.c.h.b16 %v265
    %v1746 = vunpack.c.l.b16 %v266
    %v1747 = vunpack.c.h.b16 %v266
    %v1748 = vunpack.c.l.b16 %v267
    %v1749 = vunpack.c.h.b16 %v267
    %v1750 = vunpack.c.l.b16 %v268
    %v1751 = vunpack.c.h.b16 %v268
    %v1752 = vunpack.c.l.b16 %v269
    %v1753 = vunpack.c.h.b16 %v269
    %v1754 = vunpack.c.l.b16 %v270
    %v1755 = vunpack.c.h.b16 %v270
    %v1756 = vunpack.c.l.b16 %v271
    %v1757 = vunpack.c.h.b16 %v271
    %v1758 = vunpack.c.l.b16 %v272
    %v1759 = vunpack.c.h.b16 %v272
    %v1760 = vunpack.c.l.b16 %v273
    %v1761 = vunpack.c.h.b16 %v273
    %v1762 = vunpack.c.l.b16 %v274
    %v1763 = vunpack.c.h.b16 %v274
    %v1764 = vunpack.c.l.b16 %v275
    %v1765 = vunpack.c.h.b16 %v275
    %v1766 = vunpack.c.l.b16 %v276
    %v1767 = vunpack.c.h.b16 %v276
    %v1768 = vunpack.c.l.b16 %v277
    %v1769 = vunpack.c.h.b16 %v277
    %v1770 = vunpack.c.l.b16 %v278
    %v1771 = vunpack.c.h.b16 %v278
    %v1772 = vunpack.c.l.b16 %v279
    %v1773 = vunpack.c.h.b16 %v279
    %v1774 = vunpack.c.l.b16 %v280
    %v1775 = vunpack.c.h.b16 %v280
    %v1776 = vunpack.c.l.b16 %v281
    %v1777 = vunpack.c.h.b16 %v281
    %v1778 = vunpack.c.l.b16 %v282
    %v1779 = vunpack.c.h.b16 %v282
    %v1780 = vunpack.c.l.b16 %v283
    %v1781 = vunpack.c.h.b16 %v283
    %v1782 = vunpack.c.l.b16 %v284
    %v1783 = vunpack.c.h.b16 %v284
    %v1784 = vunpack.c.l.b16 %v285
    %v1785 = vunpack.c.h.b16 %v285
    %v1786 = vunpack.c.l.b16 %v286
    %v1787 = vunpack.c.h.b16 %v286
    %v1788 = vunpack.c.l.b16 %v287
    %v1789 = vunpack.c.h.b16 %v287
    %v1790 = vunpack.c.l.b16 %v288
    %v1791 = vunpack.c.h.b16 %v288
    %v1792 = vunpack.c.l.b16 %v289
    %v1793 = vunpack.c.h.b16 %v289
    %v1794 = vunpack.c.l.b16 %v290
    %v1795 = vunpack.c.h.b16 %v290
    %v1796 = vunpack.c.l.b16 %v291
    %v1797 = vunpack.c.h.b16 %v291
    %v1798 = vunpack.c.l.b16 %v292
    %v1799 = vunpack.c.h.b16 %v292
    %v1800 = vunpack.c.l.b16 %v293
    %v1801 = vunpack.c.h.b16 %v293
    %v1802 = vunpack.c.l.b16 %v294
    %v1803 = vunpack.c.h.b16 %v294
    %v1804 = vunpack.c.l.b16 %v295
    %v1805 = vunpack.c.h.b16 %v295
    %v1806 = vunpack.c.l.b16 %v296
    %v1807 = vunpack.c.h.b16 %v296
    %v1808 = vunpack.c.l.b16 %v297
    %v1809 = vunpack.c.h.b16 %v297
    %v1810 = vunpack.c.l.b16 %v298
    %v1811 = vunpack.c.h.b16 %v298
    %v1812 = vunpack.c.l.b16 %v299
    %v1813 = vunpack.c.h.b16 %v299
    %v1814 = vunpack.c.l.b16 %v300
    %v1815 = vunpack.c.h.b16 %v300
    %v1816 = vunpack.c.l.b16 %v301
    %v1817 = vunpack.c.h.b16 %v301
    %v1818 = vunpack.c.l.b16 %v302
    %v1819 = vunpack.c.h.b16 %v302
    %v1820 = vunpack.c.l.b16 %v303
    %v1821 = vunpack.c.h.b16 %v303
    %v1822 = vunpack.c.l.b16 %v304
    %v1823 = vunpack.c.h.b16 %v304
    %v1824 = vunpack.c.l.b16 %v305
    %v1825 = vunpack.c.h.b16 %v305
    %v1826 = vunpack.c.l.b16 %v306
    %v1827 = vunpack.c.h.b16 %v306
    %v1828 = vunpack.c.l.b16 %v307
    %v1829 = vunpack.c.h.b16 %v307
    %v1830 = vunpack.c.l.b16 %v308
    %v1831 = vunpack.c.h.b16 %v308
    %v1832 = vunpack.c.l.b16 %v309
    %v1833 = vunpack.c.h.b16 %v309
    %v1834 = vunpack.c.l.b16 %v310
    %v1835 = vunpack.c.h.b16 %v310
    %v1836 = vunpack.c.l.b16 %v311
    %v1837 = vunpack.c.h.b16 %v311
    %v1838 = vunpack.c.l.b16 %v312
    %v1839 = vunpack.c.h.b16 %v312
    %v1840 = vunpack.c.l.b16 %v313
    %v1841 = vunpack.c.h.b16 %v313
    %v1842 = vunpack.c.l.b16 %v314
    %v1843 = vunpack.c.h.b16 %v314
    %v1844 = vunpack.c.l.b16 %v315
    %v1845 = vunpack.c.h.b16 %v315
    %v1846 = vunpack.c.l.b16 %v316
    %v1847 = vunpack.c.h.b16 %v316
    %v1848 = vunpack.c.l.b16 %v317
    %v1849 = vunpack.c.h.b16 %v317
    %v1850 = vunpack.c.l.b16 %v318
    %v1851 = vunpack.c.h.b16 %v318
    %v1852 = vunpack.c.l.b16 %v319
    %v1853 = vunpack.c.h.b16 %v319
    %v1854 = vunpack.c.l.b16 %v320
    %v1855 = vunpack.c.h.b16 %v320
    %v1856 = vunpack.c.l.b16 %v321
    %v1857 = vunpack.c.h.b16 %v321
    %v1858 = vunpack.c.l.b16 %v322
    %v1859 = vunpack.c.h.b16 %v322
    %v1860 = vunpack.c.l.b16 %v323
    %v1861 = vunpack.c.h.b16 %v323
    %v1862 = vunpack.c.l.b16 %v324
    %v1863 = vunpack.c.h.b16 %v324
    %v1864 = vunpack.c.l.b16 %v325
    %v1865 = vunpack.c.h.b16 %v325
    %v1866 = vunpack.c.l.b16 %v326
    %v1867 = vunpack.c.h.b16 %v326
    %v1868 = vunpack.c.l.b16 %v327
    %v1869 = vunpack.c.h.b16 %v327
    %v1870 = vunpack.c.l.b16 %v328
    %v1871 = vunpack.c.h.b16 %v328
    %v1872 = vunpack.c.l.b16 %v329
    %v1873 = vunpack.c.h.b16 %v329
    %v1874 = vunpack.c.l.b16 %v330
    %v1875 = vunpack.c.h.b16 %v330
    %v1876 = vunpack.c.l.b16 %v331
    %v1877 = vunpack.c.h.b16 %v331
    %v1878 = vunpack.c.l.b16 %v332
    %v1879 = vunpack.c.h.b16 %v332
    %v1880 = vunpack.c.l.b16 %v333
    %v1881 = vunpack.c.h.b16 %v333
    %v1882 = vunpack.c.l.b16 %v334
    %v1883 = vunpack.c.h.b16 %v334
    %v1884 = vunpack.c.l.b16 %v335
    %v1885 = vunpack.c.h.b16 %v335
    %v1886 = vunpack.c.l.b16 %v336
    %v1887 = vunpack.c.h.b16 %v336
    %v1888 = vunpack.c.l.b16 %v337
    %v1889 = vunpack.c.h.b16 %v337
    %v1890 = vunpack.c.l.b16 %v338
    %v1891 = vunpack.c.h.b16 %v338
    %v1892 = vunpack.c.l.b16 %v339
    %v1893 = vunpack.c.h.b16 %v339
    %v1894 = vunpack.c.l.b16 %v340
    %v1895 = vunpack.c.h.b16 %v340
    %v1896 = vunpack.c.l.b16 %v341
    %v1897 = vunpack.c.h.b16 %v341
    %v1898 = vunpack.c.l.b16 %v342
    %v1899 = vunpack.c.h.b16 %v342
    %v1900 = vunpack.c.l.b16 %v343
    %v1901 = vunpack.c.h.b16 %v343
    %v1902 = vunpack.c.l.b16 %v344
    %v1903 = vunpack.c.h.b16 %v344
    %v1904 = vunpack.c.l.b16 %v345
    %v1905 = vunpack.c.h.b16 %v345
    %v1906 = vunpack.c.l.b16 %v346
    %v1907 = vunpack.c.h.b16 %v346
    %v1908 = vunpack.c.l.b16 %v347
    %v1909 = vunpack.c.h.b16 %v347
    %v1910 = vunpack.c.l.b16 %v348
    %v1911 = vunpack.c.h.b16 %v348
    %v1912 = vunpack.c.l.b16 %v349
    %v1913 = vunpack.c.h.b16 %v349
    %v1914 = vunpack.c.l.b16 %v350
    %v1915 = vunpack.c.h.b16 %v350
    %v1916 = vunpack.c.l.b16 %v351
    %v1917 = vunpack.c.h.b16 %v351
    %v1918 = vunpack.c.l.b16 %v352
    %v1919 = vunpack.c.h.b16 %v352
    %v1920 = vunpack.c.l.b16 %v353
    %v1921 = vunpack.c.h.b16 %v353
    %v1922 = vunpack.c.l.b16 %v354
    %v1923 = vunpack.c.h.b16 %v354
    %v1924 = vunpack.c.l.b16 %v355
    %v1925 = vunpack.c.h.b16 %v355
    %v1926 = vunpack.c.l.b16 %v356
    %v1927 = vunpack.c.h.b16 %v356
    %v1928 = vunpack.c.l.b16 %v357
    %v1929 = vunpack.c.h.b16 %v357
    %v1930 = vunpack.c.l.b16 %v358
    %v1931 = vunpack.c.h.b16 %v358
    %v1932 = vunpack.c.l.b16 %v359
    %v1933 = vunpack.c.h.b16 %v359
    %v1934 = vunpack.c.l.b16 %v360
    %v1935 = vunpack.c.h.b16 %v360
    %v1936 = vunpack.c.l.b16 %v361
    %v1937 = vunpack.c.h.b16 %v361
    %v1938 = vunpack.c.l.b16 %v362
    %v1939 = vunpack.c.h.b16 %v362
    %v1940 = vunpack.c.l.b16 %v363
    %v1941 = vunpack.c.h.b16 %v363
    %v1942 = vunpack.c.l.b16 %v364
    %v1943 = vunpack.c.h.b16 %v364
    %v1944 = vunpack.c.l.b16 %v365
    %v1945 = vunpack.c.h.b16 %v365
    %v1946 = vunpack.c.l.b16 %v366
    %v1947 = vunpack.c.h.b16 %v366
    %v1948 = vunpack.c.l.b16 %v367
    %v1949 = vunpack.c.h.b16 %v367
    %v1950 = vunpack.c.l.b16 %v368
    %v1951 = vunpack.c.h.b16 %v368
    %v1952 = vunpack.c.l.b16 %v369
    %v1953 = vunpack.c.h.b16 %v369
    %v1954 = vunpack.c.l.b16 %v370
    %v1955 = vunpack.c.h.b16 %v370
    %v1956 = vunpack.c.l.b16 %v371
    %v1957 = vunpack.c.h.b16 %v371
    %v1958 = vunpack.c.l.b16 %v372
    %v1959 = vunpack.c.h.b16 %v372
    %v1960 = vunpack.c.l.b16 %v373
    %v1961 = vunpack.c.h.b16 %v373
    %v1962 = vunpack.c.l.b16 %v374
    %v1963 = vunpack.c.h.b16 %v374
    %v1964 = vunpack.c.l.b16 %v375
    %v1965 = vunpack.c.h.b16 %v375
    %v1966 = vunpack.c.l.b16 %v376
    %v1967 = vunpack.c.h.b16 %v376
    %v1968 = vunpack.c.l.b16 %v377
    %v1969 = vunpack.c.h.b16 %v377
    %v1970 = vunpack.c.l.b16 %v378
    %v1971 = vunpack.c.h.b16 %v378
    %v1972 = vunpack.c.l.b16 %v379
    %v1973 = vunpack.c.h.b16 %v379
    %v1974 = vunpack.c.l.b16 %v380
    %v1975 = vunpack.c.h.b16 %v380
    %v1976 = vunpack.c.l.b16 %v381
    %v1977 = vunpack.c.h.b16 %v381
    %v1978 = vunpack.c.l.b16 %v382
    %v1979 = vunpack.c.h.b16 %v382
    %v1980 = vunpack.c.l.b16 %v383
    %v1981 = vunpack.c.h.b16 %v383
    %v1982 = vunpack.c.l.b16 %v384
    %v1983 = vunpack.c.h.b16 %v384
    %v1984 = vunpack.c.l.b16 %v385
    %v1985 = vunpack.c.h.b16 %v385
    %v1986 = vunpack.c.l.b16 %v386
    %v1987 = vunpack.c.h.b16 %v386
    %v1988 = vunpack.c.l.b16 %v387
    %v1989 = vunpack.c.h.b16 %v387
    %v1990 = vunpack.c.l.b16 %v388
    %v1991 = vunpack.c.h.b16 %v388
    %v1992 = vunpack.c.l.b16 %v389
    %v1993 = vunpack.c.h.b16 %v389
    %v1994 = vunpack.c.l.b16 %v390
    %v1995 = vunpack.c.h.b16 %v390
    %v1996 = vunpack.c.l.b16 %v391
    %v1997 = vunpack.c.h.b16 %v391
    %v1998 = vunpack.c.l.b16 %v392
    %v1999 = vunpack.c.h.b16 %v392
    %v2000 = vunpack.c.l.b16 %v393
    %v2001 = vunpack.c.h.b16 %v393
    %v2002 = vunpack.c.l.b16 %v394
    %v2003 = vunpack.c.h.b16 %v394
    %v2004 = vunpack.c.l.b16 %v395
    %v2005 = vunpack.c.h.b16 %v395
    %v2006 = vunpack.c.l.b16 %v396
    %v2007 = vunpack.c.h.b16 %v396
    %v2008 = vunpack.c.l.b16 %v397
    %v2009 = vunpack.c.h.b16 %v397
    %v2010 = vunpack.c.l.b16 %v398
    %v2011 = vunpack.c.h.b16 %v398
    %v2012 = vunpack.c.l.b16 %v399
    %v2013 = vunpack.c.h.b16 %v399
    %v2014 = vunpack.c.l.b16 %v400
    %v2015 = vunpack.c.h.b16 %v400
    %v2016 = vunpack.c.l.b16 %v401
    %v2017 = vunpack.c.h.b16 %v401
    %v2018 = vunpack.c.l.b16 %v402
    %v2019 = vunpack.c.h.b16 %v402
    %v2020 = vunpack.c.l.b16 %v403
    %v2021 = vunpack.c.h.b16 %v403
    %v2022 = vunpack.c.l.b16 %v404
    %v2023 = vunpack.c.h.b16 %v404
    %v2024 = vunpack.c.l.b16 %v405
    %v2025 = vunpack.c.h.b16 %v405
    %v2026 = vunpack.c.l.b16 %v406
    %v2027 = vunpack.c.h.b16 %v406
    %v2028 = vunpack.c.l.b16 %v407
    %v2029 = vunpack.c.h.b16 %v407
    %v2030 = vunpack.c.l.b16 %v408
    %v2031 = vunpack.c.h.b16 %v408
    %v2032 = vunpack.c.l.b16 %v409
    %v2033 = vunpack.c.h.b16 %v409
    %v2034 = vunpack.c.l.b16 %v410
    %v2035 = vunpack.c.h.b16 %v410
    %v2036 = vunpack.c.l.b16 %v411
    %v2037 = vunpack.c.h.b16 %v411
    %v2038 = vunpack.c.l.b16 %v412
    %v2039 = vunpack.c.h.b16 %v412
    %v2040 = vunpack.c.l.b16 %v413
    %v2041 = vunpack.c.h.b16 %v413
    %v2042 = vunpack.c.l.b16 %v414
    %v2043 = vunpack.c.h.b16 %v414
    %v2044 = vunpack.c.l.b16 %v415
    %v2045 = vunpack.c.h.b16 %v415
    %v2046 = vunpack.c.l.b16 %v416
    %v2047 = vunpack.c.h.b16 %v416
    %v2048 = vunpack.c.l.b16 %v417
    %v2049 = vunpack.c.h.b16 %v417
    %v2050 = vunpack.c.l.b16 %v418
    %v2051 = vunpack.c.h.b16 %v418
    %v2052 = vunpack.c.l.b16 %v419
    %v2053 = vunpack.c.h.b16 %v419
    %v2054 = vunpack.c.l.b16 %v420
    %v2055 = vunpack.c.h.b16 %v420
    %v2056 = vunpack.c.l.b16 %v421
    %v2057 = vunpack.c.h.b16 %v421
    %v2058 = vunpack.c.l.b16 %v422
    %v2059 = vunpack.c.h.b16 %v422
    %v2060 = vunpack.c.l.b16 %v423
    %v2061 = vunpack.c.h.b16 %v423
    %v2062 = vunpack.c.l.b16 %v424
    %v2063 = vunpack.c.h.b16 %v424
    %v2064 = vunpack.c.l.b16 %v425
    %v2065 = vunpack.c.h.b16 %v425
    %v2066 = vunpack.c.l.b16 %v426
    %v2067 = vunpack.c.h.b16 %v426
    %v2068 = vunpack.c.l.b16 %v427
    %v2069 = vunpack.c.h.b16 %v427
    %v2070 = vunpack.c.l.b16 %v428
    %v2071 = vunpack.c.h.b16 %v428
    %v2072 = vunpack.c.l.b16 %v429
    %v2073 = vunpack.c.h.b16 %v429
    %v2074 = vunpack.c.l.b16 %v430
    %v2075 = vunpack.c.h.b16 %v430
    %v2076 = vunpack.c.l.b16 %v431
    %v2077 = vunpack.c.h.b16 %v431
    %v2078 = vunpack.c.l.b16 %v432
    %v2079 = vunpack.c.h.b16 %v432
    %v2080 = vunpack.c.l.b16 %v433
    %v2081 = vunpack.c.h.b16 %v433
    %v2082 = vunpack.c.l.b16 %v434
    %v2083 = vunpack.c.h.b16 %v434
    %v2084 = vunpack.c.l.b16 %v435
    %v2085 = vunpack.c.h.b16 %v435
    %v2086 = vunpack.c.l.b16 %v436
    %v2087 = vunpack.c.h.b16 %v436
    %v2088 = vunpack.c.l.b16 %v437
    %v2089 = vunpack.c.h.b16 %v437
    %v2090 = vunpack.c.l.b16 %v438
    %v2091 = vunpack.c.h.b16 %v438
    %v2092 = vunpack.c.l.b16 %v439
    %v2093 = vunpack.c.h.b16 %v439
    %v2094 = vunpack.c.l.b16 %v440
    %v2095 = vunpack.c.h.b16 %v440
    %v2096 = vunpack.c.l.b16 %v441
    %v2097 = vunpack.c.h.b16 %v441
    %v2098 = vunpack.c.l.b16 %v442
    %v2099 = vunpack.c.h.b16 %v442
    %v2100 = vunpack.c.l.b16 %v443
    %v2101 = vunpack.c.h.b16 %v443
    %v2102 = vunpack.c.l.b16 %v444
    %v2103 = vunpack.c.h.b16 %v444
    %v2104 = vunpack.c.l.b16 %v445
    %v2105 = vunpack.c.h.b16 %v445
    %v2106 = vunpack.c.l.b16 %v446
    %v2107 = vunpack.c.h.b16 %v446
    %v2108 = vunpack.c.l.b16 %v447
    %v2109 = vunpack.c.h.b16 %v447
    %v2110 = vunpack.c.l.b16 %v448
    %v2111 = vunpack.c.h.b16 %v448
    %v2112 = vunpack.c.l.b16 %v449
    %v2113 = vunpack.c.h.b16 %v449
    %v2114 = vunpack.c.l.b16 %v450
    %v2115 = vunpack.c.h.b16 %v450
    %v2116 = vunpack.c.l.b16 %v451
    %v2117 = vunpack.c.h.b16 %v451
    %v2118 = vunpack.c.l.b16 %v452
    %v2119 = vunpack.c.h.b16 %v452
    %v2120 = vunpack.c.l.b16 %v453
    %v2121 = vunpack.c.h.b16 %v453
    %v2122 = vunpack.c.l.b16 %v454
    %v2123 = vunpack.c.h.b16 %v454
    %v2124 = vunpack.c.l.b16 %v455
    %v2125 = vunpack.c.h.b16 %v455
    %v2126 = vunpack.c.l.b16 %v456
    %v2127 = vunpack.c.h.b16 %v456
    %v2128 = vunpack.c.l.b16 %v457
    %v2129 = vunpack.c.h.b16 %v457
    %v2130 = vunpack.c.l.b16 %v458
    %v2131 = vunpack.c.h.b16 %v458
    %v2132 = vunpack.c.l.b16 %v459
    %v2133 = vunpack.c.h.b16 %v459
    %v2134 = vunpack.c.l.b16 %v460
    %v2135 = vunpack.c.h.b16 %v460
    %v2136 = vunpack.c.l.b16 %v461
    %v2137 = vunpack.c.h.b16 %v461
    %v2138 = vunpack.c.l.b16 %v462
    %v2139 = vunpack.c.h.b16 %v462
    %v2140 = vunpack.c.l.b16 %v463
    %v2141 = vunpack.c.h.b16 %v463
    %v2142 = vunpack.c.l.b16 %v464
    %v2143 = vunpack.c.h.b16 %v464
    %v2144 = vunpack.c.l.b16 %v465
    %v2145 = vunpack.c.h.b16 %v465
    %v2146 = vunpack.c.l.b16 %v466
    %v2147 = vunpack.c.h.b16 %v466
    %v2148 = vunpack.c.l.b16 %v467
    %v2149 = vunpack.c.h.b16 %v467
    %v2150 = vunpack.c.l.b16 %v468
    %v2151 = vunpack.c.h.b16 %v468
    %v2152 = vunpack.c.l.b16 %v469
    %v2153 = vunpack.c.h.b16 %v469
    %v2154 = vunpack.c.l.b16 %v470
    %v2155 = vunpack.c.h.b16 %v470
    %v2156 = vunpack.c.l.b16 %v471
    %v2157 = vunpack.c.h.b16 %v471
    %v2158 = vunpack.c.l.b16 %v472
    %v2159 = vunpack.c.h.b16 %v472
    %v2160 = vunpack.c.l.b16 %v473
    %v2161 = vunpack.c.h.b16 %v473
    %v2162 = vunpack.c.l.b16 %v474
    %v2163 = vunpack.c.h.b16 %v474
    %v2164 = vunpack.c.l.b16 %v475
    %v2165 = vunpack.c.h.b16 %v475
    %v2166 = vunpack.c.l.b16 %v476
    %v2167 = vunpack.c.h.b16 %v476
    %v2168 = vunpack.c.l.b16 %v477
    %v2169 = vunpack.c.h.b16 %v477
    %v2170 = vunpack.c.l.b16 %v478
    %v2171 = vunpack.c.h.b16 %v478
    %v2172 = vunpack.c.l.b16 %v479
    %v2173 = vunpack.c.h.b16 %v479
    %v2174 = vunpack.c.l.b16 %v480
    %v2175 = vunpack.c.h.b16 %v480
    %v2176 = vunpack.c.l.b16 %v481
    %v2177 = vunpack.c.h.b16 %v481
    %v2178 = vunpack.c.l.b16 %v482
    %v2179 = vunpack.c.h.b16 %v482
    %v2180 = vunpack.c.l.b16 %v483
    %v2181 = vunpack.c.h.b16 %v483
    %v2182 = vunpack.c.l.b16 %v484
    %v2183 = vunpack.c.h.b16 %v484
    %v2184 = vunpack.c.l.b16 %v485
    %v2185 = vunpack.c.h.b16 %v485
    %v2186 = vunpack.c.l.b16 %v486
    %v2187 = vunpack.c.h.b16 %v486
    %v2188 = vunpack.c.l.b16 %v487
    %v2189 = vunpack.c.h.b16 %v487
    %v2190 = vunpack.c.l.b16 %v488
    %v2191 = vunpack.c.h.b16 %v488
    %v2192 = vunpack.c.l.b16 %v489
    %v2193 = vunpack.c.h.b16 %v489
    %v2194 = vunpack.c.l.b16 %v490
    %v2195 = vunpack.c.h.b16 %v490
    %v2196 = vunpack.c.l.b16 %v491
    %v2197 = vunpack.c.h.b16 %v491
    %v2198 = vunpack.c.l.b16 %v492
    %v2199 = vunpack.c.h.b16 %v492
    %v2200 = vunpack.c.l.b16 %v493
    %v2201 = vunpack.c.h.b16 %v493
    %v2202 = vunpack.c.l.b16 %v494
    %v2203 = vunpack.c.h.b16 %v494
    %v2204 = vunpack.c.l.b16 %v495
    %v2205 = vunpack.c.h.b16 %v495
    %v2206 = vunpack.c.l.b16 %v496
    %v2207 = vunpack.c.h.b16 %v496
    %v2208 = vunpack.c.l.b16 %v497
    %v2209 = vunpack.c.h.b16 %v497
    %v2210 = vunpack.c.l.b16 %v498
    %v2211 = vunpack.c.h.b16 %v498
    %v2212 = vunpack.c.l.b16 %v499
    %v2213 = vunpack.c.h.b16 %v499
    %v2214 = vunpack.c.l.b16 %v500
    %v2215 = vunpack.c.h.b16 %v500
    %v2216 = vunpack.c.l.b16 %v501
    %v2217 = vunpack.c.h.b16 %v501
    %v2218 = vunpack.c.l.b16 %v502
    %v2219 = vunpack.c.h.b16 %v502
    %v2220 = vunpack.c.l.b16 %v503
    %v2221 = vunpack.c.h.b16 %v503
    %v2222 = vunpack.c.l.b16 %v504
    %v2223 = vunpack.c.h.b16 %v504
    %v2224 = vunpack.c.l.b16 %v505
    %v2225 = vunpack.c.h.b16 %v505
    %v2226 = vunpack.c.l.b16 %v506
    %v2227 = vunpack.c.h.b16 %v506
    %v2228 = vunpack.c.l.b16 %v507
    %v2229 = vunpack.c.h.b16 %v507
    %v2230 = vunpack.c.l.b16 %v508
    %v2231 = vunpack.c.h.b16 %v508
    %v2232 = vunpack.c.l.b16 %v509
    %v2233 = vunpack.c.h.b16 %v509
    %v2234 = vunpack.c.l.b16 %v510
    %v2235 = vunpack.c.h.b16 %v510
    %v2236 = vunpack.c.l.b16 %v511
    %v2237 = vunpack.c.h.b16 %v511
    %v2238 = vunpack.c.l.b16 %v512
    %v2239 = vunpack.c.h.b16 %v512
    %v2240 = vunpack.c.l.b16 %v513
    %v2241 = vunpack.c.h.b16 %v513
    %v2242 = vunpack.c.l.b16 %v514
    %v2243 = vunpack.c.h.b16 %v514
    %v2244 = vunpack.c.l.b16 %v515
    %v2245 = vunpack.c.h.b16 %v515
    %v2246 = vunpack.c.l.b16 %v516
    %v2247 = vunpack.c.h.b16 %v516
    %v2248 = vunpack.c.l.b16 %v517
    %v2249 = vunpack.c.h.b16 %v517
    %v2250 = vunpack.c.l.b16 %v518
    %v2251 = vunpack.c.h.b16 %v518
    %v2252 = vunpack.c.l.b16 %v519
    %v2253 = vunpack.c.h.b16 %v519
    %v2254 = vunpack.c.l.b16 %v520
    %v2255 = vunpack.c.h.b16 %v520
    %v2256 = vunpack.c.l.b16 %v521
    %v2257 = vunpack.c.h.b16 %v521
    %v2258 = vunpack.c.l.b16 %v522
    %v2259 = vunpack.c.h.b16 %v522
    %v2260 = vunpack.c.l.b16 %v523
    %v2261 = vunpack.c.h.b16 %v523
    %v2262 = vunpack.c.l.b16 %v524
    %v2263 = vunpack.c.h.b16 %v524
    %v2264 = vunpack.c.l.b16 %v525
    %v2265 = vunpack.c.h.b16 %v525
    %v2266 = vunpack.c.l.b16 %v526
    %v2267 = vunpack.c.h.b16 %v526
    %v2268 = vunpack.c.l.b16 %v527
    %v2269 = vunpack.c.h.b16 %v527
    %v2270 = vunpack.c.l.b16 %v528
    %v2271 = vunpack.c.h.b16 %v528
    %v2272 = vunpack.c.l.b16 %v529
    %v2273 = vunpack.c.h.b16 %v529
    %v2274 = vunpack.c.l.b16 %v530
    %v2275 = vunpack.c.h.b16 %v530
    %v2276 = vunpack.c.l.b16 %v531
    %v2277 = vunpack.c.h.b16 %v531
    %v2278 = vunpack.c.l.b16 %v532
    %v2279 = vunpack.c.h.b16 %v532
    %v2280 = vunpack.c.l.b16 %v533
    %v2281 = vunpack.c.h.b16 %v533
    %v2282 = vunpack.c.l.b16 %v534
    %v2283 = vunpack.c.h.b16 %v534
    %v2284 = vunpack.c.l.b16 %v535
    %v2285 = vunpack.c.h.b16 %v535
    %v2286 = vunpack.c.l.b16 %v536
    %v2287 = vunpack.c.h.b16 %v536
    %v2288 = vunpack.c.l.b16 %v537
    %v2289 = vunpack.c.h.b16 %v537
    %v2290 = vunpack.c.l.b16 %v538
    %v2291 = vunpack.c.h.b16 %v538
    %v2292 = vunpack.c.l.b16 %v539
    %v2293 = vunpack.c.h.b16 %v539
    %v2294 = vunpack.c.l.b16 %v540
    %v2295 = vunpack.c.h.b16 %v540
    %v2296 = vunpack.c.l.b16 %v541
    %v2297 = vunpack.c.h.b16 %v541
    %v2298 = vunpack.c.l.b16 %v542
    %v2299 = vunpack.c.h.b16 %v542
    %v2300 = vunpack.c.l.b16 %v543
    %v2301 = vunpack.c.h.b16 %v543
    %v2302 = vunpack.c.l.b16 %v544
    %v2303 = vunpack.c.h.b16 %v544
    %v2304 = vunpack.c.l.b16 %v545
    %v2305 = vunpack.c.h.b16 %v545
    %v2306 = vunpack.c.l.b16 %v546
    %v2307 = vunpack.c.h.b16 %v546
    %v2308 = vunpack.c.l.b16 %v547
    %v2309 = vunpack.c.h.b16 %v547
    %v2310 = vunpack.c.l.b16 %v548
    %v2311 = vunpack.c.h.b16 %v548
    %v2312 = vunpack.c.l.b16 %v549
    %v2313 = vunpack.c.h.b16 %v549
    %v2314 = vunpack.c.l.b16 %v550
    %v2315 = vunpack.c.h.b16 %v550
    %v2316 = vunpack.c.l.b16 %v551
    %v2317 = vunpack.c.h.b16 %v551
    %v2318 = vunpack.c.l.b16 %v552
    %v2319 = vunpack.c.h.b16 %v552
    %v2320 = vunpack.c.l.b16 %v553
    %v2321 = vunpack.c.h.b16 %v553
    %v2322 = vunpack.c.l.b16 %v554
    %v2323 = vunpack.c.h.b16 %v554
    %v2324 = vunpack.c.l.b16 %v555
    %v2325 = vunpack.c.h.b16 %v555
    %v2326 = vunpack.c.l.b16 %v556
    %v2327 = vunpack.c.h.b16 %v556
    %v2328 = vunpack.c.l.b16 %v557
    %v2329 = vunpack.c.h.b16 %v557
    %v2330 = vunpack.c.l.b16 %v558
    %v2331 = vunpack.c.h.b16 %v558
    %v2332 = vunpack.c.l.b16 %v559
    %v2333 = vunpack.c.h.b16 %v559
    %v2334 = vunpack.c.l.b16 %v560
    %v2335 = vunpack.c.h.b16 %v560
    %v2336 = vunpack.c.l.b16 %v561
    %v2337 = vunpack.c.h.b16 %v561
    %v2338 = vunpack.c.l.b16 %v562
    %v2339 = vunpack.c.h.b16 %v562
    %v2340 = vunpack.c.l.b16 %v563
    %v2341 = vunpack.c.h.b16 %v563
    %v2342 = vunpack.c.l.b16 %v564
    %v2343 = vunpack.c.h.b16 %v564
    %v2344 = vunpack.c.l.b16 %v565
    %v2345 = vunpack.c.h.b16 %v565
    %v2346 = vunpack.c.l.b16 %v566
    %v2347 = vunpack.c.h.b16 %v566
    %v2348 = vunpack.c.l.b16 %v567
    %v2349 = vunpack.c.h.b16 %v567
    %v2350 = vunpack.c.l.b16 %v568
    %v2351 = vunpack.c.h.b16 %v568
    %v2352 = vunpack.c.l.b16 %v569
    %v2353 = vunpack.c.h.b16 %v569
    %v2354 = vunpack.c.l.b16 %v570
    %v2355 = vunpack.c.h.b16 %v570
    %v2356 = vunpack.c.l.b16 %v571
    %v2357 = vunpack.c.h.b16 %v571
    %v2358 = vunpack.c.l.b16 %v572
    %v2359 = vunpack.c.h.b16 %v572
    %v2360 = vunpack.c.l.b16 %v573
    %v2361 = vunpack.c.h.b16 %v573
    %v2362 = vunpack.c.l.b16 %v574
    %v2363 = vunpack.c.h.b16 %v574
    %v2364 = vunpack.c.l.b16 %v575
    %v2365 = vunpack.c.h.b16 %v575
    %v2366 = vunpack.c.l.b16 %v576
    %v2367 = vunpack.c.h.b16 %v576
    %v2368 = vunpack.c.l.b16 %v577
    %v2369 = vunpack.c.h.b16 %v577
    %v2370 = vunpack.c.l.b16 %v578
    %v2371 = vunpack.c.h.b16 %v578
    %v2372 = vunpack.c.l.b16 %v579
    %v2373 = vunpack.c.h.b16 %v579
    %v2374 = vunpack.c.l.b16 %v580
    %v2375 = vunpack.c.h.b16 %v580
    %v2376 = vunpack.c.l.b16 %v581
    %v2377 = vunpack.c.h.b16 %v581
    %v2378 = vunpack.c.l.b16 %v582
    %v2379 = vunpack.c.h.b16 %v582
    %v2380 = vunpack.c.l.b16 %v583
    %v2381 = vunpack.c.h.b16 %v583
    %v2382 = vunpack.c.l.b16 %v584
    %v2383 = vunpack.c.h.b16 %v584
    %v2384 = vunpack.c.l.b16 %v585
    %v2385 = vunpack.c.h.b16 %v585
    %v2386 = vunpack.c.l.b16 %v586
    %v2387 = vunpack.c.h.b16 %v586
    %v2388 = vunpack.c.l.b16 %v587
    %v2389 = vunpack.c.h.b16 %v587
    %v2390 = vunpack.c.l.b16 %v588
    %v2391 = vunpack.c.h.b16 %v588
    %v2392 = vunpack.c.l.b16 %v589
    %v2393 = vunpack.c.h.b16 %v589
    %v2394 = vunpack.c.l.b16 %v590
    %v2395 = vunpack.c.h.b16 %v590
    %v2396 = vunpack.c.l.b16 %v591
    %v2397 = vunpack.c.h.b16 %v591
    %v2398 = vunpack.c.l.b16 %v592
    %v2399 = vunpack.c.h.b16 %v592
    %v2400 = vunpack.c.l.b16 %v593
    %v2401 = vunpack.c.h.b16 %v593
    %v2402 = vunpack.c.l.b16 %v594
    %v2403 = vunpack.c.h.b16 %v594
    %v2404 = vunpack.c.l.b16 %v595
    %v2405 = vunpack.c.h.b16 %v595
    %v2406 = vunpack.c.l.b16 %v596
    %v2407 = vunpack.c.h.b16 %v596
    %v2408 = vunpack.c.l.b16 %v597
    %v2409 = vunpack.c.h.b16 %v597
    %v2410 = vunpack.c.l.b16 %v598
    %v2411 = vunpack.c.h.b16 %v598
    %v2412 = vunpack.c.l.b16 %v599
    %v2413 = vunpack.c.h.b16 %v599
    %v2414 = vunpack.c.l.b16 %v600
    %v2415 = vunpack.c.h.b16 %v600
    %v2416 = vunpack.c.l.b16 %v601
    %v2417 = vunpack.c.h.b16 %v601
    %v2418 = vpack.c.b16 %v1268, %v1266
    %v2419 = vpack.c.b16 %v1269, %v1267
    %v2420 = vpack.c.b16 %v1272, %v1270
    %v2421 = vpack.c.b16 %v1273, %v1271
    %v2422 = vpack.c.b16 %v1276, %v1274
    %v2423 = vpack.c.b16 %v1277, %v1275
    %v2424 = vpack.c.b16 %v1280, %v1278
    %v2425 = vpack.c.b16 %v1281, %v1279
    %v2426 = vpack.c.b16 %v1284, %v1282
    %v2427 = vpack.c.b16 %v1285, %v1283
    %v2428 = vpack.c.b16 %v1288, %v1286
    %v2429 = vpack.c.b16 %v1289, %v1287
    %v2430 = vpack.c.b16 %v1292, %v1290
    %v2431 = vpack.c.b16 %v1293, %v1291
    %v2432 = vpack.c.b16 %v1296, %v1294
    %v2433 = vpack.c.b16 %v1297, %v1295
    %v2434 = vpack.c.b16 %v1300, %v1298
    %v2435 = vpack.c.b16 %v1301, %v1299
    %v2436 = vpack.c.b16 %v1304, %v1302
    %v2437 = vpack.c.b16 %v1305, %v1303
    %v2438 = vpack.c.b16 %v1308, %v1306
    %v2439 = vpack.c.b16 %v1309, %v1307
    %v2440 = vpack.c.b16 %v1312, %v1310
    %v2441 = vpack.c.b16 %v1313, %v1311
    %v2442 = vpack.c.b16 %v1316, %v1314
    %v2443 = vpack.c.b16 %v1317, %v1315
    %v2444 = vpack.c.b16 %v1320, %v1318
    %v2445 = vpack.c.b16 %v1321, %v1319
    %v2446 = vpack.c.b16 %v1324, %v1322
    %v2447 = vpack.c.b16 %v1325, %v1323
    %v2448 = vpack.c.b16 %v1328, %v1326
    %v2449 = vpack.c.b16 %v1329, %v1327
    %v2450 = vpack.c.b16 %v1332, %v1330
    %v2451 = vpack.c.b16 %v1333, %v1331
    %v2452 = vpack.c.b16 %v1336, %v1334
    %v2453 = vpack.c.b16 %v1337, %v1335
    %v2454 = vpack.c.b16 %v1340, %v1338
    %v2455 = vpack.c.b16 %v1341, %v1339
    %v2456 = vpack.c.b16 %v1344, %v1342
    %v2457 = vpack.c.b16 %v1345, %v1343
    %v2458 = vpack.c.b16 %v1348, %v1346
    %v2459 = vpack.c.b16 %v1349, %v1347
    %v2460 = vpack.c.b16 %v1352, %v1350
    %v2461 = vpack.c.b16 %v1353, %v1351
    %v2462 = vpack.c.b16 %v1356, %v1354
    %v2463 = vpack.c.b16 %v1357, %v1355
    %v2464 = vpack.c.b16 %v1360, %v1358
    %v2465 = vpack.c.b16 %v1361, %v1359
    %v2466 = vpack.c.b16 %v1364, %v1362
    %v2467 = vpack.c.b16 %v1365, %v1363
    %v2468 = vpack.c.b16 %v1368, %v1366
    %v2469 = vpack.c.b16 %v1369, %v1367
    %v2470 = vpack.c.b16 %v1372, %v1370
    %v2471 = vpack.c.b16 %v1373, %v1371
    %v2472 = vpack.c.b16 %v1376, %v1374
    %v2473 = vpack.c.b16 %v1377, %v1375
    %v2474 = vpack.c.b16 %v1380, %v1378
    %v2475 = vpack.c.b16 %v1381, %v1379
    %v2476 = vpack.c.b16 %v1384, %v1382
    %v2477 = vpack.c.b16 %v1385, %v1383
    %v2478 = vpack.c.b16 %v1388, %v1386
    %v2479 = vpack.c.b16 %v1389, %v1387
    %v2480 = vpack.c.b16 %v1392, %v1390
    %v2481 = vpack.c.b16 %v1393, %v1391
    %v2482 = vpack.c.b16 %v1396, %v1394
    %v2483 = vpack.c.b16 %v1397, %v1395
    %v2484 = vpack.c.b16 %v1400, %v1398
    %v2485 = vpack.c.b16 %v1401, %v1399
    %v2486 = vpack.c.b16 %v1404, %v1402
    %v2487 = vpack.c.b16 %v1405, %v1403
    %v2488 = vpack.c.b16 %v1408, %v1406
    %v2489 = vpack.c.b16 %v1409, %v1407
    %v2490 = vpack.c.b16 %v1412, %v1410
    %v2491 = vpack.c.b16 %v1413, %v1411
    %v2492 = vpack.c.b16 %v1416, %v1414
    %v2493 = vpack.c.b16 %v1417, %v1415
    %v2494 = vpack.c.b16 %v1420, %v1418
    %v2495 = vpack.c.b16 %v1421, %v1419
    %v2496 = vpack.c.b16 %v1424, %v1422
    %v2497 = vpack.c.b16 %v1425, %v1423
    %v2498 = vpack.c.b16 %v1428, %v1426
    %v2499 = vpack.c.b16 %v1429, %v1427
    %v2500 = vpack.c.b16 %v1432, %v1430
    %v2501 = vpack.c.b16 %v1433, %v1431
    %v2502 = vpack.c.b16 %v1436, %v1434
    %v2503 = vpack.c.b16 %v1437, %v1435
    %v2504 = vpack.c.b16 %v1440, %v1438
    %v2505 = vpack.c.b16 %v1441, %v1439
    %v2506 = vpack.c.b16 %v1444, %v1442
    %v2507 = vpack.c.b16 %v1445, %v1443
    %v2508 = vpack.c.b16 %v1448, %v1446
    %v2509 = vpack.c.b16 %v1449, %v1447
    %v2510 = vpack.c.b16 %v1452, %v1450
    %v2511 = vpack.c.b16 %v1453, %v1451
    %v2512 = vpack.c.b16 %v1456, %v1454
    %v2513 = vpack.c.b16 %v1457, %v1455
    %v2514 = vpack.c.b16 %v1460, %v1458
    %v2515 = vpack.c.b16 %v1461, %v1459
    %v2516 = vpack.c.b16 %v1464, %v1462
    %v2517 = vpack.c.b16 %v1465, %v1463
    %v2518 = vpack.c.b16 %v1468, %v1466
    %v2519 = vpack.c.b16 %v1469, %v1467
    %v2520 = vpack.c.b16 %v1472, %v1470
    %v2521 = vpack.c.b16 %v1473, %v1471
    %v2522 = vpack.c.b16 %v1476, %v1474
    %v2523 = vpack.c.b16 %v1477, %v1475
    %v2524 = vpack.c.b16 %v1480, %v1478
    %v2525 = vpack.c.b16 %v1481, %v1479
    %v2526 = vpack.c.b16 %v1484, %v1482
    %v2527 = vpack.c.b16 %v1485, %v1483
    %v2528 = vpack.c.b16 %v1488, %v1486
    %v2529 = vpack.c.b16 %v1489, %v1487
    %v2530 = vpack.c.b16 %v1492, %v1490
    %v2531 = vpack.c.b16 %v1493, %v1491
    %v2532 = vpack.c.b16 %v1496, %v1494
    %v2533 = vpack.c.b16 %v1497, %v1495
    %v2534 = vpack.c.b16 %v1500, %v1498
    %v2535 = vpack.c.b16 %v1501, %v1499
    %v2536 = vpack.c.b16 %v1504, %v1502
    %v2537 = vpack.c.b16 %v1505, %v1503
    %v2538 = vpack.c.b16 %v1508, %v1506
    %v2539 = vpack.c.b16 %v1509, %v1507
    %v2540 = vpack.c.b16 %v1512, %v1510
    %v2541 = vpack.c.b16 %v1513, %v1511
    %v2542 = vpack.c.b16 %v1516, %v1514
    %v2543 = vpack.c.b16 %v1517, %v1515
    %v2544 = vpack.c.b16 %v1520, %v1518
    %v2545 = vpack.c.b16 %v1521, %v1519
    %v2546 = vpack.c.b16 %v1524, %v1522
    %v2547 = vpack.c.b16 %v1525, %v1523
    %v2548 = vpack.c.b16 %v1528, %v1526
    %v2549 = vpack.c.b16 %v1529, %v1527
    %v2550 = vpack.c.b16 %v1532, %v1530
    %v2551 = vpack.c.b16 %v1533, %v1531
    %v2552 = vpack.c.b16 %v1536, %v1534
    %v2553 = vpack.c.b16 %v1537, %v1535
    %v2554 = vpack.c.b16 %v1540, %v1538
    %v2555 = vpack.c.b16 %v1541, %v1539
    %v2556 = vpack.c.b16 %v1544, %v1542
    %v2557 = vpack.c.b16 %v1545, %v1543
    %v2558 = vpack.c.b16 %v1548, %v1546
    %v2559 = vpack.c.b16 %v1549, %v1547
    %v2560 = vpack.c.b16 %v1552, %v1550
    %v2561 = vpack.c.b16 %v1553, %v1551
    %v2562 = vpack.c.b16 %v1556, %v1554
    %v2563 = vpack.c.b16 %v1557, %v1555
    %v2564 = vpack.c.b16 %v1560, %v1558
    %v2565 = vpack.c.b16 %v1561, %v1559
    %v2566 = vpack.c.b16 %v1564, %v1562
    %v2567 = vpack.c.b16 %v1565, %v1563
    %v2568 = vpack.c.b16 %v1568, %v1566
    %v2569 = vpack.c.b16 %v1569, %v1567
    %v2570 = vpack.c.b16 %v1572, %v1570
    %v2571 = vpack.c.b16 %v1573, %v1571
    %v2572 = vpack.c.b16 %v1576, %v1574
    %v2573 = vpack.c.b16 %v1577, %v1575
    %v2574 = vpack.c.b16 %v1580, %v1578
    %v2575 = vpack.c.b16 %v1581, %v1579
    %v2576 = vpack.c.b16 %v1584, %v1582
    %v2577 = vpack.c.b16 %v1585, %v1583
    %v2578 = vpack.c.b16 %v1588, %v1586
    %v2579 = vpack.c.b16 %v1589, %v1587
    %v2580 = vpack.c.b16 %v1592, %v1590
    %v2581 = vpack.c.b16 %v1593, %v1591
    %v2582 = vpack.c.b16 %v1596, %v1594
    %v2583 = vpack.c.b16 %v1597, %v1595
    %v2584 = vpack.c.b16 %v1600, %v1598
    %v2585 = vpack.c.b16 %v1601, %v1599
    %v2586 = vpack.c.b16 %v1604, %v1602
    %v2587 = vpack.c.b16 %v1605, %v1603
    %v2588 = vpack.c.b16 %v1608, %v1606
    %v2589 = vpack.c.b16 %v1609, %v1607
    %v2590 = vpack.c.b16 %v1612, %v1610
    %v2591 = vpack.c.b16 %v1613, %v1611
    %v2592 = vpack.c.b16 %v1616, %v1614
    %v2593 = vpack.c.b16 %v1617, %v1615
    %v2594 = vpack.c.b16 %v1620, %v1618
    %v2595 = vpack.c.b16 %v1621, %v1619
    %v2596 = vpack.c.b16 %v1624, %v1622
    %v2597 = vpack.c.b16 %v1625, %v1623
    %v2598 = vpack.c.b16 %v1628, %v1626
    %v2599 = vpack.c.b16 %v1629, %v1627
    %v2600 = vpack.c.b16 %v1632, %v1630
    %v2601 = vpack.c.b16 %v1633, %v1631
    %v2602 = vpack.c.b16 %v1636, %v1634
    %v2603 = vpack.c.b16 %v1637, %v1635
    %v2604 = vpack.c.b16 %v1640, %v1638
    %v2605 = vpack.c.b16 %v1641, %v1639
    %v2606 = vpack.c.b16 %v1644, %v1642
    %v2607 = vpack.c.b16 %v1645, %v1643
    %v2608 = vpack.c.b16 %v1648, %v1646
    %v2609 = vpack.c.b16 %v1649, %v1647
    %v2610 = vpack.c.b16 %v1652, %v1650
    %v2611 = vpack.c.b16 %v1653, %v1651
    %v2612 = vpack.c.b16 %v1656, %v1654
    %v2613 = vpack.c.b16 %v1657, %v1655
    %v2614 = vpack.c.b16 %v1660, %v1658
    %v2615 = vpack.c.b16 %v1661, %v1659
    %v2616 = vpack.c.b16 %v1664, %v1662
    %v2617 = vpack.c.b16 %v1665, %v1663
    %v2618 = vpack.c.b16 %v1668, %v1666
    %v2619 = vpack.c.b16 %v1669, %v1667
    %v2620 = vpack.c.b16 %v1672, %v1670
    %v2621 = vpack.c.b16 %v1673, %v1671
    %v2622 = vpack.c.b16 %v1676, %v1674
    %v2623 = vpack.c.b16 %v1677, %v1675
    %v2624 = vpack.c.b16 %v1680, %v1678
    %v2625 = vpack.c.b16 %v1681, %v1679
    %v2626 = vpack.c.b16 %v1684, %v1682
    %v2627 = vpack.c.b16 %v1685, %v1683
    %v2628 = vpack.c.b16 %v1688, %v1686
    %v2629 = vpack.c.b16 %v1689, %v1687
    %v2630 = vpack.c.b16 %v1692, %v1690
    %v2631 = vpack.c.b16 %v1693, %v1691
    %v2632 = vpack.c.b16 %v1696, %v1694
    %v2633 = vpack.c.b16 %v1697, %v1695
    %v2634 = vpack.c.b16 %v1700, %v1698
    %v2635 = vpack.c.b16 %v1701, %v1699
    %v2636 = vpack.c.b16 %v1704, %v1702
    %v2637 = vpack.c.b16 %v1705, %v1703
    %v2638 = vpack.c.b16 %v1708, %v1706
    %v2639 = vpack.c.b16 %v1709, %v1707
    %v2640 = vpack.c.b16 %v1712, %v1710
    %v2641 = vpack.c.b16 %v1713, %v1711
    %v2642 = vpack.c.b16 %v1716, %v1714
    %v2643 = vpack.c.b16 %v1717, %v1715
    %v2644 = vpack.c.b16 %v1720, %v1718
    %v2645 = vpack.c.b16 %v1721, %v1719
    %v2646 = vpack.c.b16 %v1724, %v1722
    %v2647 = vpack.c.b16 %v1725, %v1723
    %v2648 = vpack.c.b16 %v1728, %v1726
    %v2649 = vpack.c.b16 %v1729, %v1727
    %v2650 = vpack.c.b16 %v1732, %v1730
    %v2651 = vpack.c.b16 %v1733, %v1731
    %v2652 = vpack.c.b16 %v1736, %v1734
    %v2653 = vpack.c.b16 %v1737, %v1735
    %v2654 = vpack.c.b16 %v1740, %v1738
    %v2655 = vpack.c.b16 %v1741, %v1739
    %v2656 = vpack.c.b16 %v1744, %v1742
    %v2657 = vpack.c.b16 %v1745, %v1743
    %v2658 = vpack.c.b16 %v1748, %v1746
    %v2659 = vpack.c.b16 %v1749, %v1747
    %v2660 = vpack.c.b16 %v1752, %v1750
    %v2661 = vpack.c.b16 %v1753, %v1751
    %v2662 = vpack.c.b16 %v1756, %v1754
    %v2663 = vpack.c.b16 %v1757, %v1755
    %v2664 = vpack.c.b16 %v1760, %v1758
    %v2665 = vpack.c.b16 %v1761, %v1759
    %v2666 = vpack.c.b16 %v1764, %v1762
    %v2667 = vpack.c.b16 %v1765, %v1763
    %v2668 = vpack.c.b16 %v1768, %v1766
    %v2669 = vpack.c.b16 %v1769, %v1767
    %v2670 = vpack.c.b16 %v1772, %v1770
    %v2671 = vpack.c.b16 %v1773, %v1771
    %v2672 = vpack.c.b16 %v1776, %v1774
    %v2673 = vpack.c.b16 %v1777, %v1775
    %v2674 = vpack.c.b16 %v1780, %v1778
    %v2675 = vpack.c.b16 %v1781, %v1779
    %v2676 = vpack.c.b16 %v1784, %v1782
    %v2677 = vpack.c.b16 %v1785, %v1783
    %v2678 = vpack.c.b16 %v1788, %v1786
    %v2679 = vpack.c.b16 %v1789, %v1787
    %v2680 = vpack.c.b16 %v1792, %v1790
    %v2681 = vpack.c.b16 %v1793, %v1791
    %v2682 = vpack.c.b16 %v1796, %v1794
    %v2683 = vpack.c.b16 %v1797, %v1795
    %v2684 = vpack.c.b16 %v1800, %v1798
    %v2685 = vpack.c.b16 %v1801, %v1799
    %v2686 = vpack.c.b16 %v1804, %v1802
    %v2687 = vpack.c.b16 %v1805, %v1803
    %v2688 = vpack.c.b16 %v1808, %v1806
    %v2689 = vpack.c.b16 %v1809, %v1807
    %v2690 = vpack.c.b16 %v1812, %v1810
    %v2691 = vpack.c.b16 %v1813, %v1811
    %v2692 = vpack.c.b16 %v1816, %v1814
    %v2693 = vpack.c.b16 %v1817, %v1815
    %v2694 = vpack.c.b16 %v1820, %v1818
    %v2695 = vpack.c.b16 %v1821, %v1819
    %v2696 = vpack.c.b16 %v1824, %v1822
    %v2697 = vpack.c.b16 %v1825, %v1823
    %v2698 = vpack.c.b16 %v1828, %v1826
    %v2699 = vpack.c.b16 %v1829, %v1827
    %v2700 = vpack.c.b16 %v1832, %v1830
    %v2701 = vpack.c.b16 %v1833, %v1831
    %v2702 = vpack.c.b16 %v1836, %v1834
    %v2703 = vpack.c.b16 %v1837, %v1835
    %v2704 = vpack.c.b16 %v1840, %v1838
    %v2705 = vpack.c.b16 %v1841, %v1839
    %v2706 = vpack.c.b16 %v1844, %v1842
    %v2707 = vpack.c.b16 %v1845, %v1843
    %v2708 = vpack.c.b16 %v1848, %v1846
    %v2709 = vpack.c.b16 %v1849, %v1847
    %v2710 = vpack.c.b16 %v1852, %v1850
    %v2711 = vpack.c.b16 %v1853, %v1851
    %v2712 = vpack.c.b16 %v1856, %v1854
    %v2713 = vpack.c.b16 %v1857, %v1855
    %v2714 = vpack.c.b16 %v1860, %v1858
    %v2715 = vpack.c.b16 %v1861, %v1859
    %v2716 = vpack.c.b16 %v1864, %v1862
    %v2717 = vpack.c.b16 %v1865, %v1863
    %v2718 = vpack.c.b16 %v1868, %v1866
    %v2719 = vpack.c.b16 %v1869, %v1867
    %v2720 = vpack.c.b16 %v1872, %v1870
    %v2721 = vpack.c.b16 %v1873, %v1871
    %v2722 = vpack.c.b16 %v1876, %v1874
    %v2723 = vpack.c.b16 %v1877, %v1875
    %v2724 = vpack.c.b16 %v1880, %v1878
    %v2725 = vpack.c.b16 %v1881, %v1879
    %v2726 = vpack.c.b16 %v1884, %v1882
    %v2727 = vpack.c.b16 %v1885, %v1883
    %v2728 = vpack.c.b16 %v1888, %v1886
    %v2729 = vpack.c.b16 %v1889, %v1887
    %v2730 = vpack.c.b16 %v1892, %v1890
    %v2731 = vpack.c.b16 %v1893, %v1891
    %v2732 = vpack.c.b16 %v1896, %v1894
    %v2733 = vpack.c.b16 %v1897, %v1895
    %v2734 = vpack.c.b16 %v1900, %v1898
    %v2735 = vpack.c.b16 %v1901, %v1899
    %v2736 = vpack.c.b16 %v1904, %v1902
    %v2737 = vpack.c.b16 %v1905, %v1903
    %v2738 = vpack.c.b16 %v1908, %v1906
    %v2739 = vpack.c.b16 %v1909, %v1907
    %v2740 = vpack.c.b16 %v1912, %v1910
    %v2741 = vpack.c.b16 %v1913, %v1911
    %v2742 = vpack.c.b16 %v1916, %v1914
    %v2743 = vpack.c.b16 %v1917, %v1915
    %v2744 = vpack.c.b16 %v1920, %v1918
    %v2745 = vpack.c.b16 %v1921, %v1919
    %v2746 = vpack.c.b16 %v1924, %v1922
    %v2747 = vpack.c.b16 %v1925, %v1923
    %v2748 = vpack.c.b16 %v1928, %v1926
    %v2749 = vpack.c.b16 %v1929, %v1927
    %v2750 = vpack.c.b16 %v1932, %v1930
    %v2751 = vpack.c.b16 %v1933, %v1931
    %v2752 = vpack.c.b16 %v1936, %v1934
    %v2753 = vpack.c.b16 %v1937, %v1935
    %v2754 = vpack.c.b16 %v1940, %v1938
    %v2755 = vpack.c.b16 %v1941, %v1939
    %v2756 = vpack.c.b16 %v1944, %v1942
    %v2757 = vpack.c.b16 %v1945, %v1943
    %v2758 = vpack.c.b16 %v1948, %v1946
    %v2759 = vpack.c.b16 %v1949, %v1947
    %v2760 = vpack.c.b16 %v1952, %v1950
    %v2761 = vpack.c.b16 %v1953, %v1951
    %v2762 = vpack.c.b16 %v1956, %v1954
    %v2763 = vpack.c.b16 %v1957, %v1955
    %v2764 = vpack.c.b16 %v1960, %v1958
    %v2765 = vpack.c.b16 %v1961, %v1959
    %v2766 = vpack.c.b16 %v1964, %v1962
    %v2767 = vpack.c.b16 %v1965, %v1963
    %v2768 = vpack.c.b16 %v1968, %v1966
    %v2769 = vpack.c.b16 %v1969, %v1967
    %v2770 = vpack.c.b16 %v1972, %v1970
    %v2771 = vpack.c.b16 %v1973, %v1971
    %v2772 = vpack.c.b16 %v1976, %v1974
    %v2773 = vpack.c.b16 %v1977, %v1975
    %v2774 = vpack.c.b16 %v1980, %v1978
    %v2775 = vpack.c.b16 %v1981, %v1979
    %v2776 = vpack.c.b16 %v1984, %v1982
    %v2777 = vpack.c.b16 %v1985, %v1983
    %v2778 = vpack.c.b16 %v1988, %v1986
    %v2779 = vpack.c.b16 %v1989, %v1987
    %v2780 = vpack.c.b16 %v1992, %v1990
    %v2781 = vpack.c.b16 %v1993, %v1991
    %v2782 = vpack.c.b16 %v1996, %v1994
    %v2783 = vpack.c.b16 %v1997, %v1995
    %v2784 = vpack.c.b16 %v2000, %v1998
    %v2785 = vpack.c.b16 %v2001, %v1999
    %v2786 = vpack.c.b16 %v2004, %v2002
    %v2787 = vpack.c.b16 %v2005, %v2003
    %v2788 = vpack.c.b16 %v2008, %v2006
    %v2789 = vpack.c.b16 %v2009, %v2007
    %v2790 = vpack.c.b16 %v2012, %v2010
    %v2791 = vpack.c.b16 %v2013, %v2011
    %v2792 = vpack.c.b16 %v2016, %v2014
    %v2793 = vpack.c.b16 %v2017, %v2015
    %v2794 = vpack.c.b16 %v2020, %v2018
    %v2795 = vpack.c.b16 %v2021, %v2019
    %v2796 = vpack.c.b16 %v2024, %v2022
    %v2797 = vpack.c.b16 %v2025, %v2023
    %v2798 = vpack.c.b16 %v2028, %v2026
    %v2799 = vpack.c.b16 %v2029, %v2027
    %v2800 = vpack.c.b16 %v2032, %v2030
    %v2801 = vpack.c.b16 %v2033, %v2031
    %v2802 = vpack.c.b16 %v2036, %v2034
    %v2803 = vpack.c.b16 %v2037, %v2035
    %v2804 = vpack.c.b16 %v2040, %v2038
    %v2805 = vpack.c.b16 %v2041, %v2039
    %v2806 = vpack.c.b16 %v2044, %v2042
    %v2807 = vpack.c.b16 %v2045, %v2043
    %v2808 = vpack.c.b16 %v2048, %v2046
    %v2809 = vpack.c.b16 %v2049, %v2047
    %v2810 = vpack.c.b16 %v2052, %v2050
    %v2811 = vpack.c.b16 %v2053, %v2051
    %v2812 = vpack.c.b16 %v2056, %v2054
    %v2813 = vpack.c.b16 %v2057, %v2055
    %v2814 = vpack.c.b16 %v2060, %v2058
    %v2815 = vpack.c.b16 %v2061, %v2059
    %v2816 = vpack.c.b16 %v2064, %v2062
    %v2817 = vpack.c.b16 %v2065, %v2063
    %v2818 = vpack.c.b16 %v2068, %v2066
    %v2819 = vpack.c.b16 %v2069, %v2067
    %v2820 = vpack.c.b16 %v2072, %v2070
    %v2821 = vpack.c.b16 %v2073, %v2071
    %v2822 = vpack.c.b16 %v2076, %v2074
    %v2823 = vpack.c.b16 %v2077, %v2075
    %v2824 = vpack.c.b16 %v2080, %v2078
    %v2825 = vpack.c.b16 %v2081, %v2079
    %v2826 = vpack.c.b16 %v2084, %v2082
    %v2827 = vpack.c.b16 %v2085, %v2083
    %v2828 = vpack.c.b16 %v2088, %v2086
    %v2829 = vpack.c.b16 %v2089, %v2087
    %v2830 = vpack.c.b16 %v2092, %v2090
    %v2831 = vpack.c.b16 %v2093, %v2091
    %v2832 = vpack.c.b16 %v2096, %v2094
    %v2833 = vpack.c.b16 %v2097, %v2095
    %v2834 = vpack.c.b16 %v2100, %v2098
    %v2835 = vpack.c.b16 %v2101, %v2099
    %v2836 = vpack.c.b16 %v2104, %v2102
    %v2837 = vpack.c.b16 %v2105, %v2103
    %v2838 = vpack.c.b16 %v2108, %v2106
    %v2839 = vpack.c.b16 %v2109, %v2107
    %v2840 = vpack.c.b16 %v2112, %v2110
    %v2841 = vpack.c.b16 %v2113, %v2111
    %v2842 = vpack.c.b16 %v2116, %v2114
    %v2843 = vpack.c.b16 %v2117, %v2115
    %v2844 = vpack.c.b16 %v2120, %v2118
    %v2845 = vpack.c.b16 %v2121, %v2119
    %v2846 = vpack.c.b16 %v2124, %v2122
    %v2847 = vpack.c.b16 %v2125, %v2123
    %v2848 = vpack.c.b16 %v2128, %v2126
    %v2849 = vpack.c.b16 %v2129, %v2127
    %v2850 = vpack.c.b16 %v2132, %v2130
    %v2851 = vpack.c.b16 %v2133, %v2131
    %v2852 = vpack.c.b16 %v2136, %v2134
    %v2853 = vpack.c.b16 %v2137, %v2135
    %v2854 = vpack.c.b16 %v2140, %v2138
    %v2855 = vpack.c.b16 %v2141, %v2139
    %v2856 = vpack.c.b16 %v2144, %v2142
    %v2857 = vpack.c.b16 %v2145, %v2143
    %v2858 = vpack.c.b16 %v2148, %v2146
    %v2859 = vpack.c.b16 %v2149, %v2147
    %v2860 = vpack.c.b16 %v2152, %v2150
    %v2861 = vpack.c.b16 %v2153, %v2151
    %v2862 = vpack.c.b16 %v2156, %v2154
    %v2863 = vpack.c.b16 %v2157, %v2155
    %v2864 = vpack.c.b16 %v2160, %v2158
    %v2865 = vpack.c.b16 %v2161, %v2159
    %v2866 = vpack.c.b16 %v2164, %v2162
    %v2867 = vpack.c.b16 %v2165, %v2163
    %v2868 = vpack.c.b16 %v2168, %v2166
    %v2869 = vpack.c.b16 %v2169, %v2167
    %v2870 = vpack.c.b16 %v2172, %v2170
    %v2871 = vpack.c.b16 %v2173, %v2171
    %v2872 = vpack.c.b16 %v2176, %v2174
    %v2873 = vpack.c.b16 %v2177, %v2175
    %v2874 = vpack.c.b16 %v2180, %v2178
    %v2875 = vpack.c.b16 %v2181, %v2179
    %v2876 = vpack.c.b16 %v2184, %v2182
    %v2877 = vpack.c.b16 %v2185, %v2183
    %v2878 = vpack.c.b16 %v2188, %v2186
    %v2879 = vpack.c.b16 %v2189, %v2187
    %v2880 = vpack.c.b16 %v2192, %v2190
    %v2881 = vpack.c.b16 %v2193, %v2191
    %v2882 = vpack.c.b16 %v2196, %v2194
    %v2883 = vpack.c.b16 %v2197, %v2195
    %v2884 = vpack.c.b16 %v2200, %v2198
    %v2885 = vpack.c.b16 %v2201, %v2199
    %v2886 = vpack.c.b16 %v2204, %v2202
    %v2887 = vpack.c.b16 %v2205, %v2203
    %v2888 = vpack.c.b16 %v2208, %v2206
    %v2889 = vpack.c.b16 %v2209, %v2207
    %v2890 = vpack.c.b16 %v2212, %v2210
    %v2891 = vpack.c.b16 %v2213, %v2211
    %v2892 = vpack.c.b16 %v2216, %v2214
    %v2893 = vpack.c.b16 %v2217, %v2215
    %v2894 = vpack.c.b16 %v2220, %v2218
    %v2895 = vpack.c.b16 %v2221, %v2219
    %v2896 = vpack.c.b16 %v2224, %v2222
    %v2897 = vpack.c.b16 %v2225, %v2223
    %v2898 = vpack.c.b16 %v2228, %v2226
    %v2899 = vpack.c.b16 %v2229, %v2227
    %v2900 = vpack.c.b16 %v2232, %v2230
    %v2901 = vpack.c.b16 %v2233, %v2231
    %v2902 = vpack.c.b16 %v2236, %v2234
    %v2903 = vpack.c.b16 %v2237, %v2235
    %v2904 = vpack.c.b16 %v2240, %v2238
    %v2905 = vpack.c.b16 %v2241, %v2239
    %v2906 = vpack.c.b16 %v2244, %v2242
    %v2907 = vpack.c.b16 %v2245, %v2243
    %v2908 = vpack.c.b16 %v2248, %v2246
    %v2909 = vpack.c.b16 %v2249, %v2247
    %v2910 = vpack.c.b16 %v2252, %v2250
    %v2911 = vpack.c.b16 %v2253, %v2251
    %v2912 = vpack.c.b16 %v2256, %v2254
    %v2913 = vpack.c.b16 %v2257, %v2255
    %v2914 = vpack.c.b16 %v2260, %v2258
    %v2915 = vpack.c.b16 %v2261, %v2259
    %v2916 = vpack.c.b16 %v2264, %v2262
    %v2917 = vpack.c.b16 %v2265, %v2263
    %v2918 = vpack.c.b16 %v2268, %v2266
    %v2919 = vpack.c.b16 %v2269, %v2267
    %v2920 = vpack.c.b16 %v2272, %v2270
    %v2921 = vpack.c.b16 %v2273, %v2271
    %v2922 = vpack.c.b16 %v2276, %v2274
    %v2923 = vpack.c.b16 %v2277, %v2275
    %v2924 = vpack.c.b16 %v2280, %v2278
    %v2925 = vpack.c.b16 %v2281, %v2279
    %v2926 = vpack.c.b16 %v2284, %v2282
    %v2927 = vpack.c.b16 %v2285, %v2283
    %v2928 = vpack.c.b16 %v2288, %v2286
    %v2929 = vpack.c.b16 %v2289, %v2287
    %v2930 = vpack.c.b16 %v2292, %v2290
    %v2931 = vpack.c.b16 %v2293, %v2291
    %v2932 = vpack.c.b16 %v2296, %v2294
    %v2933 = vpack.c.b16 %v2297, %v2295
    %v2934 = vpack.c.b16 %v2300, %v2298
    %v2935 = vpack.c.b16 %v2301, %v2299
    %v2936 = vpack.c.b16 %v2304, %v2302
    %v2937 = vpack.c.b16 %v2305, %v2303
    %v2938 = vpack.c.b16 %v2308, %v2306
    %v2939 = vpack.c.b16 %v2309, %v2307
    %v2940 = vpack.c.b16 %v2312, %v2310
    %v2941 = vpack.c.b16 %v2313, %v2311
    %v2942 = vpack.c.b16 %v2316, %v2314
    %v2943 = vpack.c.b16 %v2317, %v2315
    %v2944 = vpack.c.b16 %v2320, %v2318
    %v2945 = vpack.c.b16 %v2321, %v2319
    %v2946 = vpack.c.b16 %v2324, %v2322
    %v2947 = vpack.c.b16 %v2325, %v2323
    %v2948 = vpack.c.b16 %v2328, %v2326
    %v2949 = vpack.c.b16 %v2329, %v2327
    %v2950 = vpack.c.b16 %v2332, %v2330
    %v2951 = vpack.c.b16 %v2333, %v2331
    %v2952 = vpack.c.b16 %v2336, %v2334
    %v2953 = vpack.c.b16 %v2337, %v2335
    %v2954 = vpack.c.b16 %v2340, %v2338
    %v2955 = vpack.c.b16 %v2341, %v2339
    %v2956 = vpack.c.b16 %v2344, %v2342
    %v2957 = vpack.c.b16 %v2345, %v2343
    %v2958 = vpack.c.b16 %v2348, %v2346
    %v2959 = vpack.c.b16 %v2349, %v2347
    %v2960 = vpack.c.b16 %v2352, %v2350
    %v2961 = vpack.c.b16 %v2353, %v2351
    %v2962 = vpack.c.b16 %v2356, %v2354
    %v2963 = vpack.c.b16 %v2357, %v2355
    %v2964 = vpack.c.b16 %v2360, %v2358
    %v2965 = vpack.c.b16 %v2361, %v2359
    %v2966 = vpack.c.b16 %v2364, %v2362
    %v2967 = vpack.c.b16 %v2365, %v2363
    %v2968 = vpack.c.b16 %v2368, %v2366
    %v2969 = vpack.c.b16 %v2369, %v2367
    %v2970 = vpack.c.b16 %v2372, %v2370
    %v2971 = vpack.c.b16 %v2373, %v2371
    %v2972 = vpack.c.b16 %v2376, %v2374
    %v2973 = vpack.c.b16 %v2377, %v2375
    %v2974 = vpack.c.b16 %v2380, %v2378
    %v2975 = vpack.c.b16 %v2381, %v2379
    %v2976 = vpack.c.b16 %v2384, %v2382
    %v2977 = vpack.c.b16 %v2385, %v2383
    %v2978 = vpack.c.b16 %v2388, %v2386
    %v2979 = vpack.c.b16 %v2389, %v2387
    %v2980 = vpack.c.b16 %v2392, %v2390
    %v2981 = vpack.c.b16 %v2393, %v2391
    %v2982 = vpack.c.b16 %v2396, %v2394
    %v2983 = vpack.c.b16 %v2397, %v2395
    %v2984 = vpack.c.b16 %v2400, %v2398
    %v2985 = vpack.c.b16 %v2401, %v2399
    %v2986 = vpack.c.b16 %v2404, %v2402
    %v2987 = vpack.c.b16 %v2405, %v2403
    %v2988 = vpack.c.b16 %v2408, %v2406
    %v2989 = vpack.c.b16 %v2409, %v2407
    %v2990 = vpack.c.b16 %v2412, %v2410
    %v2991 = vpack.c.b16 %v2413, %v2411
    %v2992 = vpack.c.b16 %v2416, %v2414
    %v2993 = vpack.c.b16 %v2417, %v2415
    %3570 = vmatpush.bf16.msra.mxu0 %v2432
    %3571 = vmatpush.bf16.msra.mxu0 %v2430
    %3572 = vmatpush.bf16.msra.mxu0 %v2428
    %3573 = vmatpush.bf16.msra.mxu0 %v2426
    %3574 = vmatpush.bf16.msra.mxu0 %v2424
    %3575 = vmatpush.bf16.msra.mxu0 %v2422
    %3576 = vmatpush.bf16.msra.mxu0 %v2420
    %3577 = vmatpush.bf16.msra.mxu0 %v2418
    %3578 = vmatmul.bf16.gmra.mxu0 %v610
    %v3579 = vpop.f32.mrf.mxu0
    %v3580 = vadd.f32 %v604, %v3579
    %v3581 = vpop.f32.mrf.mxu0
    %3582 = vdwg.mxu0
    %3583 = vmatpush.bf16.msra.mxu0 %v2448
    %3584 = vmatpush.bf16.msra.mxu0 %v2446
    %3585 = vmatpush.bf16.msra.mxu0 %v2444
    %3586 = vmatpush.bf16.msra.mxu0 %v2442
    %3587 = vmatpush.bf16.msra.mxu0 %v2440
    %3588 = vmatpush.bf16.msra.mxu0 %v2438
    %3589 = vmatpush.bf16.msra.mxu0 %v2436
    %3590 = vmatpush.bf16.msra.mxu0 %v2434
    %3591 = vmatmul.bf16.gmra.mxu0 %v611
    %v3592 = vpop.f32.mrf.mxu0
    %v3593 = vadd.f32 %v3580, %v3592
    %v3594 = vpop.f32.mrf.mxu0
    %3595 = vdwg.mxu0
    %3596 = vmatpush.bf16.msra.mxu0 %v2464
    %3597 = vmatpush.bf16.msra.mxu0 %v2462
    %3598 = vmatpush.bf16.msra.mxu0 %v2460
    %3599 = vmatpush.bf16.msra.mxu0 %v2458
    %3600 = vmatpush.bf16.msra.mxu0 %v2456
    %3601 = vmatpush.bf16.msra.mxu0 %v2454
    %3602 = vmatpush.bf16.msra.mxu0 %v2452
    %3603 = vmatpush.bf16.msra.mxu0 %v2450
    %3604 = vmatmul.bf16.gmra.mxu0 %v612
    %v3605 = vpop.f32.mrf.mxu0
    %v3606 = vadd.f32 %v3593, %v3605
    %v3607 = vpop.f32.mrf.mxu0
    %3608 = vdwg.mxu0
    %3609 = vmatpush.bf16.msra.mxu0 %v2480
    %3610 = vmatpush.bf16.msra.mxu0 %v2478
    %3611 = vmatpush.bf16.msra.mxu0 %v2476
    %3612 = vmatpush.bf16.msra.mxu0 %v2474
    %3613 = vmatpush.bf16.msra.mxu0 %v2472
    %3614 = vmatpush.bf16.msra.mxu0 %v2470
    %3615 = vmatpush.bf16.msra.mxu0 %v2468
    %3616 = vmatpush.bf16.msra.mxu0 %v2466
    %3617 = vmatmul.bf16.gmra.mxu0 %v613
    %v3618 = vpop.f32.mrf.mxu0
    %v3619 = vadd.f32 %v3606, %v3618
    %v3620 = vpop.f32.mrf.mxu0
    %3621 = vdwg.mxu0
    %3622 = vmatpush.bf16.msra.mxu0 %v2496
    %3623 = vmatpush.bf16.msra.mxu0 %v2494
    %3624 = vmatpush.bf16.msra.mxu0 %v2492
    %3625 = vmatpush.bf16.msra.mxu0 %v2490
    %3626 = vmatpush.bf16.msra.mxu0 %v2488
    %3627 = vmatpush.bf16.msra.mxu0 %v2486
    %3628 = vmatpush.bf16.msra.mxu0 %v2484
    %3629 = vmatpush.bf16.msra.mxu0 %v2482
    %3630 = vmatmul.bf16.gmra.mxu0 %v614
    %v3631 = vpop.f32.mrf.mxu0
    %v3632 = vadd.f32 %v3619, %v3631
    %v3633 = vpop.f32.mrf.mxu0
    %3634 = vdwg.mxu0
    %3635 = vmatpush.bf16.msra.mxu0 %v2512
    %3636 = vmatpush.bf16.msra.mxu0 %v2510
    %3637 = vmatpush.bf16.msra.mxu0 %v2508
    %3638 = vmatpush.bf16.msra.mxu0 %v2506
    %3639 = vmatpush.bf16.msra.mxu0 %v2504
    %3640 = vmatpush.bf16.msra.mxu0 %v2502
    %3641 = vmatpush.bf16.msra.mxu0 %v2500
    %3642 = vmatpush.bf16.msra.mxu0 %v2498
    %3643 = vmatmul.bf16.gmra.mxu0 %v615
    %v3644 = vpop.f32.mrf.mxu0
    %v3645 = vadd.f32 %v3632, %v3644
    %v3646 = vpop.f32.mrf.mxu0
    %3647 = vdwg.mxu0
    %3648 = vmatpush.bf16.msra.mxu0 %v2528
    %3649 = vmatpush.bf16.msra.mxu0 %v2526
    %3650 = vmatpush.bf16.msra.mxu0 %v2524
    %3651 = vmatpush.bf16.msra.mxu0 %v2522
    %3652 = vmatpush.bf16.msra.mxu0 %v2520
    %3653 = vmatpush.bf16.msra.mxu0 %v2518
    %3654 = vmatpush.bf16.msra.mxu0 %v2516
    %3655 = vmatpush.bf16.msra.mxu0 %v2514
    %3656 = vmatmul.bf16.gmra.mxu0 %v616
    %v3657 = vpop.f32.mrf.mxu0
    %v3658 = vadd.f32 %v3645, %v3657
    %v3659 = vpop.f32.mrf.mxu0
    %3660 = vdwg.mxu0
    %3661 = vmatpush.bf16.msra.mxu0 %v2544
    %3662 = vmatpush.bf16.msra.mxu0 %v2542
    %3663 = vmatpush.bf16.msra.mxu0 %v2540
    %3664 = vmatpush.bf16.msra.mxu0 %v2538
    %3665 = vmatpush.bf16.msra.mxu0 %v2536
    %3666 = vmatpush.bf16.msra.mxu0 %v2534
    %3667 = vmatpush.bf16.msra.mxu0 %v2532
    %3668 = vmatpush.bf16.msra.mxu0 %v2530
    %3669 = vmatmul.bf16.gmra.mxu0 %v617
    %v3670 = vpop.f32.mrf.mxu0
    %v3671 = vadd.f32 %v3658, %v3670
    %v3672 = vpop.f32.mrf.mxu0
    %3673 = vdwg.mxu0
    %3674 = vmatpush.bf16.msra.mxu0 %v2560
    %3675 = vmatpush.bf16.msra.mxu0 %v2558
    %3676 = vmatpush.bf16.msra.mxu0 %v2556
    %3677 = vmatpush.bf16.msra.mxu0 %v2554
    %3678 = vmatpush.bf16.msra.mxu0 %v2552
    %3679 = vmatpush.bf16.msra.mxu0 %v2550
    %3680 = vmatpush.bf16.msra.mxu0 %v2548
    %3681 = vmatpush.bf16.msra.mxu0 %v2546
    %3682 = vmatmul.bf16.gmra.mxu0 %v620
    %v3683 = vpop.f32.mrf.mxu0
    %v3684 = vadd.f32 %v3671, %v3683
    %v3685 = vpop.f32.mrf.mxu0
    %3686 = vdwg.mxu0
    %3687 = vmatpush.bf16.msra.mxu0 %v2576
    %3688 = vmatpush.bf16.msra.mxu0 %v2574
    %3689 = vmatpush.bf16.msra.mxu0 %v2572
    %3690 = vmatpush.bf16.msra.mxu0 %v2570
    %3691 = vmatpush.bf16.msra.mxu0 %v2568
    %3692 = vmatpush.bf16.msra.mxu0 %v2566
    %3693 = vmatpush.bf16.msra.mxu0 %v2564
    %3694 = vmatpush.bf16.msra.mxu0 %v2562
    %3695 = vmatmul.bf16.gmra.mxu0 %v621
    %v3696 = vpop.f32.mrf.mxu0
    %v3697 = vadd.f32 %v3684, %v3696
    %v3698 = vpop.f32.mrf.mxu0
    %3699 = vdwg.mxu0
    %3700 = vmatpush.bf16.msra.mxu0 %v2592
    %3701 = vmatpush.bf16.msra.mxu0 %v2590
    %3702 = vmatpush.bf16.msra.mxu0 %v2588
    %3703 = vmatpush.bf16.msra.mxu0 %v2586
    %3704 = vmatpush.bf16.msra.mxu0 %v2584
    %3705 = vmatpush.bf16.msra.mxu0 %v2582
    %3706 = vmatpush.bf16.msra.mxu0 %v2580
    %3707 = vmatpush.bf16.msra.mxu0 %v2578
    %3708 = vmatmul.bf16.gmra.mxu0 %v622
    %v3709 = vpop.f32.mrf.mxu0
    %v3710 = vadd.f32 %v3697, %v3709
    %v3711 = vpop.f32.mrf.mxu0
    %3712 = vdwg.mxu0
    %3713 = vmatpush.bf16.msra.mxu0 %v2608
    %3714 = vmatpush.bf16.msra.mxu0 %v2606
    %3715 = vmatpush.bf16.msra.mxu0 %v2604
    %3716 = vmatpush.bf16.msra.mxu0 %v2602
    %3717 = vmatpush.bf16.msra.mxu0 %v2600
    %3718 = vmatpush.bf16.msra.mxu0 %v2598
    %3719 = vmatpush.bf16.msra.mxu0 %v2596
    %3720 = vmatpush.bf16.msra.mxu0 %v2594
    %3721 = vmatmul.bf16.gmra.mxu0 %v623
    %v3722 = vpop.f32.mrf.mxu0
    %v3723 = vadd.f32 %v3710, %v3722
    %v3724 = vpop.f32.mrf.mxu0
    %3725 = vdwg.mxu0
    %3726 = vmatpush.bf16.msra.mxu0 %v2624
    %3727 = vmatpush.bf16.msra.mxu0 %v2622
    %3728 = vmatpush.bf16.msra.mxu0 %v2620
    %3729 = vmatpush.bf16.msra.mxu0 %v2618
    %3730 = vmatpush.bf16.msra.mxu0 %v2616
    %3731 = vmatpush.bf16.msra.mxu0 %v2614
    %3732 = vmatpush.bf16.msra.mxu0 %v2612
    %3733 = vmatpush.bf16.msra.mxu0 %v2610
    %3734 = vmatmul.bf16.gmra.mxu0 %v624
    %v3735 = vpop.f32.mrf.mxu0
    %v3736 = vadd.f32 %v3723, %v3735
    %v3737 = vpop.f32.mrf.mxu0
    %3738 = vdwg.mxu0
    %3739 = vmatpush.bf16.msra.mxu0 %v2640
    %3740 = vmatpush.bf16.msra.mxu0 %v2638
    %3741 = vmatpush.bf16.msra.mxu0 %v2636
    %3742 = vmatpush.bf16.msra.mxu0 %v2634
    %3743 = vmatpush.bf16.msra.mxu0 %v2632
    %3744 = vmatpush.bf16.msra.mxu0 %v2630
    %3745 = vmatpush.bf16.msra.mxu0 %v2628
    %3746 = vmatpush.bf16.msra.mxu0 %v2626
    %3747 = vmatmul.bf16.gmra.mxu0 %v625
    %v3748 = vpop.f32.mrf.mxu0
    %v3749 = vadd.f32 %v3736, %v3748
    %v3750 = vpop.f32.mrf.mxu0
    %3751 = vdwg.mxu0
    %3752 = vmatpush.bf16.msra.mxu0 %v2656
    %3753 = vmatpush.bf16.msra.mxu0 %v2654
    %3754 = vmatpush.bf16.msra.mxu0 %v2652
    %3755 = vmatpush.bf16.msra.mxu0 %v2650
    %3756 = vmatpush.bf16.msra.mxu0 %v2648
    %3757 = vmatpush.bf16.msra.mxu0 %v2646
    %3758 = vmatpush.bf16.msra.mxu0 %v2644
    %3759 = vmatpush.bf16.msra.mxu0 %v2642
    %3760 = vmatmul.bf16.gmra.mxu0 %v626
    %v3761 = vpop.f32.mrf.mxu0
    %v3762 = vadd.f32 %v3749, %v3761
    %v3763 = vpop.f32.mrf.mxu0
    %3764 = vdwg.mxu0
    %3765 = vmatpush.bf16.msra.mxu0 %v2672
    %3766 = vmatpush.bf16.msra.mxu0 %v2670
    %3767 = vmatpush.bf16.msra.mxu0 %v2668
    %3768 = vmatpush.bf16.msra.mxu0 %v2666
    %3769 = vmatpush.bf16.msra.mxu0 %v2664
    %3770 = vmatpush.bf16.msra.mxu0 %v2662
    %3771 = vmatpush.bf16.msra.mxu0 %v2660
    %3772 = vmatpush.bf16.msra.mxu0 %v2658
    %3773 = vmatmul.bf16.gmra.mxu0 %v627
    %v3774 = vpop.f32.mrf.mxu0
    %v3775 = vadd.f32 %v3762, %v3774
    %v3776 = vpop.f32.mrf.mxu0
    %3777 = vdwg.mxu0
    %3778 = vmatpush.bf16.msra.mxu0 %v2688
    %3779 = vmatpush.bf16.msra.mxu0 %v2686
    %3780 = vmatpush.bf16.msra.mxu0 %v2684
    %3781 = vmatpush.bf16.msra.mxu0 %v2682
    %3782 = vmatpush.bf16.msra.mxu0 %v2680
    %3783 = vmatpush.bf16.msra.mxu0 %v2678
    %3784 = vmatpush.bf16.msra.mxu0 %v2676
    %3785 = vmatpush.bf16.msra.mxu0 %v2674
    %3786 = vmatmul.bf16.gmra.mxu0 %v630
    %v3787 = vpop.f32.mrf.mxu0
    %v3788 = vadd.f32 %v3775, %v3787
    %v3789 = vpop.f32.mrf.mxu0
    %3790 = vdwg.mxu0
    %3791 = vmatpush.bf16.msra.mxu0 %v2704
    %3792 = vmatpush.bf16.msra.mxu0 %v2702
    %3793 = vmatpush.bf16.msra.mxu0 %v2700
    %3794 = vmatpush.bf16.msra.mxu0 %v2698
    %3795 = vmatpush.bf16.msra.mxu0 %v2696
    %3796 = vmatpush.bf16.msra.mxu0 %v2694
    %3797 = vmatpush.bf16.msra.mxu0 %v2692
    %3798 = vmatpush.bf16.msra.mxu0 %v2690
    %3799 = vmatmul.bf16.gmra.mxu0 %v631
    %v3800 = vpop.f32.mrf.mxu0
    %v3801 = vadd.f32 %v3788, %v3800
    %v3802 = vpop.f32.mrf.mxu0
    %3803 = vdwg.mxu0
    %3804 = vmatpush.bf16.msra.mxu0 %v2720
    %3805 = vmatpush.bf16.msra.mxu0 %v2718
    %3806 = vmatpush.bf16.msra.mxu0 %v2716
    %3807 = vmatpush.bf16.msra.mxu0 %v2714
    %3808 = vmatpush.bf16.msra.mxu0 %v2712
    %3809 = vmatpush.bf16.msra.mxu0 %v2710
    %3810 = vmatpush.bf16.msra.mxu0 %v2708
    %3811 = vmatpush.bf16.msra.mxu0 %v2706
    %3812 = vmatmul.bf16.gmra.mxu0 %v632
    %v3813 = vpop.f32.mrf.mxu0
    %v3814 = vadd.f32 %v3801, %v3813
    %v3815 = vpop.f32.mrf.mxu0
    %3816 = vdwg.mxu0
    %3817 = vmatpush.bf16.msra.mxu0 %v2736
    %3818 = vmatpush.bf16.msra.mxu0 %v2734
    %3819 = vmatpush.bf16.msra.mxu0 %v2732
    %3820 = vmatpush.bf16.msra.mxu0 %v2730
    %3821 = vmatpush.bf16.msra.mxu0 %v2728
    %3822 = vmatpush.bf16.msra.mxu0 %v2726
    %3823 = vmatpush.bf16.msra.mxu0 %v2724
    %3824 = vmatpush.bf16.msra.mxu0 %v2722
    %3825 = vmatmul.bf16.gmra.mxu0 %v633
    %v3826 = vpop.f32.mrf.mxu0
    %v3827 = vadd.f32 %v3814, %v3826
    %v3828 = vpop.f32.mrf.mxu0
    %3829 = vdwg.mxu0
    %3830 = vmatpush.bf16.msra.mxu0 %v2752
    %3831 = vmatpush.bf16.msra.mxu0 %v2750
    %3832 = vmatpush.bf16.msra.mxu0 %v2748
    %3833 = vmatpush.bf16.msra.mxu0 %v2746
    %3834 = vmatpush.bf16.msra.mxu0 %v2744
    %3835 = vmatpush.bf16.msra.mxu0 %v2742
    %3836 = vmatpush.bf16.msra.mxu0 %v2740
    %3837 = vmatpush.bf16.msra.mxu0 %v2738
    %3838 = vmatmul.bf16.gmra.mxu0 %v634
    %v3839 = vpop.f32.mrf.mxu0
    %v3840 = vadd.f32 %v3827, %v3839
    %v3841 = vpop.f32.mrf.mxu0
    %3842 = vdwg.mxu0
    %3843 = vmatpush.bf16.msra.mxu0 %v2768
    %3844 = vmatpush.bf16.msra.mxu0 %v2766
    %3845 = vmatpush.bf16.msra.mxu0 %v2764
    %3846 = vmatpush.bf16.msra.mxu0 %v2762
    %3847 = vmatpush.bf16.msra.mxu0 %v2760
    %3848 = vmatpush.bf16.msra.mxu0 %v2758
    %3849 = vmatpush.bf16.msra.mxu0 %v2756
    %3850 = vmatpush.bf16.msra.mxu0 %v2754
    %3851 = vmatmul.bf16.gmra.mxu0 %v635
    %v3852 = vpop.f32.mrf.mxu0
    %v3853 = vadd.f32 %v3840, %v3852
    %v3854 = vpop.f32.mrf.mxu0
    %3855 = vdwg.mxu0
    %3856 = vmatpush.bf16.msra.mxu0 %v2784
    %3857 = vmatpush.bf16.msra.mxu0 %v2782
    %3858 = vmatpush.bf16.msra.mxu0 %v2780
    %3859 = vmatpush.bf16.msra.mxu0 %v2778
    %3860 = vmatpush.bf16.msra.mxu0 %v2776
    %3861 = vmatpush.bf16.msra.mxu0 %v2774
    %3862 = vmatpush.bf16.msra.mxu0 %v2772
    %3863 = vmatpush.bf16.msra.mxu0 %v2770
    %3864 = vmatmul.bf16.gmra.mxu0 %v636
    %v3865 = vpop.f32.mrf.mxu0
    %v3866 = vadd.f32 %v3853, %v3865
    %v3867 = vpop.f32.mrf.mxu0
    %3868 = vdwg.mxu0
    %3869 = vmatpush.bf16.msra.mxu0 %v2800
    %3870 = vmatpush.bf16.msra.mxu0 %v2798
    %3871 = vmatpush.bf16.msra.mxu0 %v2796
    %3872 = vmatpush.bf16.msra.mxu0 %v2794
    %3873 = vmatpush.bf16.msra.mxu0 %v2792
    %3874 = vmatpush.bf16.msra.mxu0 %v2790
    %3875 = vmatpush.bf16.msra.mxu0 %v2788
    %3876 = vmatpush.bf16.msra.mxu0 %v2786
    %3877 = vmatmul.bf16.gmra.mxu0 %v637
    %v3878 = vpop.f32.mrf.mxu0
    %v3879 = vadd.f32 %v3866, %v3878
    %v3880 = vpop.f32.mrf.mxu0
    %3881 = vdwg.mxu0
    %3882 = vmatpush.bf16.msra.mxu0 %v2816
    %3883 = vmatpush.bf16.msra.mxu0 %v2814
    %3884 = vmatpush.bf16.msra.mxu0 %v2812
    %3885 = vmatpush.bf16.msra.mxu0 %v2810
    %3886 = vmatpush.bf16.msra.mxu0 %v2808
    %3887 = vmatpush.bf16.msra.mxu0 %v2806
    %3888 = vmatpush.bf16.msra.mxu0 %v2804
    %3889 = vmatpush.bf16.msra.mxu0 %v2802
    %3890 = vmatmul.bf16.gmra.mxu0 %v640
    %v3891 = vpop.f32.mrf.mxu0
    %v3892 = vadd.f32 %v3879, %v3891
    %v3893 = vpop.f32.mrf.mxu0
    %3894 = vdwg.mxu0
    %3895 = vmatpush.bf16.msra.mxu0 %v2832
    %3896 = vmatpush.bf16.msra.mxu0 %v2830
    %3897 = vmatpush.bf16.msra.mxu0 %v2828
    %3898 = vmatpush.bf16.msra.mxu0 %v2826
    %3899 = vmatpush.bf16.msra.mxu0 %v2824
    %3900 = vmatpush.bf16.msra.mxu0 %v2822
    %3901 = vmatpush.bf16.msra.mxu0 %v2820
    %3902 = vmatpush.bf16.msra.mxu0 %v2818
    %3903 = vmatmul.bf16.gmra.mxu0 %v641
    %v3904 = vpop.f32.mrf.mxu0
    %v3905 = vadd.f32 %v3892, %v3904
    %v3906 = vpop.f32.mrf.mxu0
    %3907 = vdwg.mxu0
    %3908 = vmatpush.bf16.msra.mxu0 %v2848
    %3909 = vmatpush.bf16.msra.mxu0 %v2846
    %3910 = vmatpush.bf16.msra.mxu0 %v2844
    %3911 = vmatpush.bf16.msra.mxu0 %v2842
    %3912 = vmatpush.bf16.msra.mxu0 %v2840
    %3913 = vmatpush.bf16.msra.mxu0 %v2838
    %3914 = vmatpush.bf16.msra.mxu0 %v2836
    %3915 = vmatpush.bf16.msra.mxu0 %v2834
    %3916 = vmatmul.bf16.gmra.mxu0 %v642
    %v3917 = vpop.f32.mrf.mxu0
    %v3918 = vadd.f32 %v3905, %v3917
    %v3919 = vpop.f32.mrf.mxu0
    %3920 = vdwg.mxu0
    %3921 = vmatpush.bf16.msra.mxu0 %v2864
    %3922 = vmatpush.bf16.msra.mxu0 %v2862
    %3923 = vmatpush.bf16.msra.mxu0 %v2860
    %3924 = vmatpush.bf16.msra.mxu0 %v2858
    %3925 = vmatpush.bf16.msra.mxu0 %v2856
    %3926 = vmatpush.bf16.msra.mxu0 %v2854
    %3927 = vmatpush.bf16.msra.mxu0 %v2852
    %3928 = vmatpush.bf16.msra.mxu0 %v2850
    %3929 = vmatmul.bf16.gmra.mxu0 %v643
    %v3930 = vpop.f32.mrf.mxu0
    %v3931 = vadd.f32 %v3918, %v3930
    %v3932 = vpop.f32.mrf.mxu0
    %3933 = vdwg.mxu0
    %3934 = vmatpush.bf16.msra.mxu0 %v2880
    %3935 = vmatpush.bf16.msra.mxu0 %v2878
    %3936 = vmatpush.bf16.msra.mxu0 %v2876
    %3937 = vmatpush.bf16.msra.mxu0 %v2874
    %3938 = vmatpush.bf16.msra.mxu0 %v2872
    %3939 = vmatpush.bf16.msra.mxu0 %v2870
    %3940 = vmatpush.bf16.msra.mxu0 %v2868
    %3941 = vmatpush.bf16.msra.mxu0 %v2866
    %3942 = vmatmul.bf16.gmra.mxu0 %v644
    %v3943 = vpop.f32.mrf.mxu0
    %v3944 = vadd.f32 %v3931, %v3943
    %v3945 = vpop.f32.mrf.mxu0
    %3946 = vdwg.mxu0
    %3947 = vmatpush.bf16.msra.mxu0 %v2896
    %3948 = vmatpush.bf16.msra.mxu0 %v2894
    %3949 = vmatpush.bf16.msra.mxu0 %v2892
    %3950 = vmatpush.bf16.msra.mxu0 %v2890
    %3951 = vmatpush.bf16.msra.mxu0 %v2888
    %3952 = vmatpush.bf16.msra.mxu0 %v2886
    %3953 = vmatpush.bf16.msra.mxu0 %v2884
    %3954 = vmatpush.bf16.msra.mxu0 %v2882
    %3955 = vmatmul.bf16.gmra.mxu0 %v645
    %v3956 = vpop.f32.mrf.mxu0
    %v3957 = vadd.f32 %v3944, %v3956
    %v3958 = vpop.f32.mrf.mxu0
    %3959 = vdwg.mxu0
    %3960 = vmatpush.bf16.msra.mxu0 %v2912
    %3961 = vmatpush.bf16.msra.mxu0 %v2910
    %3962 = vmatpush.bf16.msra.mxu0 %v2908
    %3963 = vmatpush.bf16.msra.mxu0 %v2906
    %3964 = vmatpush.bf16.msra.mxu0 %v2904
    %3965 = vmatpush.bf16.msra.mxu0 %v2902
    %3966 = vmatpush.bf16.msra.mxu0 %v2900
    %3967 = vmatpush.bf16.msra.mxu0 %v2898
    %3968 = vmatmul.bf16.gmra.mxu0 %v646
    %v3969 = vpop.f32.mrf.mxu0
    %v3970 = vadd.f32 %v3957, %v3969
    %v3971 = vpop.f32.mrf.mxu0
    %3972 = vdwg.mxu0
    %3973 = vmatpush.bf16.msra.mxu0 %v2928
    %3974 = vmatpush.bf16.msra.mxu0 %v2926
    %3975 = vmatpush.bf16.msra.mxu0 %v2924
    %3976 = vmatpush.bf16.msra.mxu0 %v2922
    %3977 = vmatpush.bf16.msra.mxu0 %v2920
    %3978 = vmatpush.bf16.msra.mxu0 %v2918
    %3979 = vmatpush.bf16.msra.mxu0 %v2916
    %3980 = vmatpush.bf16.msra.mxu0 %v2914
    %3981 = vmatmul.bf16.gmra.mxu0 %v647
    %v3982 = vpop.f32.mrf.mxu0
    %v3983 = vadd.f32 %v3970, %v3982
    %v3984 = vpop.f32.mrf.mxu0
    %3985 = vdwg.mxu0
    %3986 = vmatpush.bf16.msra.mxu0 %v2944
    %3987 = vmatpush.bf16.msra.mxu0 %v2942
    %3988 = vmatpush.bf16.msra.mxu0 %v2940
    %3989 = vmatpush.bf16.msra.mxu0 %v2938
    %3990 = vmatpush.bf16.msra.mxu0 %v2936
    %3991 = vmatpush.bf16.msra.mxu0 %v2934
    %3992 = vmatpush.bf16.msra.mxu0 %v2932
    %3993 = vmatpush.bf16.msra.mxu0 %v2930
    %3994 = vmatmul.bf16.gmra.mxu0 %v650
    %v3995 = vpop.f32.mrf.mxu0
    %v3996 = vadd.f32 %v3983, %v3995
    %v3997 = vpop.f32.mrf.mxu0
    %3998 = vdwg.mxu0
    %3999 = vmatpush.bf16.msra.mxu0 %v2960
    %4000 = vmatpush.bf16.msra.mxu0 %v2958
    %4001 = vmatpush.bf16.msra.mxu0 %v2956
    %4002 = vmatpush.bf16.msra.mxu0 %v2954
    %4003 = vmatpush.bf16.msra.mxu0 %v2952
    %4004 = vmatpush.bf16.msra.mxu0 %v2950
    %4005 = vmatpush.bf16.msra.mxu0 %v2948
    %4006 = vmatpush.bf16.msra.mxu0 %v2946
    %4007 = vmatmul.bf16.gmra.mxu0 %v651
    %v4008 = vpop.f32.mrf.mxu0
    %v4009 = vadd.f32 %v3996, %v4008
    %v4010 = vpop.f32.mrf.mxu0
    %4011 = vdwg.mxu0
    %4012 = vmatpush.bf16.msra.mxu0 %v2976
    %4013 = vmatpush.bf16.msra.mxu0 %v2974
    %4014 = vmatpush.bf16.msra.mxu0 %v2972
    %4015 = vmatpush.bf16.msra.mxu0 %v2970
    %4016 = vmatpush.bf16.msra.mxu0 %v2968
    %4017 = vmatpush.bf16.msra.mxu0 %v2966
    %4018 = vmatpush.bf16.msra.mxu0 %v2964
    %4019 = vmatpush.bf16.msra.mxu0 %v2962
    %4020 = vmatmul.bf16.gmra.mxu0 %v652
    %v4021 = vpop.f32.mrf.mxu0
    %v4022 = vadd.f32 %v4009, %v4021
    %v4023 = vpop.f32.mrf.mxu0
    %4024 = vdwg.mxu0
    %4025 = vmatpush.bf16.msra.mxu0 %v2992
    %4026 = vmatpush.bf16.msra.mxu0 %v2990
    %4027 = vmatpush.bf16.msra.mxu0 %v2988
    %4028 = vmatpush.bf16.msra.mxu0 %v2986
    %4029 = vmatpush.bf16.msra.mxu0 %v2984
    %4030 = vmatpush.bf16.msra.mxu0 %v2982
    %4031 = vmatpush.bf16.msra.mxu0 %v2980
    %4032 = vmatpush.bf16.msra.mxu0 %v2978
    %4033 = vmatmul.bf16.gmra.mxu0 %v653
    %v4034 = vpop.f32.mrf.mxu0
    %v4035 = vadd.f32 %v4022, %v4034
    %v4036 = vpop.f32.mrf.mxu0
    %4037 = vdwg.mxu0
    %4038 = vmatpush.bf16.msra.mxu0 %v2433
    %4039 = vmatpush.bf16.msra.mxu0 %v2431
    %4040 = vmatpush.bf16.msra.mxu0 %v2429
    %4041 = vmatpush.bf16.msra.mxu0 %v2427
    %4042 = vmatpush.bf16.msra.mxu0 %v2425
    %4043 = vmatpush.bf16.msra.mxu0 %v2423
    %4044 = vmatpush.bf16.msra.mxu0 %v2421
    %4045 = vmatpush.bf16.msra.mxu0 %v2419
    %4046 = vmatmul.bf16.gmra.mxu0 %v610
    %v4047 = vpop.f32.mrf.mxu0
    %v4048 = vadd.f32 %v605, %v4047
    %v4049 = vpop.f32.mrf.mxu0
    %4050 = vdwg.mxu0
    %4051 = vmatpush.bf16.msra.mxu0 %v2449
    %4052 = vmatpush.bf16.msra.mxu0 %v2447
    %4053 = vmatpush.bf16.msra.mxu0 %v2445
    %4054 = vmatpush.bf16.msra.mxu0 %v2443
    %4055 = vmatpush.bf16.msra.mxu0 %v2441
    %4056 = vmatpush.bf16.msra.mxu0 %v2439
    %4057 = vmatpush.bf16.msra.mxu0 %v2437
    %4058 = vmatpush.bf16.msra.mxu0 %v2435
    %4059 = vmatmul.bf16.gmra.mxu0 %v611
    %v4060 = vpop.f32.mrf.mxu0
    %v4061 = vadd.f32 %v4048, %v4060
    %v4062 = vpop.f32.mrf.mxu0
    %4063 = vdwg.mxu0
    %4064 = vmatpush.bf16.msra.mxu0 %v2465
    %4065 = vmatpush.bf16.msra.mxu0 %v2463
    %4066 = vmatpush.bf16.msra.mxu0 %v2461
    %4067 = vmatpush.bf16.msra.mxu0 %v2459
    %4068 = vmatpush.bf16.msra.mxu0 %v2457
    %4069 = vmatpush.bf16.msra.mxu0 %v2455
    %4070 = vmatpush.bf16.msra.mxu0 %v2453
    %4071 = vmatpush.bf16.msra.mxu0 %v2451
    %4072 = vmatmul.bf16.gmra.mxu0 %v612
    %v4073 = vpop.f32.mrf.mxu0
    %v4074 = vadd.f32 %v4061, %v4073
    %v4075 = vpop.f32.mrf.mxu0
    %4076 = vdwg.mxu0
    %4077 = vmatpush.bf16.msra.mxu0 %v2481
    %4078 = vmatpush.bf16.msra.mxu0 %v2479
    %4079 = vmatpush.bf16.msra.mxu0 %v2477
    %4080 = vmatpush.bf16.msra.mxu0 %v2475
    %4081 = vmatpush.bf16.msra.mxu0 %v2473
    %4082 = vmatpush.bf16.msra.mxu0 %v2471
    %4083 = vmatpush.bf16.msra.mxu0 %v2469
    %4084 = vmatpush.bf16.msra.mxu0 %v2467
    %4085 = vmatmul.bf16.gmra.mxu0 %v613
    %v4086 = vpop.f32.mrf.mxu0
    %v4087 = vadd.f32 %v4074, %v4086
    %v4088 = vpop.f32.mrf.mxu0
    %4089 = vdwg.mxu0
    %4090 = vmatpush.bf16.msra.mxu0 %v2497
    %4091 = vmatpush.bf16.msra.mxu0 %v2495
    %4092 = vmatpush.bf16.msra.mxu0 %v2493
    %4093 = vmatpush.bf16.msra.mxu0 %v2491
    %4094 = vmatpush.bf16.msra.mxu0 %v2489
    %4095 = vmatpush.bf16.msra.mxu0 %v2487
    %4096 = vmatpush.bf16.msra.mxu0 %v2485
    %4097 = vmatpush.bf16.msra.mxu0 %v2483
    %4098 = vmatmul.bf16.gmra.mxu0 %v614
    %v4099 = vpop.f32.mrf.mxu0
    %v4100 = vadd.f32 %v4087, %v4099
    %v4101 = vpop.f32.mrf.mxu0
    %4102 = vdwg.mxu0
    %4103 = vmatpush.bf16.msra.mxu0 %v2513
    %4104 = vmatpush.bf16.msra.mxu0 %v2511
    %4105 = vmatpush.bf16.msra.mxu0 %v2509
    %4106 = vmatpush.bf16.msra.mxu0 %v2507
    %4107 = vmatpush.bf16.msra.mxu0 %v2505
    %4108 = vmatpush.bf16.msra.mxu0 %v2503
    %4109 = vmatpush.bf16.msra.mxu0 %v2501
    %4110 = vmatpush.bf16.msra.mxu0 %v2499
    %4111 = vmatmul.bf16.gmra.mxu0 %v615
    %v4112 = vpop.f32.mrf.mxu0
    %v4113 = vadd.f32 %v4100, %v4112
    %v4114 = vpop.f32.mrf.mxu0
    %4115 = vdwg.mxu0
    %4116 = vmatpush.bf16.msra.mxu0 %v2529
    %4117 = vmatpush.bf16.msra.mxu0 %v2527
    %4118 = vmatpush.bf16.msra.mxu0 %v2525
    %4119 = vmatpush.bf16.msra.mxu0 %v2523
    %4120 = vmatpush.bf16.msra.mxu0 %v2521
    %4121 = vmatpush.bf16.msra.mxu0 %v2519
    %4122 = vmatpush.bf16.msra.mxu0 %v2517
    %4123 = vmatpush.bf16.msra.mxu0 %v2515
    %4124 = vmatmul.bf16.gmra.mxu0 %v616
    %v4125 = vpop.f32.mrf.mxu0
    %v4126 = vadd.f32 %v4113, %v4125
    %v4127 = vpop.f32.mrf.mxu0
    %4128 = vdwg.mxu0
    %4129 = vmatpush.bf16.msra.mxu0 %v2545
    %4130 = vmatpush.bf16.msra.mxu0 %v2543
    %4131 = vmatpush.bf16.msra.mxu0 %v2541
    %4132 = vmatpush.bf16.msra.mxu0 %v2539
    %4133 = vmatpush.bf16.msra.mxu0 %v2537
    %4134 = vmatpush.bf16.msra.mxu0 %v2535
    %4135 = vmatpush.bf16.msra.mxu0 %v2533
    %4136 = vmatpush.bf16.msra.mxu0 %v2531
    %4137 = vmatmul.bf16.gmra.mxu0 %v617
    %v4138 = vpop.f32.mrf.mxu0
    %v4139 = vadd.f32 %v4126, %v4138
    %v4140 = vpop.f32.mrf.mxu0
    %4141 = vdwg.mxu0
    %4142 = vmatpush.bf16.msra.mxu0 %v2561
    %4143 = vmatpush.bf16.msra.mxu0 %v2559
    %4144 = vmatpush.bf16.msra.mxu0 %v2557
    %4145 = vmatpush.bf16.msra.mxu0 %v2555
    %4146 = vmatpush.bf16.msra.mxu0 %v2553
    %4147 = vmatpush.bf16.msra.mxu0 %v2551
    %4148 = vmatpush.bf16.msra.mxu0 %v2549
    %4149 = vmatpush.bf16.msra.mxu0 %v2547
    %4150 = vmatmul.bf16.gmra.mxu0 %v620
    %v4151 = vpop.f32.mrf.mxu0
    %v4152 = vadd.f32 %v4139, %v4151
    %v4153 = vpop.f32.mrf.mxu0
    %4154 = vdwg.mxu0
    %4155 = vmatpush.bf16.msra.mxu0 %v2577
    %4156 = vmatpush.bf16.msra.mxu0 %v2575
    %4157 = vmatpush.bf16.msra.mxu0 %v2573
    %4158 = vmatpush.bf16.msra.mxu0 %v2571
    %4159 = vmatpush.bf16.msra.mxu0 %v2569
    %4160 = vmatpush.bf16.msra.mxu0 %v2567
    %4161 = vmatpush.bf16.msra.mxu0 %v2565
    %4162 = vmatpush.bf16.msra.mxu0 %v2563
    %4163 = vmatmul.bf16.gmra.mxu0 %v621
    %v4164 = vpop.f32.mrf.mxu0
    %v4165 = vadd.f32 %v4152, %v4164
    %v4166 = vpop.f32.mrf.mxu0
    %4167 = vdwg.mxu0
    %4168 = vmatpush.bf16.msra.mxu0 %v2593
    %4169 = vmatpush.bf16.msra.mxu0 %v2591
    %4170 = vmatpush.bf16.msra.mxu0 %v2589
    %4171 = vmatpush.bf16.msra.mxu0 %v2587
    %4172 = vmatpush.bf16.msra.mxu0 %v2585
    %4173 = vmatpush.bf16.msra.mxu0 %v2583
    %4174 = vmatpush.bf16.msra.mxu0 %v2581
    %4175 = vmatpush.bf16.msra.mxu0 %v2579
    %4176 = vmatmul.bf16.gmra.mxu0 %v622
    %v4177 = vpop.f32.mrf.mxu0
    %v4178 = vadd.f32 %v4165, %v4177
    %v4179 = vpop.f32.mrf.mxu0
    %4180 = vdwg.mxu0
    %4181 = vmatpush.bf16.msra.mxu0 %v2609
    %4182 = vmatpush.bf16.msra.mxu0 %v2607
    %4183 = vmatpush.bf16.msra.mxu0 %v2605
    %4184 = vmatpush.bf16.msra.mxu0 %v2603
    %4185 = vmatpush.bf16.msra.mxu0 %v2601
    %4186 = vmatpush.bf16.msra.mxu0 %v2599
    %4187 = vmatpush.bf16.msra.mxu0 %v2597
    %4188 = vmatpush.bf16.msra.mxu0 %v2595
    %4189 = vmatmul.bf16.gmra.mxu0 %v623
    %v4190 = vpop.f32.mrf.mxu0
    %v4191 = vadd.f32 %v4178, %v4190
    %v4192 = vpop.f32.mrf.mxu0
    %4193 = vdwg.mxu0
    %4194 = vmatpush.bf16.msra.mxu0 %v2625
    %4195 = vmatpush.bf16.msra.mxu0 %v2623
    %4196 = vmatpush.bf16.msra.mxu0 %v2621
    %4197 = vmatpush.bf16.msra.mxu0 %v2619
    %4198 = vmatpush.bf16.msra.mxu0 %v2617
    %4199 = vmatpush.bf16.msra.mxu0 %v2615
    %4200 = vmatpush.bf16.msra.mxu0 %v2613
    %4201 = vmatpush.bf16.msra.mxu0 %v2611
    %4202 = vmatmul.bf16.gmra.mxu0 %v624
    %v4203 = vpop.f32.mrf.mxu0
    %v4204 = vadd.f32 %v4191, %v4203
    %v4205 = vpop.f32.mrf.mxu0
    %4206 = vdwg.mxu0
    %4207 = vmatpush.bf16.msra.mxu0 %v2641
    %4208 = vmatpush.bf16.msra.mxu0 %v2639
    %4209 = vmatpush.bf16.msra.mxu0 %v2637
    %4210 = vmatpush.bf16.msra.mxu0 %v2635
    %4211 = vmatpush.bf16.msra.mxu0 %v2633
    %4212 = vmatpush.bf16.msra.mxu0 %v2631
    %4213 = vmatpush.bf16.msra.mxu0 %v2629
    %4214 = vmatpush.bf16.msra.mxu0 %v2627
    %4215 = vmatmul.bf16.gmra.mxu0 %v625
    %v4216 = vpop.f32.mrf.mxu0
    %v4217 = vadd.f32 %v4204, %v4216
    %v4218 = vpop.f32.mrf.mxu0
    %4219 = vdwg.mxu0
    %4220 = vmatpush.bf16.msra.mxu0 %v2657
    %4221 = vmatpush.bf16.msra.mxu0 %v2655
    %4222 = vmatpush.bf16.msra.mxu0 %v2653
    %4223 = vmatpush.bf16.msra.mxu0 %v2651
    %4224 = vmatpush.bf16.msra.mxu0 %v2649
    %4225 = vmatpush.bf16.msra.mxu0 %v2647
    %4226 = vmatpush.bf16.msra.mxu0 %v2645
    %4227 = vmatpush.bf16.msra.mxu0 %v2643
    %4228 = vmatmul.bf16.gmra.mxu0 %v626
    %v4229 = vpop.f32.mrf.mxu0
    %v4230 = vadd.f32 %v4217, %v4229
    %v4231 = vpop.f32.mrf.mxu0
    %4232 = vdwg.mxu0
    %4233 = vmatpush.bf16.msra.mxu0 %v2673
    %4234 = vmatpush.bf16.msra.mxu0 %v2671
    %4235 = vmatpush.bf16.msra.mxu0 %v2669
    %4236 = vmatpush.bf16.msra.mxu0 %v2667
    %4237 = vmatpush.bf16.msra.mxu0 %v2665
    %4238 = vmatpush.bf16.msra.mxu0 %v2663
    %4239 = vmatpush.bf16.msra.mxu0 %v2661
    %4240 = vmatpush.bf16.msra.mxu0 %v2659
    %4241 = vmatmul.bf16.gmra.mxu0 %v627
    %v4242 = vpop.f32.mrf.mxu0
    %v4243 = vadd.f32 %v4230, %v4242
    %v4244 = vpop.f32.mrf.mxu0
    %4245 = vdwg.mxu0
    %4246 = vmatpush.bf16.msra.mxu0 %v2689
    %4247 = vmatpush.bf16.msra.mxu0 %v2687
    %4248 = vmatpush.bf16.msra.mxu0 %v2685
    %4249 = vmatpush.bf16.msra.mxu0 %v2683
    %4250 = vmatpush.bf16.msra.mxu0 %v2681
    %4251 = vmatpush.bf16.msra.mxu0 %v2679
    %4252 = vmatpush.bf16.msra.mxu0 %v2677
    %4253 = vmatpush.bf16.msra.mxu0 %v2675
    %4254 = vmatmul.bf16.gmra.mxu0 %v630
    %v4255 = vpop.f32.mrf.mxu0
    %v4256 = vadd.f32 %v4243, %v4255
    %v4257 = vpop.f32.mrf.mxu0
    %4258 = vdwg.mxu0
    %4259 = vmatpush.bf16.msra.mxu0 %v2705
    %4260 = vmatpush.bf16.msra.mxu0 %v2703
    %4261 = vmatpush.bf16.msra.mxu0 %v2701
    %4262 = vmatpush.bf16.msra.mxu0 %v2699
    %4263 = vmatpush.bf16.msra.mxu0 %v2697
    %4264 = vmatpush.bf16.msra.mxu0 %v2695
    %4265 = vmatpush.bf16.msra.mxu0 %v2693
    %4266 = vmatpush.bf16.msra.mxu0 %v2691
    %4267 = vmatmul.bf16.gmra.mxu0 %v631
    %v4268 = vpop.f32.mrf.mxu0
    %v4269 = vadd.f32 %v4256, %v4268
    %v4270 = vpop.f32.mrf.mxu0
    %4271 = vdwg.mxu0
    %4272 = vmatpush.bf16.msra.mxu0 %v2721
    %4273 = vmatpush.bf16.msra.mxu0 %v2719
    %4274 = vmatpush.bf16.msra.mxu0 %v2717
    %4275 = vmatpush.bf16.msra.mxu0 %v2715
    %4276 = vmatpush.bf16.msra.mxu0 %v2713
    %4277 = vmatpush.bf16.msra.mxu0 %v2711
    %4278 = vmatpush.bf16.msra.mxu0 %v2709
    %4279 = vmatpush.bf16.msra.mxu0 %v2707
    %4280 = vmatmul.bf16.gmra.mxu0 %v632
    %v4281 = vpop.f32.mrf.mxu0
    %v4282 = vadd.f32 %v4269, %v4281
    %v4283 = vpop.f32.mrf.mxu0
    %4284 = vdwg.mxu0
    %4285 = vmatpush.bf16.msra.mxu0 %v2737
    %4286 = vmatpush.bf16.msra.mxu0 %v2735
    %4287 = vmatpush.bf16.msra.mxu0 %v2733
    %4288 = vmatpush.bf16.msra.mxu0 %v2731
    %4289 = vmatpush.bf16.msra.mxu0 %v2729
    %4290 = vmatpush.bf16.msra.mxu0 %v2727
    %4291 = vmatpush.bf16.msra.mxu0 %v2725
    %4292 = vmatpush.bf16.msra.mxu0 %v2723
    %4293 = vmatmul.bf16.gmra.mxu0 %v633
    %v4294 = vpop.f32.mrf.mxu0
    %v4295 = vadd.f32 %v4282, %v4294
    %v4296 = vpop.f32.mrf.mxu0
    %4297 = vdwg.mxu0
    %4298 = vmatpush.bf16.msra.mxu0 %v2753
    %4299 = vmatpush.bf16.msra.mxu0 %v2751
    %4300 = vmatpush.bf16.msra.mxu0 %v2749
    %4301 = vmatpush.bf16.msra.mxu0 %v2747
    %4302 = vmatpush.bf16.msra.mxu0 %v2745
    %4303 = vmatpush.bf16.msra.mxu0 %v2743
    %4304 = vmatpush.bf16.msra.mxu0 %v2741
    %4305 = vmatpush.bf16.msra.mxu0 %v2739
    %4306 = vmatmul.bf16.gmra.mxu0 %v634
    %v4307 = vpop.f32.mrf.mxu0
    %v4308 = vadd.f32 %v4295, %v4307
    %v4309 = vpop.f32.mrf.mxu0
    %4310 = vdwg.mxu0
    %4311 = vmatpush.bf16.msra.mxu0 %v2769
    %4312 = vmatpush.bf16.msra.mxu0 %v2767
    %4313 = vmatpush.bf16.msra.mxu0 %v2765
    %4314 = vmatpush.bf16.msra.mxu0 %v2763
    %4315 = vmatpush.bf16.msra.mxu0 %v2761
    %4316 = vmatpush.bf16.msra.mxu0 %v2759
    %4317 = vmatpush.bf16.msra.mxu0 %v2757
    %4318 = vmatpush.bf16.msra.mxu0 %v2755
    %4319 = vmatmul.bf16.gmra.mxu0 %v635
    %v4320 = vpop.f32.mrf.mxu0
    %v4321 = vadd.f32 %v4308, %v4320
    %v4322 = vpop.f32.mrf.mxu0
    %4323 = vdwg.mxu0
    %4324 = vmatpush.bf16.msra.mxu0 %v2785
    %4325 = vmatpush.bf16.msra.mxu0 %v2783
    %4326 = vmatpush.bf16.msra.mxu0 %v2781
    %4327 = vmatpush.bf16.msra.mxu0 %v2779
    %4328 = vmatpush.bf16.msra.mxu0 %v2777
    %4329 = vmatpush.bf16.msra.mxu0 %v2775
    %4330 = vmatpush.bf16.msra.mxu0 %v2773
    %4331 = vmatpush.bf16.msra.mxu0 %v2771
    %4332 = vmatmul.bf16.gmra.mxu0 %v636
    %v4333 = vpop.f32.mrf.mxu0
    %v4334 = vadd.f32 %v4321, %v4333
    %v4335 = vpop.f32.mrf.mxu0
    %4336 = vdwg.mxu0
    %4337 = vmatpush.bf16.msra.mxu0 %v2801
    %4338 = vmatpush.bf16.msra.mxu0 %v2799
    %4339 = vmatpush.bf16.msra.mxu0 %v2797
    %4340 = vmatpush.bf16.msra.mxu0 %v2795
    %4341 = vmatpush.bf16.msra.mxu0 %v2793
    %4342 = vmatpush.bf16.msra.mxu0 %v2791
    %4343 = vmatpush.bf16.msra.mxu0 %v2789
    %4344 = vmatpush.bf16.msra.mxu0 %v2787
    %4345 = vmatmul.bf16.gmra.mxu0 %v637
    %v4346 = vpop.f32.mrf.mxu0
    %v4347 = vadd.f32 %v4334, %v4346
    %v4348 = vpop.f32.mrf.mxu0
    %4349 = vdwg.mxu0
    %4350 = vmatpush.bf16.msra.mxu0 %v2817
    %4351 = vmatpush.bf16.msra.mxu0 %v2815
    %4352 = vmatpush.bf16.msra.mxu0 %v2813
    %4353 = vmatpush.bf16.msra.mxu0 %v2811
    %4354 = vmatpush.bf16.msra.mxu0 %v2809
    %4355 = vmatpush.bf16.msra.mxu0 %v2807
    %4356 = vmatpush.bf16.msra.mxu0 %v2805
    %4357 = vmatpush.bf16.msra.mxu0 %v2803
    %4358 = vmatmul.bf16.gmra.mxu0 %v640
    %v4359 = vpop.f32.mrf.mxu0
    %v4360 = vadd.f32 %v4347, %v4359
    %v4361 = vpop.f32.mrf.mxu0
    %4362 = vdwg.mxu0
    %4363 = vmatpush.bf16.msra.mxu0 %v2833
    %4364 = vmatpush.bf16.msra.mxu0 %v2831
    %4365 = vmatpush.bf16.msra.mxu0 %v2829
    %4366 = vmatpush.bf16.msra.mxu0 %v2827
    %4367 = vmatpush.bf16.msra.mxu0 %v2825
    %4368 = vmatpush.bf16.msra.mxu0 %v2823
    %4369 = vmatpush.bf16.msra.mxu0 %v2821
    %4370 = vmatpush.bf16.msra.mxu0 %v2819
    %4371 = vmatmul.bf16.gmra.mxu0 %v641
    %v4372 = vpop.f32.mrf.mxu0
    %v4373 = vadd.f32 %v4360, %v4372
    %v4374 = vpop.f32.mrf.mxu0
    %4375 = vdwg.mxu0
    %4376 = vmatpush.bf16.msra.mxu0 %v2849
    %4377 = vmatpush.bf16.msra.mxu0 %v2847
    %4378 = vmatpush.bf16.msra.mxu0 %v2845
    %4379 = vmatpush.bf16.msra.mxu0 %v2843
    %4380 = vmatpush.bf16.msra.mxu0 %v2841
    %4381 = vmatpush.bf16.msra.mxu0 %v2839
    %4382 = vmatpush.bf16.msra.mxu0 %v2837
    %4383 = vmatpush.bf16.msra.mxu0 %v2835
    %4384 = vmatmul.bf16.gmra.mxu0 %v642
    %v4385 = vpop.f32.mrf.mxu0
    %v4386 = vadd.f32 %v4373, %v4385
    %v4387 = vpop.f32.mrf.mxu0
    %4388 = vdwg.mxu0
    %4389 = vmatpush.bf16.msra.mxu0 %v2865
    %4390 = vmatpush.bf16.msra.mxu0 %v2863
    %4391 = vmatpush.bf16.msra.mxu0 %v2861
    %4392 = vmatpush.bf16.msra.mxu0 %v2859
    %4393 = vmatpush.bf16.msra.mxu0 %v2857
    %4394 = vmatpush.bf16.msra.mxu0 %v2855
    %4395 = vmatpush.bf16.msra.mxu0 %v2853
    %4396 = vmatpush.bf16.msra.mxu0 %v2851
    %4397 = vmatmul.bf16.gmra.mxu0 %v643
    %v4398 = vpop.f32.mrf.mxu0
    %v4399 = vadd.f32 %v4386, %v4398
    %v4400 = vpop.f32.mrf.mxu0
    %4401 = vdwg.mxu0
    %4402 = vmatpush.bf16.msra.mxu0 %v2881
    %4403 = vmatpush.bf16.msra.mxu0 %v2879
    %4404 = vmatpush.bf16.msra.mxu0 %v2877
    %4405 = vmatpush.bf16.msra.mxu0 %v2875
    %4406 = vmatpush.bf16.msra.mxu0 %v2873
    %4407 = vmatpush.bf16.msra.mxu0 %v2871
    %4408 = vmatpush.bf16.msra.mxu0 %v2869
    %4409 = vmatpush.bf16.msra.mxu0 %v2867
    %4410 = vmatmul.bf16.gmra.mxu0 %v644
    %v4411 = vpop.f32.mrf.mxu0
    %v4412 = vadd.f32 %v4399, %v4411
    %v4413 = vpop.f32.mrf.mxu0
    %4414 = vdwg.mxu0
    %4415 = vmatpush.bf16.msra.mxu0 %v2897
    %4416 = vmatpush.bf16.msra.mxu0 %v2895
    %4417 = vmatpush.bf16.msra.mxu0 %v2893
    %4418 = vmatpush.bf16.msra.mxu0 %v2891
    %4419 = vmatpush.bf16.msra.mxu0 %v2889
    %4420 = vmatpush.bf16.msra.mxu0 %v2887
    %4421 = vmatpush.bf16.msra.mxu0 %v2885
    %4422 = vmatpush.bf16.msra.mxu0 %v2883
    %4423 = vmatmul.bf16.gmra.mxu0 %v645
    %v4424 = vpop.f32.mrf.mxu0
    %v4425 = vadd.f32 %v4412, %v4424
    %v4426 = vpop.f32.mrf.mxu0
    %4427 = vdwg.mxu0
    %4428 = vmatpush.bf16.msra.mxu0 %v2913
    %4429 = vmatpush.bf16.msra.mxu0 %v2911
    %4430 = vmatpush.bf16.msra.mxu0 %v2909
    %4431 = vmatpush.bf16.msra.mxu0 %v2907
    %4432 = vmatpush.bf16.msra.mxu0 %v2905
    %4433 = vmatpush.bf16.msra.mxu0 %v2903
    %4434 = vmatpush.bf16.msra.mxu0 %v2901
    %4435 = vmatpush.bf16.msra.mxu0 %v2899
    %4436 = vmatmul.bf16.gmra.mxu0 %v646
    %v4437 = vpop.f32.mrf.mxu0
    %v4438 = vadd.f32 %v4425, %v4437
    %v4439 = vpop.f32.mrf.mxu0
    %4440 = vdwg.mxu0
    %4441 = vmatpush.bf16.msra.mxu0 %v2929
    %4442 = vmatpush.bf16.msra.mxu0 %v2927
    %4443 = vmatpush.bf16.msra.mxu0 %v2925
    %4444 = vmatpush.bf16.msra.mxu0 %v2923
    %4445 = vmatpush.bf16.msra.mxu0 %v2921
    %4446 = vmatpush.bf16.msra.mxu0 %v2919
    %4447 = vmatpush.bf16.msra.mxu0 %v2917
    %4448 = vmatpush.bf16.msra.mxu0 %v2915
    %4449 = vmatmul.bf16.gmra.mxu0 %v647
    %v4450 = vpop.f32.mrf.mxu0
    %v4451 = vadd.f32 %v4438, %v4450
    %v4452 = vpop.f32.mrf.mxu0
    %4453 = vdwg.mxu0
    %4454 = vmatpush.bf16.msra.mxu0 %v2945
    %4455 = vmatpush.bf16.msra.mxu0 %v2943
    %4456 = vmatpush.bf16.msra.mxu0 %v2941
    %4457 = vmatpush.bf16.msra.mxu0 %v2939
    %4458 = vmatpush.bf16.msra.mxu0 %v2937
    %4459 = vmatpush.bf16.msra.mxu0 %v2935
    %4460 = vmatpush.bf16.msra.mxu0 %v2933
    %4461 = vmatpush.bf16.msra.mxu0 %v2931
    %4462 = vmatmul.bf16.gmra.mxu0 %v650
    %v4463 = vpop.f32.mrf.mxu0
    %v4464 = vadd.f32 %v4451, %v4463
    %v4465 = vpop.f32.mrf.mxu0
    %4466 = vdwg.mxu0
    %4467 = vmatpush.bf16.msra.mxu0 %v2961
    %4468 = vmatpush.bf16.msra.mxu0 %v2959
    %4469 = vmatpush.bf16.msra.mxu0 %v2957
    %4470 = vmatpush.bf16.msra.mxu0 %v2955
    %4471 = vmatpush.bf16.msra.mxu0 %v2953
    %4472 = vmatpush.bf16.msra.mxu0 %v2951
    %4473 = vmatpush.bf16.msra.mxu0 %v2949
    %4474 = vmatpush.bf16.msra.mxu0 %v2947
    %4475 = vmatmul.bf16.gmra.mxu0 %v651
    %v4476 = vpop.f32.mrf.mxu0
    %v4477 = vadd.f32 %v4464, %v4476
    %v4478 = vpop.f32.mrf.mxu0
    %4479 = vdwg.mxu0
    %4480 = vmatpush.bf16.msra.mxu0 %v2977
    %4481 = vmatpush.bf16.msra.mxu0 %v2975
    %4482 = vmatpush.bf16.msra.mxu0 %v2973
    %4483 = vmatpush.bf16.msra.mxu0 %v2971
    %4484 = vmatpush.bf16.msra.mxu0 %v2969
    %4485 = vmatpush.bf16.msra.mxu0 %v2967
    %4486 = vmatpush.bf16.msra.mxu0 %v2965
    %4487 = vmatpush.bf16.msra.mxu0 %v2963
    %4488 = vmatmul.bf16.gmra.mxu0 %v652
    %v4489 = vpop.f32.mrf.mxu0
    %v4490 = vadd.f32 %v4477, %v4489
    %v4491 = vpop.f32.mrf.mxu0
    %4492 = vdwg.mxu0
    %4493 = vmatpush.bf16.msra.mxu0 %v2993
    %4494 = vmatpush.bf16.msra.mxu0 %v2991
    %4495 = vmatpush.bf16.msra.mxu0 %v2989
    %4496 = vmatpush.bf16.msra.mxu0 %v2987
    %4497 = vmatpush.bf16.msra.mxu0 %v2985
    %4498 = vmatpush.bf16.msra.mxu0 %v2983
    %4499 = vmatpush.bf16.msra.mxu0 %v2981
    %4500 = vmatpush.bf16.msra.mxu0 %v2979
    %4501 = vmatmul.bf16.gmra.mxu0 %v653
    %v4502 = vpop.f32.mrf.mxu0
    %v4503 = vadd.f32 %v4490, %v4502
    %v4504 = vpop.f32.mrf.mxu0
    %4505 = vdwg.mxu0
    %v4506 = vmax.f32 %v4035, 0.0
    %v4507 = vmax.f32 %v4503, 0.0
    %v4508 = vpack.c.bf16 %v4506, %v4506
    %v4509 = vpack.c.bf16 %v4507, %v4507
    %v4510 = vld [vmem:[%s3] sm:$0xf]
    %v4511 = vld [vmem:[%s3 + $0x4] sm:$0xf]
    %v4512 = vld [vmem:[%s3 + $0x8] sm:$0xf]
    %v4513 = vld [vmem:[%s3 + $0xc] sm:$0xf]
    %v4514 = vld [vmem:[%s3 + $0x10] sm:$0xf]
    %v4515 = vld [vmem:[%s3 + $0x14] sm:$0xf]
    %v4516 = vld [vmem:[%s3 + $0x18] sm:$0xf]
    %v4517 = vld [vmem:[%s3 + $0x1c] sm:$0xf]
    %v4518 = vld [vmem:[%s3 + $0x20] sm:$0xf]
    %v4519 = vld [vmem:[%s3 + $0x24] sm:$0xf]
    %v4520 = vld [vmem:[%s3 + $0x28] sm:$0xf]
    %v4521 = vld [vmem:[%s3 + $0x2c] sm:$0xf]
    %v4522 = vld [vmem:[%s3 + $0x30] sm:$0xf]
    %v4523 = vld [vmem:[%s3 + $0x34] sm:$0xf]
    %v4524 = vld [vmem:[%s3 + $0x38] sm:$0xf]
    %v4525 = vld [vmem:[%s3 + $0x3c] sm:$0xf]
    %v4526 = vld [vmem:[%s3 + $0x40] sm:$0xf]
    %v4527 = vld [vmem:[%s3 + $0x44] sm:$0xf]
    %v4528 = vld [vmem:[%s3 + $0x48] sm:$0xf]
    %v4529 = vld [vmem:[%s3 + $0x4c] sm:$0xf]
    %v4530 = vld [vmem:[%s3 + $0x50] sm:$0xf]
    %v4531 = vld [vmem:[%s3 + $0x54] sm:$0xf]
    %v4532 = vld [vmem:[%s3 + $0x58] sm:$0xf]
    %v4533 = vld [vmem:[%s3 + $0x5c] sm:$0xf]
    %v4534 = vld [vmem:[%s3 + $0x60] sm:$0xf]
    %v4535 = vld [vmem:[%s3 + $0x64] sm:$0xf]
    %v4536 = vld [vmem:[%s3 + $0x68] sm:$0xf]
    %v4537 = vld [vmem:[%s3 + $0x6c] sm:$0xf]
    %v4538 = vld [vmem:[%s3 + $0x70] sm:$0xf]
    %v4539 = vld [vmem:[%s3 + $0x74] sm:$0xf]
    %v4540 = vld [vmem:[%s3 + $0x78] sm:$0xf]
    %v4541 = vld [vmem:[%s3 + $0x7c] sm:$0xf]
    %v4542 = vld [vmem:[%s4] sm:$0x1]
    %v4544 = vperm.slane %v4542, 0
    %v4578 = vunpack.c.l.b16 %v4510
    %v4579 = vunpack.c.l.b16 %v4511
    %v4580 = vunpack.c.l.b16 %v4512
    %v4581 = vunpack.c.l.b16 %v4513
    %v4582 = vunpack.c.l.b16 %v4514
    %v4583 = vunpack.c.l.b16 %v4515
    %v4584 = vunpack.c.l.b16 %v4516
    %v4585 = vunpack.c.l.b16 %v4517
    %v4586 = vunpack.c.l.b16 %v4518
    %v4587 = vunpack.c.l.b16 %v4519
    %v4588 = vunpack.c.l.b16 %v4520
    %v4589 = vunpack.c.l.b16 %v4521
    %v4590 = vunpack.c.l.b16 %v4522
    %v4591 = vunpack.c.l.b16 %v4523
    %v4592 = vunpack.c.l.b16 %v4524
    %v4593 = vunpack.c.l.b16 %v4525
    %v4594 = vunpack.c.l.b16 %v4526
    %v4595 = vunpack.c.l.b16 %v4527
    %v4596 = vunpack.c.l.b16 %v4528
    %v4597 = vunpack.c.l.b16 %v4529
    %v4598 = vunpack.c.l.b16 %v4530
    %v4599 = vunpack.c.l.b16 %v4531
    %v4600 = vunpack.c.l.b16 %v4532
    %v4601 = vunpack.c.l.b16 %v4533
    %v4602 = vunpack.c.l.b16 %v4534
    %v4603 = vunpack.c.l.b16 %v4535
    %v4604 = vunpack.c.l.b16 %v4536
    %v4605 = vunpack.c.l.b16 %v4537
    %v4606 = vunpack.c.l.b16 %v4538
    %v4607 = vunpack.c.l.b16 %v4539
    %v4608 = vunpack.c.l.b16 %v4540
    %v4609 = vunpack.c.l.b16 %v4541
    %v4610 = vpack.c.b16 %v4579, %v4578
    %v4611 = vpack.c.b16 %v4581, %v4580
    %v4612 = vpack.c.b16 %v4583, %v4582
    %v4613 = vpack.c.b16 %v4585, %v4584
    %v4614 = vpack.c.b16 %v4587, %v4586
    %v4615 = vpack.c.b16 %v4589, %v4588
    %v4616 = vpack.c.b16 %v4591, %v4590
    %v4617 = vpack.c.b16 %v4593, %v4592
    %v4618 = vpack.c.b16 %v4595, %v4594
    %v4619 = vpack.c.b16 %v4597, %v4596
    %v4620 = vpack.c.b16 %v4599, %v4598
    %v4621 = vpack.c.b16 %v4601, %v4600
    %v4622 = vpack.c.b16 %v4603, %v4602
    %v4623 = vpack.c.b16 %v4605, %v4604
    %v4624 = vpack.c.b16 %v4607, %v4606
    %v4625 = vpack.c.b16 %v4609, %v4608
    %4642 = vmatpush.bf16.msra.mxu0 %v4617
    %4643 = vmatpush.bf16.msra.mxu0 %v4616
    %4644 = vmatpush.bf16.msra.mxu0 %v4615
    %4645 = vmatpush.bf16.msra.mxu0 %v4614
    %4646 = vmatpush.bf16.msra.mxu0 %v4613
    %4647 = vmatpush.bf16.msra.mxu0 %v4612
    %4648 = vmatpush.bf16.msra.mxu0 %v4611
    %4649 = vmatpush.bf16.msra.mxu0 %v4610
    %4650 = vmatmul.bf16.gmra.mxu0 %v4508
    %v4651 = vpop.f32.mrf.mxu0
    %v4652 = vadd.f32 %v4544, %v4651
    %v4653 = vpop.f32.mrf.mxu0
    %4654 = vdwg.mxu0
    %4655 = vmatpush.bf16.msra.mxu0 %v4625
    %4656 = vmatpush.bf16.msra.mxu0 %v4624
    %4657 = vmatpush.bf16.msra.mxu0 %v4623
    %4658 = vmatpush.bf16.msra.mxu0 %v4622
    %4659 = vmatpush.bf16.msra.mxu0 %v4621
    %4660 = vmatpush.bf16.msra.mxu0 %v4620
    %4661 = vmatpush.bf16.msra.mxu0 %v4619
    %4662 = vmatpush.bf16.msra.mxu0 %v4618
    %4663 = vmatmul.bf16.gmra.mxu0 %v4509
    %v4664 = vpop.f32.mrf.mxu0
    %v4665 = vadd.f32 %v4652, %v4664
    %v4666 = vpop.f32.mrf.mxu0
    %4667 = vdwg.mxu0
    %v4668 = vxor.u32 %v4665, 2147483648
    %v4669 = vmul.f32 %v4668, 1.442695
    %v4670 = vpow.pop %v4669
    %v4671 = vadd.f32 %v4670, 1.0
    %v4672 = vrcp.pop %v4671
    %v4673 = vmul.f32 %v4671, %v4672
    %v4674 = vsub.f32 1.0, %v4673
    %v4675 = vmul.f32 %v4672, %v4674
    %v4676 = vadd.f32 %v4672, %v4675
    %vm4677 = vweird.f32 %v4671
    %vm4678 = vweird.f32 %v4672
    %vm4679 = vmor %vm4677, %vm4678
    %v4680 = vsel %vm4679, %v4672, %v4676
    %v4681 = vand.u32 2147483647, %v4671
    %vm4682 = vcmp.eq.f32.partialorder %v4681, 8.507059e+37
    %v4683 = vand.u32 %v4671, 2147483648
    %v4684 = vor.u32 1.1754944e-38, %v4683
    %v4685 = vsel %vm4682, %v4684, %v4680
    %v4686 = vmul.f32 1.0, %v4685
    %4687 = vst [vmem:[#allocation2] sm:$0x3] %v4686
    // Predicated region
    $region22: #{forward.7} parent=1 // pred_check
      _
    $region23: #{forward.7} parent=1 // pred_check_branch
      %4689 = sbr.rel (0) target = $region25
    $region24: #{forward.7} parent=1 // pred_region
      %4691 = vsyncadd [#allocation3], 0
      %s4693 = sshll.u32 [#allocation2], 4
      %s4694 = int_to_ptr.vmem [resolvable:$true] %s4693
      %s4695 = sshll.u32 %s5, 4
      %s4696 = int_to_ptr.hbm [resolvable:$true] %s4695
      %4698 = dma.vmem_to_hbm [thread:$0]  %s4694, 32, %s4696, [#allocation3]
    $region25: #{forward.7} parent=1 // pred_fallthru
      _
    // Predicated region
    $region26: #{forward.7} parent=1 // pred_check
      _
    $region27: #{forward.7} parent=1 // pred_check_branch
      %4700 = sbr.rel (0) target = $region29
    $region28: #{forward.7} parent=1 // pred_region
      %4702 = dma.done [#allocation3], 32
    $region29: #{forward.7} parent=1 // pred_fallthru
      _
    %4703 = vsyncpa [#allocation3], 1

</llo_original>
